<compile_context>
chip_gen: v6e
topology: v6e:2x2x1
jax: 0.10.0
libtpu: 0.0.40
codegen_flags: <defaults>
</compile_context>

<pallas_src>
import functools
import math

import jax
import jax.numpy as jnp
from jax import lax
from jax.experimental import pallas as pl
from jax.experimental.pallas import tpu as pltpu

LANE = 128
SUBLANE = 8


def _round_up(x, m):
    return ((x + m - 1) // m) * m


# --------------------------------------------------------------------------
# Fused (bi-)GRU layer kernel
# --------------------------------------------------------------------------
def gru_layer_kernel(len_ref, x_ref, wih_ref, whh_ref, bih_ref, bhh_ref,
                     o_ref, gi_scr, h_scr,
                     *, hidden_pad, num_dirs, seq_len, final, no_txtnorm,
                     unroll):
    """One (bi-)GRU layer over one batch tile, packed-sequence semantics.

    len_ref : (B_tile, 1)             int32 lengths
    x_ref   : (T, B_tile, D_pad)      bf16  time-major input
    wih_ref : (D_pad, nd*3*Hp)        bf16  W_ih^T, dirs concatenated, gates [r,z,n]
    whh_ref : (nd, Hp, 3*Hp)          bf16  W_hh^T per direction
    bih_ref : (1, nd*3*Hp)            f32
    bhh_ref : (nd, 1, 3*Hp)           f32
    o_ref   : final    : (T, B_tile, Hp)     f32  (avg of dirs, l2-normed)
              non-final: (T, B_tile, nd*Hp)  bf16 (concat of dirs)
    gi_scr  : (T, B_tile, nd*3*Hp)    f32  precomputed input gates
    h_scr   : (nd, B_tile, Hp)        f32  running hidden state
    """
    T, Hp, nd = seq_len, hidden_pad, num_dirs
    G = 3 * Hp
    B_tile = x_ref.shape[1]
    Dp = x_ref.shape[2]

    # ---- hoisted input projection: one big bf16 MXU matmul for all timesteps,
    # ---- stored once into the flat gate scratch (b_ih folded in).
    x_all = x_ref[...].reshape(T * B_tile, Dp)                       # bf16
    gi_all = jnp.dot(x_all, wih_ref[...],
                     preferred_element_type=jnp.float32)             # (T*B, nd*G) f32
    gi_scr[...] = (gi_all + bih_ref[...]).reshape(T, B_tile, nd * G)

    # ---- recurrence state init ----
    h_scr[...] = jnp.zeros_like(h_scr)
    if final and nd == 2:
        o_ref[...] = jnp.zeros_like(o_ref)                           # accumulate fwd+bwd

    lengths = len_ref[...]                                           # (B_tile, 1) int32
    # hoisted per-direction constants / zero-cost lane views
    bhh = [jnp.broadcast_to(bhh_ref[d], (B_tile, G)) for d in range(nd)]
    gi_view = [gi_scr.at[:, :, d * G:(d + 1) * G] for d in range(nd)]

    def step(i, carry):
        # direction 0 walks t = 0..T-1, direction 1 walks t = T-1..0; the two
        # dependency chains are independent and can be overlapped.
        for d in range(nd):
            t = i if d == 0 else (T - 1 - i)
            gi = gi_view[d][t]                                       # (B_tile, G) f32
            h = h_scr[d]                                             # (B_tile, Hp) f32
            gh = jnp.dot(h.astype(jnp.bfloat16), whh_ref[d],
                         preferred_element_type=jnp.float32) + bhh[d]
            r = jax.nn.sigmoid(gi[:, 0:Hp] + gh[:, 0:Hp])
            z = jax.nn.sigmoid(gi[:, Hp:2 * Hp] + gh[:, Hp:2 * Hp])
            n = jnp.tanh(gi[:, 2 * Hp:3 * Hp] + r * gh[:, 2 * Hp:3 * Hp])
            h_new = n + z * (h - n)                                  # == (1-z)*n + z*h

            valid = lengths > t                                      # (B_tile, 1)
            h_scr[d] = jnp.where(valid, h_new, h)                    # freeze past length
            out_t = jnp.where(valid, h_new, 0.0)                     # zero padded steps
            if final:
                if nd == 2:
                    o_ref[t] = o_ref[t] + out_t                      # fwd+bwd sum
                else:
                    o_ref[t] = out_t
            else:
                o_ref[t, :, d * Hp:(d + 1) * Hp] = out_t.astype(o_ref.dtype)
        return carry

    lax.fori_loop(0, T, step, 0, unroll=unroll)

    # ---- fused epilogue: average of directions + l2norm (padded lanes are 0) ----
    if final and (nd == 2 or not no_txtnorm):
        y = o_ref[...]                                               # (T, B_tile, Hp)
        if nd == 2:
            y = y * 0.5
        if not no_txtnorm:
            ssq = jnp.sum(y * y, axis=-1, keepdims=True)
            y = y * pl.reciprocal(jnp.sqrt(ssq) + 1e-8, approx=True)
        o_ref[...] = y.astype(o_ref.dtype)


def run_gru_layer(x_tm, len2d, wih2, whh, bih2, bhh, *, hidden_pad, num_dirs,
                  final, no_txtnorm, b_tile):
    """x_tm: (T, B_pad, D_pad) bf16 -> (T, B_pad, Hp) f32 (final) or
    (T, B_pad, nd*Hp) bf16 (non-final)."""
    T, B_pad, Dp = x_tm.shape
    nd, Hp = num_dirs, hidden_pad
    grid = (B_pad // b_tile,)

    if final:
        out_shape = jax.ShapeDtypeStruct((T, B_pad, Hp), jnp.float32)
        out_spec = pl.BlockSpec((T, b_tile, Hp), lambda i: (0, i, 0))
    else:
        out_shape = jax.ShapeDtypeStruct((T, B_pad, nd * Hp), jnp.bfloat16)
        out_spec = pl.BlockSpec((T, b_tile, nd * Hp), lambda i: (0, i, 0))

    scratch = [pltpu.VMEM((T, b_tile, nd * 3 * Hp), jnp.float32),   # input gates
               pltpu.VMEM((nd, b_tile, Hp), jnp.float32)]           # hidden state

    unroll = True if T <= 16 else 4
    kernel = functools.partial(
        gru_layer_kernel, hidden_pad=Hp, num_dirs=nd, seq_len=T,
        final=final, no_txtnorm=no_txtnorm, unroll=unroll)

    return pl.pallas_call(
        kernel,
        out_shape=out_shape,
        grid=grid,
        in_specs=[
            pl.BlockSpec((b_tile, 1), lambda i: (i, 0)),             # lengths
            pl.BlockSpec((T, b_tile, Dp), lambda i: (0, i, 0)),      # x, batch-tiled
            pl.BlockSpec(wih2.shape, lambda i: (0, 0)),              # weights stay
            pl.BlockSpec(whh.shape, lambda i: (0, 0, 0)),            #   VMEM-resident
            pl.BlockSpec(bih2.shape, lambda i: (0, 0)),
            pl.BlockSpec(bhh.shape, lambda i: (0, 0, 0)),
        ],
        out_specs=out_spec,
        scratch_shapes=scratch,
        compiler_params=pltpu.CompilerParams(
            dimension_semantics=("parallel",),
            vmem_limit_bytes=48 * 1024 * 1024),
    )(len2d, x_tm, wih2, whh, bih2, bhh)


# --------------------------------------------------------------------------
# Parameter construction (lane-padded, bf16 MXU operands)
# --------------------------------------------------------------------------
def _pad_gate_cols(w, H, Hp):
    """(..., 3H) -> (..., 3Hp); gate g placed at columns [g*Hp, g*Hp+H)."""
    out = jnp.zeros(w.shape[:-1] + (3 * Hp,), w.dtype)
    for g in range(3):
        out = out.at[..., g * Hp:g * Hp + H].set(w[..., g * H:(g + 1) * H])
    return out


def _pad_in_rows(w, chunk, chunk_pad, n_chunks):
    """(n_chunks*chunk, C) -> (n_chunks*chunk_pad, C); chunk c at row c*chunk_pad."""
    out = jnp.zeros((n_chunks * chunk_pad,) + w.shape[1:], w.dtype)
    for c in range(n_chunks):
        out = out.at[c * chunk_pad:c * chunk_pad + chunk, :].set(
            w[c * chunk:(c + 1) * chunk, :])
    return out


def init_encoder_text_params(key, vocab_size, embed_size, word_dim,
                             num_layers, use_bi_gru):
    """Deterministic synthetic init matching PyTorch layer shapes, pre-padded."""
    H = embed_size
    Hp = _round_up(H, LANE)
    D0 = word_dim
    D0p = _round_up(D0, LANE)
    nd = 2 if use_bi_gru else 1
    stdv = 1.0 / math.sqrt(H)

    key, k_emb = jax.random.split(key)
    emb = jax.random.uniform(k_emb, (vocab_size, D0), jnp.float32, -0.1, 0.1)
    emb_pad = jnp.zeros((vocab_size, D0p), jnp.float32).at[:, :D0].set(emb)
    emb_pad = emb_pad.astype(jnp.bfloat16)

    layers = []
    for layer in range(num_layers):
        if layer == 0:
            d_in, n_chunks, chunk, chunk_pad = D0, 1, D0, D0p
        else:
            d_in, n_chunks, chunk, chunk_pad = nd * H, nd, H, Hp
        wih_dirs, whh_dirs, bih_dirs, bhh_dirs = [], [], [], []
        for _d in range(nd):
            key, k1, k2, k3, k4 = jax.random.split(key, 5)
            wih_t = jax.random.uniform(k1, (d_in, 3 * H), jnp.float32, -stdv, stdv)
            whh_t = jax.random.uniform(k2, (H, 3 * H), jnp.float32, -stdv, stdv)
            bih = jax.random.uniform(k3, (3 * H,), jnp.float32, -stdv, stdv)
            bhh = jax.random.uniform(k4, (3 * H,), jnp.float32, -stdv, stdv)
            wih_dirs.append(_pad_in_rows(_pad_gate_cols(wih_t, H, Hp),
                                         chunk, chunk_pad, n_chunks))
            whh_dirs.append(_pad_in_rows(_pad_gate_cols(whh_t, H, Hp), H, Hp, 1))
            bih_dirs.append(_pad_gate_cols(bih, H, Hp))
            bhh_dirs.append(_pad_gate_cols(bhh, H, Hp))
        layers.append({
            "wih2": jnp.concatenate(wih_dirs, axis=1).astype(jnp.bfloat16),
            "whh": jnp.stack(whh_dirs, axis=0).astype(jnp.bfloat16),
            "bih2": jnp.concatenate(bih_dirs, axis=0).reshape(1, nd * 3 * Hp),
            "bhh": jnp.stack(bhh_dirs, axis=0).reshape(nd, 1, 3 * Hp),
        })
    return {"embed_pad": emb_pad, "layers": layers}


# --------------------------------------------------------------------------
# Forward pass
# --------------------------------------------------------------------------
def encoder_text_forward(x_tokens, lengths, params, *, embed_size, num_layers,
                         use_bi_gru, no_txtnorm=False, b_tile=None):
    """EncoderText forward. Returns cap_emb of shape (B, T, embed_size) f32."""
    B, T = x_tokens.shape
    H = embed_size
    Hp = _round_up(H, LANE)
    nd = 2 if use_bi_gru else 1

    if b_tile is None:
        b_tile = min(_round_up(B, SUBLANE), 128)
    B_pad = _round_up(max(B, b_tile), b_tile)

    # Time-major token gather straight from the padded bf16 table: avoids any
    # (B,T,D) -> (T,B,D) transpose of the embedded activations.
    ids = jnp.zeros((B_pad, T), jnp.int32).at[:B].set(x_tokens.astype(jnp.int32))
    x_tm = jnp.take(params["embed_pad"], ids.T, axis=0)       # (T, B_pad, D0p) bf16
    # dropout(0.4): identity in eval mode.

    len_pad = jnp.zeros((B_pad, 1), jnp.int32).at[:B, 0].set(
        lengths.astype(jnp.int32))

    h = x_tm
    for layer in range(num_layers):
        lw = params["layers"][layer]
        final = (layer == num_layers - 1)
        h = run_gru_layer(h, len_pad, lw["wih2"], lw["whh"], lw["bih2"],
                          lw["bhh"], hidden_pad=Hp, num_dirs=nd, final=final,
                          no_txtnorm=no_txtnorm, b_tile=b_tile)

    # Single fused XLA transpose + un-pad crop: (T, B_pad, Hp) -> (B, T, H).
    cap = jnp.transpose(h, (1, 0, 2))[:B, :, :H]
    return cap


# --------------------------------------------------------------------------
# Demo
# --------------------------------------------------------------------------
if __name__ == "__main__":
    VOCAB, WORD_DIM, EMBED_SIZE = 50, 32, 32
    NUM_LAYERS, USE_BI_GRU = 1, True
    B, T = 2, 8

    key = jax.random.PRNGKey(0)
    key, k_tok = jax.random.split(key)
    x_tokens = jax.random.randint(k_tok, (B, T), 0, VOCAB, dtype=jnp.int32)
    lengths = jnp.array([8, 5], dtype=jnp.int32)

    params = init_encoder_text_params(key, VOCAB, EMBED_SIZE, WORD_DIM,
                                      NUM_LAYERS, USE_BI_GRU)

    fwd = jax.jit(functools.partial(
        encoder_text_forward, embed_size=EMBED_SIZE, num_layers=NUM_LAYERS,
        use_bi_gru=USE_BI_GRU, no_txtnorm=False))
    cap_emb = jax.block_until_ready(fwd(x_tokens, lengths, params))

    assert cap_emb.shape == (B, T, EMBED_SIZE)
    assert bool(jnp.all(jnp.isfinite(cap_emb)))
    # l2norm sanity: valid positions have ~unit norm, padded positions are 0.
    norms = jnp.sqrt(jnp.sum(cap_emb * cap_emb, axis=-1))
    assert bool(jnp.all(jnp.abs(norms[0, :] - 1.0) < 5e-2))
    assert bool(jnp.all(jnp.abs(norms[1, :5] - 1.0) < 5e-2))
    assert bool(jnp.all(norms[1, 5:] < 1e-3))
    print("KERNEL_OK")
</pallas_src>

<mosaic_0001>
module attributes {stable_mosaic.version = 11 : i64} {
  func.func @gru_layer_kernel(%arg0: i32, %arg1: memref<8x1xi32, #tpu.memory_space<vmem>>, %arg2: memref<8x8x128xbf16, #tpu.memory_space<vmem>>, %arg3: memref<128x768xbf16, #tpu.memory_space<vmem>>, %arg4: memref<2x128x384xbf16, #tpu.memory_space<vmem>>, %arg5: memref<1x768xf32, #tpu.memory_space<vmem>>, %arg6: memref<2x1x384xf32, #tpu.memory_space<vmem>>, %arg7: memref<8x8x128xf32, #tpu.memory_space<vmem>>, %arg8: memref<8x8x768xf32, #tpu.memory_space<vmem>>, %arg9: memref<2x8x128xf32, #tpu.memory_space<vmem>>) attributes {dimension_semantics = [#tpu.dimension_semantics<parallel>], iteration_bounds = array<i64: 1>, scalar_prefetch = 0 : i64, scratch_operands = 2 : i64, tpu.core_type = #tpu.core_type<tc>, window_params = [{transform_indices = @transform_0, window_bounds = array<i64: 8, 1>}, {transform_indices = @transform_1, window_bounds = array<i64: 8, 8, 128>}, {pipeline_mode = #tpu.pipeline_mode<synchronous>, transform_indices = @transform_2, window_bounds = array<i64: 128, 768>}, {pipeline_mode = #tpu.pipeline_mode<synchronous>, transform_indices = @transform_3, window_bounds = array<i64: 2, 128, 384>}, {pipeline_mode = #tpu.pipeline_mode<synchronous>, transform_indices = @transform_4, window_bounds = array<i64: 1, 768>}, {pipeline_mode = #tpu.pipeline_mode<synchronous>, transform_indices = @transform_5, window_bounds = array<i64: 2, 1, 384>}, {transform_indices = @transform_6, window_bounds = array<i64: 8, 8, 128>}]} {
    %c0 = arith.constant 0 : index
    %c0_0 = arith.constant 0 : index
    %c0_1 = arith.constant 0 : index
    %0 = vector.load %arg2[%c0, %c0_0, %c0_1] : memref<8x8x128xbf16, #tpu.memory_space<vmem>>, vector<8x8x128xbf16>
    %1 = vector.shape_cast %0 : vector<8x8x128xbf16> to vector<64x128xbf16>
    %c0_2 = arith.constant 0 : index
    %c0_3 = arith.constant 0 : index
    %2 = vector.load %arg3[%c0_2, %c0_3] : memref<128x768xbf16, #tpu.memory_space<vmem>>, vector<128x768xbf16>
    %cst = arith.constant dense<0.000000e+00> : vector<64x768xf32>
    %3 = tpu.matmul %1, %2, %cst {dimension_numbers = #tpu.dot_dimension_numbers<[1], [0], [0], [1], [0, 0, 1, 1], [], []>} : vector<64x128xbf16>, vector<128x768xbf16>, vector<64x768xf32> -> vector<64x768xf32>
    %c0_4 = arith.constant 0 : index
    %c0_5 = arith.constant 0 : index
    %4 = vector.load %arg5[%c0_4, %c0_5] : memref<1x768xf32, #tpu.memory_space<vmem>>, vector<1x768xf32>
    %5 = vector.broadcast %4 : vector<1x768xf32> to vector<64x768xf32>
    %6 = arith.addf %3, %5 : vector<64x768xf32>
    %7 = vector.shape_cast %6 : vector<64x768xf32> to vector<8x8x768xf32>
    %c0_6 = arith.constant 0 : index
    %c0_7 = arith.constant 0 : index
    %c0_8 = arith.constant 0 : index
    %8 = vector.load %arg8[%c0_6, %c0_7, %c0_8] : memref<8x8x768xf32, #tpu.memory_space<vmem>>, vector<8x8x768xf32>
    tpu.vector_store %arg8[%c0_6, %c0_7, %c0_8], %7 {strides = array<i32>} : memref<8x8x768xf32, #tpu.memory_space<vmem>>, vector<8x8x768xf32>,
    %cst_9 = arith.constant 0.000000e+00 : f32
    %9 = vector.broadcast %cst_9 : f32 to vector<2x8x128xf32>
    %c0_10 = arith.constant 0 : index
    %c0_11 = arith.constant 0 : index
    %c0_12 = arith.constant 0 : index
    %10 = vector.load %arg9[%c0_10, %c0_11, %c0_12] : memref<2x8x128xf32, #tpu.memory_space<vmem>>, vector<2x8x128xf32>
    tpu.vector_store %arg9[%c0_10, %c0_11, %c0_12], %9 {strides = array<i32>} : memref<2x8x128xf32, #tpu.memory_space<vmem>>, vector<2x8x128xf32>,
    %cst_13 = arith.constant 0.000000e+00 : f32
    %11 = vector.broadcast %cst_13 : f32 to vector<8x8x128xf32>
    %c0_14 = arith.constant 0 : index
    %c0_15 = arith.constant 0 : index
    %c0_16 = arith.constant 0 : index
    %12 = vector.load %arg7[%c0_14, %c0_15, %c0_16] : memref<8x8x128xf32, #tpu.memory_space<vmem>>, vector<8x8x128xf32>
    tpu.vector_store %arg7[%c0_14, %c0_15, %c0_16], %11 {strides = array<i32>} : memref<8x8x128xf32, #tpu.memory_space<vmem>>, vector<8x8x128xf32>,
    %c0_17 = arith.constant 0 : index
    %c0_18 = arith.constant 0 : index
    %13 = vector.load %arg1[%c0_17, %c0_18] : memref<8x1xi32, #tpu.memory_space<vmem>>, vector<8x1xi32>
    %c0_19 = arith.constant 0 : index
    %c0_20 = arith.constant 0 : index
    %c0_21 = arith.constant 0 : index
    %14 = vector.load %arg6[%c0_19, %c0_20, %c0_21] : memref<2x1x384xf32, #tpu.memory_space<vmem>>, vector<1x1x384xf32>
    %15 = vector.shape_cast %14 : vector<1x1x384xf32> to vector<1x384xf32>
    %16 = vector.shape_cast %15 : vector<1x384xf32> to vector<1x384xf32>
    %17 = vector.broadcast %16 : vector<1x384xf32> to vector<8x384xf32>
    %c1 = arith.constant 1 : index
    %c0_22 = arith.constant 0 : index
    %c0_23 = arith.constant 0 : index
    %18 = vector.load %arg6[%c1, %c0_22, %c0_23] : memref<2x1x384xf32, #tpu.memory_space<vmem>>, vector<1x1x384xf32>
    %19 = vector.shape_cast %18 : vector<1x1x384xf32> to vector<1x384xf32>
    %20 = vector.shape_cast %19 : vector<1x384xf32> to vector<1x384xf32>
    %21 = vector.broadcast %20 : vector<1x384xf32> to vector<8x384xf32>
    %c0_i32 = arith.constant 0 : i32
    %c0_i32_24 = arith.constant 0 : i32
    %c0_i32_25 = arith.constant 0 : i32
    %c0_i32_26 = arith.constant 0 : i32
    %22 = tpu.memref_slice %arg8[%c0_i32_24, %c0_i32_25, %c0_i32_26] : memref<8x8x768xf32, #tpu.memory_space<vmem>> -> memref<8x8x384xf32, #tpu.memory_space<vmem>>
    %23 = arith.index_cast %c0_i32 : i32 to index
    %c0_27 = arith.constant 0 : index
    %c0_28 = arith.constant 0 : index
    %24 = vector.load %22[%23, %c0_27, %c0_28] : memref<8x8x384xf32, #tpu.memory_space<vmem>>, vector<1x8x384xf32>
    %25 = vector.shape_cast %24 : vector<1x8x384xf32> to vector<8x384xf32>
    %c0_29 = arith.constant 0 : index
    %c0_30 = arith.constant 0 : index
    %c0_31 = arith.constant 0 : index
    %26 = vector.load %arg9[%c0_29, %c0_30, %c0_31] : memref<2x8x128xf32, #tpu.memory_space<vmem>>, vector<1x8x128xf32>
    %27 = vector.shape_cast %26 : vector<1x8x128xf32> to vector<8x128xf32>
    %28 = arith.truncf %27 : vector<8x128xf32> to vector<8x128xbf16>
    %c0_32 = arith.constant 0 : index
    %c0_33 = arith.constant 0 : index
    %c0_34 = arith.constant 0 : index
    %29 = vector.load %arg4[%c0_32, %c0_33, %c0_34] : memref<2x128x384xbf16, #tpu.memory_space<vmem>>, vector<1x128x384xbf16>
    %30 = vector.shape_cast %29 : vector<1x128x384xbf16> to vector<128x384xbf16>
    %cst_35 = arith.constant dense<0.000000e+00> : vector<8x384xf32>
    %31 = tpu.matmul %28, %30, %cst_35 {dimension_numbers = #tpu.dot_dimension_numbers<[1], [0], [0], [1], [0, 0, 1, 1], [], []>} : vector<8x128xbf16>, vector<128x384xbf16>, vector<8x384xf32> -> vector<8x384xf32>
    %32 = arith.addf %31, %17 : vector<8x384xf32>
    %33 = vector.extract_strided_slice %25 {offsets = [0, 0], sizes = [8, 128], strides = [1, 1]} : vector<8x384xf32> to vector<8x128xf32>
    %34 = vector.extract_strided_slice %32 {offsets = [0, 0], sizes = [8, 128], strides = [1, 1]} : vector<8x384xf32> to vector<8x128xf32>
    %35 = arith.addf %33, %34 : vector<8x128xf32>
    %36 = arith.negf %35 : vector<8x128xf32>
    %37 = math.exp %36 : vector<8x128xf32>
    %cst_36 = arith.constant 1.000000e+00 : f32
    %38 = vector.broadcast %cst_36 : f32 to vector<8x128xf32>
    %39 = arith.addf %38, %37 : vector<8x128xf32>
    %40 = arith.divf %38, %39 : vector<8x128xf32>
    %41 = vector.extract_strided_slice %25 {offsets = [0, 128], sizes = [8, 128], strides = [1, 1]} : vector<8x384xf32> to vector<8x128xf32>
    %42 = vector.extract_strided_slice %32 {offsets = [0, 128], sizes = [8, 128], strides = [1, 1]} : vector<8x384xf32> to vector<8x128xf32>
    %43 = arith.addf %41, %42 : vector<8x128xf32>
    %44 = arith.negf %43 : vector<8x128xf32>
    %45 = math.exp %44 : vector<8x128xf32>
    %cst_37 = arith.constant 1.000000e+00 : f32
    %46 = vector.broadcast %cst_37 : f32 to vector<8x128xf32>
    %47 = arith.addf %46, %45 : vector<8x128xf32>
    %48 = arith.divf %46, %47 : vector<8x128xf32>
    %49 = vector.extract_strided_slice %25 {offsets = [0, 256], sizes = [8, 128], strides = [1, 1]} : vector<8x384xf32> to vector<8x128xf32>
    %50 = vector.extract_strided_slice %32 {offsets = [0, 256], sizes = [8, 128], strides = [1, 1]} : vector<8x384xf32> to vector<8x128xf32>
    %51 = arith.mulf %40, %50 : vector<8x128xf32>
    %52 = arith.addf %49, %51 : vector<8x128xf32>
    %53 = math.tanh %52 : vector<8x128xf32>
    %54 = arith.subf %27, %53 : vector<8x128xf32>
    %55 = arith.mulf %48, %54 : vector<8x128xf32>
    %56 = arith.addf %53, %55 : vector<8x128xf32>
    %57 = vector.broadcast %c0_i32 : i32 to vector<8x1xi32>
    %58 = arith.cmpi sgt, %13, %57 : vector<8x1xi32>
    %59 = vector.shape_cast %58 : vector<8x1xi1> to vector<8x1xi1>
    %60 = vector.broadcast %59 : vector<8x1xi1> to vector<8x128xi1>
    %61 = arith.select %60, %56, %27 : vector<8x128xi1>, vector<8x128xf32>
    %c0_38 = arith.constant 0 : index
    %c0_39 = arith.constant 0 : index
    %c0_40 = arith.constant 0 : index
    %62 = vector.load %arg9[%c0_38, %c0_39, %c0_40] : memref<2x8x128xf32, #tpu.memory_space<vmem>>, vector<1x8x128xf32>
    %63 = vector.shape_cast %62 : vector<1x8x128xf32> to vector<8x128xf32>
    %64 = vector.shape_cast %61 : vector<8x128xf32> to vector<1x8x128xf32>
    tpu.vector_store %arg9[%c0_38, %c0_39, %c0_40], %64 {strides = array<i32>} : memref<2x8x128xf32, #tpu.memory_space<vmem>>, vector<1x8x128xf32>,
    %cst_41 = arith.constant 0.000000e+00 : f32
    %65 = vector.shape_cast %58 : vector<8x1xi1> to vector<8x1xi1>
    %66 = vector.broadcast %65 : vector<8x1xi1> to vector<8x128xi1>
    %67 = vector.broadcast %cst_41 : f32 to vector<8x128xf32>
    %68 = arith.select %66, %56, %67 : vector<8x128xi1>, vector<8x128xf32>
    %69 = arith.index_cast %c0_i32 : i32 to index
    %c0_42 = arith.constant 0 : index
    %c0_43 = arith.constant 0 : index
    %70 = vector.load %arg7[%69, %c0_42, %c0_43] : memref<8x8x128xf32, #tpu.memory_space<vmem>>, vector<1x8x128xf32>
    %71 = vector.shape_cast %70 : vector<1x8x128xf32> to vector<8x128xf32>
    %72 = arith.addf %71, %68 : vector<8x128xf32>
    %73 = arith.index_cast %c0_i32 : i32 to index
    %c0_44 = arith.constant 0 : index
    %c0_45 = arith.constant 0 : index
    %74 = vector.load %arg7[%73, %c0_44, %c0_45] : memref<8x8x128xf32, #tpu.memory_space<vmem>>, vector<1x8x128xf32>
    %75 = vector.shape_cast %74 : vector<1x8x128xf32> to vector<8x128xf32>
    %76 = vector.shape_cast %72 : vector<8x128xf32> to vector<1x8x128xf32>
    tpu.vector_store %arg7[%73, %c0_44, %c0_45], %76 {strides = array<i32>} : memref<8x8x128xf32, #tpu.memory_space<vmem>>, vector<1x8x128xf32>,
    %c7_i32 = arith.constant 7 : i32
    %77 = arith.subi %c7_i32, %c0_i32 : i32
    %c0_i32_46 = arith.constant 0 : i32
    %c0_i32_47 = arith.constant 0 : i32
    %c384_i32 = arith.constant 384 : i32
    %78 = tpu.memref_slice %arg8[%c0_i32_46, %c0_i32_47, %c384_i32] : memref<8x8x768xf32, #tpu.memory_space<vmem>> -> memref<8x8x384xf32, #tpu.memory_space<vmem>>
    %79 = arith.index_cast %77 : i32 to index
    %c0_48 = arith.constant 0 : index
    %c0_49 = arith.constant 0 : index
    %80 = vector.load %78[%79, %c0_48, %c0_49] : memref<8x8x384xf32, #tpu.memory_space<vmem>>, vector<1x8x384xf32>
    %81 = vector.shape_cast %80 : vector<1x8x384xf32> to vector<8x384xf32>
    %c1_50 = arith.constant 1 : index
    %c0_51 = arith.constant 0 : index
    %c0_52 = arith.constant 0 : index
    %82 = vector.load %arg9[%c1_50, %c0_51, %c0_52] : memref<2x8x128xf32, #tpu.memory_space<vmem>>, vector<1x8x128xf32>
    %83 = vector.shape_cast %82 : vector<1x8x128xf32> to vector<8x128xf32>
    %84 = arith.truncf %83 : vector<8x128xf32> to vector<8x128xbf16>
    %c1_53 = arith.constant 1 : index
    %c0_54 = arith.constant 0 : index
    %c0_55 = arith.constant 0 : index
    %85 = vector.load %arg4[%c1_53, %c0_54, %c0_55] : memref<2x128x384xbf16, #tpu.memory_space<vmem>>, vector<1x128x384xbf16>
    %86 = vector.shape_cast %85 : vector<1x128x384xbf16> to vector<128x384xbf16>
    %cst_56 = arith.constant dense<0.000000e+00> : vector<8x384xf32>
    %87 = tpu.matmul %84, %86, %cst_56 {dimension_numbers = #tpu.dot_dimension_numbers<[1], [0], [0], [1], [0, 0, 1, 1], [], []>} : vector<8x128xbf16>, vector<128x384xbf16>, vector<8x384xf32> -> vector<8x384xf32>
    %88 = arith.addf %87, %21 : vector<8x384xf32>
    %89 = vector.extract_strided_slice %81 {offsets = [0, 0], sizes = [8, 128], strides = [1, 1]} : vector<8x384xf32> to vector<8x128xf32>
    %90 = vector.extract_strided_slice %88 {offsets = [0, 0], sizes = [8, 128], strides = [1, 1]} : vector<8x384xf32> to vector<8x128xf32>
    %91 = arith.addf %89, %90 : vector<8x128xf32>
    %92 = arith.negf %91 : vector<8x128xf32>
    %93 = math.exp %92 : vector<8x128xf32>
    %cst_57 = arith.constant 1.000000e+00 : f32
    %94 = vector.broadcast %cst_57 : f32 to vector<8x128xf32>
    %95 = arith.addf %94, %93 : vector<8x128xf32>
    %96 = arith.divf %94, %95 : vector<8x128xf32>
    %97 = vector.extract_strided_slice %81 {offsets = [0, 128], sizes = [8, 128], strides = [1, 1]} : vector<8x384xf32> to vector<8x128xf32>
    %98 = vector.extract_strided_slice %88 {offsets = [0, 128], sizes = [8, 128], strides = [1, 1]} : vector<8x384xf32> to vector<8x128xf32>
    %99 = arith.addf %97, %98 : vector<8x128xf32>
    %100 = arith.negf %99 : vector<8x128xf32>
    %101 = math.exp %100 : vector<8x128xf32>
    %cst_58 = arith.constant 1.000000e+00 : f32
    %102 = vector.broadcast %cst_58 : f32 to vector<8x128xf32>
    %103 = arith.addf %102, %101 : vector<8x128xf32>
    %104 = arith.divf %102, %103 : vector<8x128xf32>
    %105 = vector.extract_strided_slice %81 {offsets = [0, 256], sizes = [8, 128], strides = [1, 1]} : vector<8x384xf32> to vector<8x128xf32>
    %106 = vector.extract_strided_slice %88 {offsets = [0, 256], sizes = [8, 128], strides = [1, 1]} : vector<8x384xf32> to vector<8x128xf32>
    %107 = arith.mulf %96, %106 : vector<8x128xf32>
    %108 = arith.addf %105, %107 : vector<8x128xf32>
    %109 = math.tanh %108 : vector<8x128xf32>
    %110 = arith.subf %83, %109 : vector<8x128xf32>
    %111 = arith.mulf %104, %110 : vector<8x128xf32>
    %112 = arith.addf %109, %111 : vector<8x128xf32>
    %113 = vector.broadcast %77 : i32 to vector<8x1xi32>
    %114 = arith.cmpi sgt, %13, %113 : vector<8x1xi32>
    %115 = vector.shape_cast %114 : vector<8x1xi1> to vector<8x1xi1>
    %116 = vector.broadcast %115 : vector<8x1xi1> to vector<8x128xi1>
    %117 = arith.select %116, %112, %83 : vector<8x128xi1>, vector<8x128xf32>
    %c1_59 = arith.constant 1 : index
    %c0_60 = arith.constant 0 : index
    %c0_61 = arith.constant 0 : index
    %118 = vector.load %arg9[%c1_59, %c0_60, %c0_61] : memref<2x8x128xf32, #tpu.memory_space<vmem>>, vector<1x8x128xf32>
    %119 = vector.shape_cast %118 : vector<1x8x128xf32> to vector<8x128xf32>
    %120 = vector.shape_cast %117 : vector<8x128xf32> to vector<1x8x128xf32>
    tpu.vector_store %arg9[%c1_59, %c0_60, %c0_61], %120 {strides = array<i32>} : memref<2x8x128xf32, #tpu.memory_space<vmem>>, vector<1x8x128xf32>,
    %cst_62 = arith.constant 0.000000e+00 : f32
    %121 = vector.shape_cast %114 : vector<8x1xi1> to vector<8x1xi1>
    %122 = vector.broadcast %121 : vector<8x1xi1> to vector<8x128xi1>
    %123 = vector.broadcast %cst_62 : f32 to vector<8x128xf32>
    %124 = arith.select %122, %112, %123 : vector<8x128xi1>, vector<8x128xf32>
    %125 = arith.index_cast %77 : i32 to index
    %c0_63 = arith.constant 0 : index
    %c0_64 = arith.constant 0 : index
    %126 = vector.load %arg7[%125, %c0_63, %c0_64] : memref<8x8x128xf32, #tpu.memory_space<vmem>>, vector<1x8x128xf32>
    %127 = vector.shape_cast %126 : vector<1x8x128xf32> to vector<8x128xf32>
    %128 = arith.addf %127, %124 : vector<8x128xf32>
    %129 = arith.index_cast %77 : i32 to index
    %c0_65 = arith.constant 0 : index
    %c0_66 = arith.constant 0 : index
    %130 = vector.load %arg7[%129, %c0_65, %c0_66] : memref<8x8x128xf32, #tpu.memory_space<vmem>>, vector<1x8x128xf32>
    %131 = vector.shape_cast %130 : vector<1x8x128xf32> to vector<8x128xf32>
    %132 = vector.shape_cast %128 : vector<8x128xf32> to vector<1x8x128xf32>
    tpu.vector_store %arg7[%129, %c0_65, %c0_66], %132 {strides = array<i32>} : memref<8x8x128xf32, #tpu.memory_space<vmem>>, vector<1x8x128xf32>,
    %c1_i32 = arith.constant 1 : i32
    %c0_i32_67 = arith.constant 0 : i32
    %c0_i32_68 = arith.constant 0 : i32
    %c0_i32_69 = arith.constant 0 : i32
    %133 = tpu.memref_slice %arg8[%c0_i32_67, %c0_i32_68, %c0_i32_69] : memref<8x8x768xf32, #tpu.memory_space<vmem>> -> memref<8x8x384xf32, #tpu.memory_space<vmem>>
    %134 = arith.index_cast %c1_i32 : i32 to index
    %c0_70 = arith.constant 0 : index
    %c0_71 = arith.constant 0 : index
    %135 = vector.load %133[%134, %c0_70, %c0_71] : memref<8x8x384xf32, #tpu.memory_space<vmem>>, vector<1x8x384xf32>
    %136 = vector.shape_cast %135 : vector<1x8x384xf32> to vector<8x384xf32>
    %c0_72 = arith.constant 0 : index
    %c0_73 = arith.constant 0 : index
    %c0_74 = arith.constant 0 : index
    %137 = vector.load %arg9[%c0_72, %c0_73, %c0_74] : memref<2x8x128xf32, #tpu.memory_space<vmem>>, vector<1x8x128xf32>
    %138 = vector.shape_cast %137 : vector<1x8x128xf32> to vector<8x128xf32>
    %139 = arith.truncf %138 : vector<8x128xf32> to vector<8x128xbf16>
    %c0_75 = arith.constant 0 : index
    %c0_76 = arith.constant 0 : index
    %c0_77 = arith.constant 0 : index
    %140 = vector.load %arg4[%c0_75, %c0_76, %c0_77] : memref<2x128x384xbf16, #tpu.memory_space<vmem>>, vector<1x128x384xbf16>
    %141 = vector.shape_cast %140 : vector<1x128x384xbf16> to vector<128x384xbf16>
    %cst_78 = arith.constant dense<0.000000e+00> : vector<8x384xf32>
    %142 = tpu.matmul %139, %141, %cst_78 {dimension_numbers = #tpu.dot_dimension_numbers<[1], [0], [0], [1], [0, 0, 1, 1], [], []>} : vector<8x128xbf16>, vector<128x384xbf16>, vector<8x384xf32> -> vector<8x384xf32>
    %143 = arith.addf %142, %17 : vector<8x384xf32>
    %144 = vector.extract_strided_slice %136 {offsets = [0, 0], sizes = [8, 128], strides = [1, 1]} : vector<8x384xf32> to vector<8x128xf32>
    %145 = vector.extract_strided_slice %143 {offsets = [0, 0], sizes = [8, 128], strides = [1, 1]} : vector<8x384xf32> to vector<8x128xf32>
    %146 = arith.addf %144, %145 : vector<8x128xf32>
    %147 = arith.negf %146 : vector<8x128xf32>
    %148 = math.exp %147 : vector<8x128xf32>
    %cst_79 = arith.constant 1.000000e+00 : f32
    %149 = vector.broadcast %cst_79 : f32 to vector<8x128xf32>
    %150 = arith.addf %149, %148 : vector<8x128xf32>
    %151 = arith.divf %149, %150 : vector<8x128xf32>
    %152 = vector.extract_strided_slice %136 {offsets = [0, 128], sizes = [8, 128], strides = [1, 1]} : vector<8x384xf32> to vector<8x128xf32>
    %153 = vector.extract_strided_slice %143 {offsets = [0, 128], sizes = [8, 128], strides = [1, 1]} : vector<8x384xf32> to vector<8x128xf32>
    %154 = arith.addf %152, %153 : vector<8x128xf32>
    %155 = arith.negf %154 : vector<8x128xf32>
    %156 = math.exp %155 : vector<8x128xf32>
    %cst_80 = arith.constant 1.000000e+00 : f32
    %157 = vector.broadcast %cst_80 : f32 to vector<8x128xf32>
    %158 = arith.addf %157, %156 : vector<8x128xf32>
    %159 = arith.divf %157, %158 : vector<8x128xf32>
    %160 = vector.extract_strided_slice %136 {offsets = [0, 256], sizes = [8, 128], strides = [1, 1]} : vector<8x384xf32> to vector<8x128xf32>
    %161 = vector.extract_strided_slice %143 {offsets = [0, 256], sizes = [8, 128], strides = [1, 1]} : vector<8x384xf32> to vector<8x128xf32>
    %162 = arith.mulf %151, %161 : vector<8x128xf32>
    %163 = arith.addf %160, %162 : vector<8x128xf32>
    %164 = math.tanh %163 : vector<8x128xf32>
    %165 = arith.subf %138, %164 : vector<8x128xf32>
    %166 = arith.mulf %159, %165 : vector<8x128xf32>
    %167 = arith.addf %164, %166 : vector<8x128xf32>
    %168 = vector.broadcast %c1_i32 : i32 to vector<8x1xi32>
    %169 = arith.cmpi sgt, %13, %168 : vector<8x1xi32>
    %170 = vector.shape_cast %169 : vector<8x1xi1> to vector<8x1xi1>
    %171 = vector.broadcast %170 : vector<8x1xi1> to vector<8x128xi1>
    %172 = arith.select %171, %167, %138 : vector<8x128xi1>, vector<8x128xf32>
    %c0_81 = arith.constant 0 : index
    %c0_82 = arith.constant 0 : index
    %c0_83 = arith.constant 0 : index
    %173 = vector.load %arg9[%c0_81, %c0_82, %c0_83] : memref<2x8x128xf32, #tpu.memory_space<vmem>>, vector<1x8x128xf32>
    %174 = vector.shape_cast %173 : vector<1x8x128xf32> to vector<8x128xf32>
    %175 = vector.shape_cast %172 : vector<8x128xf32> to vector<1x8x128xf32>
    tpu.vector_store %arg9[%c0_81, %c0_82, %c0_83], %175 {strides = array<i32>} : memref<2x8x128xf32, #tpu.memory_space<vmem>>, vector<1x8x128xf32>,
    %cst_84 = arith.constant 0.000000e+00 : f32
    %176 = vector.shape_cast %169 : vector<8x1xi1> to vector<8x1xi1>
    %177 = vector.broadcast %176 : vector<8x1xi1> to vector<8x128xi1>
    %178 = vector.broadcast %cst_84 : f32 to vector<8x128xf32>
    %179 = arith.select %177, %167, %178 : vector<8x128xi1>, vector<8x128xf32>
    %180 = arith.index_cast %c1_i32 : i32 to index
    %c0_85 = arith.constant 0 : index
    %c0_86 = arith.constant 0 : index
    %181 = vector.load %arg7[%180, %c0_85, %c0_86] : memref<8x8x128xf32, #tpu.memory_space<vmem>>, vector<1x8x128xf32>
    %182 = vector.shape_cast %181 : vector<1x8x128xf32> to vector<8x128xf32>
    %183 = arith.addf %182, %179 : vector<8x128xf32>
    %184 = arith.index_cast %c1_i32 : i32 to index
    %c0_87 = arith.constant 0 : index
    %c0_88 = arith.constant 0 : index
    %185 = vector.load %arg7[%184, %c0_87, %c0_88] : memref<8x8x128xf32, #tpu.memory_space<vmem>>, vector<1x8x128xf32>
    %186 = vector.shape_cast %185 : vector<1x8x128xf32> to vector<8x128xf32>
    %187 = vector.shape_cast %183 : vector<8x128xf32> to vector<1x8x128xf32>
    tpu.vector_store %arg7[%184, %c0_87, %c0_88], %187 {strides = array<i32>} : memref<8x8x128xf32, #tpu.memory_space<vmem>>, vector<1x8x128xf32>,
    %c7_i32_89 = arith.constant 7 : i32
    %188 = arith.subi %c7_i32_89, %c1_i32 : i32
    %c0_i32_90 = arith.constant 0 : i32
    %c0_i32_91 = arith.constant 0 : i32
    %c384_i32_92 = arith.constant 384 : i32
    %189 = tpu.memref_slice %arg8[%c0_i32_90, %c0_i32_91, %c384_i32_92] : memref<8x8x768xf32, #tpu.memory_space<vmem>> -> memref<8x8x384xf32, #tpu.memory_space<vmem>>
    %190 = arith.index_cast %188 : i32 to index
    %c0_93 = arith.constant 0 : index
    %c0_94 = arith.constant 0 : index
    %191 = vector.load %189[%190, %c0_93, %c0_94] : memref<8x8x384xf32, #tpu.memory_space<vmem>>, vector<1x8x384xf32>
    %192 = vector.shape_cast %191 : vector<1x8x384xf32> to vector<8x384xf32>
    %c1_95 = arith.constant 1 : index
    %c0_96 = arith.constant 0 : index
    %c0_97 = arith.constant 0 : index
    %193 = vector.load %arg9[%c1_95, %c0_96, %c0_97] : memref<2x8x128xf32, #tpu.memory_space<vmem>>, vector<1x8x128xf32>
    %194 = vector.shape_cast %193 : vector<1x8x128xf32> to vector<8x128xf32>
    %195 = arith.truncf %194 : vector<8x128xf32> to vector<8x128xbf16>
    %c1_98 = arith.constant 1 : index
    %c0_99 = arith.constant 0 : index
    %c0_100 = arith.constant 0 : index
    %196 = vector.load %arg4[%c1_98, %c0_99, %c0_100] : memref<2x128x384xbf16, #tpu.memory_space<vmem>>, vector<1x128x384xbf16>
    %197 = vector.shape_cast %196 : vector<1x128x384xbf16> to vector<128x384xbf16>
    %cst_101 = arith.constant dense<0.000000e+00> : vector<8x384xf32>
    %198 = tpu.matmul %195, %197, %cst_101 {dimension_numbers = #tpu.dot_dimension_numbers<[1], [0], [0], [1], [0, 0, 1, 1], [], []>} : vector<8x128xbf16>, vector<128x384xbf16>, vector<8x384xf32> -> vector<8x384xf32>
    %199 = arith.addf %198, %21 : vector<8x384xf32>
    %200 = vector.extract_strided_slice %192 {offsets = [0, 0], sizes = [8, 128], strides = [1, 1]} : vector<8x384xf32> to vector<8x128xf32>
    %201 = vector.extract_strided_slice %199 {offsets = [0, 0], sizes = [8, 128], strides = [1, 1]} : vector<8x384xf32> to vector<8x128xf32>
    %202 = arith.addf %200, %201 : vector<8x128xf32>
    %203 = arith.negf %202 : vector<8x128xf32>
    %204 = math.exp %203 : vector<8x128xf32>
    %cst_102 = arith.constant 1.000000e+00 : f32
    %205 = vector.broadcast %cst_102 : f32 to vector<8x128xf32>
    %206 = arith.addf %205, %204 : vector<8x128xf32>
    %207 = arith.divf %205, %206 : vector<8x128xf32>
    %208 = vector.extract_strided_slice %192 {offsets = [0, 128], sizes = [8, 128], strides = [1, 1]} : vector<8x384xf32> to vector<8x128xf32>
    %209 = vector.extract_strided_slice %199 {offsets = [0, 128], sizes = [8, 128], strides = [1, 1]} : vector<8x384xf32> to vector<8x128xf32>
    %210 = arith.addf %208, %209 : vector<8x128xf32>
    %211 = arith.negf %210 : vector<8x128xf32>
    %212 = math.exp %211 : vector<8x128xf32>
    %cst_103 = arith.constant 1.000000e+00 : f32
    %213 = vector.broadcast %cst_103 : f32 to vector<8x128xf32>
    %214 = arith.addf %213, %212 : vector<8x128xf32>
    %215 = arith.divf %213, %214 : vector<8x128xf32>
    %216 = vector.extract_strided_slice %192 {offsets = [0, 256], sizes = [8, 128], strides = [1, 1]} : vector<8x384xf32> to vector<8x128xf32>
    %217 = vector.extract_strided_slice %199 {offsets = [0, 256], sizes = [8, 128], strides = [1, 1]} : vector<8x384xf32> to vector<8x128xf32>
    %218 = arith.mulf %207, %217 : vector<8x128xf32>
    %219 = arith.addf %216, %218 : vector<8x128xf32>
    %220 = math.tanh %219 : vector<8x128xf32>
    %221 = arith.subf %194, %220 : vector<8x128xf32>
    %222 = arith.mulf %215, %221 : vector<8x128xf32>
    %223 = arith.addf %220, %222 : vector<8x128xf32>
    %224 = vector.broadcast %188 : i32 to vector<8x1xi32>
    %225 = arith.cmpi sgt, %13, %224 : vector<8x1xi32>
    %226 = vector.shape_cast %225 : vector<8x1xi1> to vector<8x1xi1>
    %227 = vector.broadcast %226 : vector<8x1xi1> to vector<8x128xi1>
    %228 = arith.select %227, %223, %194 : vector<8x128xi1>, vector<8x128xf32>
    %c1_104 = arith.constant 1 : index
    %c0_105 = arith.constant 0 : index
    %c0_106 = arith.constant 0 : index
    %229 = vector.load %arg9[%c1_104, %c0_105, %c0_106] : memref<2x8x128xf32, #tpu.memory_space<vmem>>, vector<1x8x128xf32>
    %230 = vector.shape_cast %229 : vector<1x8x128xf32> to vector<8x128xf32>
    %231 = vector.shape_cast %228 : vector<8x128xf32> to vector<1x8x128xf32>
    tpu.vector_store %arg9[%c1_104, %c0_105, %c0_106], %231 {strides = array<i32>} : memref<2x8x128xf32, #tpu.memory_space<vmem>>, vector<1x8x128xf32>,
    %cst_107 = arith.constant 0.000000e+00 : f32
    %232 = vector.shape_cast %225 : vector<8x1xi1> to vector<8x1xi1>
    %233 = vector.broadcast %232 : vector<8x1xi1> to vector<8x128xi1>
    %234 = vector.broadcast %cst_107 : f32 to vector<8x128xf32>
    %235 = arith.select %233, %223, %234 : vector<8x128xi1>, vector<8x128xf32>
    %236 = arith.index_cast %188 : i32 to index
    %c0_108 = arith.constant 0 : index
    %c0_109 = arith.constant 0 : index
    %237 = vector.load %arg7[%236, %c0_108, %c0_109] : memref<8x8x128xf32, #tpu.memory_space<vmem>>, vector<1x8x128xf32>
    %238 = vector.shape_cast %237 : vector<1x8x128xf32> to vector<8x128xf32>
    %239 = arith.addf %238, %235 : vector<8x128xf32>
    %240 = arith.index_cast %188 : i32 to index
    %c0_110 = arith.constant 0 : index
    %c0_111 = arith.constant 0 : index
    %241 = vector.load %arg7[%240, %c0_110, %c0_111] : memref<8x8x128xf32, #tpu.memory_space<vmem>>, vector<1x8x128xf32>
    %242 = vector.shape_cast %241 : vector<1x8x128xf32> to vector<8x128xf32>
    %243 = vector.shape_cast %239 : vector<8x128xf32> to vector<1x8x128xf32>
    tpu.vector_store %arg7[%240, %c0_110, %c0_111], %243 {strides = array<i32>} : memref<8x8x128xf32, #tpu.memory_space<vmem>>, vector<1x8x128xf32>,
    %c2_i32 = arith.constant 2 : i32
    %c0_i32_112 = arith.constant 0 : i32
    %c0_i32_113 = arith.constant 0 : i32
    %c0_i32_114 = arith.constant 0 : i32
    %244 = tpu.memref_slice %arg8[%c0_i32_112, %c0_i32_113, %c0_i32_114] : memref<8x8x768xf32, #tpu.memory_space<vmem>> -> memref<8x8x384xf32, #tpu.memory_space<vmem>>
    %245 = arith.index_cast %c2_i32 : i32 to index
    %c0_115 = arith.constant 0 : index
    %c0_116 = arith.constant 0 : index
    %246 = vector.load %244[%245, %c0_115, %c0_116] : memref<8x8x384xf32, #tpu.memory_space<vmem>>, vector<1x8x384xf32>
    %247 = vector.shape_cast %246 : vector<1x8x384xf32> to vector<8x384xf32>
    %c0_117 = arith.constant 0 : index
    %c0_118 = arith.constant 0 : index
    %c0_119 = arith.constant 0 : index
    %248 = vector.load %arg9[%c0_117, %c0_118, %c0_119] : memref<2x8x128xf32, #tpu.memory_space<vmem>>, vector<1x8x128xf32>
    %249 = vector.shape_cast %248 : vector<1x8x128xf32> to vector<8x128xf32>
    %250 = arith.truncf %249 : vector<8x128xf32> to vector<8x128xbf16>
    %c0_120 = arith.constant 0 : index
    %c0_121 = arith.constant 0 : index
    %c0_122 = arith.constant 0 : index
    %251 = vector.load %arg4[%c0_120, %c0_121, %c0_122] : memref<2x128x384xbf16, #tpu.memory_space<vmem>>, vector<1x128x384xbf16>
    %252 = vector.shape_cast %251 : vector<1x128x384xbf16> to vector<128x384xbf16>
    %cst_123 = arith.constant dense<0.000000e+00> : vector<8x384xf32>
    %253 = tpu.matmul %250, %252, %cst_123 {dimension_numbers = #tpu.dot_dimension_numbers<[1], [0], [0], [1], [0, 0, 1, 1], [], []>} : vector<8x128xbf16>, vector<128x384xbf16>, vector<8x384xf32> -> vector<8x384xf32>
    %254 = arith.addf %253, %17 : vector<8x384xf32>
    %255 = vector.extract_strided_slice %247 {offsets = [0, 0], sizes = [8, 128], strides = [1, 1]} : vector<8x384xf32> to vector<8x128xf32>
    %256 = vector.extract_strided_slice %254 {offsets = [0, 0], sizes = [8, 128], strides = [1, 1]} : vector<8x384xf32> to vector<8x128xf32>
    %257 = arith.addf %255, %256 : vector<8x128xf32>
    %258 = arith.negf %257 : vector<8x128xf32>
    %259 = math.exp %258 : vector<8x128xf32>
    %cst_124 = arith.constant 1.000000e+00 : f32
    %260 = vector.broadcast %cst_124 : f32 to vector<8x128xf32>
    %261 = arith.addf %260, %259 : vector<8x128xf32>
    %262 = arith.divf %260, %261 : vector<8x128xf32>
    %263 = vector.extract_strided_slice %247 {offsets = [0, 128], sizes = [8, 128], strides = [1, 1]} : vector<8x384xf32> to vector<8x128xf32>
    %264 = vector.extract_strided_slice %254 {offsets = [0, 128], sizes = [8, 128], strides = [1, 1]} : vector<8x384xf32> to vector<8x128xf32>
    %265 = arith.addf %263, %264 : vector<8x128xf32>
    %266 = arith.negf %265 : vector<8x128xf32>
    %267 = math.exp %266 : vector<8x128xf32>
    %cst_125 = arith.constant 1.000000e+00 : f32
    %268 = vector.broadcast %cst_125 : f32 to vector<8x128xf32>
    %269 = arith.addf %268, %267 : vector<8x128xf32>
    %270 = arith.divf %268, %269 : vector<8x128xf32>
    %271 = vector.extract_strided_slice %247 {offsets = [0, 256], sizes = [8, 128], strides = [1, 1]} : vector<8x384xf32> to vector<8x128xf32>
    %272 = vector.extract_strided_slice %254 {offsets = [0, 256], sizes = [8, 128], strides = [1, 1]} : vector<8x384xf32> to vector<8x128xf32>
    %273 = arith.mulf %262, %272 : vector<8x128xf32>
    %274 = arith.addf %271, %273 : vector<8x128xf32>
    %275 = math.tanh %274 : vector<8x128xf32>
    %276 = arith.subf %249, %275 : vector<8x128xf32>
    %277 = arith.mulf %270, %276 : vector<8x128xf32>
    %278 = arith.addf %275, %277 : vector<8x128xf32>
    %279 = vector.broadcast %c2_i32 : i32 to vector<8x1xi32>
    %280 = arith.cmpi sgt, %13, %279 : vector<8x1xi32>
    %281 = vector.shape_cast %280 : vector<8x1xi1> to vector<8x1xi1>
    %282 = vector.broadcast %281 : vector<8x1xi1> to vector<8x128xi1>
    %283 = arith.select %282, %278, %249 : vector<8x128xi1>, vector<8x128xf32>
    %c0_126 = arith.constant 0 : index
    %c0_127 = arith.constant 0 : index
    %c0_128 = arith.constant 0 : index
    %284 = vector.load %arg9[%c0_126, %c0_127, %c0_128] : memref<2x8x128xf32, #tpu.memory_space<vmem>>, vector<1x8x128xf32>
    %285 = vector.shape_cast %284 : vector<1x8x128xf32> to vector<8x128xf32>
    %286 = vector.shape_cast %283 : vector<8x128xf32> to vector<1x8x128xf32>
    tpu.vector_store %arg9[%c0_126, %c0_127, %c0_128], %286 {strides = array<i32>} : memref<2x8x128xf32, #tpu.memory_space<vmem>>, vector<1x8x128xf32>,
    %cst_129 = arith.constant 0.000000e+00 : f32
    %287 = vector.shape_cast %280 : vector<8x1xi1> to vector<8x1xi1>
    %288 = vector.broadcast %287 : vector<8x1xi1> to vector<8x128xi1>
    %289 = vector.broadcast %cst_129 : f32 to vector<8x128xf32>
    %290 = arith.select %288, %278, %289 : vector<8x128xi1>, vector<8x128xf32>
    %291 = arith.index_cast %c2_i32 : i32 to index
    %c0_130 = arith.constant 0 : index
    %c0_131 = arith.constant 0 : index
    %292 = vector.load %arg7[%291, %c0_130, %c0_131] : memref<8x8x128xf32, #tpu.memory_space<vmem>>, vector<1x8x128xf32>
    %293 = vector.shape_cast %292 : vector<1x8x128xf32> to vector<8x128xf32>
    %294 = arith.addf %293, %290 : vector<8x128xf32>
    %295 = arith.index_cast %c2_i32 : i32 to index
    %c0_132 = arith.constant 0 : index
    %c0_133 = arith.constant 0 : index
    %296 = vector.load %arg7[%295, %c0_132, %c0_133] : memref<8x8x128xf32, #tpu.memory_space<vmem>>, vector<1x8x128xf32>
    %297 = vector.shape_cast %296 : vector<1x8x128xf32> to vector<8x128xf32>
    %298 = vector.shape_cast %294 : vector<8x128xf32> to vector<1x8x128xf32>
    tpu.vector_store %arg7[%295, %c0_132, %c0_133], %298 {strides = array<i32>} : memref<8x8x128xf32, #tpu.memory_space<vmem>>, vector<1x8x128xf32>,
    %c7_i32_134 = arith.constant 7 : i32
    %299 = arith.subi %c7_i32_134, %c2_i32 : i32
    %c0_i32_135 = arith.constant 0 : i32
    %c0_i32_136 = arith.constant 0 : i32
    %c384_i32_137 = arith.constant 384 : i32
    %300 = tpu.memref_slice %arg8[%c0_i32_135, %c0_i32_136, %c384_i32_137] : memref<8x8x768xf32, #tpu.memory_space<vmem>> -> memref<8x8x384xf32, #tpu.memory_space<vmem>>
    %301 = arith.index_cast %299 : i32 to index
    %c0_138 = arith.constant 0 : index
    %c0_139 = arith.constant 0 : index
    %302 = vector.load %300[%301, %c0_138, %c0_139] : memref<8x8x384xf32, #tpu.memory_space<vmem>>, vector<1x8x384xf32>
    %303 = vector.shape_cast %302 : vector<1x8x384xf32> to vector<8x384xf32>
    %c1_140 = arith.constant 1 : index
    %c0_141 = arith.constant 0 : index
    %c0_142 = arith.constant 0 : index
    %304 = vector.load %arg9[%c1_140, %c0_141, %c0_142] : memref<2x8x128xf32, #tpu.memory_space<vmem>>, vector<1x8x128xf32>
    %305 = vector.shape_cast %304 : vector<1x8x128xf32> to vector<8x128xf32>
    %306 = arith.truncf %305 : vector<8x128xf32> to vector<8x128xbf16>
    %c1_143 = arith.constant 1 : index
    %c0_144 = arith.constant 0 : index
    %c0_145 = arith.constant 0 : index
    %307 = vector.load %arg4[%c1_143, %c0_144, %c0_145] : memref<2x128x384xbf16, #tpu.memory_space<vmem>>, vector<1x128x384xbf16>
    %308 = vector.shape_cast %307 : vector<1x128x384xbf16> to vector<128x384xbf16>
    %cst_146 = arith.constant dense<0.000000e+00> : vector<8x384xf32>
    %309 = tpu.matmul %306, %308, %cst_146 {dimension_numbers = #tpu.dot_dimension_numbers<[1], [0], [0], [1], [0, 0, 1, 1], [], []>} : vector<8x128xbf16>, vector<128x384xbf16>, vector<8x384xf32> -> vector<8x384xf32>
    %310 = arith.addf %309, %21 : vector<8x384xf32>
    %311 = vector.extract_strided_slice %303 {offsets = [0, 0], sizes = [8, 128], strides = [1, 1]} : vector<8x384xf32> to vector<8x128xf32>
    %312 = vector.extract_strided_slice %310 {offsets = [0, 0], sizes = [8, 128], strides = [1, 1]} : vector<8x384xf32> to vector<8x128xf32>
    %313 = arith.addf %311, %312 : vector<8x128xf32>
    %314 = arith.negf %313 : vector<8x128xf32>
    %315 = math.exp %314 : vector<8x128xf32>
    %cst_147 = arith.constant 1.000000e+00 : f32
    %316 = vector.broadcast %cst_147 : f32 to vector<8x128xf32>
    %317 = arith.addf %316, %315 : vector<8x128xf32>
    %318 = arith.divf %316, %317 : vector<8x128xf32>
    %319 = vector.extract_strided_slice %303 {offsets = [0, 128], sizes = [8, 128], strides = [1, 1]} : vector<8x384xf32> to vector<8x128xf32>
    %320 = vector.extract_strided_slice %310 {offsets = [0, 128], sizes = [8, 128], strides = [1, 1]} : vector<8x384xf32> to vector<8x128xf32>
    %321 = arith.addf %319, %320 : vector<8x128xf32>
    %322 = arith.negf %321 : vector<8x128xf32>
    %323 = math.exp %322 : vector<8x128xf32>
    %cst_148 = arith.constant 1.000000e+00 : f32
    %324 = vector.broadcast %cst_148 : f32 to vector<8x128xf32>
    %325 = arith.addf %324, %323 : vector<8x128xf32>
    %326 = arith.divf %324, %325 : vector<8x128xf32>
    %327 = vector.extract_strided_slice %303 {offsets = [0, 256], sizes = [8, 128], strides = [1, 1]} : vector<8x384xf32> to vector<8x128xf32>
    %328 = vector.extract_strided_slice %310 {offsets = [0, 256], sizes = [8, 128], strides = [1, 1]} : vector<8x384xf32> to vector<8x128xf32>
    %329 = arith.mulf %318, %328 : vector<8x128xf32>
    %330 = arith.addf %327, %329 : vector<8x128xf32>
    %331 = math.tanh %330 : vector<8x128xf32>
    %332 = arith.subf %305, %331 : vector<8x128xf32>
    %333 = arith.mulf %326, %332 : vector<8x128xf32>
    %334 = arith.addf %331, %333 : vector<8x128xf32>
    %335 = vector.broadcast %299 : i32 to vector<8x1xi32>
    %336 = arith.cmpi sgt, %13, %335 : vector<8x1xi32>
    %337 = vector.shape_cast %336 : vector<8x1xi1> to vector<8x1xi1>
    %338 = vector.broadcast %337 : vector<8x1xi1> to vector<8x128xi1>
    %339 = arith.select %338, %334, %305 : vector<8x128xi1>, vector<8x128xf32>
    %c1_149 = arith.constant 1 : index
    %c0_150 = arith.constant 0 : index
    %c0_151 = arith.constant 0 : index
    %340 = vector.load %arg9[%c1_149, %c0_150, %c0_151] : memref<2x8x128xf32, #tpu.memory_space<vmem>>, vector<1x8x128xf32>
    %341 = vector.shape_cast %340 : vector<1x8x128xf32> to vector<8x128xf32>
    %342 = vector.shape_cast %339 : vector<8x128xf32> to vector<1x8x128xf32>
    tpu.vector_store %arg9[%c1_149, %c0_150, %c0_151], %342 {strides = array<i32>} : memref<2x8x128xf32, #tpu.memory_space<vmem>>, vector<1x8x128xf32>,
    %cst_152 = arith.constant 0.000000e+00 : f32
    %343 = vector.shape_cast %336 : vector<8x1xi1> to vector<8x1xi1>
    %344 = vector.broadcast %343 : vector<8x1xi1> to vector<8x128xi1>
    %345 = vector.broadcast %cst_152 : f32 to vector<8x128xf32>
    %346 = arith.select %344, %334, %345 : vector<8x128xi1>, vector<8x128xf32>
    %347 = arith.index_cast %299 : i32 to index
    %c0_153 = arith.constant 0 : index
    %c0_154 = arith.constant 0 : index
    %348 = vector.load %arg7[%347, %c0_153, %c0_154] : memref<8x8x128xf32, #tpu.memory_space<vmem>>, vector<1x8x128xf32>
    %349 = vector.shape_cast %348 : vector<1x8x128xf32> to vector<8x128xf32>
    %350 = arith.addf %349, %346 : vector<8x128xf32>
    %351 = arith.index_cast %299 : i32 to index
    %c0_155 = arith.constant 0 : index
    %c0_156 = arith.constant 0 : index
    %352 = vector.load %arg7[%351, %c0_155, %c0_156] : memref<8x8x128xf32, #tpu.memory_space<vmem>>, vector<1x8x128xf32>
    %353 = vector.shape_cast %352 : vector<1x8x128xf32> to vector<8x128xf32>
    %354 = vector.shape_cast %350 : vector<8x128xf32> to vector<1x8x128xf32>
    tpu.vector_store %arg7[%351, %c0_155, %c0_156], %354 {strides = array<i32>} : memref<8x8x128xf32, #tpu.memory_space<vmem>>, vector<1x8x128xf32>,
    %c3_i32 = arith.constant 3 : i32
    %c0_i32_157 = arith.constant 0 : i32
    %c0_i32_158 = arith.constant 0 : i32
    %c0_i32_159 = arith.constant 0 : i32
    %355 = tpu.memref_slice %arg8[%c0_i32_157, %c0_i32_158, %c0_i32_159] : memref<8x8x768xf32, #tpu.memory_space<vmem>> -> memref<8x8x384xf32, #tpu.memory_space<vmem>>
    %356 = arith.index_cast %c3_i32 : i32 to index
    %c0_160 = arith.constant 0 : index
    %c0_161 = arith.constant 0 : index
    %357 = vector.load %355[%356, %c0_160, %c0_161] : memref<8x8x384xf32, #tpu.memory_space<vmem>>, vector<1x8x384xf32>
    %358 = vector.shape_cast %357 : vector<1x8x384xf32> to vector<8x384xf32>
    %c0_162 = arith.constant 0 : index
    %c0_163 = arith.constant 0 : index
    %c0_164 = arith.constant 0 : index
    %359 = vector.load %arg9[%c0_162, %c0_163, %c0_164] : memref<2x8x128xf32, #tpu.memory_space<vmem>>, vector<1x8x128xf32>
    %360 = vector.shape_cast %359 : vector<1x8x128xf32> to vector<8x128xf32>
    %361 = arith.truncf %360 : vector<8x128xf32> to vector<8x128xbf16>
    %c0_165 = arith.constant 0 : index
    %c0_166 = arith.constant 0 : index
    %c0_167 = arith.constant 0 : index
    %362 = vector.load %arg4[%c0_165, %c0_166, %c0_167] : memref<2x128x384xbf16, #tpu.memory_space<vmem>>, vector<1x128x384xbf16>
    %363 = vector.shape_cast %362 : vector<1x128x384xbf16> to vector<128x384xbf16>
    %cst_168 = arith.constant dense<0.000000e+00> : vector<8x384xf32>
    %364 = tpu.matmul %361, %363, %cst_168 {dimension_numbers = #tpu.dot_dimension_numbers<[1], [0], [0], [1], [0, 0, 1, 1], [], []>} : vector<8x128xbf16>, vector<128x384xbf16>, vector<8x384xf32> -> vector<8x384xf32>
    %365 = arith.addf %364, %17 : vector<8x384xf32>
    %366 = vector.extract_strided_slice %358 {offsets = [0, 0], sizes = [8, 128], strides = [1, 1]} : vector<8x384xf32> to vector<8x128xf32>
    %367 = vector.extract_strided_slice %365 {offsets = [0, 0], sizes = [8, 128], strides = [1, 1]} : vector<8x384xf32> to vector<8x128xf32>
    %368 = arith.addf %366, %367 : vector<8x128xf32>
    %369 = arith.negf %368 : vector<8x128xf32>
    %370 = math.exp %369 : vector<8x128xf32>
    %cst_169 = arith.constant 1.000000e+00 : f32
    %371 = vector.broadcast %cst_169 : f32 to vector<8x128xf32>
    %372 = arith.addf %371, %370 : vector<8x128xf32>
    %373 = arith.divf %371, %372 : vector<8x128xf32>
    %374 = vector.extract_strided_slice %358 {offsets = [0, 128], sizes = [8, 128], strides = [1, 1]} : vector<8x384xf32> to vector<8x128xf32>
    %375 = vector.extract_strided_slice %365 {offsets = [0, 128], sizes = [8, 128], strides = [1, 1]} : vector<8x384xf32> to vector<8x128xf32>
    %376 = arith.addf %374, %375 : vector<8x128xf32>
    %377 = arith.negf %376 : vector<8x128xf32>
    %378 = math.exp %377 : vector<8x128xf32>
    %cst_170 = arith.constant 1.000000e+00 : f32
    %379 = vector.broadcast %cst_170 : f32 to vector<8x128xf32>
    %380 = arith.addf %379, %378 : vector<8x128xf32>
    %381 = arith.divf %379, %380 : vector<8x128xf32>
    %382 = vector.extract_strided_slice %358 {offsets = [0, 256], sizes = [8, 128], strides = [1, 1]} : vector<8x384xf32> to vector<8x128xf32>
    %383 = vector.extract_strided_slice %365 {offsets = [0, 256], sizes = [8, 128], strides = [1, 1]} : vector<8x384xf32> to vector<8x128xf32>
    %384 = arith.mulf %373, %383 : vector<8x128xf32>
    %385 = arith.addf %382, %384 : vector<8x128xf32>
    %386 = math.tanh %385 : vector<8x128xf32>
    %387 = arith.subf %360, %386 : vector<8x128xf32>
    %388 = arith.mulf %381, %387 : vector<8x128xf32>
    %389 = arith.addf %386, %388 : vector<8x128xf32>
    %390 = vector.broadcast %c3_i32 : i32 to vector<8x1xi32>
    %391 = arith.cmpi sgt, %13, %390 : vector<8x1xi32>
    %392 = vector.shape_cast %391 : vector<8x1xi1> to vector<8x1xi1>
    %393 = vector.broadcast %392 : vector<8x1xi1> to vector<8x128xi1>
    %394 = arith.select %393, %389, %360 : vector<8x128xi1>, vector<8x128xf32>
    %c0_171 = arith.constant 0 : index
    %c0_172 = arith.constant 0 : index
    %c0_173 = arith.constant 0 : index
    %395 = vector.load %arg9[%c0_171, %c0_172, %c0_173] : memref<2x8x128xf32, #tpu.memory_space<vmem>>, vector<1x8x128xf32>
    %396 = vector.shape_cast %395 : vector<1x8x128xf32> to vector<8x128xf32>
    %397 = vector.shape_cast %394 : vector<8x128xf32> to vector<1x8x128xf32>
    tpu.vector_store %arg9[%c0_171, %c0_172, %c0_173], %397 {strides = array<i32>} : memref<2x8x128xf32, #tpu.memory_space<vmem>>, vector<1x8x128xf32>,
    %cst_174 = arith.constant 0.000000e+00 : f32
    %398 = vector.shape_cast %391 : vector<8x1xi1> to vector<8x1xi1>
    %399 = vector.broadcast %398 : vector<8x1xi1> to vector<8x128xi1>
    %400 = vector.broadcast %cst_174 : f32 to vector<8x128xf32>
    %401 = arith.select %399, %389, %400 : vector<8x128xi1>, vector<8x128xf32>
    %402 = arith.index_cast %c3_i32 : i32 to index
    %c0_175 = arith.constant 0 : index
    %c0_176 = arith.constant 0 : index
    %403 = vector.load %arg7[%402, %c0_175, %c0_176] : memref<8x8x128xf32, #tpu.memory_space<vmem>>, vector<1x8x128xf32>
    %404 = vector.shape_cast %403 : vector<1x8x128xf32> to vector<8x128xf32>
    %405 = arith.addf %404, %401 : vector<8x128xf32>
    %406 = arith.index_cast %c3_i32 : i32 to index
    %c0_177 = arith.constant 0 : index
    %c0_178 = arith.constant 0 : index
    %407 = vector.load %arg7[%406, %c0_177, %c0_178] : memref<8x8x128xf32, #tpu.memory_space<vmem>>, vector<1x8x128xf32>
    %408 = vector.shape_cast %407 : vector<1x8x128xf32> to vector<8x128xf32>
    %409 = vector.shape_cast %405 : vector<8x128xf32> to vector<1x8x128xf32>
    tpu.vector_store %arg7[%406, %c0_177, %c0_178], %409 {strides = array<i32>} : memref<8x8x128xf32, #tpu.memory_space<vmem>>, vector<1x8x128xf32>,
    %c7_i32_179 = arith.constant 7 : i32
    %410 = arith.subi %c7_i32_179, %c3_i32 : i32
    %c0_i32_180 = arith.constant 0 : i32
    %c0_i32_181 = arith.constant 0 : i32
    %c384_i32_182 = arith.constant 384 : i32
    %411 = tpu.memref_slice %arg8[%c0_i32_180, %c0_i32_181, %c384_i32_182] : memref<8x8x768xf32, #tpu.memory_space<vmem>> -> memref<8x8x384xf32, #tpu.memory_space<vmem>>
    %412 = arith.index_cast %410 : i32 to index
    %c0_183 = arith.constant 0 : index
    %c0_184 = arith.constant 0 : index
    %413 = vector.load %411[%412, %c0_183, %c0_184] : memref<8x8x384xf32, #tpu.memory_space<vmem>>, vector<1x8x384xf32>
    %414 = vector.shape_cast %413 : vector<1x8x384xf32> to vector<8x384xf32>
    %c1_185 = arith.constant 1 : index
    %c0_186 = arith.constant 0 : index
    %c0_187 = arith.constant 0 : index
    %415 = vector.load %arg9[%c1_185, %c0_186, %c0_187] : memref<2x8x128xf32, #tpu.memory_space<vmem>>, vector<1x8x128xf32>
    %416 = vector.shape_cast %415 : vector<1x8x128xf32> to vector<8x128xf32>
    %417 = arith.truncf %416 : vector<8x128xf32> to vector<8x128xbf16>
    %c1_188 = arith.constant 1 : index
    %c0_189 = arith.constant 0 : index
    %c0_190 = arith.constant 0 : index
    %418 = vector.load %arg4[%c1_188, %c0_189, %c0_190] : memref<2x128x384xbf16, #tpu.memory_space<vmem>>, vector<1x128x384xbf16>
    %419 = vector.shape_cast %418 : vector<1x128x384xbf16> to vector<128x384xbf16>
    %cst_191 = arith.constant dense<0.000000e+00> : vector<8x384xf32>
    %420 = tpu.matmul %417, %419, %cst_191 {dimension_numbers = #tpu.dot_dimension_numbers<[1], [0], [0], [1], [0, 0, 1, 1], [], []>} : vector<8x128xbf16>, vector<128x384xbf16>, vector<8x384xf32> -> vector<8x384xf32>
    %421 = arith.addf %420, %21 : vector<8x384xf32>
    %422 = vector.extract_strided_slice %414 {offsets = [0, 0], sizes = [8, 128], strides = [1, 1]} : vector<8x384xf32> to vector<8x128xf32>
    %423 = vector.extract_strided_slice %421 {offsets = [0, 0], sizes = [8, 128], strides = [1, 1]} : vector<8x384xf32> to vector<8x128xf32>
    %424 = arith.addf %422, %423 : vector<8x128xf32>
    %425 = arith.negf %424 : vector<8x128xf32>
    %426 = math.exp %425 : vector<8x128xf32>
    %cst_192 = arith.constant 1.000000e+00 : f32
    %427 = vector.broadcast %cst_192 : f32 to vector<8x128xf32>
    %428 = arith.addf %427, %426 : vector<8x128xf32>
    %429 = arith.divf %427, %428 : vector<8x128xf32>
    %430 = vector.extract_strided_slice %414 {offsets = [0, 128], sizes = [8, 128], strides = [1, 1]} : vector<8x384xf32> to vector<8x128xf32>
    %431 = vector.extract_strided_slice %421 {offsets = [0, 128], sizes = [8, 128], strides = [1, 1]} : vector<8x384xf32> to vector<8x128xf32>
    %432 = arith.addf %430, %431 : vector<8x128xf32>
    %433 = arith.negf %432 : vector<8x128xf32>
    %434 = math.exp %433 : vector<8x128xf32>
    %cst_193 = arith.constant 1.000000e+00 : f32
    %435 = vector.broadcast %cst_193 : f32 to vector<8x128xf32>
    %436 = arith.addf %435, %434 : vector<8x128xf32>
    %437 = arith.divf %435, %436 : vector<8x128xf32>
    %438 = vector.extract_strided_slice %414 {offsets = [0, 256], sizes = [8, 128], strides = [1, 1]} : vector<8x384xf32> to vector<8x128xf32>
    %439 = vector.extract_strided_slice %421 {offsets = [0, 256], sizes = [8, 128], strides = [1, 1]} : vector<8x384xf32> to vector<8x128xf32>
    %440 = arith.mulf %429, %439 : vector<8x128xf32>
    %441 = arith.addf %438, %440 : vector<8x128xf32>
    %442 = math.tanh %441 : vector<8x128xf32>
    %443 = arith.subf %416, %442 : vector<8x128xf32>
    %444 = arith.mulf %437, %443 : vector<8x128xf32>
    %445 = arith.addf %442, %444 : vector<8x128xf32>
    %446 = vector.broadcast %410 : i32 to vector<8x1xi32>
    %447 = arith.cmpi sgt, %13, %446 : vector<8x1xi32>
    %448 = vector.shape_cast %447 : vector<8x1xi1> to vector<8x1xi1>
    %449 = vector.broadcast %448 : vector<8x1xi1> to vector<8x128xi1>
    %450 = arith.select %449, %445, %416 : vector<8x128xi1>, vector<8x128xf32>
    %c1_194 = arith.constant 1 : index
    %c0_195 = arith.constant 0 : index
    %c0_196 = arith.constant 0 : index
    %451 = vector.load %arg9[%c1_194, %c0_195, %c0_196] : memref<2x8x128xf32, #tpu.memory_space<vmem>>, vector<1x8x128xf32>
    %452 = vector.shape_cast %451 : vector<1x8x128xf32> to vector<8x128xf32>
    %453 = vector.shape_cast %450 : vector<8x128xf32> to vector<1x8x128xf32>
    tpu.vector_store %arg9[%c1_194, %c0_195, %c0_196], %453 {strides = array<i32>} : memref<2x8x128xf32, #tpu.memory_space<vmem>>, vector<1x8x128xf32>,
    %cst_197 = arith.constant 0.000000e+00 : f32
    %454 = vector.shape_cast %447 : vector<8x1xi1> to vector<8x1xi1>
    %455 = vector.broadcast %454 : vector<8x1xi1> to vector<8x128xi1>
    %456 = vector.broadcast %cst_197 : f32 to vector<8x128xf32>
    %457 = arith.select %455, %445, %456 : vector<8x128xi1>, vector<8x128xf32>
    %458 = arith.index_cast %410 : i32 to index
    %c0_198 = arith.constant 0 : index
    %c0_199 = arith.constant 0 : index
    %459 = vector.load %arg7[%458, %c0_198, %c0_199] : memref<8x8x128xf32, #tpu.memory_space<vmem>>, vector<1x8x128xf32>
    %460 = vector.shape_cast %459 : vector<1x8x128xf32> to vector<8x128xf32>
    %461 = arith.addf %460, %457 : vector<8x128xf32>
    %462 = arith.index_cast %410 : i32 to index
    %c0_200 = arith.constant 0 : index
    %c0_201 = arith.constant 0 : index
    %463 = vector.load %arg7[%462, %c0_200, %c0_201] : memref<8x8x128xf32, #tpu.memory_space<vmem>>, vector<1x8x128xf32>
    %464 = vector.shape_cast %463 : vector<1x8x128xf32> to vector<8x128xf32>
    %465 = vector.shape_cast %461 : vector<8x128xf32> to vector<1x8x128xf32>
    tpu.vector_store %arg7[%462, %c0_200, %c0_201], %465 {strides = array<i32>} : memref<8x8x128xf32, #tpu.memory_space<vmem>>, vector<1x8x128xf32>,
    %c4_i32 = arith.constant 4 : i32
    %c0_i32_202 = arith.constant 0 : i32
    %c0_i32_203 = arith.constant 0 : i32
    %c0_i32_204 = arith.constant 0 : i32
    %466 = tpu.memref_slice %arg8[%c0_i32_202, %c0_i32_203, %c0_i32_204] : memref<8x8x768xf32, #tpu.memory_space<vmem>> -> memref<8x8x384xf32, #tpu.memory_space<vmem>>
    %467 = arith.index_cast %c4_i32 : i32 to index
    %c0_205 = arith.constant 0 : index
    %c0_206 = arith.constant 0 : index
    %468 = vector.load %466[%467, %c0_205, %c0_206] : memref<8x8x384xf32, #tpu.memory_space<vmem>>, vector<1x8x384xf32>
    %469 = vector.shape_cast %468 : vector<1x8x384xf32> to vector<8x384xf32>
    %c0_207 = arith.constant 0 : index
    %c0_208 = arith.constant 0 : index
    %c0_209 = arith.constant 0 : index
    %470 = vector.load %arg9[%c0_207, %c0_208, %c0_209] : memref<2x8x128xf32, #tpu.memory_space<vmem>>, vector<1x8x128xf32>
    %471 = vector.shape_cast %470 : vector<1x8x128xf32> to vector<8x128xf32>
    %472 = arith.truncf %471 : vector<8x128xf32> to vector<8x128xbf16>
    %c0_210 = arith.constant 0 : index
    %c0_211 = arith.constant 0 : index
    %c0_212 = arith.constant 0 : index
    %473 = vector.load %arg4[%c0_210, %c0_211, %c0_212] : memref<2x128x384xbf16, #tpu.memory_space<vmem>>, vector<1x128x384xbf16>
    %474 = vector.shape_cast %473 : vector<1x128x384xbf16> to vector<128x384xbf16>
    %cst_213 = arith.constant dense<0.000000e+00> : vector<8x384xf32>
    %475 = tpu.matmul %472, %474, %cst_213 {dimension_numbers = #tpu.dot_dimension_numbers<[1], [0], [0], [1], [0, 0, 1, 1], [], []>} : vector<8x128xbf16>, vector<128x384xbf16>, vector<8x384xf32> -> vector<8x384xf32>
    %476 = arith.addf %475, %17 : vector<8x384xf32>
    %477 = vector.extract_strided_slice %469 {offsets = [0, 0], sizes = [8, 128], strides = [1, 1]} : vector<8x384xf32> to vector<8x128xf32>
    %478 = vector.extract_strided_slice %476 {offsets = [0, 0], sizes = [8, 128], strides = [1, 1]} : vector<8x384xf32> to vector<8x128xf32>
    %479 = arith.addf %477, %478 : vector<8x128xf32>
    %480 = arith.negf %479 : vector<8x128xf32>
    %481 = math.exp %480 : vector<8x128xf32>
    %cst_214 = arith.constant 1.000000e+00 : f32
    %482 = vector.broadcast %cst_214 : f32 to vector<8x128xf32>
    %483 = arith.addf %482, %481 : vector<8x128xf32>
    %484 = arith.divf %482, %483 : vector<8x128xf32>
    %485 = vector.extract_strided_slice %469 {offsets = [0, 128], sizes = [8, 128], strides = [1, 1]} : vector<8x384xf32> to vector<8x128xf32>
    %486 = vector.extract_strided_slice %476 {offsets = [0, 128], sizes = [8, 128], strides = [1, 1]} : vector<8x384xf32> to vector<8x128xf32>
    %487 = arith.addf %485, %486 : vector<8x128xf32>
    %488 = arith.negf %487 : vector<8x128xf32>
    %489 = math.exp %488 : vector<8x128xf32>
    %cst_215 = arith.constant 1.000000e+00 : f32
    %490 = vector.broadcast %cst_215 : f32 to vector<8x128xf32>
    %491 = arith.addf %490, %489 : vector<8x128xf32>
    %492 = arith.divf %490, %491 : vector<8x128xf32>
    %493 = vector.extract_strided_slice %469 {offsets = [0, 256], sizes = [8, 128], strides = [1, 1]} : vector<8x384xf32> to vector<8x128xf32>
    %494 = vector.extract_strided_slice %476 {offsets = [0, 256], sizes = [8, 128], strides = [1, 1]} : vector<8x384xf32> to vector<8x128xf32>
    %495 = arith.mulf %484, %494 : vector<8x128xf32>
    %496 = arith.addf %493, %495 : vector<8x128xf32>
    %497 = math.tanh %496 : vector<8x128xf32>
    %498 = arith.subf %471, %497 : vector<8x128xf32>
    %499 = arith.mulf %492, %498 : vector<8x128xf32>
    %500 = arith.addf %497, %499 : vector<8x128xf32>
    %501 = vector.broadcast %c4_i32 : i32 to vector<8x1xi32>
    %502 = arith.cmpi sgt, %13, %501 : vector<8x1xi32>
    %503 = vector.shape_cast %502 : vector<8x1xi1> to vector<8x1xi1>
    %504 = vector.broadcast %503 : vector<8x1xi1> to vector<8x128xi1>
    %505 = arith.select %504, %500, %471 : vector<8x128xi1>, vector<8x128xf32>
    %c0_216 = arith.constant 0 : index
    %c0_217 = arith.constant 0 : index
    %c0_218 = arith.constant 0 : index
    %506 = vector.load %arg9[%c0_216, %c0_217, %c0_218] : memref<2x8x128xf32, #tpu.memory_space<vmem>>, vector<1x8x128xf32>
    %507 = vector.shape_cast %506 : vector<1x8x128xf32> to vector<8x128xf32>
    %508 = vector.shape_cast %505 : vector<8x128xf32> to vector<1x8x128xf32>
    tpu.vector_store %arg9[%c0_216, %c0_217, %c0_218], %508 {strides = array<i32>} : memref<2x8x128xf32, #tpu.memory_space<vmem>>, vector<1x8x128xf32>,
    %cst_219 = arith.constant 0.000000e+00 : f32
    %509 = vector.shape_cast %502 : vector<8x1xi1> to vector<8x1xi1>
    %510 = vector.broadcast %509 : vector<8x1xi1> to vector<8x128xi1>
    %511 = vector.broadcast %cst_219 : f32 to vector<8x128xf32>
    %512 = arith.select %510, %500, %511 : vector<8x128xi1>, vector<8x128xf32>
    %513 = arith.index_cast %c4_i32 : i32 to index
    %c0_220 = arith.constant 0 : index
    %c0_221 = arith.constant 0 : index
    %514 = vector.load %arg7[%513, %c0_220, %c0_221] : memref<8x8x128xf32, #tpu.memory_space<vmem>>, vector<1x8x128xf32>
    %515 = vector.shape_cast %514 : vector<1x8x128xf32> to vector<8x128xf32>
    %516 = arith.addf %515, %512 : vector<8x128xf32>
    %517 = arith.index_cast %c4_i32 : i32 to index
    %c0_222 = arith.constant 0 : index
    %c0_223 = arith.constant 0 : index
    %518 = vector.load %arg7[%517, %c0_222, %c0_223] : memref<8x8x128xf32, #tpu.memory_space<vmem>>, vector<1x8x128xf32>
    %519 = vector.shape_cast %518 : vector<1x8x128xf32> to vector<8x128xf32>
    %520 = vector.shape_cast %516 : vector<8x128xf32> to vector<1x8x128xf32>
    tpu.vector_store %arg7[%517, %c0_222, %c0_223], %520 {strides = array<i32>} : memref<8x8x128xf32, #tpu.memory_space<vmem>>, vector<1x8x128xf32>,
    %c7_i32_224 = arith.constant 7 : i32
    %521 = arith.subi %c7_i32_224, %c4_i32 : i32
    %c0_i32_225 = arith.constant 0 : i32
    %c0_i32_226 = arith.constant 0 : i32
    %c384_i32_227 = arith.constant 384 : i32
    %522 = tpu.memref_slice %arg8[%c0_i32_225, %c0_i32_226, %c384_i32_227] : memref<8x8x768xf32, #tpu.memory_space<vmem>> -> memref<8x8x384xf32, #tpu.memory_space<vmem>>
    %523 = arith.index_cast %521 : i32 to index
    %c0_228 = arith.constant 0 : index
    %c0_229 = arith.constant 0 : index
    %524 = vector.load %522[%523, %c0_228, %c0_229] : memref<8x8x384xf32, #tpu.memory_space<vmem>>, vector<1x8x384xf32>
    %525 = vector.shape_cast %524 : vector<1x8x384xf32> to vector<8x384xf32>
    %c1_230 = arith.constant 1 : index
    %c0_231 = arith.constant 0 : index
    %c0_232 = arith.constant 0 : index
    %526 = vector.load %arg9[%c1_230, %c0_231, %c0_232] : memref<2x8x128xf32, #tpu.memory_space<vmem>>, vector<1x8x128xf32>
    %527 = vector.shape_cast %526 : vector<1x8x128xf32> to vector<8x128xf32>
    %528 = arith.truncf %527 : vector<8x128xf32> to vector<8x128xbf16>
    %c1_233 = arith.constant 1 : index
    %c0_234 = arith.constant 0 : index
    %c0_235 = arith.constant 0 : index
    %529 = vector.load %arg4[%c1_233, %c0_234, %c0_235] : memref<2x128x384xbf16, #tpu.memory_space<vmem>>, vector<1x128x384xbf16>
    %530 = vector.shape_cast %529 : vector<1x128x384xbf16> to vector<128x384xbf16>
    %cst_236 = arith.constant dense<0.000000e+00> : vector<8x384xf32>
    %531 = tpu.matmul %528, %530, %cst_236 {dimension_numbers = #tpu.dot_dimension_numbers<[1], [0], [0], [1], [0, 0, 1, 1], [], []>} : vector<8x128xbf16>, vector<128x384xbf16>, vector<8x384xf32> -> vector<8x384xf32>
    %532 = arith.addf %531, %21 : vector<8x384xf32>
    %533 = vector.extract_strided_slice %525 {offsets = [0, 0], sizes = [8, 128], strides = [1, 1]} : vector<8x384xf32> to vector<8x128xf32>
    %534 = vector.extract_strided_slice %532 {offsets = [0, 0], sizes = [8, 128], strides = [1, 1]} : vector<8x384xf32> to vector<8x128xf32>
    %535 = arith.addf %533, %534 : vector<8x128xf32>
    %536 = arith.negf %535 : vector<8x128xf32>
    %537 = math.exp %536 : vector<8x128xf32>
    %cst_237 = arith.constant 1.000000e+00 : f32
    %538 = vector.broadcast %cst_237 : f32 to vector<8x128xf32>
    %539 = arith.addf %538, %537 : vector<8x128xf32>
    %540 = arith.divf %538, %539 : vector<8x128xf32>
    %541 = vector.extract_strided_slice %525 {offsets = [0, 128], sizes = [8, 128], strides = [1, 1]} : vector<8x384xf32> to vector<8x128xf32>
    %542 = vector.extract_strided_slice %532 {offsets = [0, 128], sizes = [8, 128], strides = [1, 1]} : vector<8x384xf32> to vector<8x128xf32>
    %543 = arith.addf %541, %542 : vector<8x128xf32>
    %544 = arith.negf %543 : vector<8x128xf32>
    %545 = math.exp %544 : vector<8x128xf32>
    %cst_238 = arith.constant 1.000000e+00 : f32
    %546 = vector.broadcast %cst_238 : f32 to vector<8x128xf32>
    %547 = arith.addf %546, %545 : vector<8x128xf32>
    %548 = arith.divf %546, %547 : vector<8x128xf32>
    %549 = vector.extract_strided_slice %525 {offsets = [0, 256], sizes = [8, 128], strides = [1, 1]} : vector<8x384xf32> to vector<8x128xf32>
    %550 = vector.extract_strided_slice %532 {offsets = [0, 256], sizes = [8, 128], strides = [1, 1]} : vector<8x384xf32> to vector<8x128xf32>
    %551 = arith.mulf %540, %550 : vector<8x128xf32>
    %552 = arith.addf %549, %551 : vector<8x128xf32>
    %553 = math.tanh %552 : vector<8x128xf32>
    %554 = arith.subf %527, %553 : vector<8x128xf32>
    %555 = arith.mulf %548, %554 : vector<8x128xf32>
    %556 = arith.addf %553, %555 : vector<8x128xf32>
    %557 = vector.broadcast %521 : i32 to vector<8x1xi32>
    %558 = arith.cmpi sgt, %13, %557 : vector<8x1xi32>
    %559 = vector.shape_cast %558 : vector<8x1xi1> to vector<8x1xi1>
    %560 = vector.broadcast %559 : vector<8x1xi1> to vector<8x128xi1>
    %561 = arith.select %560, %556, %527 : vector<8x128xi1>, vector<8x128xf32>
    %c1_239 = arith.constant 1 : index
    %c0_240 = arith.constant 0 : index
    %c0_241 = arith.constant 0 : index
    %562 = vector.load %arg9[%c1_239, %c0_240, %c0_241] : memref<2x8x128xf32, #tpu.memory_space<vmem>>, vector<1x8x128xf32>
    %563 = vector.shape_cast %562 : vector<1x8x128xf32> to vector<8x128xf32>
    %564 = vector.shape_cast %561 : vector<8x128xf32> to vector<1x8x128xf32>
    tpu.vector_store %arg9[%c1_239, %c0_240, %c0_241], %564 {strides = array<i32>} : memref<2x8x128xf32, #tpu.memory_space<vmem>>, vector<1x8x128xf32>,
    %cst_242 = arith.constant 0.000000e+00 : f32
    %565 = vector.shape_cast %558 : vector<8x1xi1> to vector<8x1xi1>
    %566 = vector.broadcast %565 : vector<8x1xi1> to vector<8x128xi1>
    %567 = vector.broadcast %cst_242 : f32 to vector<8x128xf32>
    %568 = arith.select %566, %556, %567 : vector<8x128xi1>, vector<8x128xf32>
    %569 = arith.index_cast %521 : i32 to index
    %c0_243 = arith.constant 0 : index
    %c0_244 = arith.constant 0 : index
    %570 = vector.load %arg7[%569, %c0_243, %c0_244] : memref<8x8x128xf32, #tpu.memory_space<vmem>>, vector<1x8x128xf32>
    %571 = vector.shape_cast %570 : vector<1x8x128xf32> to vector<8x128xf32>
    %572 = arith.addf %571, %568 : vector<8x128xf32>
    %573 = arith.index_cast %521 : i32 to index
    %c0_245 = arith.constant 0 : index
    %c0_246 = arith.constant 0 : index
    %574 = vector.load %arg7[%573, %c0_245, %c0_246] : memref<8x8x128xf32, #tpu.memory_space<vmem>>, vector<1x8x128xf32>
    %575 = vector.shape_cast %574 : vector<1x8x128xf32> to vector<8x128xf32>
    %576 = vector.shape_cast %572 : vector<8x128xf32> to vector<1x8x128xf32>
    tpu.vector_store %arg7[%573, %c0_245, %c0_246], %576 {strides = array<i32>} : memref<8x8x128xf32, #tpu.memory_space<vmem>>, vector<1x8x128xf32>,
    %c5_i32 = arith.constant 5 : i32
    %c0_i32_247 = arith.constant 0 : i32
    %c0_i32_248 = arith.constant 0 : i32
    %c0_i32_249 = arith.constant 0 : i32
    %577 = tpu.memref_slice %arg8[%c0_i32_247, %c0_i32_248, %c0_i32_249] : memref<8x8x768xf32, #tpu.memory_space<vmem>> -> memref<8x8x384xf32, #tpu.memory_space<vmem>>
    %578 = arith.index_cast %c5_i32 : i32 to index
    %c0_250 = arith.constant 0 : index
    %c0_251 = arith.constant 0 : index
    %579 = vector.load %577[%578, %c0_250, %c0_251] : memref<8x8x384xf32, #tpu.memory_space<vmem>>, vector<1x8x384xf32>
    %580 = vector.shape_cast %579 : vector<1x8x384xf32> to vector<8x384xf32>
    %c0_252 = arith.constant 0 : index
    %c0_253 = arith.constant 0 : index
    %c0_254 = arith.constant 0 : index
    %581 = vector.load %arg9[%c0_252, %c0_253, %c0_254] : memref<2x8x128xf32, #tpu.memory_space<vmem>>, vector<1x8x128xf32>
    %582 = vector.shape_cast %581 : vector<1x8x128xf32> to vector<8x128xf32>
    %583 = arith.truncf %582 : vector<8x128xf32> to vector<8x128xbf16>
    %c0_255 = arith.constant 0 : index
    %c0_256 = arith.constant 0 : index
    %c0_257 = arith.constant 0 : index
    %584 = vector.load %arg4[%c0_255, %c0_256, %c0_257] : memref<2x128x384xbf16, #tpu.memory_space<vmem>>, vector<1x128x384xbf16>
    %585 = vector.shape_cast %584 : vector<1x128x384xbf16> to vector<128x384xbf16>
    %cst_258 = arith.constant dense<0.000000e+00> : vector<8x384xf32>
    %586 = tpu.matmul %583, %585, %cst_258 {dimension_numbers = #tpu.dot_dimension_numbers<[1], [0], [0], [1], [0, 0, 1, 1], [], []>} : vector<8x128xbf16>, vector<128x384xbf16>, vector<8x384xf32> -> vector<8x384xf32>
    %587 = arith.addf %586, %17 : vector<8x384xf32>
    %588 = vector.extract_strided_slice %580 {offsets = [0, 0], sizes = [8, 128], strides = [1, 1]} : vector<8x384xf32> to vector<8x128xf32>
    %589 = vector.extract_strided_slice %587 {offsets = [0, 0], sizes = [8, 128], strides = [1, 1]} : vector<8x384xf32> to vector<8x128xf32>
    %590 = arith.addf %588, %589 : vector<8x128xf32>
    %591 = arith.negf %590 : vector<8x128xf32>
    %592 = math.exp %591 : vector<8x128xf32>
    %cst_259 = arith.constant 1.000000e+00 : f32
    %593 = vector.broadcast %cst_259 : f32 to vector<8x128xf32>
    %594 = arith.addf %593, %592 : vector<8x128xf32>
    %595 = arith.divf %593, %594 : vector<8x128xf32>
    %596 = vector.extract_strided_slice %580 {offsets = [0, 128], sizes = [8, 128], strides = [1, 1]} : vector<8x384xf32> to vector<8x128xf32>
    %597 = vector.extract_strided_slice %587 {offsets = [0, 128], sizes = [8, 128], strides = [1, 1]} : vector<8x384xf32> to vector<8x128xf32>
    %598 = arith.addf %596, %597 : vector<8x128xf32>
    %599 = arith.negf %598 : vector<8x128xf32>
    %600 = math.exp %599 : vector<8x128xf32>
    %cst_260 = arith.constant 1.000000e+00 : f32
    %601 = vector.broadcast %cst_260 : f32 to vector<8x128xf32>
    %602 = arith.addf %601, %600 : vector<8x128xf32>
    %603 = arith.divf %601, %602 : vector<8x128xf32>
    %604 = vector.extract_strided_slice %580 {offsets = [0, 256], sizes = [8, 128], strides = [1, 1]} : vector<8x384xf32> to vector<8x128xf32>
    %605 = vector.extract_strided_slice %587 {offsets = [0, 256], sizes = [8, 128], strides = [1, 1]} : vector<8x384xf32> to vector<8x128xf32>
    %606 = arith.mulf %595, %605 : vector<8x128xf32>
    %607 = arith.addf %604, %606 : vector<8x128xf32>
    %608 = math.tanh %607 : vector<8x128xf32>
    %609 = arith.subf %582, %608 : vector<8x128xf32>
    %610 = arith.mulf %603, %609 : vector<8x128xf32>
    %611 = arith.addf %608, %610 : vector<8x128xf32>
    %612 = vector.broadcast %c5_i32 : i32 to vector<8x1xi32>
    %613 = arith.cmpi sgt, %13, %612 : vector<8x1xi32>
    %614 = vector.shape_cast %613 : vector<8x1xi1> to vector<8x1xi1>
    %615 = vector.broadcast %614 : vector<8x1xi1> to vector<8x128xi1>
    %616 = arith.select %615, %611, %582 : vector<8x128xi1>, vector<8x128xf32>
    %c0_261 = arith.constant 0 : index
    %c0_262 = arith.constant 0 : index
    %c0_263 = arith.constant 0 : index
    %617 = vector.load %arg9[%c0_261, %c0_262, %c0_263] : memref<2x8x128xf32, #tpu.memory_space<vmem>>, vector<1x8x128xf32>
    %618 = vector.shape_cast %617 : vector<1x8x128xf32> to vector<8x128xf32>
    %619 = vector.shape_cast %616 : vector<8x128xf32> to vector<1x8x128xf32>
    tpu.vector_store %arg9[%c0_261, %c0_262, %c0_263], %619 {strides = array<i32>} : memref<2x8x128xf32, #tpu.memory_space<vmem>>, vector<1x8x128xf32>,
    %cst_264 = arith.constant 0.000000e+00 : f32
    %620 = vector.shape_cast %613 : vector<8x1xi1> to vector<8x1xi1>
    %621 = vector.broadcast %620 : vector<8x1xi1> to vector<8x128xi1>
    %622 = vector.broadcast %cst_264 : f32 to vector<8x128xf32>
    %623 = arith.select %621, %611, %622 : vector<8x128xi1>, vector<8x128xf32>
    %624 = arith.index_cast %c5_i32 : i32 to index
    %c0_265 = arith.constant 0 : index
    %c0_266 = arith.constant 0 : index
    %625 = vector.load %arg7[%624, %c0_265, %c0_266] : memref<8x8x128xf32, #tpu.memory_space<vmem>>, vector<1x8x128xf32>
    %626 = vector.shape_cast %625 : vector<1x8x128xf32> to vector<8x128xf32>
    %627 = arith.addf %626, %623 : vector<8x128xf32>
    %628 = arith.index_cast %c5_i32 : i32 to index
    %c0_267 = arith.constant 0 : index
    %c0_268 = arith.constant 0 : index
    %629 = vector.load %arg7[%628, %c0_267, %c0_268] : memref<8x8x128xf32, #tpu.memory_space<vmem>>, vector<1x8x128xf32>
    %630 = vector.shape_cast %629 : vector<1x8x128xf32> to vector<8x128xf32>
    %631 = vector.shape_cast %627 : vector<8x128xf32> to vector<1x8x128xf32>
    tpu.vector_store %arg7[%628, %c0_267, %c0_268], %631 {strides = array<i32>} : memref<8x8x128xf32, #tpu.memory_space<vmem>>, vector<1x8x128xf32>,
    %c7_i32_269 = arith.constant 7 : i32
    %632 = arith.subi %c7_i32_269, %c5_i32 : i32
    %c0_i32_270 = arith.constant 0 : i32
    %c0_i32_271 = arith.constant 0 : i32
    %c384_i32_272 = arith.constant 384 : i32
    %633 = tpu.memref_slice %arg8[%c0_i32_270, %c0_i32_271, %c384_i32_272] : memref<8x8x768xf32, #tpu.memory_space<vmem>> -> memref<8x8x384xf32, #tpu.memory_space<vmem>>
    %634 = arith.index_cast %632 : i32 to index
    %c0_273 = arith.constant 0 : index
    %c0_274 = arith.constant 0 : index
    %635 = vector.load %633[%634, %c0_273, %c0_274] : memref<8x8x384xf32, #tpu.memory_space<vmem>>, vector<1x8x384xf32>
    %636 = vector.shape_cast %635 : vector<1x8x384xf32> to vector<8x384xf32>
    %c1_275 = arith.constant 1 : index
    %c0_276 = arith.constant 0 : index
    %c0_277 = arith.constant 0 : index
    %637 = vector.load %arg9[%c1_275, %c0_276, %c0_277] : memref<2x8x128xf32, #tpu.memory_space<vmem>>, vector<1x8x128xf32>
    %638 = vector.shape_cast %637 : vector<1x8x128xf32> to vector<8x128xf32>
    %639 = arith.truncf %638 : vector<8x128xf32> to vector<8x128xbf16>
    %c1_278 = arith.constant 1 : index
    %c0_279 = arith.constant 0 : index
    %c0_280 = arith.constant 0 : index
    %640 = vector.load %arg4[%c1_278, %c0_279, %c0_280] : memref<2x128x384xbf16, #tpu.memory_space<vmem>>, vector<1x128x384xbf16>
    %641 = vector.shape_cast %640 : vector<1x128x384xbf16> to vector<128x384xbf16>
    %cst_281 = arith.constant dense<0.000000e+00> : vector<8x384xf32>
    %642 = tpu.matmul %639, %641, %cst_281 {dimension_numbers = #tpu.dot_dimension_numbers<[1], [0], [0], [1], [0, 0, 1, 1], [], []>} : vector<8x128xbf16>, vector<128x384xbf16>, vector<8x384xf32> -> vector<8x384xf32>
    %643 = arith.addf %642, %21 : vector<8x384xf32>
    %644 = vector.extract_strided_slice %636 {offsets = [0, 0], sizes = [8, 128], strides = [1, 1]} : vector<8x384xf32> to vector<8x128xf32>
    %645 = vector.extract_strided_slice %643 {offsets = [0, 0], sizes = [8, 128], strides = [1, 1]} : vector<8x384xf32> to vector<8x128xf32>
    %646 = arith.addf %644, %645 : vector<8x128xf32>
    %647 = arith.negf %646 : vector<8x128xf32>
    %648 = math.exp %647 : vector<8x128xf32>
    %cst_282 = arith.constant 1.000000e+00 : f32
    %649 = vector.broadcast %cst_282 : f32 to vector<8x128xf32>
    %650 = arith.addf %649, %648 : vector<8x128xf32>
    %651 = arith.divf %649, %650 : vector<8x128xf32>
    %652 = vector.extract_strided_slice %636 {offsets = [0, 128], sizes = [8, 128], strides = [1, 1]} : vector<8x384xf32> to vector<8x128xf32>
    %653 = vector.extract_strided_slice %643 {offsets = [0, 128], sizes = [8, 128], strides = [1, 1]} : vector<8x384xf32> to vector<8x128xf32>
    %654 = arith.addf %652, %653 : vector<8x128xf32>
    %655 = arith.negf %654 : vector<8x128xf32>
    %656 = math.exp %655 : vector<8x128xf32>
    %cst_283 = arith.constant 1.000000e+00 : f32
    %657 = vector.broadcast %cst_283 : f32 to vector<8x128xf32>
    %658 = arith.addf %657, %656 : vector<8x128xf32>
    %659 = arith.divf %657, %658 : vector<8x128xf32>
    %660 = vector.extract_strided_slice %636 {offsets = [0, 256], sizes = [8, 128], strides = [1, 1]} : vector<8x384xf32> to vector<8x128xf32>
    %661 = vector.extract_strided_slice %643 {offsets = [0, 256], sizes = [8, 128], strides = [1, 1]} : vector<8x384xf32> to vector<8x128xf32>
    %662 = arith.mulf %651, %661 : vector<8x128xf32>
    %663 = arith.addf %660, %662 : vector<8x128xf32>
    %664 = math.tanh %663 : vector<8x128xf32>
    %665 = arith.subf %638, %664 : vector<8x128xf32>
    %666 = arith.mulf %659, %665 : vector<8x128xf32>
    %667 = arith.addf %664, %666 : vector<8x128xf32>
    %668 = vector.broadcast %632 : i32 to vector<8x1xi32>
    %669 = arith.cmpi sgt, %13, %668 : vector<8x1xi32>
    %670 = vector.shape_cast %669 : vector<8x1xi1> to vector<8x1xi1>
    %671 = vector.broadcast %670 : vector<8x1xi1> to vector<8x128xi1>
    %672 = arith.select %671, %667, %638 : vector<8x128xi1>, vector<8x128xf32>
    %c1_284 = arith.constant 1 : index
    %c0_285 = arith.constant 0 : index
    %c0_286 = arith.constant 0 : index
    %673 = vector.load %arg9[%c1_284, %c0_285, %c0_286] : memref<2x8x128xf32, #tpu.memory_space<vmem>>, vector<1x8x128xf32>
    %674 = vector.shape_cast %673 : vector<1x8x128xf32> to vector<8x128xf32>
    %675 = vector.shape_cast %672 : vector<8x128xf32> to vector<1x8x128xf32>
    tpu.vector_store %arg9[%c1_284, %c0_285, %c0_286], %675 {strides = array<i32>} : memref<2x8x128xf32, #tpu.memory_space<vmem>>, vector<1x8x128xf32>,
    %cst_287 = arith.constant 0.000000e+00 : f32
    %676 = vector.shape_cast %669 : vector<8x1xi1> to vector<8x1xi1>
    %677 = vector.broadcast %676 : vector<8x1xi1> to vector<8x128xi1>
    %678 = vector.broadcast %cst_287 : f32 to vector<8x128xf32>
    %679 = arith.select %677, %667, %678 : vector<8x128xi1>, vector<8x128xf32>
    %680 = arith.index_cast %632 : i32 to index
    %c0_288 = arith.constant 0 : index
    %c0_289 = arith.constant 0 : index
    %681 = vector.load %arg7[%680, %c0_288, %c0_289] : memref<8x8x128xf32, #tpu.memory_space<vmem>>, vector<1x8x128xf32>
    %682 = vector.shape_cast %681 : vector<1x8x128xf32> to vector<8x128xf32>
    %683 = arith.addf %682, %679 : vector<8x128xf32>
    %684 = arith.index_cast %632 : i32 to index
    %c0_290 = arith.constant 0 : index
    %c0_291 = arith.constant 0 : index
    %685 = vector.load %arg7[%684, %c0_290, %c0_291] : memref<8x8x128xf32, #tpu.memory_space<vmem>>, vector<1x8x128xf32>
    %686 = vector.shape_cast %685 : vector<1x8x128xf32> to vector<8x128xf32>
    %687 = vector.shape_cast %683 : vector<8x128xf32> to vector<1x8x128xf32>
    tpu.vector_store %arg7[%684, %c0_290, %c0_291], %687 {strides = array<i32>} : memref<8x8x128xf32, #tpu.memory_space<vmem>>, vector<1x8x128xf32>,
    %c6_i32 = arith.constant 6 : i32
    %c0_i32_292 = arith.constant 0 : i32
    %c0_i32_293 = arith.constant 0 : i32
    %c0_i32_294 = arith.constant 0 : i32
    %688 = tpu.memref_slice %arg8[%c0_i32_292, %c0_i32_293, %c0_i32_294] : memref<8x8x768xf32, #tpu.memory_space<vmem>> -> memref<8x8x384xf32, #tpu.memory_space<vmem>>
    %689 = arith.index_cast %c6_i32 : i32 to index
    %c0_295 = arith.constant 0 : index
    %c0_296 = arith.constant 0 : index
    %690 = vector.load %688[%689, %c0_295, %c0_296] : memref<8x8x384xf32, #tpu.memory_space<vmem>>, vector<1x8x384xf32>
    %691 = vector.shape_cast %690 : vector<1x8x384xf32> to vector<8x384xf32>
    %c0_297 = arith.constant 0 : index
    %c0_298 = arith.constant 0 : index
    %c0_299 = arith.constant 0 : index
    %692 = vector.load %arg9[%c0_297, %c0_298, %c0_299] : memref<2x8x128xf32, #tpu.memory_space<vmem>>, vector<1x8x128xf32>
    %693 = vector.shape_cast %692 : vector<1x8x128xf32> to vector<8x128xf32>
    %694 = arith.truncf %693 : vector<8x128xf32> to vector<8x128xbf16>
    %c0_300 = arith.constant 0 : index
    %c0_301 = arith.constant 0 : index
    %c0_302 = arith.constant 0 : index
    %695 = vector.load %arg4[%c0_300, %c0_301, %c0_302] : memref<2x128x384xbf16, #tpu.memory_space<vmem>>, vector<1x128x384xbf16>
    %696 = vector.shape_cast %695 : vector<1x128x384xbf16> to vector<128x384xbf16>
    %cst_303 = arith.constant dense<0.000000e+00> : vector<8x384xf32>
    %697 = tpu.matmul %694, %696, %cst_303 {dimension_numbers = #tpu.dot_dimension_numbers<[1], [0], [0], [1], [0, 0, 1, 1], [], []>} : vector<8x128xbf16>, vector<128x384xbf16>, vector<8x384xf32> -> vector<8x384xf32>
    %698 = arith.addf %697, %17 : vector<8x384xf32>
    %699 = vector.extract_strided_slice %691 {offsets = [0, 0], sizes = [8, 128], strides = [1, 1]} : vector<8x384xf32> to vector<8x128xf32>
    %700 = vector.extract_strided_slice %698 {offsets = [0, 0], sizes = [8, 128], strides = [1, 1]} : vector<8x384xf32> to vector<8x128xf32>
    %701 = arith.addf %699, %700 : vector<8x128xf32>
    %702 = arith.negf %701 : vector<8x128xf32>
    %703 = math.exp %702 : vector<8x128xf32>
    %cst_304 = arith.constant 1.000000e+00 : f32
    %704 = vector.broadcast %cst_304 : f32 to vector<8x128xf32>
    %705 = arith.addf %704, %703 : vector<8x128xf32>
    %706 = arith.divf %704, %705 : vector<8x128xf32>
    %707 = vector.extract_strided_slice %691 {offsets = [0, 128], sizes = [8, 128], strides = [1, 1]} : vector<8x384xf32> to vector<8x128xf32>
    %708 = vector.extract_strided_slice %698 {offsets = [0, 128], sizes = [8, 128], strides = [1, 1]} : vector<8x384xf32> to vector<8x128xf32>
    %709 = arith.addf %707, %708 : vector<8x128xf32>
    %710 = arith.negf %709 : vector<8x128xf32>
    %711 = math.exp %710 : vector<8x128xf32>
    %cst_305 = arith.constant 1.000000e+00 : f32
    %712 = vector.broadcast %cst_305 : f32 to vector<8x128xf32>
    %713 = arith.addf %712, %711 : vector<8x128xf32>
    %714 = arith.divf %712, %713 : vector<8x128xf32>
    %715 = vector.extract_strided_slice %691 {offsets = [0, 256], sizes = [8, 128], strides = [1, 1]} : vector<8x384xf32> to vector<8x128xf32>
    %716 = vector.extract_strided_slice %698 {offsets = [0, 256], sizes = [8, 128], strides = [1, 1]} : vector<8x384xf32> to vector<8x128xf32>
    %717 = arith.mulf %706, %716 : vector<8x128xf32>
    %718 = arith.addf %715, %717 : vector<8x128xf32>
    %719 = math.tanh %718 : vector<8x128xf32>
    %720 = arith.subf %693, %719 : vector<8x128xf32>
    %721 = arith.mulf %714, %720 : vector<8x128xf32>
    %722 = arith.addf %719, %721 : vector<8x128xf32>
    %723 = vector.broadcast %c6_i32 : i32 to vector<8x1xi32>
    %724 = arith.cmpi sgt, %13, %723 : vector<8x1xi32>
    %725 = vector.shape_cast %724 : vector<8x1xi1> to vector<8x1xi1>
    %726 = vector.broadcast %725 : vector<8x1xi1> to vector<8x128xi1>
    %727 = arith.select %726, %722, %693 : vector<8x128xi1>, vector<8x128xf32>
    %c0_306 = arith.constant 0 : index
    %c0_307 = arith.constant 0 : index
    %c0_308 = arith.constant 0 : index
    %728 = vector.load %arg9[%c0_306, %c0_307, %c0_308] : memref<2x8x128xf32, #tpu.memory_space<vmem>>, vector<1x8x128xf32>
    %729 = vector.shape_cast %728 : vector<1x8x128xf32> to vector<8x128xf32>
    %730 = vector.shape_cast %727 : vector<8x128xf32> to vector<1x8x128xf32>
    tpu.vector_store %arg9[%c0_306, %c0_307, %c0_308], %730 {strides = array<i32>} : memref<2x8x128xf32, #tpu.memory_space<vmem>>, vector<1x8x128xf32>,
    %cst_309 = arith.constant 0.000000e+00 : f32
    %731 = vector.shape_cast %724 : vector<8x1xi1> to vector<8x1xi1>
    %732 = vector.broadcast %731 : vector<8x1xi1> to vector<8x128xi1>
    %733 = vector.broadcast %cst_309 : f32 to vector<8x128xf32>
    %734 = arith.select %732, %722, %733 : vector<8x128xi1>, vector<8x128xf32>
    %735 = arith.index_cast %c6_i32 : i32 to index
    %c0_310 = arith.constant 0 : index
    %c0_311 = arith.constant 0 : index
    %736 = vector.load %arg7[%735, %c0_310, %c0_311] : memref<8x8x128xf32, #tpu.memory_space<vmem>>, vector<1x8x128xf32>
    %737 = vector.shape_cast %736 : vector<1x8x128xf32> to vector<8x128xf32>
    %738 = arith.addf %737, %734 : vector<8x128xf32>
    %739 = arith.index_cast %c6_i32 : i32 to index
    %c0_312 = arith.constant 0 : index
    %c0_313 = arith.constant 0 : index
    %740 = vector.load %arg7[%739, %c0_312, %c0_313] : memref<8x8x128xf32, #tpu.memory_space<vmem>>, vector<1x8x128xf32>
    %741 = vector.shape_cast %740 : vector<1x8x128xf32> to vector<8x128xf32>
    %742 = vector.shape_cast %738 : vector<8x128xf32> to vector<1x8x128xf32>
    tpu.vector_store %arg7[%739, %c0_312, %c0_313], %742 {strides = array<i32>} : memref<8x8x128xf32, #tpu.memory_space<vmem>>, vector<1x8x128xf32>,
    %c7_i32_314 = arith.constant 7 : i32
    %743 = arith.subi %c7_i32_314, %c6_i32 : i32
    %c0_i32_315 = arith.constant 0 : i32
    %c0_i32_316 = arith.constant 0 : i32
    %c384_i32_317 = arith.constant 384 : i32
    %744 = tpu.memref_slice %arg8[%c0_i32_315, %c0_i32_316, %c384_i32_317] : memref<8x8x768xf32, #tpu.memory_space<vmem>> -> memref<8x8x384xf32, #tpu.memory_space<vmem>>
    %745 = arith.index_cast %743 : i32 to index
    %c0_318 = arith.constant 0 : index
    %c0_319 = arith.constant 0 : index
    %746 = vector.load %744[%745, %c0_318, %c0_319] : memref<8x8x384xf32, #tpu.memory_space<vmem>>, vector<1x8x384xf32>
    %747 = vector.shape_cast %746 : vector<1x8x384xf32> to vector<8x384xf32>
    %c1_320 = arith.constant 1 : index
    %c0_321 = arith.constant 0 : index
    %c0_322 = arith.constant 0 : index
    %748 = vector.load %arg9[%c1_320, %c0_321, %c0_322] : memref<2x8x128xf32, #tpu.memory_space<vmem>>, vector<1x8x128xf32>
    %749 = vector.shape_cast %748 : vector<1x8x128xf32> to vector<8x128xf32>
    %750 = arith.truncf %749 : vector<8x128xf32> to vector<8x128xbf16>
    %c1_323 = arith.constant 1 : index
    %c0_324 = arith.constant 0 : index
    %c0_325 = arith.constant 0 : index
    %751 = vector.load %arg4[%c1_323, %c0_324, %c0_325] : memref<2x128x384xbf16, #tpu.memory_space<vmem>>, vector<1x128x384xbf16>
    %752 = vector.shape_cast %751 : vector<1x128x384xbf16> to vector<128x384xbf16>
    %cst_326 = arith.constant dense<0.000000e+00> : vector<8x384xf32>
    %753 = tpu.matmul %750, %752, %cst_326 {dimension_numbers = #tpu.dot_dimension_numbers<[1], [0], [0], [1], [0, 0, 1, 1], [], []>} : vector<8x128xbf16>, vector<128x384xbf16>, vector<8x384xf32> -> vector<8x384xf32>
    %754 = arith.addf %753, %21 : vector<8x384xf32>
    %755 = vector.extract_strided_slice %747 {offsets = [0, 0], sizes = [8, 128], strides = [1, 1]} : vector<8x384xf32> to vector<8x128xf32>
    %756 = vector.extract_strided_slice %754 {offsets = [0, 0], sizes = [8, 128], strides = [1, 1]} : vector<8x384xf32> to vector<8x128xf32>
    %757 = arith.addf %755, %756 : vector<8x128xf32>
    %758 = arith.negf %757 : vector<8x128xf32>
    %759 = math.exp %758 : vector<8x128xf32>
    %cst_327 = arith.constant 1.000000e+00 : f32
    %760 = vector.broadcast %cst_327 : f32 to vector<8x128xf32>
    %761 = arith.addf %760, %759 : vector<8x128xf32>
    %762 = arith.divf %760, %761 : vector<8x128xf32>
    %763 = vector.extract_strided_slice %747 {offsets = [0, 128], sizes = [8, 128], strides = [1, 1]} : vector<8x384xf32> to vector<8x128xf32>
    %764 = vector.extract_strided_slice %754 {offsets = [0, 128], sizes = [8, 128], strides = [1, 1]} : vector<8x384xf32> to vector<8x128xf32>
    %765 = arith.addf %763, %764 : vector<8x128xf32>
    %766 = arith.negf %765 : vector<8x128xf32>
    %767 = math.exp %766 : vector<8x128xf32>
    %cst_328 = arith.constant 1.000000e+00 : f32
    %768 = vector.broadcast %cst_328 : f32 to vector<8x128xf32>
    %769 = arith.addf %768, %767 : vector<8x128xf32>
    %770 = arith.divf %768, %769 : vector<8x128xf32>
    %771 = vector.extract_strided_slice %747 {offsets = [0, 256], sizes = [8, 128], strides = [1, 1]} : vector<8x384xf32> to vector<8x128xf32>
    %772 = vector.extract_strided_slice %754 {offsets = [0, 256], sizes = [8, 128], strides = [1, 1]} : vector<8x384xf32> to vector<8x128xf32>
    %773 = arith.mulf %762, %772 : vector<8x128xf32>
    %774 = arith.addf %771, %773 : vector<8x128xf32>
    %775 = math.tanh %774 : vector<8x128xf32>
    %776 = arith.subf %749, %775 : vector<8x128xf32>
    %777 = arith.mulf %770, %776 : vector<8x128xf32>
    %778 = arith.addf %775, %777 : vector<8x128xf32>
    %779 = vector.broadcast %743 : i32 to vector<8x1xi32>
    %780 = arith.cmpi sgt, %13, %779 : vector<8x1xi32>
    %781 = vector.shape_cast %780 : vector<8x1xi1> to vector<8x1xi1>
    %782 = vector.broadcast %781 : vector<8x1xi1> to vector<8x128xi1>
    %783 = arith.select %782, %778, %749 : vector<8x128xi1>, vector<8x128xf32>
    %c1_329 = arith.constant 1 : index
    %c0_330 = arith.constant 0 : index
    %c0_331 = arith.constant 0 : index
    %784 = vector.load %arg9[%c1_329, %c0_330, %c0_331] : memref<2x8x128xf32, #tpu.memory_space<vmem>>, vector<1x8x128xf32>
    %785 = vector.shape_cast %784 : vector<1x8x128xf32> to vector<8x128xf32>
    %786 = vector.shape_cast %783 : vector<8x128xf32> to vector<1x8x128xf32>
    tpu.vector_store %arg9[%c1_329, %c0_330, %c0_331], %786 {strides = array<i32>} : memref<2x8x128xf32, #tpu.memory_space<vmem>>, vector<1x8x128xf32>,
    %cst_332 = arith.constant 0.000000e+00 : f32
    %787 = vector.shape_cast %780 : vector<8x1xi1> to vector<8x1xi1>
    %788 = vector.broadcast %787 : vector<8x1xi1> to vector<8x128xi1>
    %789 = vector.broadcast %cst_332 : f32 to vector<8x128xf32>
    %790 = arith.select %788, %778, %789 : vector<8x128xi1>, vector<8x128xf32>
    %791 = arith.index_cast %743 : i32 to index
    %c0_333 = arith.constant 0 : index
    %c0_334 = arith.constant 0 : index
    %792 = vector.load %arg7[%791, %c0_333, %c0_334] : memref<8x8x128xf32, #tpu.memory_space<vmem>>, vector<1x8x128xf32>
    %793 = vector.shape_cast %792 : vector<1x8x128xf32> to vector<8x128xf32>
    %794 = arith.addf %793, %790 : vector<8x128xf32>
    %795 = arith.index_cast %743 : i32 to index
    %c0_335 = arith.constant 0 : index
    %c0_336 = arith.constant 0 : index
    %796 = vector.load %arg7[%795, %c0_335, %c0_336] : memref<8x8x128xf32, #tpu.memory_space<vmem>>, vector<1x8x128xf32>
    %797 = vector.shape_cast %796 : vector<1x8x128xf32> to vector<8x128xf32>
    %798 = vector.shape_cast %794 : vector<8x128xf32> to vector<1x8x128xf32>
    tpu.vector_store %arg7[%795, %c0_335, %c0_336], %798 {strides = array<i32>} : memref<8x8x128xf32, #tpu.memory_space<vmem>>, vector<1x8x128xf32>,
    %c7_i32_337 = arith.constant 7 : i32
    %c0_i32_338 = arith.constant 0 : i32
    %c0_i32_339 = arith.constant 0 : i32
    %c0_i32_340 = arith.constant 0 : i32
    %799 = tpu.memref_slice %arg8[%c0_i32_338, %c0_i32_339, %c0_i32_340] : memref<8x8x768xf32, #tpu.memory_space<vmem>> -> memref<8x8x384xf32, #tpu.memory_space<vmem>>
    %800 = arith.index_cast %c7_i32_337 : i32 to index
    %c0_341 = arith.constant 0 : index
    %c0_342 = arith.constant 0 : index
    %801 = vector.load %799[%800, %c0_341, %c0_342] : memref<8x8x384xf32, #tpu.memory_space<vmem>>, vector<1x8x384xf32>
    %802 = vector.shape_cast %801 : vector<1x8x384xf32> to vector<8x384xf32>
    %c0_343 = arith.constant 0 : index
    %c0_344 = arith.constant 0 : index
    %c0_345 = arith.constant 0 : index
    %803 = vector.load %arg9[%c0_343, %c0_344, %c0_345] : memref<2x8x128xf32, #tpu.memory_space<vmem>>, vector<1x8x128xf32>
    %804 = vector.shape_cast %803 : vector<1x8x128xf32> to vector<8x128xf32>
    %805 = arith.truncf %804 : vector<8x128xf32> to vector<8x128xbf16>
    %c0_346 = arith.constant 0 : index
    %c0_347 = arith.constant 0 : index
    %c0_348 = arith.constant 0 : index
    %806 = vector.load %arg4[%c0_346, %c0_347, %c0_348] : memref<2x128x384xbf16, #tpu.memory_space<vmem>>, vector<1x128x384xbf16>
    %807 = vector.shape_cast %806 : vector<1x128x384xbf16> to vector<128x384xbf16>
    %cst_349 = arith.constant dense<0.000000e+00> : vector<8x384xf32>
    %808 = tpu.matmul %805, %807, %cst_349 {dimension_numbers = #tpu.dot_dimension_numbers<[1], [0], [0], [1], [0, 0, 1, 1], [], []>} : vector<8x128xbf16>, vector<128x384xbf16>, vector<8x384xf32> -> vector<8x384xf32>
    %809 = arith.addf %808, %17 : vector<8x384xf32>
    %810 = vector.extract_strided_slice %802 {offsets = [0, 0], sizes = [8, 128], strides = [1, 1]} : vector<8x384xf32> to vector<8x128xf32>
    %811 = vector.extract_strided_slice %809 {offsets = [0, 0], sizes = [8, 128], strides = [1, 1]} : vector<8x384xf32> to vector<8x128xf32>
    %812 = arith.addf %810, %811 : vector<8x128xf32>
    %813 = arith.negf %812 : vector<8x128xf32>
    %814 = math.exp %813 : vector<8x128xf32>
    %cst_350 = arith.constant 1.000000e+00 : f32
    %815 = vector.broadcast %cst_350 : f32 to vector<8x128xf32>
    %816 = arith.addf %815, %814 : vector<8x128xf32>
    %817 = arith.divf %815, %816 : vector<8x128xf32>
    %818 = vector.extract_strided_slice %802 {offsets = [0, 128], sizes = [8, 128], strides = [1, 1]} : vector<8x384xf32> to vector<8x128xf32>
    %819 = vector.extract_strided_slice %809 {offsets = [0, 128], sizes = [8, 128], strides = [1, 1]} : vector<8x384xf32> to vector<8x128xf32>
    %820 = arith.addf %818, %819 : vector<8x128xf32>
    %821 = arith.negf %820 : vector<8x128xf32>
    %822 = math.exp %821 : vector<8x128xf32>
    %cst_351 = arith.constant 1.000000e+00 : f32
    %823 = vector.broadcast %cst_351 : f32 to vector<8x128xf32>
    %824 = arith.addf %823, %822 : vector<8x128xf32>
    %825 = arith.divf %823, %824 : vector<8x128xf32>
    %826 = vector.extract_strided_slice %802 {offsets = [0, 256], sizes = [8, 128], strides = [1, 1]} : vector<8x384xf32> to vector<8x128xf32>
    %827 = vector.extract_strided_slice %809 {offsets = [0, 256], sizes = [8, 128], strides = [1, 1]} : vector<8x384xf32> to vector<8x128xf32>
    %828 = arith.mulf %817, %827 : vector<8x128xf32>
    %829 = arith.addf %826, %828 : vector<8x128xf32>
    %830 = math.tanh %829 : vector<8x128xf32>
    %831 = arith.subf %804, %830 : vector<8x128xf32>
    %832 = arith.mulf %825, %831 : vector<8x128xf32>
    %833 = arith.addf %830, %832 : vector<8x128xf32>
    %834 = vector.broadcast %c7_i32_337 : i32 to vector<8x1xi32>
    %835 = arith.cmpi sgt, %13, %834 : vector<8x1xi32>
    %836 = vector.shape_cast %835 : vector<8x1xi1> to vector<8x1xi1>
    %837 = vector.broadcast %836 : vector<8x1xi1> to vector<8x128xi1>
    %838 = arith.select %837, %833, %804 : vector<8x128xi1>, vector<8x128xf32>
    %c0_352 = arith.constant 0 : index
    %c0_353 = arith.constant 0 : index
    %c0_354 = arith.constant 0 : index
    %839 = vector.load %arg9[%c0_352, %c0_353, %c0_354] : memref<2x8x128xf32, #tpu.memory_space<vmem>>, vector<1x8x128xf32>
    %840 = vector.shape_cast %839 : vector<1x8x128xf32> to vector<8x128xf32>
    %841 = vector.shape_cast %838 : vector<8x128xf32> to vector<1x8x128xf32>
    tpu.vector_store %arg9[%c0_352, %c0_353, %c0_354], %841 {strides = array<i32>} : memref<2x8x128xf32, #tpu.memory_space<vmem>>, vector<1x8x128xf32>,
    %cst_355 = arith.constant 0.000000e+00 : f32
    %842 = vector.shape_cast %835 : vector<8x1xi1> to vector<8x1xi1>
    %843 = vector.broadcast %842 : vector<8x1xi1> to vector<8x128xi1>
    %844 = vector.broadcast %cst_355 : f32 to vector<8x128xf32>
    %845 = arith.select %843, %833, %844 : vector<8x128xi1>, vector<8x128xf32>
    %846 = arith.index_cast %c7_i32_337 : i32 to index
    %c0_356 = arith.constant 0 : index
    %c0_357 = arith.constant 0 : index
    %847 = vector.load %arg7[%846, %c0_356, %c0_357] : memref<8x8x128xf32, #tpu.memory_space<vmem>>, vector<1x8x128xf32>
    %848 = vector.shape_cast %847 : vector<1x8x128xf32> to vector<8x128xf32>
    %849 = arith.addf %848, %845 : vector<8x128xf32>
    %850 = arith.index_cast %c7_i32_337 : i32 to index
    %c0_358 = arith.constant 0 : index
    %c0_359 = arith.constant 0 : index
    %851 = vector.load %arg7[%850, %c0_358, %c0_359] : memref<8x8x128xf32, #tpu.memory_space<vmem>>, vector<1x8x128xf32>
    %852 = vector.shape_cast %851 : vector<1x8x128xf32> to vector<8x128xf32>
    %853 = vector.shape_cast %849 : vector<8x128xf32> to vector<1x8x128xf32>
    tpu.vector_store %arg7[%850, %c0_358, %c0_359], %853 {strides = array<i32>} : memref<8x8x128xf32, #tpu.memory_space<vmem>>, vector<1x8x128xf32>,
    %c7_i32_360 = arith.constant 7 : i32
    %854 = arith.subi %c7_i32_360, %c7_i32_337 : i32
    %c0_i32_361 = arith.constant 0 : i32
    %c0_i32_362 = arith.constant 0 : i32
    %c384_i32_363 = arith.constant 384 : i32
    %855 = tpu.memref_slice %arg8[%c0_i32_361, %c0_i32_362, %c384_i32_363] : memref<8x8x768xf32, #tpu.memory_space<vmem>> -> memref<8x8x384xf32, #tpu.memory_space<vmem>>
    %856 = arith.index_cast %854 : i32 to index
    %c0_364 = arith.constant 0 : index
    %c0_365 = arith.constant 0 : index
    %857 = vector.load %855[%856, %c0_364, %c0_365] : memref<8x8x384xf32, #tpu.memory_space<vmem>>, vector<1x8x384xf32>
    %858 = vector.shape_cast %857 : vector<1x8x384xf32> to vector<8x384xf32>
    %c1_366 = arith.constant 1 : index
    %c0_367 = arith.constant 0 : index
    %c0_368 = arith.constant 0 : index
    %859 = vector.load %arg9[%c1_366, %c0_367, %c0_368] : memref<2x8x128xf32, #tpu.memory_space<vmem>>, vector<1x8x128xf32>
    %860 = vector.shape_cast %859 : vector<1x8x128xf32> to vector<8x128xf32>
    %861 = arith.truncf %860 : vector<8x128xf32> to vector<8x128xbf16>
    %c1_369 = arith.constant 1 : index
    %c0_370 = arith.constant 0 : index
    %c0_371 = arith.constant 0 : index
    %862 = vector.load %arg4[%c1_369, %c0_370, %c0_371] : memref<2x128x384xbf16, #tpu.memory_space<vmem>>, vector<1x128x384xbf16>
    %863 = vector.shape_cast %862 : vector<1x128x384xbf16> to vector<128x384xbf16>
    %cst_372 = arith.constant dense<0.000000e+00> : vector<8x384xf32>
    %864 = tpu.matmul %861, %863, %cst_372 {dimension_numbers = #tpu.dot_dimension_numbers<[1], [0], [0], [1], [0, 0, 1, 1], [], []>} : vector<8x128xbf16>, vector<128x384xbf16>, vector<8x384xf32> -> vector<8x384xf32>
    %865 = arith.addf %864, %21 : vector<8x384xf32>
    %866 = vector.extract_strided_slice %858 {offsets = [0, 0], sizes = [8, 128], strides = [1, 1]} : vector<8x384xf32> to vector<8x128xf32>
    %867 = vector.extract_strided_slice %865 {offsets = [0, 0], sizes = [8, 128], strides = [1, 1]} : vector<8x384xf32> to vector<8x128xf32>
    %868 = arith.addf %866, %867 : vector<8x128xf32>
    %869 = arith.negf %868 : vector<8x128xf32>
    %870 = math.exp %869 : vector<8x128xf32>
    %cst_373 = arith.constant 1.000000e+00 : f32
    %871 = vector.broadcast %cst_373 : f32 to vector<8x128xf32>
    %872 = arith.addf %871, %870 : vector<8x128xf32>
    %873 = arith.divf %871, %872 : vector<8x128xf32>
    %874 = vector.extract_strided_slice %858 {offsets = [0, 128], sizes = [8, 128], strides = [1, 1]} : vector<8x384xf32> to vector<8x128xf32>
    %875 = vector.extract_strided_slice %865 {offsets = [0, 128], sizes = [8, 128], strides = [1, 1]} : vector<8x384xf32> to vector<8x128xf32>
    %876 = arith.addf %874, %875 : vector<8x128xf32>
    %877 = arith.negf %876 : vector<8x128xf32>
    %878 = math.exp %877 : vector<8x128xf32>
    %cst_374 = arith.constant 1.000000e+00 : f32
    %879 = vector.broadcast %cst_374 : f32 to vector<8x128xf32>
    %880 = arith.addf %879, %878 : vector<8x128xf32>
    %881 = arith.divf %879, %880 : vector<8x128xf32>
    %882 = vector.extract_strided_slice %858 {offsets = [0, 256], sizes = [8, 128], strides = [1, 1]} : vector<8x384xf32> to vector<8x128xf32>
    %883 = vector.extract_strided_slice %865 {offsets = [0, 256], sizes = [8, 128], strides = [1, 1]} : vector<8x384xf32> to vector<8x128xf32>
    %884 = arith.mulf %873, %883 : vector<8x128xf32>
    %885 = arith.addf %882, %884 : vector<8x128xf32>
    %886 = math.tanh %885 : vector<8x128xf32>
    %887 = arith.subf %860, %886 : vector<8x128xf32>
    %888 = arith.mulf %881, %887 : vector<8x128xf32>
    %889 = arith.addf %886, %888 : vector<8x128xf32>
    %890 = vector.broadcast %854 : i32 to vector<8x1xi32>
    %891 = arith.cmpi sgt, %13, %890 : vector<8x1xi32>
    %892 = vector.shape_cast %891 : vector<8x1xi1> to vector<8x1xi1>
    %893 = vector.broadcast %892 : vector<8x1xi1> to vector<8x128xi1>
    %894 = arith.select %893, %889, %860 : vector<8x128xi1>, vector<8x128xf32>
    %c1_375 = arith.constant 1 : index
    %c0_376 = arith.constant 0 : index
    %c0_377 = arith.constant 0 : index
    %895 = vector.load %arg9[%c1_375, %c0_376, %c0_377] : memref<2x8x128xf32, #tpu.memory_space<vmem>>, vector<1x8x128xf32>
    %896 = vector.shape_cast %895 : vector<1x8x128xf32> to vector<8x128xf32>
    %897 = vector.shape_cast %894 : vector<8x128xf32> to vector<1x8x128xf32>
    tpu.vector_store %arg9[%c1_375, %c0_376, %c0_377], %897 {strides = array<i32>} : memref<2x8x128xf32, #tpu.memory_space<vmem>>, vector<1x8x128xf32>,
    %cst_378 = arith.constant 0.000000e+00 : f32
    %898 = vector.shape_cast %891 : vector<8x1xi1> to vector<8x1xi1>
    %899 = vector.broadcast %898 : vector<8x1xi1> to vector<8x128xi1>
    %900 = vector.broadcast %cst_378 : f32 to vector<8x128xf32>
    %901 = arith.select %899, %889, %900 : vector<8x128xi1>, vector<8x128xf32>
    %902 = arith.index_cast %854 : i32 to index
    %c0_379 = arith.constant 0 : index
    %c0_380 = arith.constant 0 : index
    %903 = vector.load %arg7[%902, %c0_379, %c0_380] : memref<8x8x128xf32, #tpu.memory_space<vmem>>, vector<1x8x128xf32>
    %904 = vector.shape_cast %903 : vector<1x8x128xf32> to vector<8x128xf32>
    %905 = arith.addf %904, %901 : vector<8x128xf32>
    %906 = arith.index_cast %854 : i32 to index
    %c0_381 = arith.constant 0 : index
    %c0_382 = arith.constant 0 : index
    %907 = vector.load %arg7[%906, %c0_381, %c0_382] : memref<8x8x128xf32, #tpu.memory_space<vmem>>, vector<1x8x128xf32>
    %908 = vector.shape_cast %907 : vector<1x8x128xf32> to vector<8x128xf32>
    %909 = vector.shape_cast %905 : vector<8x128xf32> to vector<1x8x128xf32>
    tpu.vector_store %arg7[%906, %c0_381, %c0_382], %909 {strides = array<i32>} : memref<8x8x128xf32, #tpu.memory_space<vmem>>, vector<1x8x128xf32>,
    %c8_i32 = arith.constant 8 : i32
    %c0_383 = arith.constant 0 : index
    %c0_384 = arith.constant 0 : index
    %c0_385 = arith.constant 0 : index
    %910 = vector.load %arg7[%c0_383, %c0_384, %c0_385] : memref<8x8x128xf32, #tpu.memory_space<vmem>>, vector<8x8x128xf32>
    %cst_386 = arith.constant 5.000000e-01 : f32
    %911 = vector.broadcast %cst_386 : f32 to vector<8x8x128xf32>
    %912 = arith.mulf %910, %911 : vector<8x8x128xf32>
    %913 = arith.mulf %912, %912 : vector<8x8x128xf32>
    %cst_387 = arith.constant dense<0.000000e+00> : vector<8x8xf32>
    %914 = vector.multi_reduction <add>, %913, %cst_387 [2] : vector<8x8x128xf32> to vector<8x8xf32>
    %915 = vector.shape_cast %914 : vector<8x8xf32> to vector<8x8x1xf32>
    %916 = math.sqrt %915 : vector<8x8x1xf32>
    %cst_388 = arith.constant 9.99999993E-9 : f32
    %917 = vector.broadcast %cst_388 : f32 to vector<8x8x1xf32>
    %918 = arith.addf %916, %917 : vector<8x8x1xf32>
    %919 = tpu.reciprocal %918 {approx = true} : vector<8x8x1xf32> -> vector<8x8x1xf32>
    %920 = vector.broadcast %919 : vector<8x8x1xf32> to vector<8x8x128xf32>
    %921 = arith.mulf %912, %920 : vector<8x8x128xf32>
    %c0_389 = arith.constant 0 : index
    %c0_390 = arith.constant 0 : index
    %c0_391 = arith.constant 0 : index
    %922 = vector.load %arg7[%c0_389, %c0_390, %c0_391] : memref<8x8x128xf32, #tpu.memory_space<vmem>>, vector<8x8x128xf32>
    tpu.vector_store %arg7[%c0_389, %c0_390, %c0_391], %921 {strides = array<i32>} : memref<8x8x128xf32, #tpu.memory_space<vmem>>, vector<8x8x128xf32>,
    return
  }
  func.func @transform_0(%arg0: i32) -> (i32, i32) {
    %c0_i32 = arith.constant 0 : i32
    %c0_i32_0 = arith.constant 0 : i32
    return %arg0, %c0_i32 : i32, i32
  }
  func.func @transform_1(%arg0: i32) -> (i32, i32, i32) {
    %c0_i32 = arith.constant 0 : i32
    %c0_i32_0 = arith.constant 0 : i32
    %c0_i32_1 = arith.constant 0 : i32
    return %c0_i32, %arg0, %c0_i32_0 : i32, i32, i32
  }
  func.func @transform_2(%arg0: i32) -> (i32, i32) {
    %c0_i32 = arith.constant 0 : i32
    %c0_i32_0 = arith.constant 0 : i32
    %c0_i32_1 = arith.constant 0 : i32
    return %c0_i32, %c0_i32_0 : i32, i32
  }
  func.func @transform_3(%arg0: i32) -> (i32, i32, i32) {
    %c0_i32 = arith.constant 0 : i32
    %c0_i32_0 = arith.constant 0 : i32
    %c0_i32_1 = arith.constant 0 : i32
    %c0_i32_2 = arith.constant 0 : i32
    return %c0_i32, %c0_i32_0, %c0_i32_1 : i32, i32, i32
  }
  func.func @transform_4(%arg0: i32) -> (i32, i32) {
    %c0_i32 = arith.constant 0 : i32
    %c0_i32_0 = arith.constant 0 : i32
    %c0_i32_1 = arith.constant 0 : i32
    return %c0_i32, %c0_i32_0 : i32, i32
  }
  func.func @transform_5(%arg0: i32) -> (i32, i32, i32) {
    %c0_i32 = arith.constant 0 : i32
    %c0_i32_0 = arith.constant 0 : i32
    %c0_i32_1 = arith.constant 0 : i32
    %c0_i32_2 = arith.constant 0 : i32
    return %c0_i32, %c0_i32_0, %c0_i32_1 : i32, i32, i32
  }
  func.func @transform_6(%arg0: i32) -> (i32, i32, i32) {
    %c0_i32 = arith.constant 0 : i32
    %c0_i32_0 = arith.constant 0 : i32
    %c0_i32_1 = arith.constant 0 : i32
    return %c0_i32, %arg0, %c0_i32_0 : i32, i32, i32
  }
}

</mosaic_0001>

<llo_original>
// kernel: encoder_text_forward.1
$region0: #{encoder_text_forward.1}
  #allocation0 [shape = 'u32[]', space=smem, size = 0x4, offset = 0x4, fixed_abs, tag = 'smem constant byte address 0x4 - core index']
  #allocation1 [shape = 'u32[144,128]{1,0:T(1,128)}', space=vmem, size = 0x12000, scoped, tag = 'internal scratch']
  #allocation2 [shape = 'f32[8,8,768]{2,1,0:T(8,128)}', space=vmem, size = 0x30000, scoped, tag = 'scratch operand']
  #allocation3 [shape = 'f32[2,8,128]{2,1,0:T(8,128)}', space=vmem, size = 0x2000, scoped, tag = 'scratch operand']
  %s0 = inlined_call_operand.vmem [shape: s32[8,1], index: 0, kind: input, shape index: {}]
  %s1 = inlined_call_operand.vmem [shape: bf16[8,8,128], index: 1, kind: input, shape index: {}]
  %s2 = inlined_call_operand.vmem [shape: bf16[128,768], index: 2, kind: input, shape index: {}]
  %s3 = inlined_call_operand.hbm [shape: bf16[2,128,384], index: 3, kind: input, shape index: {}]
  %s4 = inlined_call_operand.vmem [shape: f32[1,768], index: 4, kind: input, shape index: {}]
  %s5 = inlined_call_operand.vmem [shape: f32[2,1,384], index: 5, kind: input, shape index: {}]
  %s6 = inlined_call_operand.vmem [shape: f32[8,8,128], index: 6, kind: output, shape index: {}]
  %s7 = sld [smem:[#allocation0]]
  $region38: #{encoder_text_forward.1} parent=0
    _
  %s9 = ssub.s32 1, %s7
  %s10 = scalar_select 0, %s9, %s7
  $region1: #{encoder_text_forward.1} parent=0
    #allocation4 [shape = 'u8[196608]{0}', space=vmem, size = 0x30000, scoped, tag = 'input window, operand 3, single buffered']
    #allocation5 [shape = 's32[1]{0}', space=sflag, size = 0x4, scoped, tag = 'scoped memory for encoder_text_forward.1']
    %11 = vsyncpa [#allocation5], 0
    // Predicated region
    $region2: #{encoder_text_forward.1} parent=1 // pred_check
      _
    $region3: #{encoder_text_forward.1} parent=1 // pred_check_branch
      %13 = sbr.rel (0) target = $region5
    $region4: #{encoder_text_forward.1} parent=1 // pred_region
      _
    $region5: #{encoder_text_forward.1} parent=1 // pred_fallthru
      _
    // Predicated region
    $region6: #{encoder_text_forward.1} parent=1 // pred_check
      _
    $region7: #{encoder_text_forward.1} parent=1 // pred_check_branch
      %15 = sbr.rel (0) target = $region9
    $region8: #{encoder_text_forward.1} parent=1 // pred_region
      _
    $region9: #{encoder_text_forward.1} parent=1 // pred_fallthru
      _
    // Predicated region
    $region10: #{encoder_text_forward.1} parent=1 // pred_check
      _
    $region11: #{encoder_text_forward.1} parent=1 // pred_check_branch
      %17 = sbr.rel (0) target = $region13
    $region12: #{encoder_text_forward.1} parent=1 // pred_region
      _
    $region13: #{encoder_text_forward.1} parent=1 // pred_fallthru
      _
    // Predicated region
    $region14: #{encoder_text_forward.1} parent=1 // pred_check
      _
    $region15: #{encoder_text_forward.1} parent=1 // pred_check_branch
      %19 = sbr.rel (0) target = $region17
    $region16: #{encoder_text_forward.1} parent=1 // pred_region
      %s21 = ssub.s32 6144, 6144
      %22 = vsyncadd [#allocation5], %s21
      %s23 = sshll.u32 [#allocation4], 4
      %s24 = int_to_ptr.vmem [resolvable:$true] %s23
      %29 = dma.hbm_to_vmem [thread:$0]  %s3, 6144, %s24, [#allocation5], 192, 192, 12
    $region17: #{encoder_text_forward.1} parent=1 // pred_fallthru
      _
    // Predicated region
    $region18: #{encoder_text_forward.1} parent=1 // pred_check
      _
    $region19: #{encoder_text_forward.1} parent=1 // pred_check_branch
      %31 = sbr.rel (0) target = $region21
    $region20: #{encoder_text_forward.1} parent=1 // pred_region
      _
    $region21: #{encoder_text_forward.1} parent=1 // pred_fallthru
      _
    // Predicated region
    $region22: #{encoder_text_forward.1} parent=1 // pred_check
      _
    $region23: #{encoder_text_forward.1} parent=1 // pred_check_branch
      %33 = sbr.rel (0) target = $region25
    $region24: #{encoder_text_forward.1} parent=1 // pred_region
      _
    $region25: #{encoder_text_forward.1} parent=1 // pred_fallthru
      _
    // Predicated region
    $region26: #{encoder_text_forward.1} parent=1 // pred_check
      _
    $region27: #{encoder_text_forward.1} parent=1 // pred_check_branch
      %35 = sbr.rel (0) target = $region29
    $region28: #{encoder_text_forward.1} parent=1 // pred_region
      %36 = dma.done [#allocation5], 6144
    $region29: #{encoder_text_forward.1} parent=1 // pred_fallthru
      _
    %v38 = vld [vmem:[%s1] sm:$0xf]
    %v39 = vld [vmem:[%s1 + $0x4] sm:$0xf]
    %v40 = vld [vmem:[%s1 + $0x8] sm:$0xf]
    %v41 = vld [vmem:[%s1 + $0xc] sm:$0xf]
    %v42 = vld [vmem:[%s1 + $0x10] sm:$0xf]
    %v43 = vld [vmem:[%s1 + $0x14] sm:$0xf]
    %v44 = vld [vmem:[%s1 + $0x18] sm:$0xf]
    %v45 = vld [vmem:[%s1 + $0x1c] sm:$0xf]
    %v46 = vld [vmem:[%s2] sm:$0xff]
    %v47 = vld [vmem:[%s2 + $0x8] sm:$0xff]
    %v48 = vld [vmem:[%s2 + $0x10] sm:$0xff]
    %v49 = vld [vmem:[%s2 + $0x18] sm:$0xff]
    %v50 = vld [vmem:[%s2 + $0x20] sm:$0xff]
    %v51 = vld [vmem:[%s2 + $0x28] sm:$0xff]
    %v52 = vld [vmem:[%s2 + $0x30] sm:$0xff]
    %v53 = vld [vmem:[%s2 + $0x38] sm:$0xff]
    %v54 = vld [vmem:[%s2 + $0x40] sm:$0xff]
    %v55 = vld [vmem:[%s2 + $0x48] sm:$0xff]
    %v56 = vld [vmem:[%s2 + $0x50] sm:$0xff]
    %v57 = vld [vmem:[%s2 + $0x58] sm:$0xff]
    %v58 = vld [vmem:[%s2 + $0x60] sm:$0xff]
    %v59 = vld [vmem:[%s2 + $0x68] sm:$0xff]
    %v60 = vld [vmem:[%s2 + $0x70] sm:$0xff]
    %v61 = vld [vmem:[%s2 + $0x78] sm:$0xff]
    %v62 = vld [vmem:[%s2 + $0x80] sm:$0xff]
    %v63 = vld [vmem:[%s2 + $0x88] sm:$0xff]
    %v64 = vld [vmem:[%s2 + $0x90] sm:$0xff]
    %v65 = vld [vmem:[%s2 + $0x98] sm:$0xff]
    %v66 = vld [vmem:[%s2 + $0xa0] sm:$0xff]
    %v67 = vld [vmem:[%s2 + $0xa8] sm:$0xff]
    %v68 = vld [vmem:[%s2 + $0xb0] sm:$0xff]
    %v69 = vld [vmem:[%s2 + $0xb8] sm:$0xff]
    %v70 = vld [vmem:[%s2 + $0xc0] sm:$0xff]
    %v71 = vld [vmem:[%s2 + $0xc8] sm:$0xff]
    %v72 = vld [vmem:[%s2 + $0xd0] sm:$0xff]
    %v73 = vld [vmem:[%s2 + $0xd8] sm:$0xff]
    %v74 = vld [vmem:[%s2 + $0xe0] sm:$0xff]
    %v75 = vld [vmem:[%s2 + $0xe8] sm:$0xff]
    %v76 = vld [vmem:[%s2 + $0xf0] sm:$0xff]
    %v77 = vld [vmem:[%s2 + $0xf8] sm:$0xff]
    %v78 = vld [vmem:[%s2 + $0x100] sm:$0xff]
    %v79 = vld [vmem:[%s2 + $0x108] sm:$0xff]
    %v80 = vld [vmem:[%s2 + $0x110] sm:$0xff]
    %v81 = vld [vmem:[%s2 + $0x118] sm:$0xff]
    %v82 = vld [vmem:[%s2 + $0x120] sm:$0xff]
    %v83 = vld [vmem:[%s2 + $0x128] sm:$0xff]
    %v84 = vld [vmem:[%s2 + $0x130] sm:$0xff]
    %v85 = vld [vmem:[%s2 + $0x138] sm:$0xff]
    %v86 = vld [vmem:[%s2 + $0x140] sm:$0xff]
    %v87 = vld [vmem:[%s2 + $0x148] sm:$0xff]
    %v88 = vld [vmem:[%s2 + $0x150] sm:$0xff]
    %v89 = vld [vmem:[%s2 + $0x158] sm:$0xff]
    %v90 = vld [vmem:[%s2 + $0x160] sm:$0xff]
    %v91 = vld [vmem:[%s2 + $0x168] sm:$0xff]
    %v92 = vld [vmem:[%s2 + $0x170] sm:$0xff]
    %v93 = vld [vmem:[%s2 + $0x178] sm:$0xff]
    %v94 = vld [vmem:[%s4] sm:$0x3f]
    %v96 = vlaneseq
    %v97 = vshrl.u32 %v96, 7
    %v98 = vsub.s32 0, %v97
    %v99 = vrot.slane %v94, %v98
    %v100 = vlaneseq
    %v101 = vshrl.u32 %v100, 7
    %v102 = vsub.s32 1, %v101
    %v103 = vrot.slane %v94, %v102
    %v104 = vlaneseq
    %v105 = vshrl.u32 %v104, 7
    %v106 = vsub.s32 2, %v105
    %v107 = vrot.slane %v94, %v106
    %v108 = vlaneseq
    %v109 = vshrl.u32 %v108, 7
    %v110 = vsub.s32 3, %v109
    %v111 = vrot.slane %v94, %v110
    %v112 = vlaneseq
    %v113 = vshrl.u32 %v112, 7
    %v114 = vsub.s32 4, %v113
    %v115 = vrot.slane %v94, %v114
    %v116 = vlaneseq
    %v117 = vshrl.u32 %v116, 7
    %v118 = vsub.s32 5, %v117
    %v119 = vrot.slane %v94, %v118
    %v134 = vunpack.c.l.b16 %v38
    %v135 = vunpack.c.l.b16 %v39
    %v136 = vunpack.c.l.b16 %v40
    %v137 = vunpack.c.l.b16 %v41
    %v138 = vunpack.c.l.b16 %v42
    %v139 = vunpack.c.l.b16 %v43
    %v140 = vunpack.c.l.b16 %v44
    %v141 = vunpack.c.l.b16 %v45
    %v142 = vpack.c.b16 %v135, %v134
    %v143 = vpack.c.b16 %v137, %v136
    %v144 = vpack.c.b16 %v139, %v138
    %v145 = vpack.c.b16 %v141, %v140
    %v198 = vunpack.c.l.b16 %v46
    %v199 = vunpack.c.h.b16 %v46
    %v200 = vunpack.c.l.b16 %v47
    %v201 = vunpack.c.h.b16 %v47
    %v202 = vunpack.c.l.b16 %v48
    %v203 = vunpack.c.h.b16 %v48
    %v204 = vunpack.c.l.b16 %v49
    %v205 = vunpack.c.h.b16 %v49
    %v206 = vunpack.c.l.b16 %v50
    %v207 = vunpack.c.h.b16 %v50
    %v208 = vunpack.c.l.b16 %v51
    %v209 = vunpack.c.h.b16 %v51
    %v210 = vunpack.c.l.b16 %v52
    %v211 = vunpack.c.h.b16 %v52
    %v212 = vunpack.c.l.b16 %v53
    %v213 = vunpack.c.h.b16 %v53
    %v214 = vunpack.c.l.b16 %v54
    %v215 = vunpack.c.h.b16 %v54
    %v216 = vunpack.c.l.b16 %v55
    %v217 = vunpack.c.h.b16 %v55
    %v218 = vunpack.c.l.b16 %v56
    %v219 = vunpack.c.h.b16 %v56
    %v220 = vunpack.c.l.b16 %v57
    %v221 = vunpack.c.h.b16 %v57
    %v222 = vunpack.c.l.b16 %v58
    %v223 = vunpack.c.h.b16 %v58
    %v224 = vunpack.c.l.b16 %v59
    %v225 = vunpack.c.h.b16 %v59
    %v226 = vunpack.c.l.b16 %v60
    %v227 = vunpack.c.h.b16 %v60
    %v228 = vunpack.c.l.b16 %v61
    %v229 = vunpack.c.h.b16 %v61
    %v230 = vunpack.c.l.b16 %v62
    %v231 = vunpack.c.h.b16 %v62
    %v232 = vunpack.c.l.b16 %v63
    %v233 = vunpack.c.h.b16 %v63
    %v234 = vunpack.c.l.b16 %v64
    %v235 = vunpack.c.h.b16 %v64
    %v236 = vunpack.c.l.b16 %v65
    %v237 = vunpack.c.h.b16 %v65
    %v238 = vunpack.c.l.b16 %v66
    %v239 = vunpack.c.h.b16 %v66
    %v240 = vunpack.c.l.b16 %v67
    %v241 = vunpack.c.h.b16 %v67
    %v242 = vunpack.c.l.b16 %v68
    %v243 = vunpack.c.h.b16 %v68
    %v244 = vunpack.c.l.b16 %v69
    %v245 = vunpack.c.h.b16 %v69
    %v246 = vunpack.c.l.b16 %v70
    %v247 = vunpack.c.h.b16 %v70
    %v248 = vunpack.c.l.b16 %v71
    %v249 = vunpack.c.h.b16 %v71
    %v250 = vunpack.c.l.b16 %v72
    %v251 = vunpack.c.h.b16 %v72
    %v252 = vunpack.c.l.b16 %v73
    %v253 = vunpack.c.h.b16 %v73
    %v254 = vunpack.c.l.b16 %v74
    %v255 = vunpack.c.h.b16 %v74
    %v256 = vunpack.c.l.b16 %v75
    %v257 = vunpack.c.h.b16 %v75
    %v258 = vunpack.c.l.b16 %v76
    %v259 = vunpack.c.h.b16 %v76
    %v260 = vunpack.c.l.b16 %v77
    %v261 = vunpack.c.h.b16 %v77
    %v262 = vunpack.c.l.b16 %v78
    %v263 = vunpack.c.h.b16 %v78
    %v264 = vunpack.c.l.b16 %v79
    %v265 = vunpack.c.h.b16 %v79
    %v266 = vunpack.c.l.b16 %v80
    %v267 = vunpack.c.h.b16 %v80
    %v268 = vunpack.c.l.b16 %v81
    %v269 = vunpack.c.h.b16 %v81
    %v270 = vunpack.c.l.b16 %v82
    %v271 = vunpack.c.h.b16 %v82
    %v272 = vunpack.c.l.b16 %v83
    %v273 = vunpack.c.h.b16 %v83
    %v274 = vunpack.c.l.b16 %v84
    %v275 = vunpack.c.h.b16 %v84
    %v276 = vunpack.c.l.b16 %v85
    %v277 = vunpack.c.h.b16 %v85
    %v278 = vunpack.c.l.b16 %v86
    %v279 = vunpack.c.h.b16 %v86
    %v280 = vunpack.c.l.b16 %v87
    %v281 = vunpack.c.h.b16 %v87
    %v282 = vunpack.c.l.b16 %v88
    %v283 = vunpack.c.h.b16 %v88
    %v284 = vunpack.c.l.b16 %v89
    %v285 = vunpack.c.h.b16 %v89
    %v286 = vunpack.c.l.b16 %v90
    %v287 = vunpack.c.h.b16 %v90
    %v288 = vunpack.c.l.b16 %v91
    %v289 = vunpack.c.h.b16 %v91
    %v290 = vunpack.c.l.b16 %v92
    %v291 = vunpack.c.h.b16 %v92
    %v292 = vunpack.c.l.b16 %v93
    %v293 = vunpack.c.h.b16 %v93
    %v294 = vpack.c.b16 %v204, %v198
    %v295 = vpack.c.b16 %v205, %v199
    %v296 = vpack.c.b16 %v206, %v200
    %v297 = vpack.c.b16 %v207, %v201
    %v298 = vpack.c.b16 %v208, %v202
    %v299 = vpack.c.b16 %v209, %v203
    %v300 = vpack.c.b16 %v216, %v210
    %v301 = vpack.c.b16 %v217, %v211
    %v302 = vpack.c.b16 %v218, %v212
    %v303 = vpack.c.b16 %v219, %v213
    %v304 = vpack.c.b16 %v220, %v214
    %v305 = vpack.c.b16 %v221, %v215
    %v306 = vpack.c.b16 %v228, %v222
    %v307 = vpack.c.b16 %v229, %v223
    %v308 = vpack.c.b16 %v230, %v224
    %v309 = vpack.c.b16 %v231, %v225
    %v310 = vpack.c.b16 %v232, %v226
    %v311 = vpack.c.b16 %v233, %v227
    %v312 = vpack.c.b16 %v240, %v234
    %v313 = vpack.c.b16 %v241, %v235
    %v314 = vpack.c.b16 %v242, %v236
    %v315 = vpack.c.b16 %v243, %v237
    %v316 = vpack.c.b16 %v244, %v238
    %v317 = vpack.c.b16 %v245, %v239
    %v318 = vpack.c.b16 %v252, %v246
    %v319 = vpack.c.b16 %v253, %v247
    %v320 = vpack.c.b16 %v254, %v248
    %v321 = vpack.c.b16 %v255, %v249
    %v322 = vpack.c.b16 %v256, %v250
    %v323 = vpack.c.b16 %v257, %v251
    %v324 = vpack.c.b16 %v264, %v258
    %v325 = vpack.c.b16 %v265, %v259
    %v326 = vpack.c.b16 %v266, %v260
    %v327 = vpack.c.b16 %v267, %v261
    %v328 = vpack.c.b16 %v268, %v262
    %v329 = vpack.c.b16 %v269, %v263
    %v330 = vpack.c.b16 %v276, %v270
    %v331 = vpack.c.b16 %v277, %v271
    %v332 = vpack.c.b16 %v278, %v272
    %v333 = vpack.c.b16 %v279, %v273
    %v334 = vpack.c.b16 %v280, %v274
    %v335 = vpack.c.b16 %v281, %v275
    %v336 = vpack.c.b16 %v288, %v282
    %v337 = vpack.c.b16 %v289, %v283
    %v338 = vpack.c.b16 %v290, %v284
    %v339 = vpack.c.b16 %v291, %v285
    %v340 = vpack.c.b16 %v292, %v286
    %v341 = vpack.c.b16 %v293, %v287
    %390 = vmatprep.subr.bf16.mxu0 %v337
    %391 = vmatpush1.bf16.msra.mxu0 %v336
    %392 = vmatprep.subr.bf16.mxu0 %v331
    %393 = vmatpush1.bf16.msra.mxu0 %v330
    %394 = vmatprep.subr.bf16.mxu0 %v325
    %395 = vmatpush1.bf16.msra.mxu0 %v324
    %396 = vmatprep.subr.bf16.mxu0 %v319
    %397 = vmatpush1.bf16.msra.mxu0 %v318
    %398 = vmatprep.subr.bf16.mxu0 %v313
    %399 = vmatpush1.bf16.msra.mxu0 %v312
    %400 = vmatprep.subr.bf16.mxu0 %v307
    %401 = vmatpush1.bf16.msra.mxu0 %v306
    %402 = vmatprep.subr.bf16.mxu0 %v301
    %403 = vmatpush1.bf16.msra.mxu0 %v300
    %404 = vmatprep.subr.bf16.mxu0 %v295
    %405 = vmatpush1.bf16.msra.mxu0 %v294
    %406 = vmatprep.subr.bf16.mxu0 0
    %407 = vmatpush2.bf16.msra.mxu0 0
    %408 = vmatprep.subr.bf16.mxu0 0
    %409 = vmatpush2.bf16.msra.mxu0 0
    %410 = vmatprep.subr.bf16.mxu0 0
    %411 = vmatpush2.bf16.msra.mxu0 0
    %412 = vmatprep.subr.bf16.mxu0 0
    %413 = vmatpush2.bf16.msra.mxu0 0
    %414 = vmatprep.subr.bf16.mxu0 0
    %415 = vmatpush2.bf16.msra.mxu0 0
    %416 = vmatprep.subr.bf16.mxu0 0
    %417 = vmatpush2.bf16.msra.mxu0 0
    %418 = vmatprep.subr.bf16.mxu0 0
    %419 = vmatpush2.bf16.msra.mxu0 0
    %420 = vmatprep.subr.bf16.mxu0 0
    %421 = vmatpush2.bf16.msra.mxu0 0
    %422 = vmatprep.mubr.bf16.mxu0 0
    %423 = vmatmul.mubr.bf16.gmra.mxu0 %v142
    %v424 = vpop.f32.mrf.mxu0
    %v425 = vadd.f32 %v99, %v424
    %v426 = vpop.f32.mrf.mxu0
    %v427 = vadd.f32 %v103, %v426
    %v428 = vpop.f32.mrf.mxu0
    %v429 = vadd.f32 %v99, %v428
    %v430 = vpop.f32.mrf.mxu0
    %v431 = vadd.f32 %v103, %v430
    %432 = vmatprep.mubr.bf16.mxu0 0
    %433 = vmatmul.mubr.bf16.gmra.mxu0 %v143
    %v434 = vpop.f32.mrf.mxu0
    %v435 = vadd.f32 %v99, %v434
    %v436 = vpop.f32.mrf.mxu0
    %v437 = vadd.f32 %v103, %v436
    %v438 = vpop.f32.mrf.mxu0
    %v439 = vadd.f32 %v99, %v438
    %v440 = vpop.f32.mrf.mxu0
    %v441 = vadd.f32 %v103, %v440
    %442 = vmatprep.mubr.bf16.mxu0 0
    %443 = vmatmul.mubr.bf16.gmra.mxu0 %v144
    %v444 = vpop.f32.mrf.mxu0
    %v445 = vadd.f32 %v99, %v444
    %v446 = vpop.f32.mrf.mxu0
    %v447 = vadd.f32 %v103, %v446
    %v448 = vpop.f32.mrf.mxu0
    %v449 = vadd.f32 %v99, %v448
    %v450 = vpop.f32.mrf.mxu0
    %v451 = vadd.f32 %v103, %v450
    %452 = vmatprep.mubr.bf16.mxu0 0
    %453 = vmatmul.mubr.bf16.gmra.mxu0 %v145
    %v454 = vpop.f32.mrf.mxu0
    %v455 = vadd.f32 %v99, %v454
    %v456 = vpop.f32.mrf.mxu0
    %v457 = vadd.f32 %v103, %v456
    %v458 = vpop.f32.mrf.mxu0
    %v459 = vadd.f32 %v99, %v458
    %v460 = vpop.f32.mrf.mxu0
    %v461 = vadd.f32 %v103, %v460
    %462 = vdwg.mxu0
    %463 = vmatprep.subr.bf16.mxu0 %v339
    %464 = vmatpush1.bf16.msra.mxu0 %v338
    %465 = vmatprep.subr.bf16.mxu0 %v333
    %466 = vmatpush1.bf16.msra.mxu0 %v332
    %467 = vmatprep.subr.bf16.mxu0 %v327
    %468 = vmatpush1.bf16.msra.mxu0 %v326
    %469 = vmatprep.subr.bf16.mxu0 %v321
    %470 = vmatpush1.bf16.msra.mxu0 %v320
    %471 = vmatprep.subr.bf16.mxu0 %v315
    %472 = vmatpush1.bf16.msra.mxu0 %v314
    %473 = vmatprep.subr.bf16.mxu0 %v309
    %474 = vmatpush1.bf16.msra.mxu0 %v308
    %475 = vmatprep.subr.bf16.mxu0 %v303
    %476 = vmatpush1.bf16.msra.mxu0 %v302
    %477 = vmatprep.subr.bf16.mxu0 %v297
    %478 = vmatpush1.bf16.msra.mxu0 %v296
    %479 = vmatprep.subr.bf16.mxu0 0
    %480 = vmatpush2.bf16.msra.mxu0 0
    %481 = vmatprep.subr.bf16.mxu0 0
    %482 = vmatpush2.bf16.msra.mxu0 0
    %483 = vmatprep.subr.bf16.mxu0 0
    %484 = vmatpush2.bf16.msra.mxu0 0
    %485 = vmatprep.subr.bf16.mxu0 0
    %486 = vmatpush2.bf16.msra.mxu0 0
    %487 = vmatprep.subr.bf16.mxu0 0
    %488 = vmatpush2.bf16.msra.mxu0 0
    %489 = vmatprep.subr.bf16.mxu0 0
    %490 = vmatpush2.bf16.msra.mxu0 0
    %491 = vmatprep.subr.bf16.mxu0 0
    %492 = vmatpush2.bf16.msra.mxu0 0
    %493 = vmatprep.subr.bf16.mxu0 0
    %494 = vmatpush2.bf16.msra.mxu0 0
    %495 = vmatprep.mubr.bf16.mxu0 0
    %496 = vmatmul.mubr.bf16.gmra.mxu0 %v142
    %v497 = vpop.f32.mrf.mxu0
    %v498 = vadd.f32 %v107, %v497
    %v499 = vpop.f32.mrf.mxu0
    %v500 = vadd.f32 %v111, %v499
    %v501 = vpop.f32.mrf.mxu0
    %v502 = vadd.f32 %v107, %v501
    %v503 = vpop.f32.mrf.mxu0
    %v504 = vadd.f32 %v111, %v503
    %505 = vmatprep.mubr.bf16.mxu0 0
    %506 = vmatmul.mubr.bf16.gmra.mxu0 %v143
    %v507 = vpop.f32.mrf.mxu0
    %v508 = vadd.f32 %v107, %v507
    %v509 = vpop.f32.mrf.mxu0
    %v510 = vadd.f32 %v111, %v509
    %v511 = vpop.f32.mrf.mxu0
    %v512 = vadd.f32 %v107, %v511
    %v513 = vpop.f32.mrf.mxu0
    %v514 = vadd.f32 %v111, %v513
    %515 = vmatprep.mubr.bf16.mxu0 0
    %516 = vmatmul.mubr.bf16.gmra.mxu0 %v144
    %v517 = vpop.f32.mrf.mxu0
    %v518 = vadd.f32 %v107, %v517
    %v519 = vpop.f32.mrf.mxu0
    %v520 = vadd.f32 %v111, %v519
    %v521 = vpop.f32.mrf.mxu0
    %v522 = vadd.f32 %v107, %v521
    %v523 = vpop.f32.mrf.mxu0
    %v524 = vadd.f32 %v111, %v523
    %525 = vmatprep.mubr.bf16.mxu0 0
    %526 = vmatmul.mubr.bf16.gmra.mxu0 %v145
    %v527 = vpop.f32.mrf.mxu0
    %v528 = vadd.f32 %v107, %v527
    %v529 = vpop.f32.mrf.mxu0
    %v530 = vadd.f32 %v111, %v529
    %v531 = vpop.f32.mrf.mxu0
    %v532 = vadd.f32 %v107, %v531
    %v533 = vpop.f32.mrf.mxu0
    %v534 = vadd.f32 %v111, %v533
    %535 = vdwg.mxu0
    %536 = vmatprep.subr.bf16.mxu0 %v341
    %537 = vmatpush1.bf16.msra.mxu0 %v340
    %538 = vmatprep.subr.bf16.mxu0 %v335
    %539 = vmatpush1.bf16.msra.mxu0 %v334
    %540 = vmatprep.subr.bf16.mxu0 %v329
    %541 = vmatpush1.bf16.msra.mxu0 %v328
    %542 = vmatprep.subr.bf16.mxu0 %v323
    %543 = vmatpush1.bf16.msra.mxu0 %v322
    %544 = vmatprep.subr.bf16.mxu0 %v317
    %545 = vmatpush1.bf16.msra.mxu0 %v316
    %546 = vmatprep.subr.bf16.mxu0 %v311
    %547 = vmatpush1.bf16.msra.mxu0 %v310
    %548 = vmatprep.subr.bf16.mxu0 %v305
    %549 = vmatpush1.bf16.msra.mxu0 %v304
    %550 = vmatprep.subr.bf16.mxu0 %v299
    %551 = vmatpush1.bf16.msra.mxu0 %v298
    %552 = vmatprep.subr.bf16.mxu0 0
    %553 = vmatpush2.bf16.msra.mxu0 0
    %554 = vmatprep.subr.bf16.mxu0 0
    %555 = vmatpush2.bf16.msra.mxu0 0
    %556 = vmatprep.subr.bf16.mxu0 0
    %557 = vmatpush2.bf16.msra.mxu0 0
    %558 = vmatprep.subr.bf16.mxu0 0
    %559 = vmatpush2.bf16.msra.mxu0 0
    %560 = vmatprep.subr.bf16.mxu0 0
    %561 = vmatpush2.bf16.msra.mxu0 0
    %562 = vmatprep.subr.bf16.mxu0 0
    %563 = vmatpush2.bf16.msra.mxu0 0
    %564 = vmatprep.subr.bf16.mxu0 0
    %565 = vmatpush2.bf16.msra.mxu0 0
    %566 = vmatprep.subr.bf16.mxu0 0
    %567 = vmatpush2.bf16.msra.mxu0 0
    %568 = vmatprep.mubr.bf16.mxu0 0
    %569 = vmatmul.mubr.bf16.gmra.mxu0 %v142
    %v570 = vpop.f32.mrf.mxu0
    %v571 = vadd.f32 %v115, %v570
    %v572 = vpop.f32.mrf.mxu0
    %v573 = vadd.f32 %v119, %v572
    %v574 = vpop.f32.mrf.mxu0
    %v575 = vadd.f32 %v115, %v574
    %v576 = vpop.f32.mrf.mxu0
    %v577 = vadd.f32 %v119, %v576
    %578 = vmatprep.mubr.bf16.mxu0 0
    %579 = vmatmul.mubr.bf16.gmra.mxu0 %v143
    %v580 = vpop.f32.mrf.mxu0
    %v581 = vadd.f32 %v115, %v580
    %v582 = vpop.f32.mrf.mxu0
    %v583 = vadd.f32 %v119, %v582
    %v584 = vpop.f32.mrf.mxu0
    %v585 = vadd.f32 %v115, %v584
    %v586 = vpop.f32.mrf.mxu0
    %v587 = vadd.f32 %v119, %v586
    %588 = vmatprep.mubr.bf16.mxu0 0
    %589 = vmatmul.mubr.bf16.gmra.mxu0 %v144
    %v590 = vpop.f32.mrf.mxu0
    %v591 = vadd.f32 %v115, %v590
    %v592 = vpop.f32.mrf.mxu0
    %v593 = vadd.f32 %v119, %v592
    %v594 = vpop.f32.mrf.mxu0
    %v595 = vadd.f32 %v115, %v594
    %v596 = vpop.f32.mrf.mxu0
    %v597 = vadd.f32 %v119, %v596
    %598 = vmatprep.mubr.bf16.mxu0 0
    %599 = vmatmul.mubr.bf16.gmra.mxu0 %v145
    %v600 = vpop.f32.mrf.mxu0
    %v601 = vadd.f32 %v115, %v600
    %v602 = vpop.f32.mrf.mxu0
    %v603 = vadd.f32 %v119, %v602
    %v604 = vpop.f32.mrf.mxu0
    %v605 = vadd.f32 %v115, %v604
    %v606 = vpop.f32.mrf.mxu0
    %v607 = vadd.f32 %v119, %v606
    %608 = vdwg.mxu0
    %609 = vst [vmem:[#allocation2] sm:$0xff] %v425
    %610 = vst [vmem:[#allocation2 + $0x8] sm:$0xff] %v427
    %611 = vst [vmem:[#allocation2 + $0x10] sm:$0xff] %v498
    %612 = vst [vmem:[#allocation2 + $0x18] sm:$0xff] %v500
    %613 = vst [vmem:[#allocation2 + $0x20] sm:$0xff] %v571
    %614 = vst [vmem:[#allocation2 + $0x28] sm:$0xff] %v573
    %615 = vst [vmem:[#allocation2 + $0x30] sm:$0xff] %v429
    %616 = vst [vmem:[#allocation2 + $0x38] sm:$0xff] %v431
    %617 = vst [vmem:[#allocation2 + $0x40] sm:$0xff] %v502
    %618 = vst [vmem:[#allocation2 + $0x48] sm:$0xff] %v504
    %619 = vst [vmem:[#allocation2 + $0x50] sm:$0xff] %v575
    %620 = vst [vmem:[#allocation2 + $0x58] sm:$0xff] %v577
    %621 = vst [vmem:[#allocation2 + $0x60] sm:$0xff] %v435
    %622 = vst [vmem:[#allocation2 + $0x68] sm:$0xff] %v437
    %623 = vst [vmem:[#allocation2 + $0x70] sm:$0xff] %v508
    %624 = vst [vmem:[#allocation2 + $0x78] sm:$0xff] %v510
    %625 = vst [vmem:[#allocation2 + $0x80] sm:$0xff] %v581
    %626 = vst [vmem:[#allocation2 + $0x88] sm:$0xff] %v583
    %627 = vst [vmem:[#allocation2 + $0x90] sm:$0xff] %v439
    %628 = vst [vmem:[#allocation2 + $0x98] sm:$0xff] %v441
    %629 = vst [vmem:[#allocation2 + $0xa0] sm:$0xff] %v512
    %630 = vst [vmem:[#allocation2 + $0xa8] sm:$0xff] %v514
    %631 = vst [vmem:[#allocation2 + $0xb0] sm:$0xff] %v585
    %632 = vst [vmem:[#allocation2 + $0xb8] sm:$0xff] %v587
    %633 = vst [vmem:[#allocation2 + $0xc0] sm:$0xff] %v445
    %634 = vst [vmem:[#allocation2 + $0xc8] sm:$0xff] %v447
    %635 = vst [vmem:[#allocation2 + $0xd0] sm:$0xff] %v518
    %636 = vst [vmem:[#allocation2 + $0xd8] sm:$0xff] %v520
    %637 = vst [vmem:[#allocation2 + $0xe0] sm:$0xff] %v591
    %638 = vst [vmem:[#allocation2 + $0xe8] sm:$0xff] %v593
    %639 = vst [vmem:[#allocation2 + $0xf0] sm:$0xff] %v449
    %640 = vst [vmem:[#allocation2 + $0xf8] sm:$0xff] %v451
    %641 = vst [vmem:[#allocation2 + $0x100] sm:$0xff] %v522
    %642 = vst [vmem:[#allocation2 + $0x108] sm:$0xff] %v524
    %643 = vst [vmem:[#allocation2 + $0x110] sm:$0xff] %v595
    %644 = vst [vmem:[#allocation2 + $0x118] sm:$0xff] %v597
    %645 = vst [vmem:[#allocation2 + $0x120] sm:$0xff] %v455
    %646 = vst [vmem:[#allocation2 + $0x128] sm:$0xff] %v457
    %647 = vst [vmem:[#allocation2 + $0x130] sm:$0xff] %v528
    %648 = vst [vmem:[#allocation2 + $0x138] sm:$0xff] %v530
    %649 = vst [vmem:[#allocation2 + $0x140] sm:$0xff] %v601
    %650 = vst [vmem:[#allocation2 + $0x148] sm:$0xff] %v603
    %651 = vst [vmem:[#allocation2 + $0x150] sm:$0xff] %v459
    %652 = vst [vmem:[#allocation2 + $0x158] sm:$0xff] %v461
    %653 = vst [vmem:[#allocation2 + $0x160] sm:$0xff] %v532
    %654 = vst [vmem:[#allocation2 + $0x168] sm:$0xff] %v534
    %655 = vst [vmem:[#allocation2 + $0x170] sm:$0xff] %v605
    %656 = vst [vmem:[#allocation2 + $0x178] sm:$0xff] %v607
    %657 = vst [vmem:[#allocation3] sm:$0xff] 0.0
    %658 = vst [vmem:[#allocation3 + $0x8] sm:$0xff] 0.0
    %659 = vst [vmem:[%s6] sm:$0xff] 0.0
    %660 = vst [vmem:[%s6 + $0x8] sm:$0xff] 0.0
    %661 = vst [vmem:[%s6 + $0x10] sm:$0xff] 0.0
    %662 = vst [vmem:[%s6 + $0x18] sm:$0xff] 0.0
    %663 = vst [vmem:[%s6 + $0x20] sm:$0xff] 0.0
    %664 = vst [vmem:[%s6 + $0x28] sm:$0xff] 0.0
    %665 = vst [vmem:[%s6 + $0x30] sm:$0xff] 0.0
    %666 = vst [vmem:[%s6 + $0x38] sm:$0xff] 0.0
    %v667 = vld [vmem:[%s0] sm:$0xff]
    %v668 = vld [vmem:[%s5] sm:$0x7]
    %v670 = vlaneseq
    %v671 = vshrl.u32 %v670, 7
    %v672 = vsub.s32 0, %v671
    %v673 = vrot.slane %v668, %v672
    %v674 = vlaneseq
    %v675 = vshrl.u32 %v674, 7
    %v676 = vsub.s32 1, %v675
    %v677 = vrot.slane %v668, %v676
    %v678 = vlaneseq
    %v679 = vshrl.u32 %v678, 7
    %v680 = vsub.s32 2, %v679
    %v681 = vrot.slane %v668, %v680
    %s685 = scalar_lea.vmem %s5, 3
    %v686 = vld [vmem:[%s685] sm:$0x7]
    %v688 = vlaneseq
    %v689 = vshrl.u32 %v688, 7
    %v690 = vsub.s32 0, %v689
    %v691 = vrot.slane %v686, %v690
    %v692 = vlaneseq
    %v693 = vshrl.u32 %v692, 7
    %v694 = vsub.s32 1, %v693
    %v695 = vrot.slane %v686, %v694
    %v696 = vlaneseq
    %v697 = vshrl.u32 %v696, 7
    %v698 = vsub.s32 2, %v697
    %v699 = vrot.slane %v686, %v698
    %v703 = vld [vmem:[#allocation2] sm:$0xff]
    %v704 = vld [vmem:[#allocation2 + $0x8] sm:$0xff]
    %v705 = vld [vmem:[#allocation2 + $0x10] sm:$0xff]
    %v706 = vld [vmem:[#allocation3] sm:$0xff]
    %v707 = vpack.c.bf16 %v706, %v706
    %v708 = vld [vmem:[#allocation4] sm:$0xff]
    %v709 = vld [vmem:[#allocation4 + $0x8] sm:$0xf]
    %v710 = vld [vmem:[#allocation4 + $0xc] sm:$0xff]
    %v711 = vld [vmem:[#allocation4 + $0x14] sm:$0xf]
    %v712 = vld [vmem:[#allocation4 + $0x18] sm:$0xff]
    %v713 = vld [vmem:[#allocation4 + $0x20] sm:$0xf]
    %v714 = vld [vmem:[#allocation4 + $0x24] sm:$0xff]
    %v715 = vld [vmem:[#allocation4 + $0x2c] sm:$0xf]
    %v716 = vld [vmem:[#allocation4 + $0x30] sm:$0xff]
    %v717 = vld [vmem:[#allocation4 + $0x38] sm:$0xf]
    %v718 = vld [vmem:[#allocation4 + $0x3c] sm:$0xff]
    %v719 = vld [vmem:[#allocation4 + $0x44] sm:$0xf]
    %v720 = vld [vmem:[#allocation4 + $0x48] sm:$0xff]
    %v721 = vld [vmem:[#allocation4 + $0x50] sm:$0xf]
    %v722 = vld [vmem:[#allocation4 + $0x54] sm:$0xff]
    %v723 = vld [vmem:[#allocation4 + $0x5c] sm:$0xf]
    %v724 = vld [vmem:[#allocation4 + $0x60] sm:$0xff]
    %v725 = vld [vmem:[#allocation4 + $0x68] sm:$0xf]
    %v726 = vld [vmem:[#allocation4 + $0x6c] sm:$0xff]
    %v727 = vld [vmem:[#allocation4 + $0x74] sm:$0xf]
    %v728 = vld [vmem:[#allocation4 + $0x78] sm:$0xff]
    %v729 = vld [vmem:[#allocation4 + $0x80] sm:$0xf]
    %v730 = vld [vmem:[#allocation4 + $0x84] sm:$0xff]
    %v731 = vld [vmem:[#allocation4 + $0x8c] sm:$0xf]
    %v732 = vld [vmem:[#allocation4 + $0x90] sm:$0xff]
    %v733 = vld [vmem:[#allocation4 + $0x98] sm:$0xf]
    %v734 = vld [vmem:[#allocation4 + $0x9c] sm:$0xff]
    %v735 = vld [vmem:[#allocation4 + $0xa4] sm:$0xf]
    %v736 = vld [vmem:[#allocation4 + $0xa8] sm:$0xff]
    %v737 = vld [vmem:[#allocation4 + $0xb0] sm:$0xf]
    %v738 = vld [vmem:[#allocation4 + $0xb4] sm:$0xff]
    %v739 = vld [vmem:[#allocation4 + $0xbc] sm:$0xf]
    %v772 = vunpack.c.l.b16 %v708
    %v773 = vunpack.c.h.b16 %v708
    %v774 = vunpack.c.l.b16 %v709
    %v775 = vunpack.c.l.b16 %v710
    %v776 = vunpack.c.h.b16 %v710
    %v777 = vunpack.c.l.b16 %v711
    %v778 = vunpack.c.l.b16 %v712
    %v779 = vunpack.c.h.b16 %v712
    %v780 = vunpack.c.l.b16 %v713
    %v781 = vunpack.c.l.b16 %v714
    %v782 = vunpack.c.h.b16 %v714
    %v783 = vunpack.c.l.b16 %v715
    %v784 = vunpack.c.l.b16 %v716
    %v785 = vunpack.c.h.b16 %v716
    %v786 = vunpack.c.l.b16 %v717
    %v787 = vunpack.c.l.b16 %v718
    %v788 = vunpack.c.h.b16 %v718
    %v789 = vunpack.c.l.b16 %v719
    %v790 = vunpack.c.l.b16 %v720
    %v791 = vunpack.c.h.b16 %v720
    %v792 = vunpack.c.l.b16 %v721
    %v793 = vunpack.c.l.b16 %v722
    %v794 = vunpack.c.h.b16 %v722
    %v795 = vunpack.c.l.b16 %v723
    %v796 = vunpack.c.l.b16 %v724
    %v797 = vunpack.c.h.b16 %v724
    %v798 = vunpack.c.l.b16 %v725
    %v799 = vunpack.c.l.b16 %v726
    %v800 = vunpack.c.h.b16 %v726
    %v801 = vunpack.c.l.b16 %v727
    %v802 = vunpack.c.l.b16 %v728
    %v803 = vunpack.c.h.b16 %v728
    %v804 = vunpack.c.l.b16 %v729
    %v805 = vunpack.c.l.b16 %v730
    %v806 = vunpack.c.h.b16 %v730
    %v807 = vunpack.c.l.b16 %v731
    %v808 = vunpack.c.l.b16 %v732
    %v809 = vunpack.c.h.b16 %v732
    %v810 = vunpack.c.l.b16 %v733
    %v811 = vunpack.c.l.b16 %v734
    %v812 = vunpack.c.h.b16 %v734
    %v813 = vunpack.c.l.b16 %v735
    %v814 = vunpack.c.l.b16 %v736
    %v815 = vunpack.c.h.b16 %v736
    %v816 = vunpack.c.l.b16 %v737
    %v817 = vunpack.c.l.b16 %v738
    %v818 = vunpack.c.h.b16 %v738
    %v819 = vunpack.c.l.b16 %v739
    %v820 = vpack.c.b16 %v775, %v772
    %v821 = vpack.c.b16 %v776, %v773
    %v822 = vpack.c.b16 %v777, %v774
    %v823 = vpack.c.b16 %v781, %v778
    %v824 = vpack.c.b16 %v782, %v779
    %v825 = vpack.c.b16 %v783, %v780
    %v826 = vpack.c.b16 %v787, %v784
    %v827 = vpack.c.b16 %v788, %v785
    %v828 = vpack.c.b16 %v789, %v786
    %v829 = vpack.c.b16 %v793, %v790
    %v830 = vpack.c.b16 %v794, %v791
    %v831 = vpack.c.b16 %v795, %v792
    %v832 = vpack.c.b16 %v799, %v796
    %v833 = vpack.c.b16 %v800, %v797
    %v834 = vpack.c.b16 %v801, %v798
    %v835 = vpack.c.b16 %v805, %v802
    %v836 = vpack.c.b16 %v806, %v803
    %v837 = vpack.c.b16 %v807, %v804
    %v838 = vpack.c.b16 %v811, %v808
    %v839 = vpack.c.b16 %v812, %v809
    %v840 = vpack.c.b16 %v813, %v810
    %v841 = vpack.c.b16 %v817, %v814
    %v842 = vpack.c.b16 %v818, %v815
    %v843 = vpack.c.b16 %v819, %v816
    %868 = vmatprep.subr.bf16.mxu0 %v842
    %869 = vmatpush1.bf16.msra.mxu0 %v841
    %870 = vmatprep.subr.bf16.mxu0 %v839
    %871 = vmatpush1.bf16.msra.mxu0 %v838
    %872 = vmatprep.subr.bf16.mxu0 %v836
    %873 = vmatpush1.bf16.msra.mxu0 %v835
    %874 = vmatprep.subr.bf16.mxu0 %v833
    %875 = vmatpush1.bf16.msra.mxu0 %v832
    %876 = vmatprep.subr.bf16.mxu0 %v830
    %877 = vmatpush1.bf16.msra.mxu0 %v829
    %878 = vmatprep.subr.bf16.mxu0 %v827
    %879 = vmatpush1.bf16.msra.mxu0 %v826
    %880 = vmatprep.subr.bf16.mxu0 %v824
    %881 = vmatpush1.bf16.msra.mxu0 %v823
    %882 = vmatprep.subr.bf16.mxu0 %v821
    %883 = vmatpush1.bf16.msra.mxu0 %v820
    %884 = vmatprep.subr.bf16.mxu0 0
    %885 = vmatpush2.bf16.msra.mxu0 0
    %886 = vmatprep.subr.bf16.mxu0 0
    %887 = vmatpush2.bf16.msra.mxu0 0
    %888 = vmatprep.subr.bf16.mxu0 0
    %889 = vmatpush2.bf16.msra.mxu0 0
    %890 = vmatprep.subr.bf16.mxu0 0
    %891 = vmatpush2.bf16.msra.mxu0 0
    %892 = vmatprep.subr.bf16.mxu0 0
    %893 = vmatpush2.bf16.msra.mxu0 0
    %894 = vmatprep.subr.bf16.mxu0 0
    %895 = vmatpush2.bf16.msra.mxu0 0
    %896 = vmatprep.subr.bf16.mxu0 0
    %897 = vmatpush2.bf16.msra.mxu0 0
    %898 = vmatprep.subr.bf16.mxu0 0
    %899 = vmatpush2.bf16.msra.mxu0 0
    %900 = vmatprep.mubr.bf16.mxu0 0
    %901 = vmatmul.mubr.bf16.gmra.mxu0 %v707
    %v902 = vpop.f32.mrf.mxu0
    %v903 = vadd.f32 %v673, %v902
    %v904 = vpop.f32.mrf.mxu0
    %v905 = vadd.f32 %v677, %v904
    %v906 = vpop.f32.mrf.mxu0
    %v907 = vpop.f32.mrf.mxu0
    %908 = vdwg.mxu0
    %909 = vmatprep.subr.bf16.mxu0 0
    %910 = vmatpush1.bf16.msra.mxu0 %v843
    %911 = vmatprep.subr.bf16.mxu0 0
    %912 = vmatpush1.bf16.msra.mxu0 %v840
    %913 = vmatprep.subr.bf16.mxu0 0
    %914 = vmatpush1.bf16.msra.mxu0 %v837
    %915 = vmatprep.subr.bf16.mxu0 0
    %916 = vmatpush1.bf16.msra.mxu0 %v834
    %917 = vmatprep.subr.bf16.mxu0 0
    %918 = vmatpush1.bf16.msra.mxu0 %v831
    %919 = vmatprep.subr.bf16.mxu0 0
    %920 = vmatpush1.bf16.msra.mxu0 %v828
    %921 = vmatprep.subr.bf16.mxu0 0
    %922 = vmatpush1.bf16.msra.mxu0 %v825
    %923 = vmatprep.subr.bf16.mxu0 0
    %924 = vmatpush1.bf16.msra.mxu0 %v822
    %925 = vmatprep.subr.bf16.mxu0 0
    %926 = vmatpush2.bf16.msra.mxu0 0
    %927 = vmatprep.subr.bf16.mxu0 0
    %928 = vmatpush2.bf16.msra.mxu0 0
    %929 = vmatprep.subr.bf16.mxu0 0
    %930 = vmatpush2.bf16.msra.mxu0 0
    %931 = vmatprep.subr.bf16.mxu0 0
    %932 = vmatpush2.bf16.msra.mxu0 0
    %933 = vmatprep.subr.bf16.mxu0 0
    %934 = vmatpush2.bf16.msra.mxu0 0
    %935 = vmatprep.subr.bf16.mxu0 0
    %936 = vmatpush2.bf16.msra.mxu0 0
    %937 = vmatprep.subr.bf16.mxu0 0
    %938 = vmatpush2.bf16.msra.mxu0 0
    %939 = vmatprep.subr.bf16.mxu0 0
    %940 = vmatpush2.bf16.msra.mxu0 0
    %941 = vmatprep.mubr.bf16.mxu0 0
    %942 = vmatmul.mubr.bf16.gmra.mxu0 %v707
    %v943 = vpop.f32.mrf.mxu0
    %v944 = vadd.f32 %v681, %v943
    %v945 = vpop.f32.mrf.mxu0
    %v946 = vpop.f32.mrf.mxu0
    %v947 = vpop.f32.mrf.mxu0
    %948 = vdwg.mxu0
    %v949 = vadd.f32 %v703, %v903
    %v950 = vxor.u32 %v949, 2147483648
    %v951 = vmul.f32 %v950, 1.442695
    %v952 = vpow.pop %v951
    %v953 = vadd.f32 %v952, 1.0
    %v954 = vrcp.pop %v953
    %v955 = vmul.f32 1.0, %v954
    %v956 = vadd.f32 %v704, %v905
    %v957 = vxor.u32 %v956, 2147483648
    %v958 = vmul.f32 %v957, 1.442695
    %v959 = vpow.pop %v958
    %v960 = vadd.f32 %v959, 1.0
    %v961 = vrcp.pop %v960
    %v962 = vmul.f32 1.0, %v961
    %v963 = vmul.f32 %v955, %v944
    %v964 = vadd.f32 %v705, %v963
    %v965 = vtanh.pop %v964
    %v966 = vsub.f32 %v706, %v965
    %v967 = vmul.f32 %v962, %v966
    %v968 = vadd.f32 %v965, %v967
    %vm969 = vcmp.gt.s32.totalorder %v667, 0
    %v970 = vsel %vm969, 1, 0
    %971 = vset.pattern.permute.xlu0 0
    %972 = vperm.xlu0 %971, %v970
    %v973 = vpop.permute.xlu0 %972
    %vm974 = vcmp.eq.s32.totalorder %v973, 1
    %v975 = vsel %vm974, %v968, %v706
    %976 = vst [vmem:[#allocation3] sm:$0xff] %v975
    %v977 = vsel %vm974, %v968, 0.0
    %v978 = vld [vmem:[%s6] sm:$0xff]
    %v979 = vadd.f32 %v978, %v977
    %980 = vst [vmem:[%s6] sm:$0xff] %v979
    %s981 = scalar_lea.vmem [#allocation2], 24
    %s982 = scalar_lea.vmem %s981, 336 [#allocation2]
    %v983 = vld [vmem:[%s982] sm:$0xff]
    %v984 = vld [vmem:[%s982 + $0x8] sm:$0xff]
    %v985 = vld [vmem:[%s982 + $0x10] sm:$0xff]
    %s986 = scalar_lea.vmem [#allocation3], 8
    %v987 = vld [vmem:[%s986] sm:$0xff]
    %v988 = vpack.c.bf16 %v987, %v987
    %s989 = scalar_lea.vmem [#allocation4], 192
    %v990 = vld [vmem:[%s989] sm:$0xff]
    %v991 = vld [vmem:[%s989 + $0x8] sm:$0xf]
    %v992 = vld [vmem:[%s989 + $0xc] sm:$0xff]
    %v993 = vld [vmem:[%s989 + $0x14] sm:$0xf]
    %v994 = vld [vmem:[%s989 + $0x18] sm:$0xff]
    %v995 = vld [vmem:[%s989 + $0x20] sm:$0xf]
    %v996 = vld [vmem:[%s989 + $0x24] sm:$0xff]
    %v997 = vld [vmem:[%s989 + $0x2c] sm:$0xf]
    %v998 = vld [vmem:[%s989 + $0x30] sm:$0xff]
    %v999 = vld [vmem:[%s989 + $0x38] sm:$0xf]
    %v1000 = vld [vmem:[%s989 + $0x3c] sm:$0xff]
    %v1001 = vld [vmem:[%s989 + $0x44] sm:$0xf]
    %v1002 = vld [vmem:[%s989 + $0x48] sm:$0xff]
    %v1003 = vld [vmem:[%s989 + $0x50] sm:$0xf]
    %v1004 = vld [vmem:[%s989 + $0x54] sm:$0xff]
    %v1005 = vld [vmem:[%s989 + $0x5c] sm:$0xf]
    %v1006 = vld [vmem:[%s989 + $0x60] sm:$0xff]
    %v1007 = vld [vmem:[%s989 + $0x68] sm:$0xf]
    %v1008 = vld [vmem:[%s989 + $0x6c] sm:$0xff]
    %v1009 = vld [vmem:[%s989 + $0x74] sm:$0xf]
    %v1010 = vld [vmem:[%s989 + $0x78] sm:$0xff]
    %v1011 = vld [vmem:[%s989 + $0x80] sm:$0xf]
    %v1012 = vld [vmem:[%s989 + $0x84] sm:$0xff]
    %v1013 = vld [vmem:[%s989 + $0x8c] sm:$0xf]
    %v1014 = vld [vmem:[%s989 + $0x90] sm:$0xff]
    %v1015 = vld [vmem:[%s989 + $0x98] sm:$0xf]
    %v1016 = vld [vmem:[%s989 + $0x9c] sm:$0xff]
    %v1017 = vld [vmem:[%s989 + $0xa4] sm:$0xf]
    %v1018 = vld [vmem:[%s989 + $0xa8] sm:$0xff]
    %v1019 = vld [vmem:[%s989 + $0xb0] sm:$0xf]
    %v1020 = vld [vmem:[%s989 + $0xb4] sm:$0xff]
    %v1021 = vld [vmem:[%s989 + $0xbc] sm:$0xf]
    %v1054 = vunpack.c.l.b16 %v990
    %v1055 = vunpack.c.h.b16 %v990
    %v1056 = vunpack.c.l.b16 %v991
    %v1057 = vunpack.c.l.b16 %v992
    %v1058 = vunpack.c.h.b16 %v992
    %v1059 = vunpack.c.l.b16 %v993
    %v1060 = vunpack.c.l.b16 %v994
    %v1061 = vunpack.c.h.b16 %v994
    %v1062 = vunpack.c.l.b16 %v995
    %v1063 = vunpack.c.l.b16 %v996
    %v1064 = vunpack.c.h.b16 %v996
    %v1065 = vunpack.c.l.b16 %v997
    %v1066 = vunpack.c.l.b16 %v998
    %v1067 = vunpack.c.h.b16 %v998
    %v1068 = vunpack.c.l.b16 %v999
    %v1069 = vunpack.c.l.b16 %v1000
    %v1070 = vunpack.c.h.b16 %v1000
    %v1071 = vunpack.c.l.b16 %v1001
    %v1072 = vunpack.c.l.b16 %v1002
    %v1073 = vunpack.c.h.b16 %v1002
    %v1074 = vunpack.c.l.b16 %v1003
    %v1075 = vunpack.c.l.b16 %v1004
    %v1076 = vunpack.c.h.b16 %v1004
    %v1077 = vunpack.c.l.b16 %v1005
    %v1078 = vunpack.c.l.b16 %v1006
    %v1079 = vunpack.c.h.b16 %v1006
    %v1080 = vunpack.c.l.b16 %v1007
    %v1081 = vunpack.c.l.b16 %v1008
    %v1082 = vunpack.c.h.b16 %v1008
    %v1083 = vunpack.c.l.b16 %v1009
    %v1084 = vunpack.c.l.b16 %v1010
    %v1085 = vunpack.c.h.b16 %v1010
    %v1086 = vunpack.c.l.b16 %v1011
    %v1087 = vunpack.c.l.b16 %v1012
    %v1088 = vunpack.c.h.b16 %v1012
    %v1089 = vunpack.c.l.b16 %v1013
    %v1090 = vunpack.c.l.b16 %v1014
    %v1091 = vunpack.c.h.b16 %v1014
    %v1092 = vunpack.c.l.b16 %v1015
    %v1093 = vunpack.c.l.b16 %v1016
    %v1094 = vunpack.c.h.b16 %v1016
    %v1095 = vunpack.c.l.b16 %v1017
    %v1096 = vunpack.c.l.b16 %v1018
    %v1097 = vunpack.c.h.b16 %v1018
    %v1098 = vunpack.c.l.b16 %v1019
    %v1099 = vunpack.c.l.b16 %v1020
    %v1100 = vunpack.c.h.b16 %v1020
    %v1101 = vunpack.c.l.b16 %v1021
    %v1102 = vpack.c.b16 %v1057, %v1054
    %v1103 = vpack.c.b16 %v1058, %v1055
    %v1104 = vpack.c.b16 %v1059, %v1056
    %v1105 = vpack.c.b16 %v1063, %v1060
    %v1106 = vpack.c.b16 %v1064, %v1061
    %v1107 = vpack.c.b16 %v1065, %v1062
    %v1108 = vpack.c.b16 %v1069, %v1066
    %v1109 = vpack.c.b16 %v1070, %v1067
    %v1110 = vpack.c.b16 %v1071, %v1068
    %v1111 = vpack.c.b16 %v1075, %v1072
    %v1112 = vpack.c.b16 %v1076, %v1073
    %v1113 = vpack.c.b16 %v1077, %v1074
    %v1114 = vpack.c.b16 %v1081, %v1078
    %v1115 = vpack.c.b16 %v1082, %v1079
    %v1116 = vpack.c.b16 %v1083, %v1080
    %v1117 = vpack.c.b16 %v1087, %v1084
    %v1118 = vpack.c.b16 %v1088, %v1085
    %v1119 = vpack.c.b16 %v1089, %v1086
    %v1120 = vpack.c.b16 %v1093, %v1090
    %v1121 = vpack.c.b16 %v1094, %v1091
    %v1122 = vpack.c.b16 %v1095, %v1092
    %v1123 = vpack.c.b16 %v1099, %v1096
    %v1124 = vpack.c.b16 %v1100, %v1097
    %v1125 = vpack.c.b16 %v1101, %v1098
    %1150 = vmatprep.subr.bf16.mxu0 %v1124
    %1151 = vmatpush1.bf16.msra.mxu0 %v1123
    %1152 = vmatprep.subr.bf16.mxu0 %v1121
    %1153 = vmatpush1.bf16.msra.mxu0 %v1120
    %1154 = vmatprep.subr.bf16.mxu0 %v1118
    %1155 = vmatpush1.bf16.msra.mxu0 %v1117
    %1156 = vmatprep.subr.bf16.mxu0 %v1115
    %1157 = vmatpush1.bf16.msra.mxu0 %v1114
    %1158 = vmatprep.subr.bf16.mxu0 %v1112
    %1159 = vmatpush1.bf16.msra.mxu0 %v1111
    %1160 = vmatprep.subr.bf16.mxu0 %v1109
    %1161 = vmatpush1.bf16.msra.mxu0 %v1108
    %1162 = vmatprep.subr.bf16.mxu0 %v1106
    %1163 = vmatpush1.bf16.msra.mxu0 %v1105
    %1164 = vmatprep.subr.bf16.mxu0 %v1103
    %1165 = vmatpush1.bf16.msra.mxu0 %v1102
    %1166 = vmatprep.subr.bf16.mxu0 0
    %1167 = vmatpush2.bf16.msra.mxu0 0
    %1168 = vmatprep.subr.bf16.mxu0 0
    %1169 = vmatpush2.bf16.msra.mxu0 0
    %1170 = vmatprep.subr.bf16.mxu0 0
    %1171 = vmatpush2.bf16.msra.mxu0 0
    %1172 = vmatprep.subr.bf16.mxu0 0
    %1173 = vmatpush2.bf16.msra.mxu0 0
    %1174 = vmatprep.subr.bf16.mxu0 0
    %1175 = vmatpush2.bf16.msra.mxu0 0
    %1176 = vmatprep.subr.bf16.mxu0 0
    %1177 = vmatpush2.bf16.msra.mxu0 0
    %1178 = vmatprep.subr.bf16.mxu0 0
    %1179 = vmatpush2.bf16.msra.mxu0 0
    %1180 = vmatprep.subr.bf16.mxu0 0
    %1181 = vmatpush2.bf16.msra.mxu0 0
    %1182 = vmatprep.mubr.bf16.mxu0 0
    %1183 = vmatmul.mubr.bf16.gmra.mxu0 %v988
    %v1184 = vpop.f32.mrf.mxu0
    %v1185 = vadd.f32 %v691, %v1184
    %v1186 = vpop.f32.mrf.mxu0
    %v1187 = vadd.f32 %v695, %v1186
    %v1188 = vpop.f32.mrf.mxu0
    %v1189 = vpop.f32.mrf.mxu0
    %1190 = vdwg.mxu0
    %1191 = vmatprep.subr.bf16.mxu0 0
    %1192 = vmatpush1.bf16.msra.mxu0 %v1125
    %1193 = vmatprep.subr.bf16.mxu0 0
    %1194 = vmatpush1.bf16.msra.mxu0 %v1122
    %1195 = vmatprep.subr.bf16.mxu0 0
    %1196 = vmatpush1.bf16.msra.mxu0 %v1119
    %1197 = vmatprep.subr.bf16.mxu0 0
    %1198 = vmatpush1.bf16.msra.mxu0 %v1116
    %1199 = vmatprep.subr.bf16.mxu0 0
    %1200 = vmatpush1.bf16.msra.mxu0 %v1113
    %1201 = vmatprep.subr.bf16.mxu0 0
    %1202 = vmatpush1.bf16.msra.mxu0 %v1110
    %1203 = vmatprep.subr.bf16.mxu0 0
    %1204 = vmatpush1.bf16.msra.mxu0 %v1107
    %1205 = vmatprep.subr.bf16.mxu0 0
    %1206 = vmatpush1.bf16.msra.mxu0 %v1104
    %1207 = vmatprep.subr.bf16.mxu0 0
    %1208 = vmatpush2.bf16.msra.mxu0 0
    %1209 = vmatprep.subr.bf16.mxu0 0
    %1210 = vmatpush2.bf16.msra.mxu0 0
    %1211 = vmatprep.subr.bf16.mxu0 0
    %1212 = vmatpush2.bf16.msra.mxu0 0
    %1213 = vmatprep.subr.bf16.mxu0 0
    %1214 = vmatpush2.bf16.msra.mxu0 0
    %1215 = vmatprep.subr.bf16.mxu0 0
    %1216 = vmatpush2.bf16.msra.mxu0 0
    %1217 = vmatprep.subr.bf16.mxu0 0
    %1218 = vmatpush2.bf16.msra.mxu0 0
    %1219 = vmatprep.subr.bf16.mxu0 0
    %1220 = vmatpush2.bf16.msra.mxu0 0
    %1221 = vmatprep.subr.bf16.mxu0 0
    %1222 = vmatpush2.bf16.msra.mxu0 0
    %1223 = vmatprep.mubr.bf16.mxu0 0
    %1224 = vmatmul.mubr.bf16.gmra.mxu0 %v988
    %v1225 = vpop.f32.mrf.mxu0
    %v1226 = vadd.f32 %v699, %v1225
    %v1227 = vpop.f32.mrf.mxu0
    %v1228 = vpop.f32.mrf.mxu0
    %v1229 = vpop.f32.mrf.mxu0
    %1230 = vdwg.mxu0
    %v1231 = vadd.f32 %v983, %v1185
    %v1232 = vxor.u32 %v1231, 2147483648
    %v1233 = vmul.f32 %v1232, 1.442695
    %v1234 = vpow.pop %v1233
    %v1235 = vadd.f32 %v1234, 1.0
    %v1236 = vrcp.pop %v1235
    %v1237 = vmul.f32 1.0, %v1236
    %v1238 = vadd.f32 %v984, %v1187
    %v1239 = vxor.u32 %v1238, 2147483648
    %v1240 = vmul.f32 %v1239, 1.442695
    %v1241 = vpow.pop %v1240
    %v1242 = vadd.f32 %v1241, 1.0
    %v1243 = vrcp.pop %v1242
    %v1244 = vmul.f32 1.0, %v1243
    %v1245 = vmul.f32 %v1237, %v1226
    %v1246 = vadd.f32 %v985, %v1245
    %v1247 = vtanh.pop %v1246
    %v1248 = vsub.f32 %v987, %v1247
    %v1249 = vmul.f32 %v1244, %v1248
    %v1250 = vadd.f32 %v1247, %v1249
    %vm1251 = vcmp.gt.s32.totalorder %v667, 7
    %v1252 = vsel %vm1251, 1, 0
    %1253 = vset.pattern.permute.xlu0 0
    %1254 = vperm.xlu0 %1253, %v1252
    %v1255 = vpop.permute.xlu0 %1254
    %vm1256 = vcmp.eq.s32.totalorder %v1255, 1
    %v1257 = vsel %vm1256, %v1250, %v987
    %1258 = vst [vmem:[%s986] sm:$0xff] %v1257
    %v1259 = vsel %vm1256, %v1250, 0.0
    %s1260 = scalar_lea.vmem %s6, 56
    %v1261 = vld [vmem:[%s1260] sm:$0xff]
    %v1262 = vadd.f32 %v1261, %v1259
    %1263 = vst [vmem:[%s1260] sm:$0xff] %v1262
    %s1264 = scalar_lea.vmem [#allocation2], 48
    %v1265 = vld [vmem:[%s1264] sm:$0xff]
    %v1266 = vld [vmem:[%s1264 + $0x8] sm:$0xff]
    %v1267 = vld [vmem:[%s1264 + $0x10] sm:$0xff]
    %v1268 = vld [vmem:[#allocation3] sm:$0xff]
    %v1269 = vpack.c.bf16 %v1268, %v1268
    %v1270 = vld [vmem:[#allocation4] sm:$0xff]
    %v1271 = vld [vmem:[#allocation4 + $0x8] sm:$0xf]
    %v1272 = vld [vmem:[#allocation4 + $0xc] sm:$0xff]
    %v1273 = vld [vmem:[#allocation4 + $0x14] sm:$0xf]
    %v1274 = vld [vmem:[#allocation4 + $0x18] sm:$0xff]
    %v1275 = vld [vmem:[#allocation4 + $0x20] sm:$0xf]
    %v1276 = vld [vmem:[#allocation4 + $0x24] sm:$0xff]
    %v1277 = vld [vmem:[#allocation4 + $0x2c] sm:$0xf]
    %v1278 = vld [vmem:[#allocation4 + $0x30] sm:$0xff]
    %v1279 = vld [vmem:[#allocation4 + $0x38] sm:$0xf]
    %v1280 = vld [vmem:[#allocation4 + $0x3c] sm:$0xff]
    %v1281 = vld [vmem:[#allocation4 + $0x44] sm:$0xf]
    %v1282 = vld [vmem:[#allocation4 + $0x48] sm:$0xff]
    %v1283 = vld [vmem:[#allocation4 + $0x50] sm:$0xf]
    %v1284 = vld [vmem:[#allocation4 + $0x54] sm:$0xff]
    %v1285 = vld [vmem:[#allocation4 + $0x5c] sm:$0xf]
    %v1286 = vld [vmem:[#allocation4 + $0x60] sm:$0xff]
    %v1287 = vld [vmem:[#allocation4 + $0x68] sm:$0xf]
    %v1288 = vld [vmem:[#allocation4 + $0x6c] sm:$0xff]
    %v1289 = vld [vmem:[#allocation4 + $0x74] sm:$0xf]
    %v1290 = vld [vmem:[#allocation4 + $0x78] sm:$0xff]
    %v1291 = vld [vmem:[#allocation4 + $0x80] sm:$0xf]
    %v1292 = vld [vmem:[#allocation4 + $0x84] sm:$0xff]
    %v1293 = vld [vmem:[#allocation4 + $0x8c] sm:$0xf]
    %v1294 = vld [vmem:[#allocation4 + $0x90] sm:$0xff]
    %v1295 = vld [vmem:[#allocation4 + $0x98] sm:$0xf]
    %v1296 = vld [vmem:[#allocation4 + $0x9c] sm:$0xff]
    %v1297 = vld [vmem:[#allocation4 + $0xa4] sm:$0xf]
    %v1298 = vld [vmem:[#allocation4 + $0xa8] sm:$0xff]
    %v1299 = vld [vmem:[#allocation4 + $0xb0] sm:$0xf]
    %v1300 = vld [vmem:[#allocation4 + $0xb4] sm:$0xff]
    %v1301 = vld [vmem:[#allocation4 + $0xbc] sm:$0xf]
    %v1334 = vunpack.c.l.b16 %v1270
    %v1335 = vunpack.c.h.b16 %v1270
    %v1336 = vunpack.c.l.b16 %v1271
    %v1337 = vunpack.c.l.b16 %v1272
    %v1338 = vunpack.c.h.b16 %v1272
    %v1339 = vunpack.c.l.b16 %v1273
    %v1340 = vunpack.c.l.b16 %v1274
    %v1341 = vunpack.c.h.b16 %v1274
    %v1342 = vunpack.c.l.b16 %v1275
    %v1343 = vunpack.c.l.b16 %v1276
    %v1344 = vunpack.c.h.b16 %v1276
    %v1345 = vunpack.c.l.b16 %v1277
    %v1346 = vunpack.c.l.b16 %v1278
    %v1347 = vunpack.c.h.b16 %v1278
    %v1348 = vunpack.c.l.b16 %v1279
    %v1349 = vunpack.c.l.b16 %v1280
    %v1350 = vunpack.c.h.b16 %v1280
    %v1351 = vunpack.c.l.b16 %v1281
    %v1352 = vunpack.c.l.b16 %v1282
    %v1353 = vunpack.c.h.b16 %v1282
    %v1354 = vunpack.c.l.b16 %v1283
    %v1355 = vunpack.c.l.b16 %v1284
    %v1356 = vunpack.c.h.b16 %v1284
    %v1357 = vunpack.c.l.b16 %v1285
    %v1358 = vunpack.c.l.b16 %v1286
    %v1359 = vunpack.c.h.b16 %v1286
    %v1360 = vunpack.c.l.b16 %v1287
    %v1361 = vunpack.c.l.b16 %v1288
    %v1362 = vunpack.c.h.b16 %v1288
    %v1363 = vunpack.c.l.b16 %v1289
    %v1364 = vunpack.c.l.b16 %v1290
    %v1365 = vunpack.c.h.b16 %v1290
    %v1366 = vunpack.c.l.b16 %v1291
    %v1367 = vunpack.c.l.b16 %v1292
    %v1368 = vunpack.c.h.b16 %v1292
    %v1369 = vunpack.c.l.b16 %v1293
    %v1370 = vunpack.c.l.b16 %v1294
    %v1371 = vunpack.c.h.b16 %v1294
    %v1372 = vunpack.c.l.b16 %v1295
    %v1373 = vunpack.c.l.b16 %v1296
    %v1374 = vunpack.c.h.b16 %v1296
    %v1375 = vunpack.c.l.b16 %v1297
    %v1376 = vunpack.c.l.b16 %v1298
    %v1377 = vunpack.c.h.b16 %v1298
    %v1378 = vunpack.c.l.b16 %v1299
    %v1379 = vunpack.c.l.b16 %v1300
    %v1380 = vunpack.c.h.b16 %v1300
    %v1381 = vunpack.c.l.b16 %v1301
    %v1382 = vpack.c.b16 %v1337, %v1334
    %v1383 = vpack.c.b16 %v1338, %v1335
    %v1384 = vpack.c.b16 %v1339, %v1336
    %v1385 = vpack.c.b16 %v1343, %v1340
    %v1386 = vpack.c.b16 %v1344, %v1341
    %v1387 = vpack.c.b16 %v1345, %v1342
    %v1388 = vpack.c.b16 %v1349, %v1346
    %v1389 = vpack.c.b16 %v1350, %v1347
    %v1390 = vpack.c.b16 %v1351, %v1348
    %v1391 = vpack.c.b16 %v1355, %v1352
    %v1392 = vpack.c.b16 %v1356, %v1353
    %v1393 = vpack.c.b16 %v1357, %v1354
    %v1394 = vpack.c.b16 %v1361, %v1358
    %v1395 = vpack.c.b16 %v1362, %v1359
    %v1396 = vpack.c.b16 %v1363, %v1360
    %v1397 = vpack.c.b16 %v1367, %v1364
    %v1398 = vpack.c.b16 %v1368, %v1365
    %v1399 = vpack.c.b16 %v1369, %v1366
    %v1400 = vpack.c.b16 %v1373, %v1370
    %v1401 = vpack.c.b16 %v1374, %v1371
    %v1402 = vpack.c.b16 %v1375, %v1372
    %v1403 = vpack.c.b16 %v1379, %v1376
    %v1404 = vpack.c.b16 %v1380, %v1377
    %v1405 = vpack.c.b16 %v1381, %v1378
    %1430 = vmatprep.subr.bf16.mxu0 %v1404
    %1431 = vmatpush1.bf16.msra.mxu0 %v1403
    %1432 = vmatprep.subr.bf16.mxu0 %v1401
    %1433 = vmatpush1.bf16.msra.mxu0 %v1400
    %1434 = vmatprep.subr.bf16.mxu0 %v1398
    %1435 = vmatpush1.bf16.msra.mxu0 %v1397
    %1436 = vmatprep.subr.bf16.mxu0 %v1395
    %1437 = vmatpush1.bf16.msra.mxu0 %v1394
    %1438 = vmatprep.subr.bf16.mxu0 %v1392
    %1439 = vmatpush1.bf16.msra.mxu0 %v1391
    %1440 = vmatprep.subr.bf16.mxu0 %v1389
    %1441 = vmatpush1.bf16.msra.mxu0 %v1388
    %1442 = vmatprep.subr.bf16.mxu0 %v1386
    %1443 = vmatpush1.bf16.msra.mxu0 %v1385
    %1444 = vmatprep.subr.bf16.mxu0 %v1383
    %1445 = vmatpush1.bf16.msra.mxu0 %v1382
    %1446 = vmatprep.subr.bf16.mxu0 0
    %1447 = vmatpush2.bf16.msra.mxu0 0
    %1448 = vmatprep.subr.bf16.mxu0 0
    %1449 = vmatpush2.bf16.msra.mxu0 0
    %1450 = vmatprep.subr.bf16.mxu0 0
    %1451 = vmatpush2.bf16.msra.mxu0 0
    %1452 = vmatprep.subr.bf16.mxu0 0
    %1453 = vmatpush2.bf16.msra.mxu0 0
    %1454 = vmatprep.subr.bf16.mxu0 0
    %1455 = vmatpush2.bf16.msra.mxu0 0
    %1456 = vmatprep.subr.bf16.mxu0 0
    %1457 = vmatpush2.bf16.msra.mxu0 0
    %1458 = vmatprep.subr.bf16.mxu0 0
    %1459 = vmatpush2.bf16.msra.mxu0 0
    %1460 = vmatprep.subr.bf16.mxu0 0
    %1461 = vmatpush2.bf16.msra.mxu0 0
    %1462 = vmatprep.mubr.bf16.mxu0 0
    %1463 = vmatmul.mubr.bf16.gmra.mxu0 %v1269
    %v1464 = vpop.f32.mrf.mxu0
    %v1465 = vadd.f32 %v673, %v1464
    %v1466 = vpop.f32.mrf.mxu0
    %v1467 = vadd.f32 %v677, %v1466
    %v1468 = vpop.f32.mrf.mxu0
    %v1469 = vpop.f32.mrf.mxu0
    %1470 = vdwg.mxu0
    %1471 = vmatprep.subr.bf16.mxu0 0
    %1472 = vmatpush1.bf16.msra.mxu0 %v1405
    %1473 = vmatprep.subr.bf16.mxu0 0
    %1474 = vmatpush1.bf16.msra.mxu0 %v1402
    %1475 = vmatprep.subr.bf16.mxu0 0
    %1476 = vmatpush1.bf16.msra.mxu0 %v1399
    %1477 = vmatprep.subr.bf16.mxu0 0
    %1478 = vmatpush1.bf16.msra.mxu0 %v1396
    %1479 = vmatprep.subr.bf16.mxu0 0
    %1480 = vmatpush1.bf16.msra.mxu0 %v1393
    %1481 = vmatprep.subr.bf16.mxu0 0
    %1482 = vmatpush1.bf16.msra.mxu0 %v1390
    %1483 = vmatprep.subr.bf16.mxu0 0
    %1484 = vmatpush1.bf16.msra.mxu0 %v1387
    %1485 = vmatprep.subr.bf16.mxu0 0
    %1486 = vmatpush1.bf16.msra.mxu0 %v1384
    %1487 = vmatprep.subr.bf16.mxu0 0
    %1488 = vmatpush2.bf16.msra.mxu0 0
    %1489 = vmatprep.subr.bf16.mxu0 0
    %1490 = vmatpush2.bf16.msra.mxu0 0
    %1491 = vmatprep.subr.bf16.mxu0 0
    %1492 = vmatpush2.bf16.msra.mxu0 0
    %1493 = vmatprep.subr.bf16.mxu0 0
    %1494 = vmatpush2.bf16.msra.mxu0 0
    %1495 = vmatprep.subr.bf16.mxu0 0
    %1496 = vmatpush2.bf16.msra.mxu0 0
    %1497 = vmatprep.subr.bf16.mxu0 0
    %1498 = vmatpush2.bf16.msra.mxu0 0
    %1499 = vmatprep.subr.bf16.mxu0 0
    %1500 = vmatpush2.bf16.msra.mxu0 0
    %1501 = vmatprep.subr.bf16.mxu0 0
    %1502 = vmatpush2.bf16.msra.mxu0 0
    %1503 = vmatprep.mubr.bf16.mxu0 0
    %1504 = vmatmul.mubr.bf16.gmra.mxu0 %v1269
    %v1505 = vpop.f32.mrf.mxu0
    %v1506 = vadd.f32 %v681, %v1505
    %v1507 = vpop.f32.mrf.mxu0
    %v1508 = vpop.f32.mrf.mxu0
    %v1509 = vpop.f32.mrf.mxu0
    %1510 = vdwg.mxu0
    %v1511 = vadd.f32 %v1265, %v1465
    %v1512 = vxor.u32 %v1511, 2147483648
    %v1513 = vmul.f32 %v1512, 1.442695
    %v1514 = vpow.pop %v1513
    %v1515 = vadd.f32 %v1514, 1.0
    %v1516 = vrcp.pop %v1515
    %v1517 = vmul.f32 1.0, %v1516
    %v1518 = vadd.f32 %v1266, %v1467
    %v1519 = vxor.u32 %v1518, 2147483648
    %v1520 = vmul.f32 %v1519, 1.442695
    %v1521 = vpow.pop %v1520
    %v1522 = vadd.f32 %v1521, 1.0
    %v1523 = vrcp.pop %v1522
    %v1524 = vmul.f32 1.0, %v1523
    %v1525 = vmul.f32 %v1517, %v1506
    %v1526 = vadd.f32 %v1267, %v1525
    %v1527 = vtanh.pop %v1526
    %v1528 = vsub.f32 %v1268, %v1527
    %v1529 = vmul.f32 %v1524, %v1528
    %v1530 = vadd.f32 %v1527, %v1529
    %vm1531 = vcmp.gt.s32.totalorder %v667, 1
    %v1532 = vsel %vm1531, 1, 0
    %1533 = vset.pattern.permute.xlu0 0
    %1534 = vperm.xlu0 %1533, %v1532
    %v1535 = vpop.permute.xlu0 %1534
    %vm1536 = vcmp.eq.s32.totalorder %v1535, 1
    %v1537 = vsel %vm1536, %v1530, %v1268
    %1538 = vst [vmem:[#allocation3] sm:$0xff] %v1537
    %v1539 = vsel %vm1536, %v1530, 0.0
    %s1540 = scalar_lea.vmem %s6, 8
    %v1541 = vld [vmem:[%s1540] sm:$0xff]
    %v1542 = vadd.f32 %v1541, %v1539
    %1543 = vst [vmem:[%s1540] sm:$0xff] %v1542
    %s1544 = scalar_lea.vmem %s981, 288 [#allocation2]
    %v1545 = vld [vmem:[%s1544] sm:$0xff]
    %v1546 = vld [vmem:[%s1544 + $0x8] sm:$0xff]
    %v1547 = vld [vmem:[%s1544 + $0x10] sm:$0xff]
    %v1548 = vld [vmem:[%s986] sm:$0xff]
    %v1549 = vpack.c.bf16 %v1548, %v1548
    %v1550 = vld [vmem:[%s989] sm:$0xff]
    %v1551 = vld [vmem:[%s989 + $0x8] sm:$0xf]
    %v1552 = vld [vmem:[%s989 + $0xc] sm:$0xff]
    %v1553 = vld [vmem:[%s989 + $0x14] sm:$0xf]
    %v1554 = vld [vmem:[%s989 + $0x18] sm:$0xff]
    %v1555 = vld [vmem:[%s989 + $0x20] sm:$0xf]
    %v1556 = vld [vmem:[%s989 + $0x24] sm:$0xff]
    %v1557 = vld [vmem:[%s989 + $0x2c] sm:$0xf]
    %v1558 = vld [vmem:[%s989 + $0x30] sm:$0xff]
    %v1559 = vld [vmem:[%s989 + $0x38] sm:$0xf]
    %v1560 = vld [vmem:[%s989 + $0x3c] sm:$0xff]
    %v1561 = vld [vmem:[%s989 + $0x44] sm:$0xf]
    %v1562 = vld [vmem:[%s989 + $0x48] sm:$0xff]
    %v1563 = vld [vmem:[%s989 + $0x50] sm:$0xf]
    %v1564 = vld [vmem:[%s989 + $0x54] sm:$0xff]
    %v1565 = vld [vmem:[%s989 + $0x5c] sm:$0xf]
    %v1566 = vld [vmem:[%s989 + $0x60] sm:$0xff]
    %v1567 = vld [vmem:[%s989 + $0x68] sm:$0xf]
    %v1568 = vld [vmem:[%s989 + $0x6c] sm:$0xff]
    %v1569 = vld [vmem:[%s989 + $0x74] sm:$0xf]
    %v1570 = vld [vmem:[%s989 + $0x78] sm:$0xff]
    %v1571 = vld [vmem:[%s989 + $0x80] sm:$0xf]
    %v1572 = vld [vmem:[%s989 + $0x84] sm:$0xff]
    %v1573 = vld [vmem:[%s989 + $0x8c] sm:$0xf]
    %v1574 = vld [vmem:[%s989 + $0x90] sm:$0xff]
    %v1575 = vld [vmem:[%s989 + $0x98] sm:$0xf]
    %v1576 = vld [vmem:[%s989 + $0x9c] sm:$0xff]
    %v1577 = vld [vmem:[%s989 + $0xa4] sm:$0xf]
    %v1578 = vld [vmem:[%s989 + $0xa8] sm:$0xff]
    %v1579 = vld [vmem:[%s989 + $0xb0] sm:$0xf]
    %v1580 = vld [vmem:[%s989 + $0xb4] sm:$0xff]
    %v1581 = vld [vmem:[%s989 + $0xbc] sm:$0xf]
    %v1614 = vunpack.c.l.b16 %v1550
    %v1615 = vunpack.c.h.b16 %v1550
    %v1616 = vunpack.c.l.b16 %v1551
    %v1617 = vunpack.c.l.b16 %v1552
    %v1618 = vunpack.c.h.b16 %v1552
    %v1619 = vunpack.c.l.b16 %v1553
    %v1620 = vunpack.c.l.b16 %v1554
    %v1621 = vunpack.c.h.b16 %v1554
    %v1622 = vunpack.c.l.b16 %v1555
    %v1623 = vunpack.c.l.b16 %v1556
    %v1624 = vunpack.c.h.b16 %v1556
    %v1625 = vunpack.c.l.b16 %v1557
    %v1626 = vunpack.c.l.b16 %v1558
    %v1627 = vunpack.c.h.b16 %v1558
    %v1628 = vunpack.c.l.b16 %v1559
    %v1629 = vunpack.c.l.b16 %v1560
    %v1630 = vunpack.c.h.b16 %v1560
    %v1631 = vunpack.c.l.b16 %v1561
    %v1632 = vunpack.c.l.b16 %v1562
    %v1633 = vunpack.c.h.b16 %v1562
    %v1634 = vunpack.c.l.b16 %v1563
    %v1635 = vunpack.c.l.b16 %v1564
    %v1636 = vunpack.c.h.b16 %v1564
    %v1637 = vunpack.c.l.b16 %v1565
    %v1638 = vunpack.c.l.b16 %v1566
    %v1639 = vunpack.c.h.b16 %v1566
    %v1640 = vunpack.c.l.b16 %v1567
    %v1641 = vunpack.c.l.b16 %v1568
    %v1642 = vunpack.c.h.b16 %v1568
    %v1643 = vunpack.c.l.b16 %v1569
    %v1644 = vunpack.c.l.b16 %v1570
    %v1645 = vunpack.c.h.b16 %v1570
    %v1646 = vunpack.c.l.b16 %v1571
    %v1647 = vunpack.c.l.b16 %v1572
    %v1648 = vunpack.c.h.b16 %v1572
    %v1649 = vunpack.c.l.b16 %v1573
    %v1650 = vunpack.c.l.b16 %v1574
    %v1651 = vunpack.c.h.b16 %v1574
    %v1652 = vunpack.c.l.b16 %v1575
    %v1653 = vunpack.c.l.b16 %v1576
    %v1654 = vunpack.c.h.b16 %v1576
    %v1655 = vunpack.c.l.b16 %v1577
    %v1656 = vunpack.c.l.b16 %v1578
    %v1657 = vunpack.c.h.b16 %v1578
    %v1658 = vunpack.c.l.b16 %v1579
    %v1659 = vunpack.c.l.b16 %v1580
    %v1660 = vunpack.c.h.b16 %v1580
    %v1661 = vunpack.c.l.b16 %v1581
    %v1662 = vpack.c.b16 %v1617, %v1614
    %v1663 = vpack.c.b16 %v1618, %v1615
    %v1664 = vpack.c.b16 %v1619, %v1616
    %v1665 = vpack.c.b16 %v1623, %v1620
    %v1666 = vpack.c.b16 %v1624, %v1621
    %v1667 = vpack.c.b16 %v1625, %v1622
    %v1668 = vpack.c.b16 %v1629, %v1626
    %v1669 = vpack.c.b16 %v1630, %v1627
    %v1670 = vpack.c.b16 %v1631, %v1628
    %v1671 = vpack.c.b16 %v1635, %v1632
    %v1672 = vpack.c.b16 %v1636, %v1633
    %v1673 = vpack.c.b16 %v1637, %v1634
    %v1674 = vpack.c.b16 %v1641, %v1638
    %v1675 = vpack.c.b16 %v1642, %v1639
    %v1676 = vpack.c.b16 %v1643, %v1640
    %v1677 = vpack.c.b16 %v1647, %v1644
    %v1678 = vpack.c.b16 %v1648, %v1645
    %v1679 = vpack.c.b16 %v1649, %v1646
    %v1680 = vpack.c.b16 %v1653, %v1650
    %v1681 = vpack.c.b16 %v1654, %v1651
    %v1682 = vpack.c.b16 %v1655, %v1652
    %v1683 = vpack.c.b16 %v1659, %v1656
    %v1684 = vpack.c.b16 %v1660, %v1657
    %v1685 = vpack.c.b16 %v1661, %v1658
    %1710 = vmatprep.subr.bf16.mxu0 %v1684
    %1711 = vmatpush1.bf16.msra.mxu0 %v1683
    %1712 = vmatprep.subr.bf16.mxu0 %v1681
    %1713 = vmatpush1.bf16.msra.mxu0 %v1680
    %1714 = vmatprep.subr.bf16.mxu0 %v1678
    %1715 = vmatpush1.bf16.msra.mxu0 %v1677
    %1716 = vmatprep.subr.bf16.mxu0 %v1675
    %1717 = vmatpush1.bf16.msra.mxu0 %v1674
    %1718 = vmatprep.subr.bf16.mxu0 %v1672
    %1719 = vmatpush1.bf16.msra.mxu0 %v1671
    %1720 = vmatprep.subr.bf16.mxu0 %v1669
    %1721 = vmatpush1.bf16.msra.mxu0 %v1668
    %1722 = vmatprep.subr.bf16.mxu0 %v1666
    %1723 = vmatpush1.bf16.msra.mxu0 %v1665
    %1724 = vmatprep.subr.bf16.mxu0 %v1663
    %1725 = vmatpush1.bf16.msra.mxu0 %v1662
    %1726 = vmatprep.subr.bf16.mxu0 0
    %1727 = vmatpush2.bf16.msra.mxu0 0
    %1728 = vmatprep.subr.bf16.mxu0 0
    %1729 = vmatpush2.bf16.msra.mxu0 0
    %1730 = vmatprep.subr.bf16.mxu0 0
    %1731 = vmatpush2.bf16.msra.mxu0 0
    %1732 = vmatprep.subr.bf16.mxu0 0
    %1733 = vmatpush2.bf16.msra.mxu0 0
    %1734 = vmatprep.subr.bf16.mxu0 0
    %1735 = vmatpush2.bf16.msra.mxu0 0
    %1736 = vmatprep.subr.bf16.mxu0 0
    %1737 = vmatpush2.bf16.msra.mxu0 0
    %1738 = vmatprep.subr.bf16.mxu0 0
    %1739 = vmatpush2.bf16.msra.mxu0 0
    %1740 = vmatprep.subr.bf16.mxu0 0
    %1741 = vmatpush2.bf16.msra.mxu0 0
    %1742 = vmatprep.mubr.bf16.mxu0 0
    %1743 = vmatmul.mubr.bf16.gmra.mxu0 %v1549
    %v1744 = vpop.f32.mrf.mxu0
    %v1745 = vadd.f32 %v691, %v1744
    %v1746 = vpop.f32.mrf.mxu0
    %v1747 = vadd.f32 %v695, %v1746
    %v1748 = vpop.f32.mrf.mxu0
    %v1749 = vpop.f32.mrf.mxu0
    %1750 = vdwg.mxu0
    %1751 = vmatprep.subr.bf16.mxu0 0
    %1752 = vmatpush1.bf16.msra.mxu0 %v1685
    %1753 = vmatprep.subr.bf16.mxu0 0
    %1754 = vmatpush1.bf16.msra.mxu0 %v1682
    %1755 = vmatprep.subr.bf16.mxu0 0
    %1756 = vmatpush1.bf16.msra.mxu0 %v1679
    %1757 = vmatprep.subr.bf16.mxu0 0
    %1758 = vmatpush1.bf16.msra.mxu0 %v1676
    %1759 = vmatprep.subr.bf16.mxu0 0
    %1760 = vmatpush1.bf16.msra.mxu0 %v1673
    %1761 = vmatprep.subr.bf16.mxu0 0
    %1762 = vmatpush1.bf16.msra.mxu0 %v1670
    %1763 = vmatprep.subr.bf16.mxu0 0
    %1764 = vmatpush1.bf16.msra.mxu0 %v1667
    %1765 = vmatprep.subr.bf16.mxu0 0
    %1766 = vmatpush1.bf16.msra.mxu0 %v1664
    %1767 = vmatprep.subr.bf16.mxu0 0
    %1768 = vmatpush2.bf16.msra.mxu0 0
    %1769 = vmatprep.subr.bf16.mxu0 0
    %1770 = vmatpush2.bf16.msra.mxu0 0
    %1771 = vmatprep.subr.bf16.mxu0 0
    %1772 = vmatpush2.bf16.msra.mxu0 0
    %1773 = vmatprep.subr.bf16.mxu0 0
    %1774 = vmatpush2.bf16.msra.mxu0 0
    %1775 = vmatprep.subr.bf16.mxu0 0
    %1776 = vmatpush2.bf16.msra.mxu0 0
    %1777 = vmatprep.subr.bf16.mxu0 0
    %1778 = vmatpush2.bf16.msra.mxu0 0
    %1779 = vmatprep.subr.bf16.mxu0 0
    %1780 = vmatpush2.bf16.msra.mxu0 0
    %1781 = vmatprep.subr.bf16.mxu0 0
    %1782 = vmatpush2.bf16.msra.mxu0 0
    %1783 = vmatprep.mubr.bf16.mxu0 0
    %1784 = vmatmul.mubr.bf16.gmra.mxu0 %v1549
    %v1785 = vpop.f32.mrf.mxu0
    %v1786 = vadd.f32 %v699, %v1785
    %v1787 = vpop.f32.mrf.mxu0
    %v1788 = vpop.f32.mrf.mxu0
    %v1789 = vpop.f32.mrf.mxu0
    %1790 = vdwg.mxu0
    %v1791 = vadd.f32 %v1545, %v1745
    %v1792 = vxor.u32 %v1791, 2147483648
    %v1793 = vmul.f32 %v1792, 1.442695
    %v1794 = vpow.pop %v1793
    %v1795 = vadd.f32 %v1794, 1.0
    %v1796 = vrcp.pop %v1795
    %v1797 = vmul.f32 1.0, %v1796
    %v1798 = vadd.f32 %v1546, %v1747
    %v1799 = vxor.u32 %v1798, 2147483648
    %v1800 = vmul.f32 %v1799, 1.442695
    %v1801 = vpow.pop %v1800
    %v1802 = vadd.f32 %v1801, 1.0
    %v1803 = vrcp.pop %v1802
    %v1804 = vmul.f32 1.0, %v1803
    %v1805 = vmul.f32 %v1797, %v1786
    %v1806 = vadd.f32 %v1547, %v1805
    %v1807 = vtanh.pop %v1806
    %v1808 = vsub.f32 %v1548, %v1807
    %v1809 = vmul.f32 %v1804, %v1808
    %v1810 = vadd.f32 %v1807, %v1809
    %vm1811 = vcmp.gt.s32.totalorder %v667, 6
    %v1812 = vsel %vm1811, 1, 0
    %1813 = vset.pattern.permute.xlu0 0
    %1814 = vperm.xlu0 %1813, %v1812
    %v1815 = vpop.permute.xlu0 %1814
    %vm1816 = vcmp.eq.s32.totalorder %v1815, 1
    %v1817 = vsel %vm1816, %v1810, %v1548
    %1818 = vst [vmem:[%s986] sm:$0xff] %v1817
    %v1819 = vsel %vm1816, %v1810, 0.0
    %s1820 = scalar_lea.vmem %s6, 48
    %v1821 = vld [vmem:[%s1820] sm:$0xff]
    %v1822 = vadd.f32 %v1821, %v1819
    %1823 = vst [vmem:[%s1820] sm:$0xff] %v1822
    %s1824 = scalar_lea.vmem [#allocation2], 96
    %v1825 = vld [vmem:[%s1824] sm:$0xff]
    %v1826 = vld [vmem:[%s1824 + $0x8] sm:$0xff]
    %v1827 = vld [vmem:[%s1824 + $0x10] sm:$0xff]
    %v1828 = vld [vmem:[#allocation3] sm:$0xff]
    %v1829 = vpack.c.bf16 %v1828, %v1828
    %v1830 = vld [vmem:[#allocation4] sm:$0xff]
    %v1831 = vld [vmem:[#allocation4 + $0x8] sm:$0xf]
    %v1832 = vld [vmem:[#allocation4 + $0xc] sm:$0xff]
    %v1833 = vld [vmem:[#allocation4 + $0x14] sm:$0xf]
    %v1834 = vld [vmem:[#allocation4 + $0x18] sm:$0xff]
    %v1835 = vld [vmem:[#allocation4 + $0x20] sm:$0xf]
    %v1836 = vld [vmem:[#allocation4 + $0x24] sm:$0xff]
    %v1837 = vld [vmem:[#allocation4 + $0x2c] sm:$0xf]
    %v1838 = vld [vmem:[#allocation4 + $0x30] sm:$0xff]
    %v1839 = vld [vmem:[#allocation4 + $0x38] sm:$0xf]
    %v1840 = vld [vmem:[#allocation4 + $0x3c] sm:$0xff]
    %v1841 = vld [vmem:[#allocation4 + $0x44] sm:$0xf]
    %v1842 = vld [vmem:[#allocation4 + $0x48] sm:$0xff]
    %v1843 = vld [vmem:[#allocation4 + $0x50] sm:$0xf]
    %v1844 = vld [vmem:[#allocation4 + $0x54] sm:$0xff]
    %v1845 = vld [vmem:[#allocation4 + $0x5c] sm:$0xf]
    %v1846 = vld [vmem:[#allocation4 + $0x60] sm:$0xff]
    %v1847 = vld [vmem:[#allocation4 + $0x68] sm:$0xf]
    %v1848 = vld [vmem:[#allocation4 + $0x6c] sm:$0xff]
    %v1849 = vld [vmem:[#allocation4 + $0x74] sm:$0xf]
    %v1850 = vld [vmem:[#allocation4 + $0x78] sm:$0xff]
    %v1851 = vld [vmem:[#allocation4 + $0x80] sm:$0xf]
    %v1852 = vld [vmem:[#allocation4 + $0x84] sm:$0xff]
    %v1853 = vld [vmem:[#allocation4 + $0x8c] sm:$0xf]
    %v1854 = vld [vmem:[#allocation4 + $0x90] sm:$0xff]
    %v1855 = vld [vmem:[#allocation4 + $0x98] sm:$0xf]
    %v1856 = vld [vmem:[#allocation4 + $0x9c] sm:$0xff]
    %v1857 = vld [vmem:[#allocation4 + $0xa4] sm:$0xf]
    %v1858 = vld [vmem:[#allocation4 + $0xa8] sm:$0xff]
    %v1859 = vld [vmem:[#allocation4 + $0xb0] sm:$0xf]
    %v1860 = vld [vmem:[#allocation4 + $0xb4] sm:$0xff]
    %v1861 = vld [vmem:[#allocation4 + $0xbc] sm:$0xf]
    %v1894 = vunpack.c.l.b16 %v1830
    %v1895 = vunpack.c.h.b16 %v1830
    %v1896 = vunpack.c.l.b16 %v1831
    %v1897 = vunpack.c.l.b16 %v1832
    %v1898 = vunpack.c.h.b16 %v1832
    %v1899 = vunpack.c.l.b16 %v1833
    %v1900 = vunpack.c.l.b16 %v1834
    %v1901 = vunpack.c.h.b16 %v1834
    %v1902 = vunpack.c.l.b16 %v1835
    %v1903 = vunpack.c.l.b16 %v1836
    %v1904 = vunpack.c.h.b16 %v1836
    %v1905 = vunpack.c.l.b16 %v1837
    %v1906 = vunpack.c.l.b16 %v1838
    %v1907 = vunpack.c.h.b16 %v1838
    %v1908 = vunpack.c.l.b16 %v1839
    %v1909 = vunpack.c.l.b16 %v1840
    %v1910 = vunpack.c.h.b16 %v1840
    %v1911 = vunpack.c.l.b16 %v1841
    %v1912 = vunpack.c.l.b16 %v1842
    %v1913 = vunpack.c.h.b16 %v1842
    %v1914 = vunpack.c.l.b16 %v1843
    %v1915 = vunpack.c.l.b16 %v1844
    %v1916 = vunpack.c.h.b16 %v1844
    %v1917 = vunpack.c.l.b16 %v1845
    %v1918 = vunpack.c.l.b16 %v1846
    %v1919 = vunpack.c.h.b16 %v1846
    %v1920 = vunpack.c.l.b16 %v1847
    %v1921 = vunpack.c.l.b16 %v1848
    %v1922 = vunpack.c.h.b16 %v1848
    %v1923 = vunpack.c.l.b16 %v1849
    %v1924 = vunpack.c.l.b16 %v1850
    %v1925 = vunpack.c.h.b16 %v1850
    %v1926 = vunpack.c.l.b16 %v1851
    %v1927 = vunpack.c.l.b16 %v1852
    %v1928 = vunpack.c.h.b16 %v1852
    %v1929 = vunpack.c.l.b16 %v1853
    %v1930 = vunpack.c.l.b16 %v1854
    %v1931 = vunpack.c.h.b16 %v1854
    %v1932 = vunpack.c.l.b16 %v1855
    %v1933 = vunpack.c.l.b16 %v1856
    %v1934 = vunpack.c.h.b16 %v1856
    %v1935 = vunpack.c.l.b16 %v1857
    %v1936 = vunpack.c.l.b16 %v1858
    %v1937 = vunpack.c.h.b16 %v1858
    %v1938 = vunpack.c.l.b16 %v1859
    %v1939 = vunpack.c.l.b16 %v1860
    %v1940 = vunpack.c.h.b16 %v1860
    %v1941 = vunpack.c.l.b16 %v1861
    %v1942 = vpack.c.b16 %v1897, %v1894
    %v1943 = vpack.c.b16 %v1898, %v1895
    %v1944 = vpack.c.b16 %v1899, %v1896
    %v1945 = vpack.c.b16 %v1903, %v1900
    %v1946 = vpack.c.b16 %v1904, %v1901
    %v1947 = vpack.c.b16 %v1905, %v1902
    %v1948 = vpack.c.b16 %v1909, %v1906
    %v1949 = vpack.c.b16 %v1910, %v1907
    %v1950 = vpack.c.b16 %v1911, %v1908
    %v1951 = vpack.c.b16 %v1915, %v1912
    %v1952 = vpack.c.b16 %v1916, %v1913
    %v1953 = vpack.c.b16 %v1917, %v1914
    %v1954 = vpack.c.b16 %v1921, %v1918
    %v1955 = vpack.c.b16 %v1922, %v1919
    %v1956 = vpack.c.b16 %v1923, %v1920
    %v1957 = vpack.c.b16 %v1927, %v1924
    %v1958 = vpack.c.b16 %v1928, %v1925
    %v1959 = vpack.c.b16 %v1929, %v1926
    %v1960 = vpack.c.b16 %v1933, %v1930
    %v1961 = vpack.c.b16 %v1934, %v1931
    %v1962 = vpack.c.b16 %v1935, %v1932
    %v1963 = vpack.c.b16 %v1939, %v1936
    %v1964 = vpack.c.b16 %v1940, %v1937
    %v1965 = vpack.c.b16 %v1941, %v1938
    %1990 = vmatprep.subr.bf16.mxu0 %v1964
    %1991 = vmatpush1.bf16.msra.mxu0 %v1963
    %1992 = vmatprep.subr.bf16.mxu0 %v1961
    %1993 = vmatpush1.bf16.msra.mxu0 %v1960
    %1994 = vmatprep.subr.bf16.mxu0 %v1958
    %1995 = vmatpush1.bf16.msra.mxu0 %v1957
    %1996 = vmatprep.subr.bf16.mxu0 %v1955
    %1997 = vmatpush1.bf16.msra.mxu0 %v1954
    %1998 = vmatprep.subr.bf16.mxu0 %v1952
    %1999 = vmatpush1.bf16.msra.mxu0 %v1951
    %2000 = vmatprep.subr.bf16.mxu0 %v1949
    %2001 = vmatpush1.bf16.msra.mxu0 %v1948
    %2002 = vmatprep.subr.bf16.mxu0 %v1946
    %2003 = vmatpush1.bf16.msra.mxu0 %v1945
    %2004 = vmatprep.subr.bf16.mxu0 %v1943
    %2005 = vmatpush1.bf16.msra.mxu0 %v1942
    %2006 = vmatprep.subr.bf16.mxu0 0
    %2007 = vmatpush2.bf16.msra.mxu0 0
    %2008 = vmatprep.subr.bf16.mxu0 0
    %2009 = vmatpush2.bf16.msra.mxu0 0
    %2010 = vmatprep.subr.bf16.mxu0 0
    %2011 = vmatpush2.bf16.msra.mxu0 0
    %2012 = vmatprep.subr.bf16.mxu0 0
    %2013 = vmatpush2.bf16.msra.mxu0 0
    %2014 = vmatprep.subr.bf16.mxu0 0
    %2015 = vmatpush2.bf16.msra.mxu0 0
    %2016 = vmatprep.subr.bf16.mxu0 0
    %2017 = vmatpush2.bf16.msra.mxu0 0
    %2018 = vmatprep.subr.bf16.mxu0 0
    %2019 = vmatpush2.bf16.msra.mxu0 0
    %2020 = vmatprep.subr.bf16.mxu0 0
    %2021 = vmatpush2.bf16.msra.mxu0 0
    %2022 = vmatprep.mubr.bf16.mxu0 0
    %2023 = vmatmul.mubr.bf16.gmra.mxu0 %v1829
    %v2024 = vpop.f32.mrf.mxu0
    %v2025 = vadd.f32 %v673, %v2024
    %v2026 = vpop.f32.mrf.mxu0
    %v2027 = vadd.f32 %v677, %v2026
    %v2028 = vpop.f32.mrf.mxu0
    %v2029 = vpop.f32.mrf.mxu0
    %2030 = vdwg.mxu0
    %2031 = vmatprep.subr.bf16.mxu0 0
    %2032 = vmatpush1.bf16.msra.mxu0 %v1965
    %2033 = vmatprep.subr.bf16.mxu0 0
    %2034 = vmatpush1.bf16.msra.mxu0 %v1962
    %2035 = vmatprep.subr.bf16.mxu0 0
    %2036 = vmatpush1.bf16.msra.mxu0 %v1959
    %2037 = vmatprep.subr.bf16.mxu0 0
    %2038 = vmatpush1.bf16.msra.mxu0 %v1956
    %2039 = vmatprep.subr.bf16.mxu0 0
    %2040 = vmatpush1.bf16.msra.mxu0 %v1953
    %2041 = vmatprep.subr.bf16.mxu0 0
    %2042 = vmatpush1.bf16.msra.mxu0 %v1950
    %2043 = vmatprep.subr.bf16.mxu0 0
    %2044 = vmatpush1.bf16.msra.mxu0 %v1947
    %2045 = vmatprep.subr.bf16.mxu0 0
    %2046 = vmatpush1.bf16.msra.mxu0 %v1944
    %2047 = vmatprep.subr.bf16.mxu0 0
    %2048 = vmatpush2.bf16.msra.mxu0 0
    %2049 = vmatprep.subr.bf16.mxu0 0
    %2050 = vmatpush2.bf16.msra.mxu0 0
    %2051 = vmatprep.subr.bf16.mxu0 0
    %2052 = vmatpush2.bf16.msra.mxu0 0
    %2053 = vmatprep.subr.bf16.mxu0 0
    %2054 = vmatpush2.bf16.msra.mxu0 0
    %2055 = vmatprep.subr.bf16.mxu0 0
    %2056 = vmatpush2.bf16.msra.mxu0 0
    %2057 = vmatprep.subr.bf16.mxu0 0
    %2058 = vmatpush2.bf16.msra.mxu0 0
    %2059 = vmatprep.subr.bf16.mxu0 0
    %2060 = vmatpush2.bf16.msra.mxu0 0
    %2061 = vmatprep.subr.bf16.mxu0 0
    %2062 = vmatpush2.bf16.msra.mxu0 0
    %2063 = vmatprep.mubr.bf16.mxu0 0
    %2064 = vmatmul.mubr.bf16.gmra.mxu0 %v1829
    %v2065 = vpop.f32.mrf.mxu0
    %v2066 = vadd.f32 %v681, %v2065
    %v2067 = vpop.f32.mrf.mxu0
    %v2068 = vpop.f32.mrf.mxu0
    %v2069 = vpop.f32.mrf.mxu0
    %2070 = vdwg.mxu0
    %v2071 = vadd.f32 %v1825, %v2025
    %v2072 = vxor.u32 %v2071, 2147483648
    %v2073 = vmul.f32 %v2072, 1.442695
    %v2074 = vpow.pop %v2073
    %v2075 = vadd.f32 %v2074, 1.0
    %v2076 = vrcp.pop %v2075
    %v2077 = vmul.f32 1.0, %v2076
    %v2078 = vadd.f32 %v1826, %v2027
    %v2079 = vxor.u32 %v2078, 2147483648
    %v2080 = vmul.f32 %v2079, 1.442695
    %v2081 = vpow.pop %v2080
    %v2082 = vadd.f32 %v2081, 1.0
    %v2083 = vrcp.pop %v2082
    %v2084 = vmul.f32 1.0, %v2083
    %v2085 = vmul.f32 %v2077, %v2066
    %v2086 = vadd.f32 %v1827, %v2085
    %v2087 = vtanh.pop %v2086
    %v2088 = vsub.f32 %v1828, %v2087
    %v2089 = vmul.f32 %v2084, %v2088
    %v2090 = vadd.f32 %v2087, %v2089
    %vm2091 = vcmp.gt.s32.totalorder %v667, 2
    %v2092 = vsel %vm2091, 1, 0
    %2093 = vset.pattern.permute.xlu0 0
    %2094 = vperm.xlu0 %2093, %v2092
    %v2095 = vpop.permute.xlu0 %2094
    %vm2096 = vcmp.eq.s32.totalorder %v2095, 1
    %v2097 = vsel %vm2096, %v2090, %v1828
    %2098 = vst [vmem:[#allocation3] sm:$0xff] %v2097
    %v2099 = vsel %vm2096, %v2090, 0.0
    %s2100 = scalar_lea.vmem %s6, 16
    %v2101 = vld [vmem:[%s2100] sm:$0xff]
    %v2102 = vadd.f32 %v2101, %v2099
    %2103 = vst [vmem:[%s2100] sm:$0xff] %v2102
    %s2104 = scalar_lea.vmem %s981, 240 [#allocation2]
    %v2105 = vld [vmem:[%s2104] sm:$0xff]
    %v2106 = vld [vmem:[%s2104 + $0x8] sm:$0xff]
    %v2107 = vld [vmem:[%s2104 + $0x10] sm:$0xff]
    %v2108 = vld [vmem:[%s986] sm:$0xff]
    %v2109 = vpack.c.bf16 %v2108, %v2108
    %v2110 = vld [vmem:[%s989] sm:$0xff]
    %v2111 = vld [vmem:[%s989 + $0x8] sm:$0xf]
    %v2112 = vld [vmem:[%s989 + $0xc] sm:$0xff]
    %v2113 = vld [vmem:[%s989 + $0x14] sm:$0xf]
    %v2114 = vld [vmem:[%s989 + $0x18] sm:$0xff]
    %v2115 = vld [vmem:[%s989 + $0x20] sm:$0xf]
    %v2116 = vld [vmem:[%s989 + $0x24] sm:$0xff]
    %v2117 = vld [vmem:[%s989 + $0x2c] sm:$0xf]
    %v2118 = vld [vmem:[%s989 + $0x30] sm:$0xff]
    %v2119 = vld [vmem:[%s989 + $0x38] sm:$0xf]
    %v2120 = vld [vmem:[%s989 + $0x3c] sm:$0xff]
    %v2121 = vld [vmem:[%s989 + $0x44] sm:$0xf]
    %v2122 = vld [vmem:[%s989 + $0x48] sm:$0xff]
    %v2123 = vld [vmem:[%s989 + $0x50] sm:$0xf]
    %v2124 = vld [vmem:[%s989 + $0x54] sm:$0xff]
    %v2125 = vld [vmem:[%s989 + $0x5c] sm:$0xf]
    %v2126 = vld [vmem:[%s989 + $0x60] sm:$0xff]
    %v2127 = vld [vmem:[%s989 + $0x68] sm:$0xf]
    %v2128 = vld [vmem:[%s989 + $0x6c] sm:$0xff]
    %v2129 = vld [vmem:[%s989 + $0x74] sm:$0xf]
    %v2130 = vld [vmem:[%s989 + $0x78] sm:$0xff]
    %v2131 = vld [vmem:[%s989 + $0x80] sm:$0xf]
    %v2132 = vld [vmem:[%s989 + $0x84] sm:$0xff]
    %v2133 = vld [vmem:[%s989 + $0x8c] sm:$0xf]
    %v2134 = vld [vmem:[%s989 + $0x90] sm:$0xff]
    %v2135 = vld [vmem:[%s989 + $0x98] sm:$0xf]
    %v2136 = vld [vmem:[%s989 + $0x9c] sm:$0xff]
    %v2137 = vld [vmem:[%s989 + $0xa4] sm:$0xf]
    %v2138 = vld [vmem:[%s989 + $0xa8] sm:$0xff]
    %v2139 = vld [vmem:[%s989 + $0xb0] sm:$0xf]
    %v2140 = vld [vmem:[%s989 + $0xb4] sm:$0xff]
    %v2141 = vld [vmem:[%s989 + $0xbc] sm:$0xf]
    %v2174 = vunpack.c.l.b16 %v2110
    %v2175 = vunpack.c.h.b16 %v2110
    %v2176 = vunpack.c.l.b16 %v2111
    %v2177 = vunpack.c.l.b16 %v2112
    %v2178 = vunpack.c.h.b16 %v2112
    %v2179 = vunpack.c.l.b16 %v2113
    %v2180 = vunpack.c.l.b16 %v2114
    %v2181 = vunpack.c.h.b16 %v2114
    %v2182 = vunpack.c.l.b16 %v2115
    %v2183 = vunpack.c.l.b16 %v2116
    %v2184 = vunpack.c.h.b16 %v2116
    %v2185 = vunpack.c.l.b16 %v2117
    %v2186 = vunpack.c.l.b16 %v2118
    %v2187 = vunpack.c.h.b16 %v2118
    %v2188 = vunpack.c.l.b16 %v2119
    %v2189 = vunpack.c.l.b16 %v2120
    %v2190 = vunpack.c.h.b16 %v2120
    %v2191 = vunpack.c.l.b16 %v2121
    %v2192 = vunpack.c.l.b16 %v2122
    %v2193 = vunpack.c.h.b16 %v2122
    %v2194 = vunpack.c.l.b16 %v2123
    %v2195 = vunpack.c.l.b16 %v2124
    %v2196 = vunpack.c.h.b16 %v2124
    %v2197 = vunpack.c.l.b16 %v2125
    %v2198 = vunpack.c.l.b16 %v2126
    %v2199 = vunpack.c.h.b16 %v2126
    %v2200 = vunpack.c.l.b16 %v2127
    %v2201 = vunpack.c.l.b16 %v2128
    %v2202 = vunpack.c.h.b16 %v2128
    %v2203 = vunpack.c.l.b16 %v2129
    %v2204 = vunpack.c.l.b16 %v2130
    %v2205 = vunpack.c.h.b16 %v2130
    %v2206 = vunpack.c.l.b16 %v2131
    %v2207 = vunpack.c.l.b16 %v2132
    %v2208 = vunpack.c.h.b16 %v2132
    %v2209 = vunpack.c.l.b16 %v2133
    %v2210 = vunpack.c.l.b16 %v2134
    %v2211 = vunpack.c.h.b16 %v2134
    %v2212 = vunpack.c.l.b16 %v2135
    %v2213 = vunpack.c.l.b16 %v2136
    %v2214 = vunpack.c.h.b16 %v2136
    %v2215 = vunpack.c.l.b16 %v2137
    %v2216 = vunpack.c.l.b16 %v2138
    %v2217 = vunpack.c.h.b16 %v2138
    %v2218 = vunpack.c.l.b16 %v2139
    %v2219 = vunpack.c.l.b16 %v2140
    %v2220 = vunpack.c.h.b16 %v2140
    %v2221 = vunpack.c.l.b16 %v2141
    %v2222 = vpack.c.b16 %v2177, %v2174
    %v2223 = vpack.c.b16 %v2178, %v2175
    %v2224 = vpack.c.b16 %v2179, %v2176
    %v2225 = vpack.c.b16 %v2183, %v2180
    %v2226 = vpack.c.b16 %v2184, %v2181
    %v2227 = vpack.c.b16 %v2185, %v2182
    %v2228 = vpack.c.b16 %v2189, %v2186
    %v2229 = vpack.c.b16 %v2190, %v2187
    %v2230 = vpack.c.b16 %v2191, %v2188
    %v2231 = vpack.c.b16 %v2195, %v2192
    %v2232 = vpack.c.b16 %v2196, %v2193
    %v2233 = vpack.c.b16 %v2197, %v2194
    %v2234 = vpack.c.b16 %v2201, %v2198
    %v2235 = vpack.c.b16 %v2202, %v2199
    %v2236 = vpack.c.b16 %v2203, %v2200
    %v2237 = vpack.c.b16 %v2207, %v2204
    %v2238 = vpack.c.b16 %v2208, %v2205
    %v2239 = vpack.c.b16 %v2209, %v2206
    %v2240 = vpack.c.b16 %v2213, %v2210
    %v2241 = vpack.c.b16 %v2214, %v2211
    %v2242 = vpack.c.b16 %v2215, %v2212
    %v2243 = vpack.c.b16 %v2219, %v2216
    %v2244 = vpack.c.b16 %v2220, %v2217
    %v2245 = vpack.c.b16 %v2221, %v2218
    %2270 = vmatprep.subr.bf16.mxu0 %v2244
    %2271 = vmatpush1.bf16.msra.mxu0 %v2243
    %2272 = vmatprep.subr.bf16.mxu0 %v2241
    %2273 = vmatpush1.bf16.msra.mxu0 %v2240
    %2274 = vmatprep.subr.bf16.mxu0 %v2238
    %2275 = vmatpush1.bf16.msra.mxu0 %v2237
    %2276 = vmatprep.subr.bf16.mxu0 %v2235
    %2277 = vmatpush1.bf16.msra.mxu0 %v2234
    %2278 = vmatprep.subr.bf16.mxu0 %v2232
    %2279 = vmatpush1.bf16.msra.mxu0 %v2231
    %2280 = vmatprep.subr.bf16.mxu0 %v2229
    %2281 = vmatpush1.bf16.msra.mxu0 %v2228
    %2282 = vmatprep.subr.bf16.mxu0 %v2226
    %2283 = vmatpush1.bf16.msra.mxu0 %v2225
    %2284 = vmatprep.subr.bf16.mxu0 %v2223
    %2285 = vmatpush1.bf16.msra.mxu0 %v2222
    %2286 = vmatprep.subr.bf16.mxu0 0
    %2287 = vmatpush2.bf16.msra.mxu0 0
    %2288 = vmatprep.subr.bf16.mxu0 0
    %2289 = vmatpush2.bf16.msra.mxu0 0
    %2290 = vmatprep.subr.bf16.mxu0 0
    %2291 = vmatpush2.bf16.msra.mxu0 0
    %2292 = vmatprep.subr.bf16.mxu0 0
    %2293 = vmatpush2.bf16.msra.mxu0 0
    %2294 = vmatprep.subr.bf16.mxu0 0
    %2295 = vmatpush2.bf16.msra.mxu0 0
    %2296 = vmatprep.subr.bf16.mxu0 0
    %2297 = vmatpush2.bf16.msra.mxu0 0
    %2298 = vmatprep.subr.bf16.mxu0 0
    %2299 = vmatpush2.bf16.msra.mxu0 0
    %2300 = vmatprep.subr.bf16.mxu0 0
    %2301 = vmatpush2.bf16.msra.mxu0 0
    %2302 = vmatprep.mubr.bf16.mxu0 0
    %2303 = vmatmul.mubr.bf16.gmra.mxu0 %v2109
    %v2304 = vpop.f32.mrf.mxu0
    %v2305 = vadd.f32 %v691, %v2304
    %v2306 = vpop.f32.mrf.mxu0
    %v2307 = vadd.f32 %v695, %v2306
    %v2308 = vpop.f32.mrf.mxu0
    %v2309 = vpop.f32.mrf.mxu0
    %2310 = vdwg.mxu0
    %2311 = vmatprep.subr.bf16.mxu0 0
    %2312 = vmatpush1.bf16.msra.mxu0 %v2245
    %2313 = vmatprep.subr.bf16.mxu0 0
    %2314 = vmatpush1.bf16.msra.mxu0 %v2242
    %2315 = vmatprep.subr.bf16.mxu0 0
    %2316 = vmatpush1.bf16.msra.mxu0 %v2239
    %2317 = vmatprep.subr.bf16.mxu0 0
    %2318 = vmatpush1.bf16.msra.mxu0 %v2236
    %2319 = vmatprep.subr.bf16.mxu0 0
    %2320 = vmatpush1.bf16.msra.mxu0 %v2233
    %2321 = vmatprep.subr.bf16.mxu0 0
    %2322 = vmatpush1.bf16.msra.mxu0 %v2230
    %2323 = vmatprep.subr.bf16.mxu0 0
    %2324 = vmatpush1.bf16.msra.mxu0 %v2227
    %2325 = vmatprep.subr.bf16.mxu0 0
    %2326 = vmatpush1.bf16.msra.mxu0 %v2224
    %2327 = vmatprep.subr.bf16.mxu0 0
    %2328 = vmatpush2.bf16.msra.mxu0 0
    %2329 = vmatprep.subr.bf16.mxu0 0
    %2330 = vmatpush2.bf16.msra.mxu0 0
    %2331 = vmatprep.subr.bf16.mxu0 0
    %2332 = vmatpush2.bf16.msra.mxu0 0
    %2333 = vmatprep.subr.bf16.mxu0 0
    %2334 = vmatpush2.bf16.msra.mxu0 0
    %2335 = vmatprep.subr.bf16.mxu0 0
    %2336 = vmatpush2.bf16.msra.mxu0 0
    %2337 = vmatprep.subr.bf16.mxu0 0
    %2338 = vmatpush2.bf16.msra.mxu0 0
    %2339 = vmatprep.subr.bf16.mxu0 0
    %2340 = vmatpush2.bf16.msra.mxu0 0
    %2341 = vmatprep.subr.bf16.mxu0 0
    %2342 = vmatpush2.bf16.msra.mxu0 0
    %2343 = vmatprep.mubr.bf16.mxu0 0
    %2344 = vmatmul.mubr.bf16.gmra.mxu0 %v2109
    %v2345 = vpop.f32.mrf.mxu0
    %v2346 = vadd.f32 %v699, %v2345
    %v2347 = vpop.f32.mrf.mxu0
    %v2348 = vpop.f32.mrf.mxu0
    %v2349 = vpop.f32.mrf.mxu0
    %2350 = vdwg.mxu0
    %v2351 = vadd.f32 %v2105, %v2305
    %v2352 = vxor.u32 %v2351, 2147483648
    %v2353 = vmul.f32 %v2352, 1.442695
    %v2354 = vpow.pop %v2353
    %v2355 = vadd.f32 %v2354, 1.0
    %v2356 = vrcp.pop %v2355
    %v2357 = vmul.f32 1.0, %v2356
    %v2358 = vadd.f32 %v2106, %v2307
    %v2359 = vxor.u32 %v2358, 2147483648
    %v2360 = vmul.f32 %v2359, 1.442695
    %v2361 = vpow.pop %v2360
    %v2362 = vadd.f32 %v2361, 1.0
    %v2363 = vrcp.pop %v2362
    %v2364 = vmul.f32 1.0, %v2363
    %v2365 = vmul.f32 %v2357, %v2346
    %v2366 = vadd.f32 %v2107, %v2365
    %v2367 = vtanh.pop %v2366
    %v2368 = vsub.f32 %v2108, %v2367
    %v2369 = vmul.f32 %v2364, %v2368
    %v2370 = vadd.f32 %v2367, %v2369
    %vm2371 = vcmp.gt.s32.totalorder %v667, 5
    %v2372 = vsel %vm2371, 1, 0
    %2373 = vset.pattern.permute.xlu0 0
    %2374 = vperm.xlu0 %2373, %v2372
    %v2375 = vpop.permute.xlu0 %2374
    %vm2376 = vcmp.eq.s32.totalorder %v2375, 1
    %v2377 = vsel %vm2376, %v2370, %v2108
    %2378 = vst [vmem:[%s986] sm:$0xff] %v2377
    %v2379 = vsel %vm2376, %v2370, 0.0
    %s2380 = scalar_lea.vmem %s6, 40
    %v2381 = vld [vmem:[%s2380] sm:$0xff]
    %v2382 = vadd.f32 %v2381, %v2379
    %2383 = vst [vmem:[%s2380] sm:$0xff] %v2382
    %s2384 = scalar_lea.vmem [#allocation2], 144
    %v2385 = vld [vmem:[%s2384] sm:$0xff]
    %v2386 = vld [vmem:[%s2384 + $0x8] sm:$0xff]
    %v2387 = vld [vmem:[%s2384 + $0x10] sm:$0xff]
    %v2388 = vld [vmem:[#allocation3] sm:$0xff]
    %v2389 = vpack.c.bf16 %v2388, %v2388
    %v2390 = vld [vmem:[#allocation4] sm:$0xff]
    %v2391 = vld [vmem:[#allocation4 + $0x8] sm:$0xf]
    %v2392 = vld [vmem:[#allocation4 + $0xc] sm:$0xff]
    %v2393 = vld [vmem:[#allocation4 + $0x14] sm:$0xf]
    %v2394 = vld [vmem:[#allocation4 + $0x18] sm:$0xff]
    %v2395 = vld [vmem:[#allocation4 + $0x20] sm:$0xf]
    %v2396 = vld [vmem:[#allocation4 + $0x24] sm:$0xff]
    %v2397 = vld [vmem:[#allocation4 + $0x2c] sm:$0xf]
    %v2398 = vld [vmem:[#allocation4 + $0x30] sm:$0xff]
    %v2399 = vld [vmem:[#allocation4 + $0x38] sm:$0xf]
    %v2400 = vld [vmem:[#allocation4 + $0x3c] sm:$0xff]
    %v2401 = vld [vmem:[#allocation4 + $0x44] sm:$0xf]
    %v2402 = vld [vmem:[#allocation4 + $0x48] sm:$0xff]
    %v2403 = vld [vmem:[#allocation4 + $0x50] sm:$0xf]
    %v2404 = vld [vmem:[#allocation4 + $0x54] sm:$0xff]
    %v2405 = vld [vmem:[#allocation4 + $0x5c] sm:$0xf]
    %v2406 = vld [vmem:[#allocation4 + $0x60] sm:$0xff]
    %v2407 = vld [vmem:[#allocation4 + $0x68] sm:$0xf]
    %v2408 = vld [vmem:[#allocation4 + $0x6c] sm:$0xff]
    %v2409 = vld [vmem:[#allocation4 + $0x74] sm:$0xf]
    %v2410 = vld [vmem:[#allocation4 + $0x78] sm:$0xff]
    %v2411 = vld [vmem:[#allocation4 + $0x80] sm:$0xf]
    %v2412 = vld [vmem:[#allocation4 + $0x84] sm:$0xff]
    %v2413 = vld [vmem:[#allocation4 + $0x8c] sm:$0xf]
    %v2414 = vld [vmem:[#allocation4 + $0x90] sm:$0xff]
    %v2415 = vld [vmem:[#allocation4 + $0x98] sm:$0xf]
    %v2416 = vld [vmem:[#allocation4 + $0x9c] sm:$0xff]
    %v2417 = vld [vmem:[#allocation4 + $0xa4] sm:$0xf]
    %v2418 = vld [vmem:[#allocation4 + $0xa8] sm:$0xff]
    %v2419 = vld [vmem:[#allocation4 + $0xb0] sm:$0xf]
    %v2420 = vld [vmem:[#allocation4 + $0xb4] sm:$0xff]
    %v2421 = vld [vmem:[#allocation4 + $0xbc] sm:$0xf]
    %v2454 = vunpack.c.l.b16 %v2390
    %v2455 = vunpack.c.h.b16 %v2390
    %v2456 = vunpack.c.l.b16 %v2391
    %v2457 = vunpack.c.l.b16 %v2392
    %v2458 = vunpack.c.h.b16 %v2392
    %v2459 = vunpack.c.l.b16 %v2393
    %v2460 = vunpack.c.l.b16 %v2394
    %v2461 = vunpack.c.h.b16 %v2394
    %v2462 = vunpack.c.l.b16 %v2395
    %v2463 = vunpack.c.l.b16 %v2396
    %v2464 = vunpack.c.h.b16 %v2396
    %v2465 = vunpack.c.l.b16 %v2397
    %v2466 = vunpack.c.l.b16 %v2398
    %v2467 = vunpack.c.h.b16 %v2398
    %v2468 = vunpack.c.l.b16 %v2399
    %v2469 = vunpack.c.l.b16 %v2400
    %v2470 = vunpack.c.h.b16 %v2400
    %v2471 = vunpack.c.l.b16 %v2401
    %v2472 = vunpack.c.l.b16 %v2402
    %v2473 = vunpack.c.h.b16 %v2402
    %v2474 = vunpack.c.l.b16 %v2403
    %v2475 = vunpack.c.l.b16 %v2404
    %v2476 = vunpack.c.h.b16 %v2404
    %v2477 = vunpack.c.l.b16 %v2405
    %v2478 = vunpack.c.l.b16 %v2406
    %v2479 = vunpack.c.h.b16 %v2406
    %v2480 = vunpack.c.l.b16 %v2407
    %v2481 = vunpack.c.l.b16 %v2408
    %v2482 = vunpack.c.h.b16 %v2408
    %v2483 = vunpack.c.l.b16 %v2409
    %v2484 = vunpack.c.l.b16 %v2410
    %v2485 = vunpack.c.h.b16 %v2410
    %v2486 = vunpack.c.l.b16 %v2411
    %v2487 = vunpack.c.l.b16 %v2412
    %v2488 = vunpack.c.h.b16 %v2412
    %v2489 = vunpack.c.l.b16 %v2413
    %v2490 = vunpack.c.l.b16 %v2414
    %v2491 = vunpack.c.h.b16 %v2414
    %v2492 = vunpack.c.l.b16 %v2415
    %v2493 = vunpack.c.l.b16 %v2416
    %v2494 = vunpack.c.h.b16 %v2416
    %v2495 = vunpack.c.l.b16 %v2417
    %v2496 = vunpack.c.l.b16 %v2418
    %v2497 = vunpack.c.h.b16 %v2418
    %v2498 = vunpack.c.l.b16 %v2419
    %v2499 = vunpack.c.l.b16 %v2420
    %v2500 = vunpack.c.h.b16 %v2420
    %v2501 = vunpack.c.l.b16 %v2421
    %v2502 = vpack.c.b16 %v2457, %v2454
    %v2503 = vpack.c.b16 %v2458, %v2455
    %v2504 = vpack.c.b16 %v2459, %v2456
    %v2505 = vpack.c.b16 %v2463, %v2460
    %v2506 = vpack.c.b16 %v2464, %v2461
    %v2507 = vpack.c.b16 %v2465, %v2462
    %v2508 = vpack.c.b16 %v2469, %v2466
    %v2509 = vpack.c.b16 %v2470, %v2467
    %v2510 = vpack.c.b16 %v2471, %v2468
    %v2511 = vpack.c.b16 %v2475, %v2472
    %v2512 = vpack.c.b16 %v2476, %v2473
    %v2513 = vpack.c.b16 %v2477, %v2474
    %v2514 = vpack.c.b16 %v2481, %v2478
    %v2515 = vpack.c.b16 %v2482, %v2479
    %v2516 = vpack.c.b16 %v2483, %v2480
    %v2517 = vpack.c.b16 %v2487, %v2484
    %v2518 = vpack.c.b16 %v2488, %v2485
    %v2519 = vpack.c.b16 %v2489, %v2486
    %v2520 = vpack.c.b16 %v2493, %v2490
    %v2521 = vpack.c.b16 %v2494, %v2491
    %v2522 = vpack.c.b16 %v2495, %v2492
    %v2523 = vpack.c.b16 %v2499, %v2496
    %v2524 = vpack.c.b16 %v2500, %v2497
    %v2525 = vpack.c.b16 %v2501, %v2498
    %2550 = vmatprep.subr.bf16.mxu0 %v2524
    %2551 = vmatpush1.bf16.msra.mxu0 %v2523
    %2552 = vmatprep.subr.bf16.mxu0 %v2521
    %2553 = vmatpush1.bf16.msra.mxu0 %v2520
    %2554 = vmatprep.subr.bf16.mxu0 %v2518
    %2555 = vmatpush1.bf16.msra.mxu0 %v2517
    %2556 = vmatprep.subr.bf16.mxu0 %v2515
    %2557 = vmatpush1.bf16.msra.mxu0 %v2514
    %2558 = vmatprep.subr.bf16.mxu0 %v2512
    %2559 = vmatpush1.bf16.msra.mxu0 %v2511
    %2560 = vmatprep.subr.bf16.mxu0 %v2509
    %2561 = vmatpush1.bf16.msra.mxu0 %v2508
    %2562 = vmatprep.subr.bf16.mxu0 %v2506
    %2563 = vmatpush1.bf16.msra.mxu0 %v2505
    %2564 = vmatprep.subr.bf16.mxu0 %v2503
    %2565 = vmatpush1.bf16.msra.mxu0 %v2502
    %2566 = vmatprep.subr.bf16.mxu0 0
    %2567 = vmatpush2.bf16.msra.mxu0 0
    %2568 = vmatprep.subr.bf16.mxu0 0
    %2569 = vmatpush2.bf16.msra.mxu0 0
    %2570 = vmatprep.subr.bf16.mxu0 0
    %2571 = vmatpush2.bf16.msra.mxu0 0
    %2572 = vmatprep.subr.bf16.mxu0 0
    %2573 = vmatpush2.bf16.msra.mxu0 0
    %2574 = vmatprep.subr.bf16.mxu0 0
    %2575 = vmatpush2.bf16.msra.mxu0 0
    %2576 = vmatprep.subr.bf16.mxu0 0
    %2577 = vmatpush2.bf16.msra.mxu0 0
    %2578 = vmatprep.subr.bf16.mxu0 0
    %2579 = vmatpush2.bf16.msra.mxu0 0
    %2580 = vmatprep.subr.bf16.mxu0 0
    %2581 = vmatpush2.bf16.msra.mxu0 0
    %2582 = vmatprep.mubr.bf16.mxu0 0
    %2583 = vmatmul.mubr.bf16.gmra.mxu0 %v2389
    %v2584 = vpop.f32.mrf.mxu0
    %v2585 = vadd.f32 %v673, %v2584
    %v2586 = vpop.f32.mrf.mxu0
    %v2587 = vadd.f32 %v677, %v2586
    %v2588 = vpop.f32.mrf.mxu0
    %v2589 = vpop.f32.mrf.mxu0
    %2590 = vdwg.mxu0
    %2591 = vmatprep.subr.bf16.mxu0 0
    %2592 = vmatpush1.bf16.msra.mxu0 %v2525
    %2593 = vmatprep.subr.bf16.mxu0 0
    %2594 = vmatpush1.bf16.msra.mxu0 %v2522
    %2595 = vmatprep.subr.bf16.mxu0 0
    %2596 = vmatpush1.bf16.msra.mxu0 %v2519
    %2597 = vmatprep.subr.bf16.mxu0 0
    %2598 = vmatpush1.bf16.msra.mxu0 %v2516
    %2599 = vmatprep.subr.bf16.mxu0 0
    %2600 = vmatpush1.bf16.msra.mxu0 %v2513
    %2601 = vmatprep.subr.bf16.mxu0 0
    %2602 = vmatpush1.bf16.msra.mxu0 %v2510
    %2603 = vmatprep.subr.bf16.mxu0 0
    %2604 = vmatpush1.bf16.msra.mxu0 %v2507
    %2605 = vmatprep.subr.bf16.mxu0 0
    %2606 = vmatpush1.bf16.msra.mxu0 %v2504
    %2607 = vmatprep.subr.bf16.mxu0 0
    %2608 = vmatpush2.bf16.msra.mxu0 0
    %2609 = vmatprep.subr.bf16.mxu0 0
    %2610 = vmatpush2.bf16.msra.mxu0 0
    %2611 = vmatprep.subr.bf16.mxu0 0
    %2612 = vmatpush2.bf16.msra.mxu0 0
    %2613 = vmatprep.subr.bf16.mxu0 0
    %2614 = vmatpush2.bf16.msra.mxu0 0
    %2615 = vmatprep.subr.bf16.mxu0 0
    %2616 = vmatpush2.bf16.msra.mxu0 0
    %2617 = vmatprep.subr.bf16.mxu0 0
    %2618 = vmatpush2.bf16.msra.mxu0 0
    %2619 = vmatprep.subr.bf16.mxu0 0
    %2620 = vmatpush2.bf16.msra.mxu0 0
    %2621 = vmatprep.subr.bf16.mxu0 0
    %2622 = vmatpush2.bf16.msra.mxu0 0
    %2623 = vmatprep.mubr.bf16.mxu0 0
    %2624 = vmatmul.mubr.bf16.gmra.mxu0 %v2389
    %v2625 = vpop.f32.mrf.mxu0
    %v2626 = vadd.f32 %v681, %v2625
    %v2627 = vpop.f32.mrf.mxu0
    %v2628 = vpop.f32.mrf.mxu0
    %v2629 = vpop.f32.mrf.mxu0
    %2630 = vdwg.mxu0
    %v2631 = vadd.f32 %v2385, %v2585
    %v2632 = vxor.u32 %v2631, 2147483648
    %v2633 = vmul.f32 %v2632, 1.442695
    %v2634 = vpow.pop %v2633
    %v2635 = vadd.f32 %v2634, 1.0
    %v2636 = vrcp.pop %v2635
    %v2637 = vmul.f32 1.0, %v2636
    %v2638 = vadd.f32 %v2386, %v2587
    %v2639 = vxor.u32 %v2638, 2147483648
    %v2640 = vmul.f32 %v2639, 1.442695
    %v2641 = vpow.pop %v2640
    %v2642 = vadd.f32 %v2641, 1.0
    %v2643 = vrcp.pop %v2642
    %v2644 = vmul.f32 1.0, %v2643
    %v2645 = vmul.f32 %v2637, %v2626
    %v2646 = vadd.f32 %v2387, %v2645
    %v2647 = vtanh.pop %v2646
    %v2648 = vsub.f32 %v2388, %v2647
    %v2649 = vmul.f32 %v2644, %v2648
    %v2650 = vadd.f32 %v2647, %v2649
    %vm2651 = vcmp.gt.s32.totalorder %v667, 3
    %v2652 = vsel %vm2651, 1, 0
    %2653 = vset.pattern.permute.xlu0 0
    %2654 = vperm.xlu0 %2653, %v2652
    %v2655 = vpop.permute.xlu0 %2654
    %vm2656 = vcmp.eq.s32.totalorder %v2655, 1
    %v2657 = vsel %vm2656, %v2650, %v2388
    %2658 = vst [vmem:[#allocation3] sm:$0xff] %v2657
    %v2659 = vsel %vm2656, %v2650, 0.0
    %s2660 = scalar_lea.vmem %s6, 24
    %v2661 = vld [vmem:[%s2660] sm:$0xff]
    %v2662 = vadd.f32 %v2661, %v2659
    %2663 = vst [vmem:[%s2660] sm:$0xff] %v2662
    %s2664 = scalar_lea.vmem %s981, 192 [#allocation2]
    %v2665 = vld [vmem:[%s2664] sm:$0xff]
    %v2666 = vld [vmem:[%s2664 + $0x8] sm:$0xff]
    %v2667 = vld [vmem:[%s2664 + $0x10] sm:$0xff]
    %v2668 = vld [vmem:[%s986] sm:$0xff]
    %v2669 = vpack.c.bf16 %v2668, %v2668
    %v2670 = vld [vmem:[%s989] sm:$0xff]
    %v2671 = vld [vmem:[%s989 + $0x8] sm:$0xf]
    %v2672 = vld [vmem:[%s989 + $0xc] sm:$0xff]
    %v2673 = vld [vmem:[%s989 + $0x14] sm:$0xf]
    %v2674 = vld [vmem:[%s989 + $0x18] sm:$0xff]
    %v2675 = vld [vmem:[%s989 + $0x20] sm:$0xf]
    %v2676 = vld [vmem:[%s989 + $0x24] sm:$0xff]
    %v2677 = vld [vmem:[%s989 + $0x2c] sm:$0xf]
    %v2678 = vld [vmem:[%s989 + $0x30] sm:$0xff]
    %v2679 = vld [vmem:[%s989 + $0x38] sm:$0xf]
    %v2680 = vld [vmem:[%s989 + $0x3c] sm:$0xff]
    %v2681 = vld [vmem:[%s989 + $0x44] sm:$0xf]
    %v2682 = vld [vmem:[%s989 + $0x48] sm:$0xff]
    %v2683 = vld [vmem:[%s989 + $0x50] sm:$0xf]
    %v2684 = vld [vmem:[%s989 + $0x54] sm:$0xff]
    %v2685 = vld [vmem:[%s989 + $0x5c] sm:$0xf]
    %v2686 = vld [vmem:[%s989 + $0x60] sm:$0xff]
    %v2687 = vld [vmem:[%s989 + $0x68] sm:$0xf]
    %v2688 = vld [vmem:[%s989 + $0x6c] sm:$0xff]
    %v2689 = vld [vmem:[%s989 + $0x74] sm:$0xf]
    %v2690 = vld [vmem:[%s989 + $0x78] sm:$0xff]
    %v2691 = vld [vmem:[%s989 + $0x80] sm:$0xf]
    %v2692 = vld [vmem:[%s989 + $0x84] sm:$0xff]
    %v2693 = vld [vmem:[%s989 + $0x8c] sm:$0xf]
    %v2694 = vld [vmem:[%s989 + $0x90] sm:$0xff]
    %v2695 = vld [vmem:[%s989 + $0x98] sm:$0xf]
    %v2696 = vld [vmem:[%s989 + $0x9c] sm:$0xff]
    %v2697 = vld [vmem:[%s989 + $0xa4] sm:$0xf]
    %v2698 = vld [vmem:[%s989 + $0xa8] sm:$0xff]
    %v2699 = vld [vmem:[%s989 + $0xb0] sm:$0xf]
    %v2700 = vld [vmem:[%s989 + $0xb4] sm:$0xff]
    %v2701 = vld [vmem:[%s989 + $0xbc] sm:$0xf]
    %v2734 = vunpack.c.l.b16 %v2670
    %v2735 = vunpack.c.h.b16 %v2670
    %v2736 = vunpack.c.l.b16 %v2671
    %v2737 = vunpack.c.l.b16 %v2672
    %v2738 = vunpack.c.h.b16 %v2672
    %v2739 = vunpack.c.l.b16 %v2673
    %v2740 = vunpack.c.l.b16 %v2674
    %v2741 = vunpack.c.h.b16 %v2674
    %v2742 = vunpack.c.l.b16 %v2675
    %v2743 = vunpack.c.l.b16 %v2676
    %v2744 = vunpack.c.h.b16 %v2676
    %v2745 = vunpack.c.l.b16 %v2677
    %v2746 = vunpack.c.l.b16 %v2678
    %v2747 = vunpack.c.h.b16 %v2678
    %v2748 = vunpack.c.l.b16 %v2679
    %v2749 = vunpack.c.l.b16 %v2680
    %v2750 = vunpack.c.h.b16 %v2680
    %v2751 = vunpack.c.l.b16 %v2681
    %v2752 = vunpack.c.l.b16 %v2682
    %v2753 = vunpack.c.h.b16 %v2682
    %v2754 = vunpack.c.l.b16 %v2683
    %v2755 = vunpack.c.l.b16 %v2684
    %v2756 = vunpack.c.h.b16 %v2684
    %v2757 = vunpack.c.l.b16 %v2685
    %v2758 = vunpack.c.l.b16 %v2686
    %v2759 = vunpack.c.h.b16 %v2686
    %v2760 = vunpack.c.l.b16 %v2687
    %v2761 = vunpack.c.l.b16 %v2688
    %v2762 = vunpack.c.h.b16 %v2688
    %v2763 = vunpack.c.l.b16 %v2689
    %v2764 = vunpack.c.l.b16 %v2690
    %v2765 = vunpack.c.h.b16 %v2690
    %v2766 = vunpack.c.l.b16 %v2691
    %v2767 = vunpack.c.l.b16 %v2692
    %v2768 = vunpack.c.h.b16 %v2692
    %v2769 = vunpack.c.l.b16 %v2693
    %v2770 = vunpack.c.l.b16 %v2694
    %v2771 = vunpack.c.h.b16 %v2694
    %v2772 = vunpack.c.l.b16 %v2695
    %v2773 = vunpack.c.l.b16 %v2696
    %v2774 = vunpack.c.h.b16 %v2696
    %v2775 = vunpack.c.l.b16 %v2697
    %v2776 = vunpack.c.l.b16 %v2698
    %v2777 = vunpack.c.h.b16 %v2698
    %v2778 = vunpack.c.l.b16 %v2699
    %v2779 = vunpack.c.l.b16 %v2700
    %v2780 = vunpack.c.h.b16 %v2700
    %v2781 = vunpack.c.l.b16 %v2701
    %v2782 = vpack.c.b16 %v2737, %v2734
    %v2783 = vpack.c.b16 %v2738, %v2735
    %v2784 = vpack.c.b16 %v2739, %v2736
    %v2785 = vpack.c.b16 %v2743, %v2740
    %v2786 = vpack.c.b16 %v2744, %v2741
    %v2787 = vpack.c.b16 %v2745, %v2742
    %v2788 = vpack.c.b16 %v2749, %v2746
    %v2789 = vpack.c.b16 %v2750, %v2747
    %v2790 = vpack.c.b16 %v2751, %v2748
    %v2791 = vpack.c.b16 %v2755, %v2752
    %v2792 = vpack.c.b16 %v2756, %v2753
    %v2793 = vpack.c.b16 %v2757, %v2754
    %v2794 = vpack.c.b16 %v2761, %v2758
    %v2795 = vpack.c.b16 %v2762, %v2759
    %v2796 = vpack.c.b16 %v2763, %v2760
    %v2797 = vpack.c.b16 %v2767, %v2764
    %v2798 = vpack.c.b16 %v2768, %v2765
    %v2799 = vpack.c.b16 %v2769, %v2766
    %v2800 = vpack.c.b16 %v2773, %v2770
    %v2801 = vpack.c.b16 %v2774, %v2771
    %v2802 = vpack.c.b16 %v2775, %v2772
    %v2803 = vpack.c.b16 %v2779, %v2776
    %v2804 = vpack.c.b16 %v2780, %v2777
    %v2805 = vpack.c.b16 %v2781, %v2778
    %2830 = vmatprep.subr.bf16.mxu0 %v2804
    %2831 = vmatpush1.bf16.msra.mxu0 %v2803
    %2832 = vmatprep.subr.bf16.mxu0 %v2801
    %2833 = vmatpush1.bf16.msra.mxu0 %v2800
    %2834 = vmatprep.subr.bf16.mxu0 %v2798
    %2835 = vmatpush1.bf16.msra.mxu0 %v2797
    %2836 = vmatprep.subr.bf16.mxu0 %v2795
    %2837 = vmatpush1.bf16.msra.mxu0 %v2794
    %2838 = vmatprep.subr.bf16.mxu0 %v2792
    %2839 = vmatpush1.bf16.msra.mxu0 %v2791
    %2840 = vmatprep.subr.bf16.mxu0 %v2789
    %2841 = vmatpush1.bf16.msra.mxu0 %v2788
    %2842 = vmatprep.subr.bf16.mxu0 %v2786
    %2843 = vmatpush1.bf16.msra.mxu0 %v2785
    %2844 = vmatprep.subr.bf16.mxu0 %v2783
    %2845 = vmatpush1.bf16.msra.mxu0 %v2782
    %2846 = vmatprep.subr.bf16.mxu0 0
    %2847 = vmatpush2.bf16.msra.mxu0 0
    %2848 = vmatprep.subr.bf16.mxu0 0
    %2849 = vmatpush2.bf16.msra.mxu0 0
    %2850 = vmatprep.subr.bf16.mxu0 0
    %2851 = vmatpush2.bf16.msra.mxu0 0
    %2852 = vmatprep.subr.bf16.mxu0 0
    %2853 = vmatpush2.bf16.msra.mxu0 0
    %2854 = vmatprep.subr.bf16.mxu0 0
    %2855 = vmatpush2.bf16.msra.mxu0 0
    %2856 = vmatprep.subr.bf16.mxu0 0
    %2857 = vmatpush2.bf16.msra.mxu0 0
    %2858 = vmatprep.subr.bf16.mxu0 0
    %2859 = vmatpush2.bf16.msra.mxu0 0
    %2860 = vmatprep.subr.bf16.mxu0 0
    %2861 = vmatpush2.bf16.msra.mxu0 0
    %2862 = vmatprep.mubr.bf16.mxu0 0
    %2863 = vmatmul.mubr.bf16.gmra.mxu0 %v2669
    %v2864 = vpop.f32.mrf.mxu0
    %v2865 = vadd.f32 %v691, %v2864
    %v2866 = vpop.f32.mrf.mxu0
    %v2867 = vadd.f32 %v695, %v2866
    %v2868 = vpop.f32.mrf.mxu0
    %v2869 = vpop.f32.mrf.mxu0
    %2870 = vdwg.mxu0
    %2871 = vmatprep.subr.bf16.mxu0 0
    %2872 = vmatpush1.bf16.msra.mxu0 %v2805
    %2873 = vmatprep.subr.bf16.mxu0 0
    %2874 = vmatpush1.bf16.msra.mxu0 %v2802
    %2875 = vmatprep.subr.bf16.mxu0 0
    %2876 = vmatpush1.bf16.msra.mxu0 %v2799
    %2877 = vmatprep.subr.bf16.mxu0 0
    %2878 = vmatpush1.bf16.msra.mxu0 %v2796
    %2879 = vmatprep.subr.bf16.mxu0 0
    %2880 = vmatpush1.bf16.msra.mxu0 %v2793
    %2881 = vmatprep.subr.bf16.mxu0 0
    %2882 = vmatpush1.bf16.msra.mxu0 %v2790
    %2883 = vmatprep.subr.bf16.mxu0 0
    %2884 = vmatpush1.bf16.msra.mxu0 %v2787
    %2885 = vmatprep.subr.bf16.mxu0 0
    %2886 = vmatpush1.bf16.msra.mxu0 %v2784
    %2887 = vmatprep.subr.bf16.mxu0 0
    %2888 = vmatpush2.bf16.msra.mxu0 0
    %2889 = vmatprep.subr.bf16.mxu0 0
    %2890 = vmatpush2.bf16.msra.mxu0 0
    %2891 = vmatprep.subr.bf16.mxu0 0
    %2892 = vmatpush2.bf16.msra.mxu0 0
    %2893 = vmatprep.subr.bf16.mxu0 0
    %2894 = vmatpush2.bf16.msra.mxu0 0
    %2895 = vmatprep.subr.bf16.mxu0 0
    %2896 = vmatpush2.bf16.msra.mxu0 0
    %2897 = vmatprep.subr.bf16.mxu0 0
    %2898 = vmatpush2.bf16.msra.mxu0 0
    %2899 = vmatprep.subr.bf16.mxu0 0
    %2900 = vmatpush2.bf16.msra.mxu0 0
    %2901 = vmatprep.subr.bf16.mxu0 0
    %2902 = vmatpush2.bf16.msra.mxu0 0
    %2903 = vmatprep.mubr.bf16.mxu0 0
    %2904 = vmatmul.mubr.bf16.gmra.mxu0 %v2669
    %v2905 = vpop.f32.mrf.mxu0
    %v2906 = vadd.f32 %v699, %v2905
    %v2907 = vpop.f32.mrf.mxu0
    %v2908 = vpop.f32.mrf.mxu0
    %v2909 = vpop.f32.mrf.mxu0
    %2910 = vdwg.mxu0
    %v2911 = vadd.f32 %v2665, %v2865
    %v2912 = vxor.u32 %v2911, 2147483648
    %v2913 = vmul.f32 %v2912, 1.442695
    %v2914 = vpow.pop %v2913
    %v2915 = vadd.f32 %v2914, 1.0
    %v2916 = vrcp.pop %v2915
    %v2917 = vmul.f32 1.0, %v2916
    %v2918 = vadd.f32 %v2666, %v2867
    %v2919 = vxor.u32 %v2918, 2147483648
    %v2920 = vmul.f32 %v2919, 1.442695
    %v2921 = vpow.pop %v2920
    %v2922 = vadd.f32 %v2921, 1.0
    %v2923 = vrcp.pop %v2922
    %v2924 = vmul.f32 1.0, %v2923
    %v2925 = vmul.f32 %v2917, %v2906
    %v2926 = vadd.f32 %v2667, %v2925
    %v2927 = vtanh.pop %v2926
    %v2928 = vsub.f32 %v2668, %v2927
    %v2929 = vmul.f32 %v2924, %v2928
    %v2930 = vadd.f32 %v2927, %v2929
    %vm2931 = vcmp.gt.s32.totalorder %v667, 4
    %v2932 = vsel %vm2931, 1, 0
    %2933 = vset.pattern.permute.xlu0 0
    %2934 = vperm.xlu0 %2933, %v2932
    %v2935 = vpop.permute.xlu0 %2934
    %vm2936 = vcmp.eq.s32.totalorder %v2935, 1
    %v2937 = vsel %vm2936, %v2930, %v2668
    %2938 = vst [vmem:[%s986] sm:$0xff] %v2937
    %v2939 = vsel %vm2936, %v2930, 0.0
    %s2940 = scalar_lea.vmem %s6, 32
    %v2941 = vld [vmem:[%s2940] sm:$0xff]
    %v2942 = vadd.f32 %v2941, %v2939
    %2943 = vst [vmem:[%s2940] sm:$0xff] %v2942
    %s2944 = scalar_lea.vmem [#allocation2], 192
    %v2945 = vld [vmem:[%s2944] sm:$0xff]
    %v2946 = vld [vmem:[%s2944 + $0x8] sm:$0xff]
    %v2947 = vld [vmem:[%s2944 + $0x10] sm:$0xff]
    %v2948 = vld [vmem:[#allocation3] sm:$0xff]
    %v2949 = vpack.c.bf16 %v2948, %v2948
    %v2950 = vld [vmem:[#allocation4] sm:$0xff]
    %v2951 = vld [vmem:[#allocation4 + $0x8] sm:$0xf]
    %v2952 = vld [vmem:[#allocation4 + $0xc] sm:$0xff]
    %v2953 = vld [vmem:[#allocation4 + $0x14] sm:$0xf]
    %v2954 = vld [vmem:[#allocation4 + $0x18] sm:$0xff]
    %v2955 = vld [vmem:[#allocation4 + $0x20] sm:$0xf]
    %v2956 = vld [vmem:[#allocation4 + $0x24] sm:$0xff]
    %v2957 = vld [vmem:[#allocation4 + $0x2c] sm:$0xf]
    %v2958 = vld [vmem:[#allocation4 + $0x30] sm:$0xff]
    %v2959 = vld [vmem:[#allocation4 + $0x38] sm:$0xf]
    %v2960 = vld [vmem:[#allocation4 + $0x3c] sm:$0xff]
    %v2961 = vld [vmem:[#allocation4 + $0x44] sm:$0xf]
    %v2962 = vld [vmem:[#allocation4 + $0x48] sm:$0xff]
    %v2963 = vld [vmem:[#allocation4 + $0x50] sm:$0xf]
    %v2964 = vld [vmem:[#allocation4 + $0x54] sm:$0xff]
    %v2965 = vld [vmem:[#allocation4 + $0x5c] sm:$0xf]
    %v2966 = vld [vmem:[#allocation4 + $0x60] sm:$0xff]
    %v2967 = vld [vmem:[#allocation4 + $0x68] sm:$0xf]
    %v2968 = vld [vmem:[#allocation4 + $0x6c] sm:$0xff]
    %v2969 = vld [vmem:[#allocation4 + $0x74] sm:$0xf]
    %v2970 = vld [vmem:[#allocation4 + $0x78] sm:$0xff]
    %v2971 = vld [vmem:[#allocation4 + $0x80] sm:$0xf]
    %v2972 = vld [vmem:[#allocation4 + $0x84] sm:$0xff]
    %v2973 = vld [vmem:[#allocation4 + $0x8c] sm:$0xf]
    %v2974 = vld [vmem:[#allocation4 + $0x90] sm:$0xff]
    %v2975 = vld [vmem:[#allocation4 + $0x98] sm:$0xf]
    %v2976 = vld [vmem:[#allocation4 + $0x9c] sm:$0xff]
    %v2977 = vld [vmem:[#allocation4 + $0xa4] sm:$0xf]
    %v2978 = vld [vmem:[#allocation4 + $0xa8] sm:$0xff]
    %v2979 = vld [vmem:[#allocation4 + $0xb0] sm:$0xf]
    %v2980 = vld [vmem:[#allocation4 + $0xb4] sm:$0xff]
    %v2981 = vld [vmem:[#allocation4 + $0xbc] sm:$0xf]
    %v3014 = vunpack.c.l.b16 %v2950
    %v3015 = vunpack.c.h.b16 %v2950
    %v3016 = vunpack.c.l.b16 %v2951
    %v3017 = vunpack.c.l.b16 %v2952
    %v3018 = vunpack.c.h.b16 %v2952
    %v3019 = vunpack.c.l.b16 %v2953
    %v3020 = vunpack.c.l.b16 %v2954
    %v3021 = vunpack.c.h.b16 %v2954
    %v3022 = vunpack.c.l.b16 %v2955
    %v3023 = vunpack.c.l.b16 %v2956
    %v3024 = vunpack.c.h.b16 %v2956
    %v3025 = vunpack.c.l.b16 %v2957
    %v3026 = vunpack.c.l.b16 %v2958
    %v3027 = vunpack.c.h.b16 %v2958
    %v3028 = vunpack.c.l.b16 %v2959
    %v3029 = vunpack.c.l.b16 %v2960
    %v3030 = vunpack.c.h.b16 %v2960
    %v3031 = vunpack.c.l.b16 %v2961
    %v3032 = vunpack.c.l.b16 %v2962
    %v3033 = vunpack.c.h.b16 %v2962
    %v3034 = vunpack.c.l.b16 %v2963
    %v3035 = vunpack.c.l.b16 %v2964
    %v3036 = vunpack.c.h.b16 %v2964
    %v3037 = vunpack.c.l.b16 %v2965
    %v3038 = vunpack.c.l.b16 %v2966
    %v3039 = vunpack.c.h.b16 %v2966
    %v3040 = vunpack.c.l.b16 %v2967
    %v3041 = vunpack.c.l.b16 %v2968
    %v3042 = vunpack.c.h.b16 %v2968
    %v3043 = vunpack.c.l.b16 %v2969
    %v3044 = vunpack.c.l.b16 %v2970
    %v3045 = vunpack.c.h.b16 %v2970
    %v3046 = vunpack.c.l.b16 %v2971
    %v3047 = vunpack.c.l.b16 %v2972
    %v3048 = vunpack.c.h.b16 %v2972
    %v3049 = vunpack.c.l.b16 %v2973
    %v3050 = vunpack.c.l.b16 %v2974
    %v3051 = vunpack.c.h.b16 %v2974
    %v3052 = vunpack.c.l.b16 %v2975
    %v3053 = vunpack.c.l.b16 %v2976
    %v3054 = vunpack.c.h.b16 %v2976
    %v3055 = vunpack.c.l.b16 %v2977
    %v3056 = vunpack.c.l.b16 %v2978
    %v3057 = vunpack.c.h.b16 %v2978
    %v3058 = vunpack.c.l.b16 %v2979
    %v3059 = vunpack.c.l.b16 %v2980
    %v3060 = vunpack.c.h.b16 %v2980
    %v3061 = vunpack.c.l.b16 %v2981
    %v3062 = vpack.c.b16 %v3017, %v3014
    %v3063 = vpack.c.b16 %v3018, %v3015
    %v3064 = vpack.c.b16 %v3019, %v3016
    %v3065 = vpack.c.b16 %v3023, %v3020
    %v3066 = vpack.c.b16 %v3024, %v3021
    %v3067 = vpack.c.b16 %v3025, %v3022
    %v3068 = vpack.c.b16 %v3029, %v3026
    %v3069 = vpack.c.b16 %v3030, %v3027
    %v3070 = vpack.c.b16 %v3031, %v3028
    %v3071 = vpack.c.b16 %v3035, %v3032
    %v3072 = vpack.c.b16 %v3036, %v3033
    %v3073 = vpack.c.b16 %v3037, %v3034
    %v3074 = vpack.c.b16 %v3041, %v3038
    %v3075 = vpack.c.b16 %v3042, %v3039
    %v3076 = vpack.c.b16 %v3043, %v3040
    %v3077 = vpack.c.b16 %v3047, %v3044
    %v3078 = vpack.c.b16 %v3048, %v3045
    %v3079 = vpack.c.b16 %v3049, %v3046
    %v3080 = vpack.c.b16 %v3053, %v3050
    %v3081 = vpack.c.b16 %v3054, %v3051
    %v3082 = vpack.c.b16 %v3055, %v3052
    %v3083 = vpack.c.b16 %v3059, %v3056
    %v3084 = vpack.c.b16 %v3060, %v3057
    %v3085 = vpack.c.b16 %v3061, %v3058
    %3110 = vmatprep.subr.bf16.mxu0 %v3084
    %3111 = vmatpush1.bf16.msra.mxu0 %v3083
    %3112 = vmatprep.subr.bf16.mxu0 %v3081
    %3113 = vmatpush1.bf16.msra.mxu0 %v3080
    %3114 = vmatprep.subr.bf16.mxu0 %v3078
    %3115 = vmatpush1.bf16.msra.mxu0 %v3077
    %3116 = vmatprep.subr.bf16.mxu0 %v3075
    %3117 = vmatpush1.bf16.msra.mxu0 %v3074
    %3118 = vmatprep.subr.bf16.mxu0 %v3072
    %3119 = vmatpush1.bf16.msra.mxu0 %v3071
    %3120 = vmatprep.subr.bf16.mxu0 %v3069
    %3121 = vmatpush1.bf16.msra.mxu0 %v3068
    %3122 = vmatprep.subr.bf16.mxu0 %v3066
    %3123 = vmatpush1.bf16.msra.mxu0 %v3065
    %3124 = vmatprep.subr.bf16.mxu0 %v3063
    %3125 = vmatpush1.bf16.msra.mxu0 %v3062
    %3126 = vmatprep.subr.bf16.mxu0 0
    %3127 = vmatpush2.bf16.msra.mxu0 0
    %3128 = vmatprep.subr.bf16.mxu0 0
    %3129 = vmatpush2.bf16.msra.mxu0 0
    %3130 = vmatprep.subr.bf16.mxu0 0
    %3131 = vmatpush2.bf16.msra.mxu0 0
    %3132 = vmatprep.subr.bf16.mxu0 0
    %3133 = vmatpush2.bf16.msra.mxu0 0
    %3134 = vmatprep.subr.bf16.mxu0 0
    %3135 = vmatpush2.bf16.msra.mxu0 0
    %3136 = vmatprep.subr.bf16.mxu0 0
    %3137 = vmatpush2.bf16.msra.mxu0 0
    %3138 = vmatprep.subr.bf16.mxu0 0
    %3139 = vmatpush2.bf16.msra.mxu0 0
    %3140 = vmatprep.subr.bf16.mxu0 0
    %3141 = vmatpush2.bf16.msra.mxu0 0
    %3142 = vmatprep.mubr.bf16.mxu0 0
    %3143 = vmatmul.mubr.bf16.gmra.mxu0 %v2949
    %v3144 = vpop.f32.mrf.mxu0
    %v3145 = vadd.f32 %v673, %v3144
    %v3146 = vpop.f32.mrf.mxu0
    %v3147 = vadd.f32 %v677, %v3146
    %v3148 = vpop.f32.mrf.mxu0
    %v3149 = vpop.f32.mrf.mxu0
    %3150 = vdwg.mxu0
    %3151 = vmatprep.subr.bf16.mxu0 0
    %3152 = vmatpush1.bf16.msra.mxu0 %v3085
    %3153 = vmatprep.subr.bf16.mxu0 0
    %3154 = vmatpush1.bf16.msra.mxu0 %v3082
    %3155 = vmatprep.subr.bf16.mxu0 0
    %3156 = vmatpush1.bf16.msra.mxu0 %v3079
    %3157 = vmatprep.subr.bf16.mxu0 0
    %3158 = vmatpush1.bf16.msra.mxu0 %v3076
    %3159 = vmatprep.subr.bf16.mxu0 0
    %3160 = vmatpush1.bf16.msra.mxu0 %v3073
    %3161 = vmatprep.subr.bf16.mxu0 0
    %3162 = vmatpush1.bf16.msra.mxu0 %v3070
    %3163 = vmatprep.subr.bf16.mxu0 0
    %3164 = vmatpush1.bf16.msra.mxu0 %v3067
    %3165 = vmatprep.subr.bf16.mxu0 0
    %3166 = vmatpush1.bf16.msra.mxu0 %v3064
    %3167 = vmatprep.subr.bf16.mxu0 0
    %3168 = vmatpush2.bf16.msra.mxu0 0
    %3169 = vmatprep.subr.bf16.mxu0 0
    %3170 = vmatpush2.bf16.msra.mxu0 0
    %3171 = vmatprep.subr.bf16.mxu0 0
    %3172 = vmatpush2.bf16.msra.mxu0 0
    %3173 = vmatprep.subr.bf16.mxu0 0
    %3174 = vmatpush2.bf16.msra.mxu0 0
    %3175 = vmatprep.subr.bf16.mxu0 0
    %3176 = vmatpush2.bf16.msra.mxu0 0
    %3177 = vmatprep.subr.bf16.mxu0 0
    %3178 = vmatpush2.bf16.msra.mxu0 0
    %3179 = vmatprep.subr.bf16.mxu0 0
    %3180 = vmatpush2.bf16.msra.mxu0 0
    %3181 = vmatprep.subr.bf16.mxu0 0
    %3182 = vmatpush2.bf16.msra.mxu0 0
    %3183 = vmatprep.mubr.bf16.mxu0 0
    %3184 = vmatmul.mubr.bf16.gmra.mxu0 %v2949
    %v3185 = vpop.f32.mrf.mxu0
    %v3186 = vadd.f32 %v681, %v3185
    %v3187 = vpop.f32.mrf.mxu0
    %v3188 = vpop.f32.mrf.mxu0
    %v3189 = vpop.f32.mrf.mxu0
    %3190 = vdwg.mxu0
    %v3191 = vadd.f32 %v2945, %v3145
    %v3192 = vxor.u32 %v3191, 2147483648
    %v3193 = vmul.f32 %v3192, 1.442695
    %v3194 = vpow.pop %v3193
    %v3195 = vadd.f32 %v3194, 1.0
    %v3196 = vrcp.pop %v3195
    %v3197 = vmul.f32 1.0, %v3196
    %v3198 = vadd.f32 %v2946, %v3147
    %v3199 = vxor.u32 %v3198, 2147483648
    %v3200 = vmul.f32 %v3199, 1.442695
    %v3201 = vpow.pop %v3200
    %v3202 = vadd.f32 %v3201, 1.0
    %v3203 = vrcp.pop %v3202
    %v3204 = vmul.f32 1.0, %v3203
    %v3205 = vmul.f32 %v3197, %v3186
    %v3206 = vadd.f32 %v2947, %v3205
    %v3207 = vtanh.pop %v3206
    %v3208 = vsub.f32 %v2948, %v3207
    %v3209 = vmul.f32 %v3204, %v3208
    %v3210 = vadd.f32 %v3207, %v3209
    %v3211 = vsel %vm2936, %v3210, %v2948
    %3212 = vst [vmem:[#allocation3] sm:$0xff] %v3211
    %v3213 = vsel %vm2936, %v3210, 0.0
    %v3214 = vld [vmem:[%s2940] sm:$0xff]
    %v3215 = vadd.f32 %v3214, %v3213
    %3216 = vst [vmem:[%s2940] sm:$0xff] %v3215
    %s3217 = scalar_lea.vmem %s981, 144 [#allocation2]
    %v3218 = vld [vmem:[%s3217] sm:$0xff]
    %v3219 = vld [vmem:[%s3217 + $0x8] sm:$0xff]
    %v3220 = vld [vmem:[%s3217 + $0x10] sm:$0xff]
    %v3221 = vld [vmem:[%s986] sm:$0xff]
    %v3222 = vpack.c.bf16 %v3221, %v3221
    %v3223 = vld [vmem:[%s989] sm:$0xff]
    %v3224 = vld [vmem:[%s989 + $0x8] sm:$0xf]
    %v3225 = vld [vmem:[%s989 + $0xc] sm:$0xff]
    %v3226 = vld [vmem:[%s989 + $0x14] sm:$0xf]
    %v3227 = vld [vmem:[%s989 + $0x18] sm:$0xff]
    %v3228 = vld [vmem:[%s989 + $0x20] sm:$0xf]
    %v3229 = vld [vmem:[%s989 + $0x24] sm:$0xff]
    %v3230 = vld [vmem:[%s989 + $0x2c] sm:$0xf]
    %v3231 = vld [vmem:[%s989 + $0x30] sm:$0xff]
    %v3232 = vld [vmem:[%s989 + $0x38] sm:$0xf]
    %v3233 = vld [vmem:[%s989 + $0x3c] sm:$0xff]
    %v3234 = vld [vmem:[%s989 + $0x44] sm:$0xf]
    %v3235 = vld [vmem:[%s989 + $0x48] sm:$0xff]
    %v3236 = vld [vmem:[%s989 + $0x50] sm:$0xf]
    %v3237 = vld [vmem:[%s989 + $0x54] sm:$0xff]
    %v3238 = vld [vmem:[%s989 + $0x5c] sm:$0xf]
    %v3239 = vld [vmem:[%s989 + $0x60] sm:$0xff]
    %v3240 = vld [vmem:[%s989 + $0x68] sm:$0xf]
    %v3241 = vld [vmem:[%s989 + $0x6c] sm:$0xff]
    %v3242 = vld [vmem:[%s989 + $0x74] sm:$0xf]
    %v3243 = vld [vmem:[%s989 + $0x78] sm:$0xff]
    %v3244 = vld [vmem:[%s989 + $0x80] sm:$0xf]
    %v3245 = vld [vmem:[%s989 + $0x84] sm:$0xff]
    %v3246 = vld [vmem:[%s989 + $0x8c] sm:$0xf]
    %v3247 = vld [vmem:[%s989 + $0x90] sm:$0xff]
    %v3248 = vld [vmem:[%s989 + $0x98] sm:$0xf]
    %v3249 = vld [vmem:[%s989 + $0x9c] sm:$0xff]
    %v3250 = vld [vmem:[%s989 + $0xa4] sm:$0xf]
    %v3251 = vld [vmem:[%s989 + $0xa8] sm:$0xff]
    %v3252 = vld [vmem:[%s989 + $0xb0] sm:$0xf]
    %v3253 = vld [vmem:[%s989 + $0xb4] sm:$0xff]
    %v3254 = vld [vmem:[%s989 + $0xbc] sm:$0xf]
    %v3287 = vunpack.c.l.b16 %v3223
    %v3288 = vunpack.c.h.b16 %v3223
    %v3289 = vunpack.c.l.b16 %v3224
    %v3290 = vunpack.c.l.b16 %v3225
    %v3291 = vunpack.c.h.b16 %v3225
    %v3292 = vunpack.c.l.b16 %v3226
    %v3293 = vunpack.c.l.b16 %v3227
    %v3294 = vunpack.c.h.b16 %v3227
    %v3295 = vunpack.c.l.b16 %v3228
    %v3296 = vunpack.c.l.b16 %v3229
    %v3297 = vunpack.c.h.b16 %v3229
    %v3298 = vunpack.c.l.b16 %v3230
    %v3299 = vunpack.c.l.b16 %v3231
    %v3300 = vunpack.c.h.b16 %v3231
    %v3301 = vunpack.c.l.b16 %v3232
    %v3302 = vunpack.c.l.b16 %v3233
    %v3303 = vunpack.c.h.b16 %v3233
    %v3304 = vunpack.c.l.b16 %v3234
    %v3305 = vunpack.c.l.b16 %v3235
    %v3306 = vunpack.c.h.b16 %v3235
    %v3307 = vunpack.c.l.b16 %v3236
    %v3308 = vunpack.c.l.b16 %v3237
    %v3309 = vunpack.c.h.b16 %v3237
    %v3310 = vunpack.c.l.b16 %v3238
    %v3311 = vunpack.c.l.b16 %v3239
    %v3312 = vunpack.c.h.b16 %v3239
    %v3313 = vunpack.c.l.b16 %v3240
    %v3314 = vunpack.c.l.b16 %v3241
    %v3315 = vunpack.c.h.b16 %v3241
    %v3316 = vunpack.c.l.b16 %v3242
    %v3317 = vunpack.c.l.b16 %v3243
    %v3318 = vunpack.c.h.b16 %v3243
    %v3319 = vunpack.c.l.b16 %v3244
    %v3320 = vunpack.c.l.b16 %v3245
    %v3321 = vunpack.c.h.b16 %v3245
    %v3322 = vunpack.c.l.b16 %v3246
    %v3323 = vunpack.c.l.b16 %v3247
    %v3324 = vunpack.c.h.b16 %v3247
    %v3325 = vunpack.c.l.b16 %v3248
    %v3326 = vunpack.c.l.b16 %v3249
    %v3327 = vunpack.c.h.b16 %v3249
    %v3328 = vunpack.c.l.b16 %v3250
    %v3329 = vunpack.c.l.b16 %v3251
    %v3330 = vunpack.c.h.b16 %v3251
    %v3331 = vunpack.c.l.b16 %v3252
    %v3332 = vunpack.c.l.b16 %v3253
    %v3333 = vunpack.c.h.b16 %v3253
    %v3334 = vunpack.c.l.b16 %v3254
    %v3335 = vpack.c.b16 %v3290, %v3287
    %v3336 = vpack.c.b16 %v3291, %v3288
    %v3337 = vpack.c.b16 %v3292, %v3289
    %v3338 = vpack.c.b16 %v3296, %v3293
    %v3339 = vpack.c.b16 %v3297, %v3294
    %v3340 = vpack.c.b16 %v3298, %v3295
    %v3341 = vpack.c.b16 %v3302, %v3299
    %v3342 = vpack.c.b16 %v3303, %v3300
    %v3343 = vpack.c.b16 %v3304, %v3301
    %v3344 = vpack.c.b16 %v3308, %v3305
    %v3345 = vpack.c.b16 %v3309, %v3306
    %v3346 = vpack.c.b16 %v3310, %v3307
    %v3347 = vpack.c.b16 %v3314, %v3311
    %v3348 = vpack.c.b16 %v3315, %v3312
    %v3349 = vpack.c.b16 %v3316, %v3313
    %v3350 = vpack.c.b16 %v3320, %v3317
    %v3351 = vpack.c.b16 %v3321, %v3318
    %v3352 = vpack.c.b16 %v3322, %v3319
    %v3353 = vpack.c.b16 %v3326, %v3323
    %v3354 = vpack.c.b16 %v3327, %v3324
    %v3355 = vpack.c.b16 %v3328, %v3325
    %v3356 = vpack.c.b16 %v3332, %v3329
    %v3357 = vpack.c.b16 %v3333, %v3330
    %v3358 = vpack.c.b16 %v3334, %v3331
    %3383 = vmatprep.subr.bf16.mxu0 %v3357
    %3384 = vmatpush1.bf16.msra.mxu0 %v3356
    %3385 = vmatprep.subr.bf16.mxu0 %v3354
    %3386 = vmatpush1.bf16.msra.mxu0 %v3353
    %3387 = vmatprep.subr.bf16.mxu0 %v3351
    %3388 = vmatpush1.bf16.msra.mxu0 %v3350
    %3389 = vmatprep.subr.bf16.mxu0 %v3348
    %3390 = vmatpush1.bf16.msra.mxu0 %v3347
    %3391 = vmatprep.subr.bf16.mxu0 %v3345
    %3392 = vmatpush1.bf16.msra.mxu0 %v3344
    %3393 = vmatprep.subr.bf16.mxu0 %v3342
    %3394 = vmatpush1.bf16.msra.mxu0 %v3341
    %3395 = vmatprep.subr.bf16.mxu0 %v3339
    %3396 = vmatpush1.bf16.msra.mxu0 %v3338
    %3397 = vmatprep.subr.bf16.mxu0 %v3336
    %3398 = vmatpush1.bf16.msra.mxu0 %v3335
    %3399 = vmatprep.subr.bf16.mxu0 0
    %3400 = vmatpush2.bf16.msra.mxu0 0
    %3401 = vmatprep.subr.bf16.mxu0 0
    %3402 = vmatpush2.bf16.msra.mxu0 0
    %3403 = vmatprep.subr.bf16.mxu0 0
    %3404 = vmatpush2.bf16.msra.mxu0 0
    %3405 = vmatprep.subr.bf16.mxu0 0
    %3406 = vmatpush2.bf16.msra.mxu0 0
    %3407 = vmatprep.subr.bf16.mxu0 0
    %3408 = vmatpush2.bf16.msra.mxu0 0
    %3409 = vmatprep.subr.bf16.mxu0 0
    %3410 = vmatpush2.bf16.msra.mxu0 0
    %3411 = vmatprep.subr.bf16.mxu0 0
    %3412 = vmatpush2.bf16.msra.mxu0 0
    %3413 = vmatprep.subr.bf16.mxu0 0
    %3414 = vmatpush2.bf16.msra.mxu0 0
    %3415 = vmatprep.mubr.bf16.mxu0 0
    %3416 = vmatmul.mubr.bf16.gmra.mxu0 %v3222
    %v3417 = vpop.f32.mrf.mxu0
    %v3418 = vadd.f32 %v691, %v3417
    %v3419 = vpop.f32.mrf.mxu0
    %v3420 = vadd.f32 %v695, %v3419
    %v3421 = vpop.f32.mrf.mxu0
    %v3422 = vpop.f32.mrf.mxu0
    %3423 = vdwg.mxu0
    %3424 = vmatprep.subr.bf16.mxu0 0
    %3425 = vmatpush1.bf16.msra.mxu0 %v3358
    %3426 = vmatprep.subr.bf16.mxu0 0
    %3427 = vmatpush1.bf16.msra.mxu0 %v3355
    %3428 = vmatprep.subr.bf16.mxu0 0
    %3429 = vmatpush1.bf16.msra.mxu0 %v3352
    %3430 = vmatprep.subr.bf16.mxu0 0
    %3431 = vmatpush1.bf16.msra.mxu0 %v3349
    %3432 = vmatprep.subr.bf16.mxu0 0
    %3433 = vmatpush1.bf16.msra.mxu0 %v3346
    %3434 = vmatprep.subr.bf16.mxu0 0
    %3435 = vmatpush1.bf16.msra.mxu0 %v3343
    %3436 = vmatprep.subr.bf16.mxu0 0
    %3437 = vmatpush1.bf16.msra.mxu0 %v3340
    %3438 = vmatprep.subr.bf16.mxu0 0
    %3439 = vmatpush1.bf16.msra.mxu0 %v3337
    %3440 = vmatprep.subr.bf16.mxu0 0
    %3441 = vmatpush2.bf16.msra.mxu0 0
    %3442 = vmatprep.subr.bf16.mxu0 0
    %3443 = vmatpush2.bf16.msra.mxu0 0
    %3444 = vmatprep.subr.bf16.mxu0 0
    %3445 = vmatpush2.bf16.msra.mxu0 0
    %3446 = vmatprep.subr.bf16.mxu0 0
    %3447 = vmatpush2.bf16.msra.mxu0 0
    %3448 = vmatprep.subr.bf16.mxu0 0
    %3449 = vmatpush2.bf16.msra.mxu0 0
    %3450 = vmatprep.subr.bf16.mxu0 0
    %3451 = vmatpush2.bf16.msra.mxu0 0
    %3452 = vmatprep.subr.bf16.mxu0 0
    %3453 = vmatpush2.bf16.msra.mxu0 0
    %3454 = vmatprep.subr.bf16.mxu0 0
    %3455 = vmatpush2.bf16.msra.mxu0 0
    %3456 = vmatprep.mubr.bf16.mxu0 0
    %3457 = vmatmul.mubr.bf16.gmra.mxu0 %v3222
    %v3458 = vpop.f32.mrf.mxu0
    %v3459 = vadd.f32 %v699, %v3458
    %v3460 = vpop.f32.mrf.mxu0
    %v3461 = vpop.f32.mrf.mxu0
    %v3462 = vpop.f32.mrf.mxu0
    %3463 = vdwg.mxu0
    %v3464 = vadd.f32 %v3218, %v3418
    %v3465 = vxor.u32 %v3464, 2147483648
    %v3466 = vmul.f32 %v3465, 1.442695
    %v3467 = vpow.pop %v3466
    %v3468 = vadd.f32 %v3467, 1.0
    %v3469 = vrcp.pop %v3468
    %v3470 = vmul.f32 1.0, %v3469
    %v3471 = vadd.f32 %v3219, %v3420
    %v3472 = vxor.u32 %v3471, 2147483648
    %v3473 = vmul.f32 %v3472, 1.442695
    %v3474 = vpow.pop %v3473
    %v3475 = vadd.f32 %v3474, 1.0
    %v3476 = vrcp.pop %v3475
    %v3477 = vmul.f32 1.0, %v3476
    %v3478 = vmul.f32 %v3470, %v3459
    %v3479 = vadd.f32 %v3220, %v3478
    %v3480 = vtanh.pop %v3479
    %v3481 = vsub.f32 %v3221, %v3480
    %v3482 = vmul.f32 %v3477, %v3481
    %v3483 = vadd.f32 %v3480, %v3482
    %v3484 = vsel %vm2656, %v3483, %v3221
    %3485 = vst [vmem:[%s986] sm:$0xff] %v3484
    %v3486 = vsel %vm2656, %v3483, 0.0
    %v3487 = vld [vmem:[%s2660] sm:$0xff]
    %v3488 = vadd.f32 %v3487, %v3486
    %3489 = vst [vmem:[%s2660] sm:$0xff] %v3488
    %s3490 = scalar_lea.vmem [#allocation2], 240
    %v3491 = vld [vmem:[%s3490] sm:$0xff]
    %v3492 = vld [vmem:[%s3490 + $0x8] sm:$0xff]
    %v3493 = vld [vmem:[%s3490 + $0x10] sm:$0xff]
    %v3494 = vld [vmem:[#allocation3] sm:$0xff]
    %v3495 = vpack.c.bf16 %v3494, %v3494
    %v3496 = vld [vmem:[#allocation4] sm:$0xff]
    %v3497 = vld [vmem:[#allocation4 + $0x8] sm:$0xf]
    %v3498 = vld [vmem:[#allocation4 + $0xc] sm:$0xff]
    %v3499 = vld [vmem:[#allocation4 + $0x14] sm:$0xf]
    %v3500 = vld [vmem:[#allocation4 + $0x18] sm:$0xff]
    %v3501 = vld [vmem:[#allocation4 + $0x20] sm:$0xf]
    %v3502 = vld [vmem:[#allocation4 + $0x24] sm:$0xff]
    %v3503 = vld [vmem:[#allocation4 + $0x2c] sm:$0xf]
    %v3504 = vld [vmem:[#allocation4 + $0x30] sm:$0xff]
    %v3505 = vld [vmem:[#allocation4 + $0x38] sm:$0xf]
    %v3506 = vld [vmem:[#allocation4 + $0x3c] sm:$0xff]
    %v3507 = vld [vmem:[#allocation4 + $0x44] sm:$0xf]
    %v3508 = vld [vmem:[#allocation4 + $0x48] sm:$0xff]
    %v3509 = vld [vmem:[#allocation4 + $0x50] sm:$0xf]
    %v3510 = vld [vmem:[#allocation4 + $0x54] sm:$0xff]
    %v3511 = vld [vmem:[#allocation4 + $0x5c] sm:$0xf]
    %v3512 = vld [vmem:[#allocation4 + $0x60] sm:$0xff]
    %v3513 = vld [vmem:[#allocation4 + $0x68] sm:$0xf]
    %v3514 = vld [vmem:[#allocation4 + $0x6c] sm:$0xff]
    %v3515 = vld [vmem:[#allocation4 + $0x74] sm:$0xf]
    %v3516 = vld [vmem:[#allocation4 + $0x78] sm:$0xff]
    %v3517 = vld [vmem:[#allocation4 + $0x80] sm:$0xf]
    %v3518 = vld [vmem:[#allocation4 + $0x84] sm:$0xff]
    %v3519 = vld [vmem:[#allocation4 + $0x8c] sm:$0xf]
    %v3520 = vld [vmem:[#allocation4 + $0x90] sm:$0xff]
    %v3521 = vld [vmem:[#allocation4 + $0x98] sm:$0xf]
    %v3522 = vld [vmem:[#allocation4 + $0x9c] sm:$0xff]
    %v3523 = vld [vmem:[#allocation4 + $0xa4] sm:$0xf]
    %v3524 = vld [vmem:[#allocation4 + $0xa8] sm:$0xff]
    %v3525 = vld [vmem:[#allocation4 + $0xb0] sm:$0xf]
    %v3526 = vld [vmem:[#allocation4 + $0xb4] sm:$0xff]
    %v3527 = vld [vmem:[#allocation4 + $0xbc] sm:$0xf]
    %v3560 = vunpack.c.l.b16 %v3496
    %v3561 = vunpack.c.h.b16 %v3496
    %v3562 = vunpack.c.l.b16 %v3497
    %v3563 = vunpack.c.l.b16 %v3498
    %v3564 = vunpack.c.h.b16 %v3498
    %v3565 = vunpack.c.l.b16 %v3499
    %v3566 = vunpack.c.l.b16 %v3500
    %v3567 = vunpack.c.h.b16 %v3500
    %v3568 = vunpack.c.l.b16 %v3501
    %v3569 = vunpack.c.l.b16 %v3502
    %v3570 = vunpack.c.h.b16 %v3502
    %v3571 = vunpack.c.l.b16 %v3503
    %v3572 = vunpack.c.l.b16 %v3504
    %v3573 = vunpack.c.h.b16 %v3504
    %v3574 = vunpack.c.l.b16 %v3505
    %v3575 = vunpack.c.l.b16 %v3506
    %v3576 = vunpack.c.h.b16 %v3506
    %v3577 = vunpack.c.l.b16 %v3507
    %v3578 = vunpack.c.l.b16 %v3508
    %v3579 = vunpack.c.h.b16 %v3508
    %v3580 = vunpack.c.l.b16 %v3509
    %v3581 = vunpack.c.l.b16 %v3510
    %v3582 = vunpack.c.h.b16 %v3510
    %v3583 = vunpack.c.l.b16 %v3511
    %v3584 = vunpack.c.l.b16 %v3512
    %v3585 = vunpack.c.h.b16 %v3512
    %v3586 = vunpack.c.l.b16 %v3513
    %v3587 = vunpack.c.l.b16 %v3514
    %v3588 = vunpack.c.h.b16 %v3514
    %v3589 = vunpack.c.l.b16 %v3515
    %v3590 = vunpack.c.l.b16 %v3516
    %v3591 = vunpack.c.h.b16 %v3516
    %v3592 = vunpack.c.l.b16 %v3517
    %v3593 = vunpack.c.l.b16 %v3518
    %v3594 = vunpack.c.h.b16 %v3518
    %v3595 = vunpack.c.l.b16 %v3519
    %v3596 = vunpack.c.l.b16 %v3520
    %v3597 = vunpack.c.h.b16 %v3520
    %v3598 = vunpack.c.l.b16 %v3521
    %v3599 = vunpack.c.l.b16 %v3522
    %v3600 = vunpack.c.h.b16 %v3522
    %v3601 = vunpack.c.l.b16 %v3523
    %v3602 = vunpack.c.l.b16 %v3524
    %v3603 = vunpack.c.h.b16 %v3524
    %v3604 = vunpack.c.l.b16 %v3525
    %v3605 = vunpack.c.l.b16 %v3526
    %v3606 = vunpack.c.h.b16 %v3526
    %v3607 = vunpack.c.l.b16 %v3527
    %v3608 = vpack.c.b16 %v3563, %v3560
    %v3609 = vpack.c.b16 %v3564, %v3561
    %v3610 = vpack.c.b16 %v3565, %v3562
    %v3611 = vpack.c.b16 %v3569, %v3566
    %v3612 = vpack.c.b16 %v3570, %v3567
    %v3613 = vpack.c.b16 %v3571, %v3568
    %v3614 = vpack.c.b16 %v3575, %v3572
    %v3615 = vpack.c.b16 %v3576, %v3573
    %v3616 = vpack.c.b16 %v3577, %v3574
    %v3617 = vpack.c.b16 %v3581, %v3578
    %v3618 = vpack.c.b16 %v3582, %v3579
    %v3619 = vpack.c.b16 %v3583, %v3580
    %v3620 = vpack.c.b16 %v3587, %v3584
    %v3621 = vpack.c.b16 %v3588, %v3585
    %v3622 = vpack.c.b16 %v3589, %v3586
    %v3623 = vpack.c.b16 %v3593, %v3590
    %v3624 = vpack.c.b16 %v3594, %v3591
    %v3625 = vpack.c.b16 %v3595, %v3592
    %v3626 = vpack.c.b16 %v3599, %v3596
    %v3627 = vpack.c.b16 %v3600, %v3597
    %v3628 = vpack.c.b16 %v3601, %v3598
    %v3629 = vpack.c.b16 %v3605, %v3602
    %v3630 = vpack.c.b16 %v3606, %v3603
    %v3631 = vpack.c.b16 %v3607, %v3604
    %3656 = vmatprep.subr.bf16.mxu0 %v3630
    %3657 = vmatpush1.bf16.msra.mxu0 %v3629
    %3658 = vmatprep.subr.bf16.mxu0 %v3627
    %3659 = vmatpush1.bf16.msra.mxu0 %v3626
    %3660 = vmatprep.subr.bf16.mxu0 %v3624
    %3661 = vmatpush1.bf16.msra.mxu0 %v3623
    %3662 = vmatprep.subr.bf16.mxu0 %v3621
    %3663 = vmatpush1.bf16.msra.mxu0 %v3620
    %3664 = vmatprep.subr.bf16.mxu0 %v3618
    %3665 = vmatpush1.bf16.msra.mxu0 %v3617
    %3666 = vmatprep.subr.bf16.mxu0 %v3615
    %3667 = vmatpush1.bf16.msra.mxu0 %v3614
    %3668 = vmatprep.subr.bf16.mxu0 %v3612
    %3669 = vmatpush1.bf16.msra.mxu0 %v3611
    %3670 = vmatprep.subr.bf16.mxu0 %v3609
    %3671 = vmatpush1.bf16.msra.mxu0 %v3608
    %3672 = vmatprep.subr.bf16.mxu0 0
    %3673 = vmatpush2.bf16.msra.mxu0 0
    %3674 = vmatprep.subr.bf16.mxu0 0
    %3675 = vmatpush2.bf16.msra.mxu0 0
    %3676 = vmatprep.subr.bf16.mxu0 0
    %3677 = vmatpush2.bf16.msra.mxu0 0
    %3678 = vmatprep.subr.bf16.mxu0 0
    %3679 = vmatpush2.bf16.msra.mxu0 0
    %3680 = vmatprep.subr.bf16.mxu0 0
    %3681 = vmatpush2.bf16.msra.mxu0 0
    %3682 = vmatprep.subr.bf16.mxu0 0
    %3683 = vmatpush2.bf16.msra.mxu0 0
    %3684 = vmatprep.subr.bf16.mxu0 0
    %3685 = vmatpush2.bf16.msra.mxu0 0
    %3686 = vmatprep.subr.bf16.mxu0 0
    %3687 = vmatpush2.bf16.msra.mxu0 0
    %3688 = vmatprep.mubr.bf16.mxu0 0
    %3689 = vmatmul.mubr.bf16.gmra.mxu0 %v3495
    %v3690 = vpop.f32.mrf.mxu0
    %v3691 = vadd.f32 %v673, %v3690
    %v3692 = vpop.f32.mrf.mxu0
    %v3693 = vadd.f32 %v677, %v3692
    %v3694 = vpop.f32.mrf.mxu0
    %v3695 = vpop.f32.mrf.mxu0
    %3696 = vdwg.mxu0
    %3697 = vmatprep.subr.bf16.mxu0 0
    %3698 = vmatpush1.bf16.msra.mxu0 %v3631
    %3699 = vmatprep.subr.bf16.mxu0 0
    %3700 = vmatpush1.bf16.msra.mxu0 %v3628
    %3701 = vmatprep.subr.bf16.mxu0 0
    %3702 = vmatpush1.bf16.msra.mxu0 %v3625
    %3703 = vmatprep.subr.bf16.mxu0 0
    %3704 = vmatpush1.bf16.msra.mxu0 %v3622
    %3705 = vmatprep.subr.bf16.mxu0 0
    %3706 = vmatpush1.bf16.msra.mxu0 %v3619
    %3707 = vmatprep.subr.bf16.mxu0 0
    %3708 = vmatpush1.bf16.msra.mxu0 %v3616
    %3709 = vmatprep.subr.bf16.mxu0 0
    %3710 = vmatpush1.bf16.msra.mxu0 %v3613
    %3711 = vmatprep.subr.bf16.mxu0 0
    %3712 = vmatpush1.bf16.msra.mxu0 %v3610
    %3713 = vmatprep.subr.bf16.mxu0 0
    %3714 = vmatpush2.bf16.msra.mxu0 0
    %3715 = vmatprep.subr.bf16.mxu0 0
    %3716 = vmatpush2.bf16.msra.mxu0 0
    %3717 = vmatprep.subr.bf16.mxu0 0
    %3718 = vmatpush2.bf16.msra.mxu0 0
    %3719 = vmatprep.subr.bf16.mxu0 0
    %3720 = vmatpush2.bf16.msra.mxu0 0
    %3721 = vmatprep.subr.bf16.mxu0 0
    %3722 = vmatpush2.bf16.msra.mxu0 0
    %3723 = vmatprep.subr.bf16.mxu0 0
    %3724 = vmatpush2.bf16.msra.mxu0 0
    %3725 = vmatprep.subr.bf16.mxu0 0
    %3726 = vmatpush2.bf16.msra.mxu0 0
    %3727 = vmatprep.subr.bf16.mxu0 0
    %3728 = vmatpush2.bf16.msra.mxu0 0
    %3729 = vmatprep.mubr.bf16.mxu0 0
    %3730 = vmatmul.mubr.bf16.gmra.mxu0 %v3495
    %v3731 = vpop.f32.mrf.mxu0
    %v3732 = vadd.f32 %v681, %v3731
    %v3733 = vpop.f32.mrf.mxu0
    %v3734 = vpop.f32.mrf.mxu0
    %v3735 = vpop.f32.mrf.mxu0
    %3736 = vdwg.mxu0
    %v3737 = vadd.f32 %v3491, %v3691
    %v3738 = vxor.u32 %v3737, 2147483648
    %v3739 = vmul.f32 %v3738, 1.442695
    %v3740 = vpow.pop %v3739
    %v3741 = vadd.f32 %v3740, 1.0
    %v3742 = vrcp.pop %v3741
    %v3743 = vmul.f32 1.0, %v3742
    %v3744 = vadd.f32 %v3492, %v3693
    %v3745 = vxor.u32 %v3744, 2147483648
    %v3746 = vmul.f32 %v3745, 1.442695
    %v3747 = vpow.pop %v3746
    %v3748 = vadd.f32 %v3747, 1.0
    %v3749 = vrcp.pop %v3748
    %v3750 = vmul.f32 1.0, %v3749
    %v3751 = vmul.f32 %v3743, %v3732
    %v3752 = vadd.f32 %v3493, %v3751
    %v3753 = vtanh.pop %v3752
    %v3754 = vsub.f32 %v3494, %v3753
    %v3755 = vmul.f32 %v3750, %v3754
    %v3756 = vadd.f32 %v3753, %v3755
    %v3757 = vsel %vm2376, %v3756, %v3494
    %3758 = vst [vmem:[#allocation3] sm:$0xff] %v3757
    %v3759 = vsel %vm2376, %v3756, 0.0
    %v3760 = vld [vmem:[%s2380] sm:$0xff]
    %v3761 = vadd.f32 %v3760, %v3759
    %3762 = vst [vmem:[%s2380] sm:$0xff] %v3761
    %s3763 = scalar_lea.vmem %s981, 96 [#allocation2]
    %v3764 = vld [vmem:[%s3763] sm:$0xff]
    %v3765 = vld [vmem:[%s3763 + $0x8] sm:$0xff]
    %v3766 = vld [vmem:[%s3763 + $0x10] sm:$0xff]
    %v3767 = vld [vmem:[%s986] sm:$0xff]
    %v3768 = vpack.c.bf16 %v3767, %v3767
    %v3769 = vld [vmem:[%s989] sm:$0xff]
    %v3770 = vld [vmem:[%s989 + $0x8] sm:$0xf]
    %v3771 = vld [vmem:[%s989 + $0xc] sm:$0xff]
    %v3772 = vld [vmem:[%s989 + $0x14] sm:$0xf]
    %v3773 = vld [vmem:[%s989 + $0x18] sm:$0xff]
    %v3774 = vld [vmem:[%s989 + $0x20] sm:$0xf]
    %v3775 = vld [vmem:[%s989 + $0x24] sm:$0xff]
    %v3776 = vld [vmem:[%s989 + $0x2c] sm:$0xf]
    %v3777 = vld [vmem:[%s989 + $0x30] sm:$0xff]
    %v3778 = vld [vmem:[%s989 + $0x38] sm:$0xf]
    %v3779 = vld [vmem:[%s989 + $0x3c] sm:$0xff]
    %v3780 = vld [vmem:[%s989 + $0x44] sm:$0xf]
    %v3781 = vld [vmem:[%s989 + $0x48] sm:$0xff]
    %v3782 = vld [vmem:[%s989 + $0x50] sm:$0xf]
    %v3783 = vld [vmem:[%s989 + $0x54] sm:$0xff]
    %v3784 = vld [vmem:[%s989 + $0x5c] sm:$0xf]
    %v3785 = vld [vmem:[%s989 + $0x60] sm:$0xff]
    %v3786 = vld [vmem:[%s989 + $0x68] sm:$0xf]
    %v3787 = vld [vmem:[%s989 + $0x6c] sm:$0xff]
    %v3788 = vld [vmem:[%s989 + $0x74] sm:$0xf]
    %v3789 = vld [vmem:[%s989 + $0x78] sm:$0xff]
    %v3790 = vld [vmem:[%s989 + $0x80] sm:$0xf]
    %v3791 = vld [vmem:[%s989 + $0x84] sm:$0xff]
    %v3792 = vld [vmem:[%s989 + $0x8c] sm:$0xf]
    %v3793 = vld [vmem:[%s989 + $0x90] sm:$0xff]
    %v3794 = vld [vmem:[%s989 + $0x98] sm:$0xf]
    %v3795 = vld [vmem:[%s989 + $0x9c] sm:$0xff]
    %v3796 = vld [vmem:[%s989 + $0xa4] sm:$0xf]
    %v3797 = vld [vmem:[%s989 + $0xa8] sm:$0xff]
    %v3798 = vld [vmem:[%s989 + $0xb0] sm:$0xf]
    %v3799 = vld [vmem:[%s989 + $0xb4] sm:$0xff]
    %v3800 = vld [vmem:[%s989 + $0xbc] sm:$0xf]
    %v3833 = vunpack.c.l.b16 %v3769
    %v3834 = vunpack.c.h.b16 %v3769
    %v3835 = vunpack.c.l.b16 %v3770
    %v3836 = vunpack.c.l.b16 %v3771
    %v3837 = vunpack.c.h.b16 %v3771
    %v3838 = vunpack.c.l.b16 %v3772
    %v3839 = vunpack.c.l.b16 %v3773
    %v3840 = vunpack.c.h.b16 %v3773
    %v3841 = vunpack.c.l.b16 %v3774
    %v3842 = vunpack.c.l.b16 %v3775
    %v3843 = vunpack.c.h.b16 %v3775
    %v3844 = vunpack.c.l.b16 %v3776
    %v3845 = vunpack.c.l.b16 %v3777
    %v3846 = vunpack.c.h.b16 %v3777
    %v3847 = vunpack.c.l.b16 %v3778
    %v3848 = vunpack.c.l.b16 %v3779
    %v3849 = vunpack.c.h.b16 %v3779
    %v3850 = vunpack.c.l.b16 %v3780
    %v3851 = vunpack.c.l.b16 %v3781
    %v3852 = vunpack.c.h.b16 %v3781
    %v3853 = vunpack.c.l.b16 %v3782
    %v3854 = vunpack.c.l.b16 %v3783
    %v3855 = vunpack.c.h.b16 %v3783
    %v3856 = vunpack.c.l.b16 %v3784
    %v3857 = vunpack.c.l.b16 %v3785
    %v3858 = vunpack.c.h.b16 %v3785
    %v3859 = vunpack.c.l.b16 %v3786
    %v3860 = vunpack.c.l.b16 %v3787
    %v3861 = vunpack.c.h.b16 %v3787
    %v3862 = vunpack.c.l.b16 %v3788
    %v3863 = vunpack.c.l.b16 %v3789
    %v3864 = vunpack.c.h.b16 %v3789
    %v3865 = vunpack.c.l.b16 %v3790
    %v3866 = vunpack.c.l.b16 %v3791
    %v3867 = vunpack.c.h.b16 %v3791
    %v3868 = vunpack.c.l.b16 %v3792
    %v3869 = vunpack.c.l.b16 %v3793
    %v3870 = vunpack.c.h.b16 %v3793
    %v3871 = vunpack.c.l.b16 %v3794
    %v3872 = vunpack.c.l.b16 %v3795
    %v3873 = vunpack.c.h.b16 %v3795
    %v3874 = vunpack.c.l.b16 %v3796
    %v3875 = vunpack.c.l.b16 %v3797
    %v3876 = vunpack.c.h.b16 %v3797
    %v3877 = vunpack.c.l.b16 %v3798
    %v3878 = vunpack.c.l.b16 %v3799
    %v3879 = vunpack.c.h.b16 %v3799
    %v3880 = vunpack.c.l.b16 %v3800
    %v3881 = vpack.c.b16 %v3836, %v3833
    %v3882 = vpack.c.b16 %v3837, %v3834
    %v3883 = vpack.c.b16 %v3838, %v3835
    %v3884 = vpack.c.b16 %v3842, %v3839
    %v3885 = vpack.c.b16 %v3843, %v3840
    %v3886 = vpack.c.b16 %v3844, %v3841
    %v3887 = vpack.c.b16 %v3848, %v3845
    %v3888 = vpack.c.b16 %v3849, %v3846
    %v3889 = vpack.c.b16 %v3850, %v3847
    %v3890 = vpack.c.b16 %v3854, %v3851
    %v3891 = vpack.c.b16 %v3855, %v3852
    %v3892 = vpack.c.b16 %v3856, %v3853
    %v3893 = vpack.c.b16 %v3860, %v3857
    %v3894 = vpack.c.b16 %v3861, %v3858
    %v3895 = vpack.c.b16 %v3862, %v3859
    %v3896 = vpack.c.b16 %v3866, %v3863
    %v3897 = vpack.c.b16 %v3867, %v3864
    %v3898 = vpack.c.b16 %v3868, %v3865
    %v3899 = vpack.c.b16 %v3872, %v3869
    %v3900 = vpack.c.b16 %v3873, %v3870
    %v3901 = vpack.c.b16 %v3874, %v3871
    %v3902 = vpack.c.b16 %v3878, %v3875
    %v3903 = vpack.c.b16 %v3879, %v3876
    %v3904 = vpack.c.b16 %v3880, %v3877
    %3929 = vmatprep.subr.bf16.mxu0 %v3903
    %3930 = vmatpush1.bf16.msra.mxu0 %v3902
    %3931 = vmatprep.subr.bf16.mxu0 %v3900
    %3932 = vmatpush1.bf16.msra.mxu0 %v3899
    %3933 = vmatprep.subr.bf16.mxu0 %v3897
    %3934 = vmatpush1.bf16.msra.mxu0 %v3896
    %3935 = vmatprep.subr.bf16.mxu0 %v3894
    %3936 = vmatpush1.bf16.msra.mxu0 %v3893
    %3937 = vmatprep.subr.bf16.mxu0 %v3891
    %3938 = vmatpush1.bf16.msra.mxu0 %v3890
    %3939 = vmatprep.subr.bf16.mxu0 %v3888
    %3940 = vmatpush1.bf16.msra.mxu0 %v3887
    %3941 = vmatprep.subr.bf16.mxu0 %v3885
    %3942 = vmatpush1.bf16.msra.mxu0 %v3884
    %3943 = vmatprep.subr.bf16.mxu0 %v3882
    %3944 = vmatpush1.bf16.msra.mxu0 %v3881
    %3945 = vmatprep.subr.bf16.mxu0 0
    %3946 = vmatpush2.bf16.msra.mxu0 0
    %3947 = vmatprep.subr.bf16.mxu0 0
    %3948 = vmatpush2.bf16.msra.mxu0 0
    %3949 = vmatprep.subr.bf16.mxu0 0
    %3950 = vmatpush2.bf16.msra.mxu0 0
    %3951 = vmatprep.subr.bf16.mxu0 0
    %3952 = vmatpush2.bf16.msra.mxu0 0
    %3953 = vmatprep.subr.bf16.mxu0 0
    %3954 = vmatpush2.bf16.msra.mxu0 0
    %3955 = vmatprep.subr.bf16.mxu0 0
    %3956 = vmatpush2.bf16.msra.mxu0 0
    %3957 = vmatprep.subr.bf16.mxu0 0
    %3958 = vmatpush2.bf16.msra.mxu0 0
    %3959 = vmatprep.subr.bf16.mxu0 0
    %3960 = vmatpush2.bf16.msra.mxu0 0
    %3961 = vmatprep.mubr.bf16.mxu0 0
    %3962 = vmatmul.mubr.bf16.gmra.mxu0 %v3768
    %v3963 = vpop.f32.mrf.mxu0
    %v3964 = vadd.f32 %v691, %v3963
    %v3965 = vpop.f32.mrf.mxu0
    %v3966 = vadd.f32 %v695, %v3965
    %v3967 = vpop.f32.mrf.mxu0
    %v3968 = vpop.f32.mrf.mxu0
    %3969 = vdwg.mxu0
    %3970 = vmatprep.subr.bf16.mxu0 0
    %3971 = vmatpush1.bf16.msra.mxu0 %v3904
    %3972 = vmatprep.subr.bf16.mxu0 0
    %3973 = vmatpush1.bf16.msra.mxu0 %v3901
    %3974 = vmatprep.subr.bf16.mxu0 0
    %3975 = vmatpush1.bf16.msra.mxu0 %v3898
    %3976 = vmatprep.subr.bf16.mxu0 0
    %3977 = vmatpush1.bf16.msra.mxu0 %v3895
    %3978 = vmatprep.subr.bf16.mxu0 0
    %3979 = vmatpush1.bf16.msra.mxu0 %v3892
    %3980 = vmatprep.subr.bf16.mxu0 0
    %3981 = vmatpush1.bf16.msra.mxu0 %v3889
    %3982 = vmatprep.subr.bf16.mxu0 0
    %3983 = vmatpush1.bf16.msra.mxu0 %v3886
    %3984 = vmatprep.subr.bf16.mxu0 0
    %3985 = vmatpush1.bf16.msra.mxu0 %v3883
    %3986 = vmatprep.subr.bf16.mxu0 0
    %3987 = vmatpush2.bf16.msra.mxu0 0
    %3988 = vmatprep.subr.bf16.mxu0 0
    %3989 = vmatpush2.bf16.msra.mxu0 0
    %3990 = vmatprep.subr.bf16.mxu0 0
    %3991 = vmatpush2.bf16.msra.mxu0 0
    %3992 = vmatprep.subr.bf16.mxu0 0
    %3993 = vmatpush2.bf16.msra.mxu0 0
    %3994 = vmatprep.subr.bf16.mxu0 0
    %3995 = vmatpush2.bf16.msra.mxu0 0
    %3996 = vmatprep.subr.bf16.mxu0 0
    %3997 = vmatpush2.bf16.msra.mxu0 0
    %3998 = vmatprep.subr.bf16.mxu0 0
    %3999 = vmatpush2.bf16.msra.mxu0 0
    %4000 = vmatprep.subr.bf16.mxu0 0
    %4001 = vmatpush2.bf16.msra.mxu0 0
    %4002 = vmatprep.mubr.bf16.mxu0 0
    %4003 = vmatmul.mubr.bf16.gmra.mxu0 %v3768
    %v4004 = vpop.f32.mrf.mxu0
    %v4005 = vadd.f32 %v699, %v4004
    %v4006 = vpop.f32.mrf.mxu0
    %v4007 = vpop.f32.mrf.mxu0
    %v4008 = vpop.f32.mrf.mxu0
    %4009 = vdwg.mxu0
    %v4010 = vadd.f32 %v3764, %v3964
    %v4011 = vxor.u32 %v4010, 2147483648
    %v4012 = vmul.f32 %v4011, 1.442695
    %v4013 = vpow.pop %v4012
    %v4014 = vadd.f32 %v4013, 1.0
    %v4015 = vrcp.pop %v4014
    %v4016 = vmul.f32 1.0, %v4015
    %v4017 = vadd.f32 %v3765, %v3966
    %v4018 = vxor.u32 %v4017, 2147483648
    %v4019 = vmul.f32 %v4018, 1.442695
    %v4020 = vpow.pop %v4019
    %v4021 = vadd.f32 %v4020, 1.0
    %v4022 = vrcp.pop %v4021
    %v4023 = vmul.f32 1.0, %v4022
    %v4024 = vmul.f32 %v4016, %v4005
    %v4025 = vadd.f32 %v3766, %v4024
    %v4026 = vtanh.pop %v4025
    %v4027 = vsub.f32 %v3767, %v4026
    %v4028 = vmul.f32 %v4023, %v4027
    %v4029 = vadd.f32 %v4026, %v4028
    %v4030 = vsel %vm2096, %v4029, %v3767
    %4031 = vst [vmem:[%s986] sm:$0xff] %v4030
    %v4032 = vsel %vm2096, %v4029, 0.0
    %v4033 = vld [vmem:[%s2100] sm:$0xff]
    %v4034 = vadd.f32 %v4033, %v4032
    %4035 = vst [vmem:[%s2100] sm:$0xff] %v4034
    %s4036 = scalar_lea.vmem [#allocation2], 288
    %v4037 = vld [vmem:[%s4036] sm:$0xff]
    %v4038 = vld [vmem:[%s4036 + $0x8] sm:$0xff]
    %v4039 = vld [vmem:[%s4036 + $0x10] sm:$0xff]
    %v4040 = vld [vmem:[#allocation3] sm:$0xff]
    %v4041 = vpack.c.bf16 %v4040, %v4040
    %v4042 = vld [vmem:[#allocation4] sm:$0xff]
    %v4043 = vld [vmem:[#allocation4 + $0x8] sm:$0xf]
    %v4044 = vld [vmem:[#allocation4 + $0xc] sm:$0xff]
    %v4045 = vld [vmem:[#allocation4 + $0x14] sm:$0xf]
    %v4046 = vld [vmem:[#allocation4 + $0x18] sm:$0xff]
    %v4047 = vld [vmem:[#allocation4 + $0x20] sm:$0xf]
    %v4048 = vld [vmem:[#allocation4 + $0x24] sm:$0xff]
    %v4049 = vld [vmem:[#allocation4 + $0x2c] sm:$0xf]
    %v4050 = vld [vmem:[#allocation4 + $0x30] sm:$0xff]
    %v4051 = vld [vmem:[#allocation4 + $0x38] sm:$0xf]
    %v4052 = vld [vmem:[#allocation4 + $0x3c] sm:$0xff]
    %v4053 = vld [vmem:[#allocation4 + $0x44] sm:$0xf]
    %v4054 = vld [vmem:[#allocation4 + $0x48] sm:$0xff]
    %v4055 = vld [vmem:[#allocation4 + $0x50] sm:$0xf]
    %v4056 = vld [vmem:[#allocation4 + $0x54] sm:$0xff]
    %v4057 = vld [vmem:[#allocation4 + $0x5c] sm:$0xf]
    %v4058 = vld [vmem:[#allocation4 + $0x60] sm:$0xff]
    %v4059 = vld [vmem:[#allocation4 + $0x68] sm:$0xf]
    %v4060 = vld [vmem:[#allocation4 + $0x6c] sm:$0xff]
    %v4061 = vld [vmem:[#allocation4 + $0x74] sm:$0xf]
    %v4062 = vld [vmem:[#allocation4 + $0x78] sm:$0xff]
    %v4063 = vld [vmem:[#allocation4 + $0x80] sm:$0xf]
    %v4064 = vld [vmem:[#allocation4 + $0x84] sm:$0xff]
    %v4065 = vld [vmem:[#allocation4 + $0x8c] sm:$0xf]
    %v4066 = vld [vmem:[#allocation4 + $0x90] sm:$0xff]
    %v4067 = vld [vmem:[#allocation4 + $0x98] sm:$0xf]
    %v4068 = vld [vmem:[#allocation4 + $0x9c] sm:$0xff]
    %v4069 = vld [vmem:[#allocation4 + $0xa4] sm:$0xf]
    %v4070 = vld [vmem:[#allocation4 + $0xa8] sm:$0xff]
    %v4071 = vld [vmem:[#allocation4 + $0xb0] sm:$0xf]
    %v4072 = vld [vmem:[#allocation4 + $0xb4] sm:$0xff]
    %v4073 = vld [vmem:[#allocation4 + $0xbc] sm:$0xf]
    %v4106 = vunpack.c.l.b16 %v4042
    %v4107 = vunpack.c.h.b16 %v4042
    %v4108 = vunpack.c.l.b16 %v4043
    %v4109 = vunpack.c.l.b16 %v4044
    %v4110 = vunpack.c.h.b16 %v4044
    %v4111 = vunpack.c.l.b16 %v4045
    %v4112 = vunpack.c.l.b16 %v4046
    %v4113 = vunpack.c.h.b16 %v4046
    %v4114 = vunpack.c.l.b16 %v4047
    %v4115 = vunpack.c.l.b16 %v4048
    %v4116 = vunpack.c.h.b16 %v4048
    %v4117 = vunpack.c.l.b16 %v4049
    %v4118 = vunpack.c.l.b16 %v4050
    %v4119 = vunpack.c.h.b16 %v4050
    %v4120 = vunpack.c.l.b16 %v4051
    %v4121 = vunpack.c.l.b16 %v4052
    %v4122 = vunpack.c.h.b16 %v4052
    %v4123 = vunpack.c.l.b16 %v4053
    %v4124 = vunpack.c.l.b16 %v4054
    %v4125 = vunpack.c.h.b16 %v4054
    %v4126 = vunpack.c.l.b16 %v4055
    %v4127 = vunpack.c.l.b16 %v4056
    %v4128 = vunpack.c.h.b16 %v4056
    %v4129 = vunpack.c.l.b16 %v4057
    %v4130 = vunpack.c.l.b16 %v4058
    %v4131 = vunpack.c.h.b16 %v4058
    %v4132 = vunpack.c.l.b16 %v4059
    %v4133 = vunpack.c.l.b16 %v4060
    %v4134 = vunpack.c.h.b16 %v4060
    %v4135 = vunpack.c.l.b16 %v4061
    %v4136 = vunpack.c.l.b16 %v4062
    %v4137 = vunpack.c.h.b16 %v4062
    %v4138 = vunpack.c.l.b16 %v4063
    %v4139 = vunpack.c.l.b16 %v4064
    %v4140 = vunpack.c.h.b16 %v4064
    %v4141 = vunpack.c.l.b16 %v4065
    %v4142 = vunpack.c.l.b16 %v4066
    %v4143 = vunpack.c.h.b16 %v4066
    %v4144 = vunpack.c.l.b16 %v4067
    %v4145 = vunpack.c.l.b16 %v4068
    %v4146 = vunpack.c.h.b16 %v4068
    %v4147 = vunpack.c.l.b16 %v4069
    %v4148 = vunpack.c.l.b16 %v4070
    %v4149 = vunpack.c.h.b16 %v4070
    %v4150 = vunpack.c.l.b16 %v4071
    %v4151 = vunpack.c.l.b16 %v4072
    %v4152 = vunpack.c.h.b16 %v4072
    %v4153 = vunpack.c.l.b16 %v4073
    %v4154 = vpack.c.b16 %v4109, %v4106
    %v4155 = vpack.c.b16 %v4110, %v4107
    %v4156 = vpack.c.b16 %v4111, %v4108
    %v4157 = vpack.c.b16 %v4115, %v4112
    %v4158 = vpack.c.b16 %v4116, %v4113
    %v4159 = vpack.c.b16 %v4117, %v4114
    %v4160 = vpack.c.b16 %v4121, %v4118
    %v4161 = vpack.c.b16 %v4122, %v4119
    %v4162 = vpack.c.b16 %v4123, %v4120
    %v4163 = vpack.c.b16 %v4127, %v4124
    %v4164 = vpack.c.b16 %v4128, %v4125
    %v4165 = vpack.c.b16 %v4129, %v4126
    %v4166 = vpack.c.b16 %v4133, %v4130
    %v4167 = vpack.c.b16 %v4134, %v4131
    %v4168 = vpack.c.b16 %v4135, %v4132
    %v4169 = vpack.c.b16 %v4139, %v4136
    %v4170 = vpack.c.b16 %v4140, %v4137
    %v4171 = vpack.c.b16 %v4141, %v4138
    %v4172 = vpack.c.b16 %v4145, %v4142
    %v4173 = vpack.c.b16 %v4146, %v4143
    %v4174 = vpack.c.b16 %v4147, %v4144
    %v4175 = vpack.c.b16 %v4151, %v4148
    %v4176 = vpack.c.b16 %v4152, %v4149
    %v4177 = vpack.c.b16 %v4153, %v4150
    %4202 = vmatprep.subr.bf16.mxu0 %v4176
    %4203 = vmatpush1.bf16.msra.mxu0 %v4175
    %4204 = vmatprep.subr.bf16.mxu0 %v4173
    %4205 = vmatpush1.bf16.msra.mxu0 %v4172
    %4206 = vmatprep.subr.bf16.mxu0 %v4170
    %4207 = vmatpush1.bf16.msra.mxu0 %v4169
    %4208 = vmatprep.subr.bf16.mxu0 %v4167
    %4209 = vmatpush1.bf16.msra.mxu0 %v4166
    %4210 = vmatprep.subr.bf16.mxu0 %v4164
    %4211 = vmatpush1.bf16.msra.mxu0 %v4163
    %4212 = vmatprep.subr.bf16.mxu0 %v4161
    %4213 = vmatpush1.bf16.msra.mxu0 %v4160
    %4214 = vmatprep.subr.bf16.mxu0 %v4158
    %4215 = vmatpush1.bf16.msra.mxu0 %v4157
    %4216 = vmatprep.subr.bf16.mxu0 %v4155
    %4217 = vmatpush1.bf16.msra.mxu0 %v4154
    %4218 = vmatprep.subr.bf16.mxu0 0
    %4219 = vmatpush2.bf16.msra.mxu0 0
    %4220 = vmatprep.subr.bf16.mxu0 0
    %4221 = vmatpush2.bf16.msra.mxu0 0
    %4222 = vmatprep.subr.bf16.mxu0 0
    %4223 = vmatpush2.bf16.msra.mxu0 0
    %4224 = vmatprep.subr.bf16.mxu0 0
    %4225 = vmatpush2.bf16.msra.mxu0 0
    %4226 = vmatprep.subr.bf16.mxu0 0
    %4227 = vmatpush2.bf16.msra.mxu0 0
    %4228 = vmatprep.subr.bf16.mxu0 0
    %4229 = vmatpush2.bf16.msra.mxu0 0
    %4230 = vmatprep.subr.bf16.mxu0 0
    %4231 = vmatpush2.bf16.msra.mxu0 0
    %4232 = vmatprep.subr.bf16.mxu0 0
    %4233 = vmatpush2.bf16.msra.mxu0 0
    %4234 = vmatprep.mubr.bf16.mxu0 0
    %4235 = vmatmul.mubr.bf16.gmra.mxu0 %v4041
    %v4236 = vpop.f32.mrf.mxu0
    %v4237 = vadd.f32 %v673, %v4236
    %v4238 = vpop.f32.mrf.mxu0
    %v4239 = vadd.f32 %v677, %v4238
    %v4240 = vpop.f32.mrf.mxu0
    %v4241 = vpop.f32.mrf.mxu0
    %4242 = vdwg.mxu0
    %4243 = vmatprep.subr.bf16.mxu0 0
    %4244 = vmatpush1.bf16.msra.mxu0 %v4177
    %4245 = vmatprep.subr.bf16.mxu0 0
    %4246 = vmatpush1.bf16.msra.mxu0 %v4174
    %4247 = vmatprep.subr.bf16.mxu0 0
    %4248 = vmatpush1.bf16.msra.mxu0 %v4171
    %4249 = vmatprep.subr.bf16.mxu0 0
    %4250 = vmatpush1.bf16.msra.mxu0 %v4168
    %4251 = vmatprep.subr.bf16.mxu0 0
    %4252 = vmatpush1.bf16.msra.mxu0 %v4165
    %4253 = vmatprep.subr.bf16.mxu0 0
    %4254 = vmatpush1.bf16.msra.mxu0 %v4162
    %4255 = vmatprep.subr.bf16.mxu0 0
    %4256 = vmatpush1.bf16.msra.mxu0 %v4159
    %4257 = vmatprep.subr.bf16.mxu0 0
    %4258 = vmatpush1.bf16.msra.mxu0 %v4156
    %4259 = vmatprep.subr.bf16.mxu0 0
    %4260 = vmatpush2.bf16.msra.mxu0 0
    %4261 = vmatprep.subr.bf16.mxu0 0
    %4262 = vmatpush2.bf16.msra.mxu0 0
    %4263 = vmatprep.subr.bf16.mxu0 0
    %4264 = vmatpush2.bf16.msra.mxu0 0
    %4265 = vmatprep.subr.bf16.mxu0 0
    %4266 = vmatpush2.bf16.msra.mxu0 0
    %4267 = vmatprep.subr.bf16.mxu0 0
    %4268 = vmatpush2.bf16.msra.mxu0 0
    %4269 = vmatprep.subr.bf16.mxu0 0
    %4270 = vmatpush2.bf16.msra.mxu0 0
    %4271 = vmatprep.subr.bf16.mxu0 0
    %4272 = vmatpush2.bf16.msra.mxu0 0
    %4273 = vmatprep.subr.bf16.mxu0 0
    %4274 = vmatpush2.bf16.msra.mxu0 0
    %4275 = vmatprep.mubr.bf16.mxu0 0
    %4276 = vmatmul.mubr.bf16.gmra.mxu0 %v4041
    %v4277 = vpop.f32.mrf.mxu0
    %v4278 = vadd.f32 %v681, %v4277
    %v4279 = vpop.f32.mrf.mxu0
    %v4280 = vpop.f32.mrf.mxu0
    %v4281 = vpop.f32.mrf.mxu0
    %4282 = vdwg.mxu0
    %v4283 = vadd.f32 %v4037, %v4237
    %v4284 = vxor.u32 %v4283, 2147483648
    %v4285 = vmul.f32 %v4284, 1.442695
    %v4286 = vpow.pop %v4285
    %v4287 = vadd.f32 %v4286, 1.0
    %v4288 = vrcp.pop %v4287
    %v4289 = vmul.f32 1.0, %v4288
    %v4290 = vadd.f32 %v4038, %v4239
    %v4291 = vxor.u32 %v4290, 2147483648
    %v4292 = vmul.f32 %v4291, 1.442695
    %v4293 = vpow.pop %v4292
    %v4294 = vadd.f32 %v4293, 1.0
    %v4295 = vrcp.pop %v4294
    %v4296 = vmul.f32 1.0, %v4295
    %v4297 = vmul.f32 %v4289, %v4278
    %v4298 = vadd.f32 %v4039, %v4297
    %v4299 = vtanh.pop %v4298
    %v4300 = vsub.f32 %v4040, %v4299
    %v4301 = vmul.f32 %v4296, %v4300
    %v4302 = vadd.f32 %v4299, %v4301
    %v4303 = vsel %vm1816, %v4302, %v4040
    %4304 = vst [vmem:[#allocation3] sm:$0xff] %v4303
    %v4305 = vsel %vm1816, %v4302, 0.0
    %v4306 = vld [vmem:[%s1820] sm:$0xff]
    %v4307 = vadd.f32 %v4306, %v4305
    %4308 = vst [vmem:[%s1820] sm:$0xff] %v4307
    %s4309 = scalar_lea.vmem %s981, 48 [#allocation2]
    %v4310 = vld [vmem:[%s4309] sm:$0xff]
    %v4311 = vld [vmem:[%s4309 + $0x8] sm:$0xff]
    %v4312 = vld [vmem:[%s4309 + $0x10] sm:$0xff]
    %v4313 = vld [vmem:[%s986] sm:$0xff]
    %v4314 = vpack.c.bf16 %v4313, %v4313
    %v4315 = vld [vmem:[%s989] sm:$0xff]
    %v4316 = vld [vmem:[%s989 + $0x8] sm:$0xf]
    %v4317 = vld [vmem:[%s989 + $0xc] sm:$0xff]
    %v4318 = vld [vmem:[%s989 + $0x14] sm:$0xf]
    %v4319 = vld [vmem:[%s989 + $0x18] sm:$0xff]
    %v4320 = vld [vmem:[%s989 + $0x20] sm:$0xf]
    %v4321 = vld [vmem:[%s989 + $0x24] sm:$0xff]
    %v4322 = vld [vmem:[%s989 + $0x2c] sm:$0xf]
    %v4323 = vld [vmem:[%s989 + $0x30] sm:$0xff]
    %v4324 = vld [vmem:[%s989 + $0x38] sm:$0xf]
    %v4325 = vld [vmem:[%s989 + $0x3c] sm:$0xff]
    %v4326 = vld [vmem:[%s989 + $0x44] sm:$0xf]
    %v4327 = vld [vmem:[%s989 + $0x48] sm:$0xff]
    %v4328 = vld [vmem:[%s989 + $0x50] sm:$0xf]
    %v4329 = vld [vmem:[%s989 + $0x54] sm:$0xff]
    %v4330 = vld [vmem:[%s989 + $0x5c] sm:$0xf]
    %v4331 = vld [vmem:[%s989 + $0x60] sm:$0xff]
    %v4332 = vld [vmem:[%s989 + $0x68] sm:$0xf]
    %v4333 = vld [vmem:[%s989 + $0x6c] sm:$0xff]
    %v4334 = vld [vmem:[%s989 + $0x74] sm:$0xf]
    %v4335 = vld [vmem:[%s989 + $0x78] sm:$0xff]
    %v4336 = vld [vmem:[%s989 + $0x80] sm:$0xf]
    %v4337 = vld [vmem:[%s989 + $0x84] sm:$0xff]
    %v4338 = vld [vmem:[%s989 + $0x8c] sm:$0xf]
    %v4339 = vld [vmem:[%s989 + $0x90] sm:$0xff]
    %v4340 = vld [vmem:[%s989 + $0x98] sm:$0xf]
    %v4341 = vld [vmem:[%s989 + $0x9c] sm:$0xff]
    %v4342 = vld [vmem:[%s989 + $0xa4] sm:$0xf]
    %v4343 = vld [vmem:[%s989 + $0xa8] sm:$0xff]
    %v4344 = vld [vmem:[%s989 + $0xb0] sm:$0xf]
    %v4345 = vld [vmem:[%s989 + $0xb4] sm:$0xff]
    %v4346 = vld [vmem:[%s989 + $0xbc] sm:$0xf]
    %v4379 = vunpack.c.l.b16 %v4315
    %v4380 = vunpack.c.h.b16 %v4315
    %v4381 = vunpack.c.l.b16 %v4316
    %v4382 = vunpack.c.l.b16 %v4317
    %v4383 = vunpack.c.h.b16 %v4317
    %v4384 = vunpack.c.l.b16 %v4318
    %v4385 = vunpack.c.l.b16 %v4319
    %v4386 = vunpack.c.h.b16 %v4319
    %v4387 = vunpack.c.l.b16 %v4320
    %v4388 = vunpack.c.l.b16 %v4321
    %v4389 = vunpack.c.h.b16 %v4321
    %v4390 = vunpack.c.l.b16 %v4322
    %v4391 = vunpack.c.l.b16 %v4323
    %v4392 = vunpack.c.h.b16 %v4323
    %v4393 = vunpack.c.l.b16 %v4324
    %v4394 = vunpack.c.l.b16 %v4325
    %v4395 = vunpack.c.h.b16 %v4325
    %v4396 = vunpack.c.l.b16 %v4326
    %v4397 = vunpack.c.l.b16 %v4327
    %v4398 = vunpack.c.h.b16 %v4327
    %v4399 = vunpack.c.l.b16 %v4328
    %v4400 = vunpack.c.l.b16 %v4329
    %v4401 = vunpack.c.h.b16 %v4329
    %v4402 = vunpack.c.l.b16 %v4330
    %v4403 = vunpack.c.l.b16 %v4331
    %v4404 = vunpack.c.h.b16 %v4331
    %v4405 = vunpack.c.l.b16 %v4332
    %v4406 = vunpack.c.l.b16 %v4333
    %v4407 = vunpack.c.h.b16 %v4333
    %v4408 = vunpack.c.l.b16 %v4334
    %v4409 = vunpack.c.l.b16 %v4335
    %v4410 = vunpack.c.h.b16 %v4335
    %v4411 = vunpack.c.l.b16 %v4336
    %v4412 = vunpack.c.l.b16 %v4337
    %v4413 = vunpack.c.h.b16 %v4337
    %v4414 = vunpack.c.l.b16 %v4338
    %v4415 = vunpack.c.l.b16 %v4339
    %v4416 = vunpack.c.h.b16 %v4339
    %v4417 = vunpack.c.l.b16 %v4340
    %v4418 = vunpack.c.l.b16 %v4341
    %v4419 = vunpack.c.h.b16 %v4341
    %v4420 = vunpack.c.l.b16 %v4342
    %v4421 = vunpack.c.l.b16 %v4343
    %v4422 = vunpack.c.h.b16 %v4343
    %v4423 = vunpack.c.l.b16 %v4344
    %v4424 = vunpack.c.l.b16 %v4345
    %v4425 = vunpack.c.h.b16 %v4345
    %v4426 = vunpack.c.l.b16 %v4346
    %v4427 = vpack.c.b16 %v4382, %v4379
    %v4428 = vpack.c.b16 %v4383, %v4380
    %v4429 = vpack.c.b16 %v4384, %v4381
    %v4430 = vpack.c.b16 %v4388, %v4385
    %v4431 = vpack.c.b16 %v4389, %v4386
    %v4432 = vpack.c.b16 %v4390, %v4387
    %v4433 = vpack.c.b16 %v4394, %v4391
    %v4434 = vpack.c.b16 %v4395, %v4392
    %v4435 = vpack.c.b16 %v4396, %v4393
    %v4436 = vpack.c.b16 %v4400, %v4397
    %v4437 = vpack.c.b16 %v4401, %v4398
    %v4438 = vpack.c.b16 %v4402, %v4399
    %v4439 = vpack.c.b16 %v4406, %v4403
    %v4440 = vpack.c.b16 %v4407, %v4404
    %v4441 = vpack.c.b16 %v4408, %v4405
    %v4442 = vpack.c.b16 %v4412, %v4409
    %v4443 = vpack.c.b16 %v4413, %v4410
    %v4444 = vpack.c.b16 %v4414, %v4411
    %v4445 = vpack.c.b16 %v4418, %v4415
    %v4446 = vpack.c.b16 %v4419, %v4416
    %v4447 = vpack.c.b16 %v4420, %v4417
    %v4448 = vpack.c.b16 %v4424, %v4421
    %v4449 = vpack.c.b16 %v4425, %v4422
    %v4450 = vpack.c.b16 %v4426, %v4423
    %4475 = vmatprep.subr.bf16.mxu0 %v4449
    %4476 = vmatpush1.bf16.msra.mxu0 %v4448
    %4477 = vmatprep.subr.bf16.mxu0 %v4446
    %4478 = vmatpush1.bf16.msra.mxu0 %v4445
    %4479 = vmatprep.subr.bf16.mxu0 %v4443
    %4480 = vmatpush1.bf16.msra.mxu0 %v4442
    %4481 = vmatprep.subr.bf16.mxu0 %v4440
    %4482 = vmatpush1.bf16.msra.mxu0 %v4439
    %4483 = vmatprep.subr.bf16.mxu0 %v4437
    %4484 = vmatpush1.bf16.msra.mxu0 %v4436
    %4485 = vmatprep.subr.bf16.mxu0 %v4434
    %4486 = vmatpush1.bf16.msra.mxu0 %v4433
    %4487 = vmatprep.subr.bf16.mxu0 %v4431
    %4488 = vmatpush1.bf16.msra.mxu0 %v4430
    %4489 = vmatprep.subr.bf16.mxu0 %v4428
    %4490 = vmatpush1.bf16.msra.mxu0 %v4427
    %4491 = vmatprep.subr.bf16.mxu0 0
    %4492 = vmatpush2.bf16.msra.mxu0 0
    %4493 = vmatprep.subr.bf16.mxu0 0
    %4494 = vmatpush2.bf16.msra.mxu0 0
    %4495 = vmatprep.subr.bf16.mxu0 0
    %4496 = vmatpush2.bf16.msra.mxu0 0
    %4497 = vmatprep.subr.bf16.mxu0 0
    %4498 = vmatpush2.bf16.msra.mxu0 0
    %4499 = vmatprep.subr.bf16.mxu0 0
    %4500 = vmatpush2.bf16.msra.mxu0 0
    %4501 = vmatprep.subr.bf16.mxu0 0
    %4502 = vmatpush2.bf16.msra.mxu0 0
    %4503 = vmatprep.subr.bf16.mxu0 0
    %4504 = vmatpush2.bf16.msra.mxu0 0
    %4505 = vmatprep.subr.bf16.mxu0 0
    %4506 = vmatpush2.bf16.msra.mxu0 0
    %4507 = vmatprep.mubr.bf16.mxu0 0
    %4508 = vmatmul.mubr.bf16.gmra.mxu0 %v4314
    %v4509 = vpop.f32.mrf.mxu0
    %v4510 = vadd.f32 %v691, %v4509
    %v4511 = vpop.f32.mrf.mxu0
    %v4512 = vadd.f32 %v695, %v4511
    %v4513 = vpop.f32.mrf.mxu0
    %v4514 = vpop.f32.mrf.mxu0
    %4515 = vdwg.mxu0
    %4516 = vmatprep.subr.bf16.mxu0 0
    %4517 = vmatpush1.bf16.msra.mxu0 %v4450
    %4518 = vmatprep.subr.bf16.mxu0 0
    %4519 = vmatpush1.bf16.msra.mxu0 %v4447
    %4520 = vmatprep.subr.bf16.mxu0 0
    %4521 = vmatpush1.bf16.msra.mxu0 %v4444
    %4522 = vmatprep.subr.bf16.mxu0 0
    %4523 = vmatpush1.bf16.msra.mxu0 %v4441
    %4524 = vmatprep.subr.bf16.mxu0 0
    %4525 = vmatpush1.bf16.msra.mxu0 %v4438
    %4526 = vmatprep.subr.bf16.mxu0 0
    %4527 = vmatpush1.bf16.msra.mxu0 %v4435
    %4528 = vmatprep.subr.bf16.mxu0 0
    %4529 = vmatpush1.bf16.msra.mxu0 %v4432
    %4530 = vmatprep.subr.bf16.mxu0 0
    %4531 = vmatpush1.bf16.msra.mxu0 %v4429
    %4532 = vmatprep.subr.bf16.mxu0 0
    %4533 = vmatpush2.bf16.msra.mxu0 0
    %4534 = vmatprep.subr.bf16.mxu0 0
    %4535 = vmatpush2.bf16.msra.mxu0 0
    %4536 = vmatprep.subr.bf16.mxu0 0
    %4537 = vmatpush2.bf16.msra.mxu0 0
    %4538 = vmatprep.subr.bf16.mxu0 0
    %4539 = vmatpush2.bf16.msra.mxu0 0
    %4540 = vmatprep.subr.bf16.mxu0 0
    %4541 = vmatpush2.bf16.msra.mxu0 0
    %4542 = vmatprep.subr.bf16.mxu0 0
    %4543 = vmatpush2.bf16.msra.mxu0 0
    %4544 = vmatprep.subr.bf16.mxu0 0
    %4545 = vmatpush2.bf16.msra.mxu0 0
    %4546 = vmatprep.subr.bf16.mxu0 0
    %4547 = vmatpush2.bf16.msra.mxu0 0
    %4548 = vmatprep.mubr.bf16.mxu0 0
    %4549 = vmatmul.mubr.bf16.gmra.mxu0 %v4314
    %v4550 = vpop.f32.mrf.mxu0
    %v4551 = vadd.f32 %v699, %v4550
    %v4552 = vpop.f32.mrf.mxu0
    %v4553 = vpop.f32.mrf.mxu0
    %v4554 = vpop.f32.mrf.mxu0
    %4555 = vdwg.mxu0
    %v4556 = vadd.f32 %v4310, %v4510
    %v4557 = vxor.u32 %v4556, 2147483648
    %v4558 = vmul.f32 %v4557, 1.442695
    %v4559 = vpow.pop %v4558
    %v4560 = vadd.f32 %v4559, 1.0
    %v4561 = vrcp.pop %v4560
    %v4562 = vmul.f32 1.0, %v4561
    %v4563 = vadd.f32 %v4311, %v4512
    %v4564 = vxor.u32 %v4563, 2147483648
    %v4565 = vmul.f32 %v4564, 1.442695
    %v4566 = vpow.pop %v4565
    %v4567 = vadd.f32 %v4566, 1.0
    %v4568 = vrcp.pop %v4567
    %v4569 = vmul.f32 1.0, %v4568
    %v4570 = vmul.f32 %v4562, %v4551
    %v4571 = vadd.f32 %v4312, %v4570
    %v4572 = vtanh.pop %v4571
    %v4573 = vsub.f32 %v4313, %v4572
    %v4574 = vmul.f32 %v4569, %v4573
    %v4575 = vadd.f32 %v4572, %v4574
    %v4576 = vsel %vm1536, %v4575, %v4313
    %4577 = vst [vmem:[%s986] sm:$0xff] %v4576
    %v4578 = vsel %vm1536, %v4575, 0.0
    %v4579 = vld [vmem:[%s1540] sm:$0xff]
    %v4580 = vadd.f32 %v4579, %v4578
    %4581 = vst [vmem:[%s1540] sm:$0xff] %v4580
    %s4582 = scalar_lea.vmem [#allocation2], 336
    %v4583 = vld [vmem:[%s4582] sm:$0xff]
    %v4584 = vld [vmem:[%s4582 + $0x8] sm:$0xff]
    %v4585 = vld [vmem:[%s4582 + $0x10] sm:$0xff]
    %v4586 = vld [vmem:[#allocation3] sm:$0xff]
    %v4587 = vpack.c.bf16 %v4586, %v4586
    %v4588 = vld [vmem:[#allocation4] sm:$0xff]
    %v4589 = vld [vmem:[#allocation4 + $0x8] sm:$0xf]
    %v4590 = vld [vmem:[#allocation4 + $0xc] sm:$0xff]
    %v4591 = vld [vmem:[#allocation4 + $0x14] sm:$0xf]
    %v4592 = vld [vmem:[#allocation4 + $0x18] sm:$0xff]
    %v4593 = vld [vmem:[#allocation4 + $0x20] sm:$0xf]
    %v4594 = vld [vmem:[#allocation4 + $0x24] sm:$0xff]
    %v4595 = vld [vmem:[#allocation4 + $0x2c] sm:$0xf]
    %v4596 = vld [vmem:[#allocation4 + $0x30] sm:$0xff]
    %v4597 = vld [vmem:[#allocation4 + $0x38] sm:$0xf]
    %v4598 = vld [vmem:[#allocation4 + $0x3c] sm:$0xff]
    %v4599 = vld [vmem:[#allocation4 + $0x44] sm:$0xf]
    %v4600 = vld [vmem:[#allocation4 + $0x48] sm:$0xff]
    %v4601 = vld [vmem:[#allocation4 + $0x50] sm:$0xf]
    %v4602 = vld [vmem:[#allocation4 + $0x54] sm:$0xff]
    %v4603 = vld [vmem:[#allocation4 + $0x5c] sm:$0xf]
    %v4604 = vld [vmem:[#allocation4 + $0x60] sm:$0xff]
    %v4605 = vld [vmem:[#allocation4 + $0x68] sm:$0xf]
    %v4606 = vld [vmem:[#allocation4 + $0x6c] sm:$0xff]
    %v4607 = vld [vmem:[#allocation4 + $0x74] sm:$0xf]
    %v4608 = vld [vmem:[#allocation4 + $0x78] sm:$0xff]
    %v4609 = vld [vmem:[#allocation4 + $0x80] sm:$0xf]
    %v4610 = vld [vmem:[#allocation4 + $0x84] sm:$0xff]
    %v4611 = vld [vmem:[#allocation4 + $0x8c] sm:$0xf]
    %v4612 = vld [vmem:[#allocation4 + $0x90] sm:$0xff]
    %v4613 = vld [vmem:[#allocation4 + $0x98] sm:$0xf]
    %v4614 = vld [vmem:[#allocation4 + $0x9c] sm:$0xff]
    %v4615 = vld [vmem:[#allocation4 + $0xa4] sm:$0xf]
    %v4616 = vld [vmem:[#allocation4 + $0xa8] sm:$0xff]
    %v4617 = vld [vmem:[#allocation4 + $0xb0] sm:$0xf]
    %v4618 = vld [vmem:[#allocation4 + $0xb4] sm:$0xff]
    %v4619 = vld [vmem:[#allocation4 + $0xbc] sm:$0xf]
    %v4652 = vunpack.c.l.b16 %v4588
    %v4653 = vunpack.c.h.b16 %v4588
    %v4654 = vunpack.c.l.b16 %v4589
    %v4655 = vunpack.c.l.b16 %v4590
    %v4656 = vunpack.c.h.b16 %v4590
    %v4657 = vunpack.c.l.b16 %v4591
    %v4658 = vunpack.c.l.b16 %v4592
    %v4659 = vunpack.c.h.b16 %v4592
    %v4660 = vunpack.c.l.b16 %v4593
    %v4661 = vunpack.c.l.b16 %v4594
    %v4662 = vunpack.c.h.b16 %v4594
    %v4663 = vunpack.c.l.b16 %v4595
    %v4664 = vunpack.c.l.b16 %v4596
    %v4665 = vunpack.c.h.b16 %v4596
    %v4666 = vunpack.c.l.b16 %v4597
    %v4667 = vunpack.c.l.b16 %v4598
    %v4668 = vunpack.c.h.b16 %v4598
    %v4669 = vunpack.c.l.b16 %v4599
    %v4670 = vunpack.c.l.b16 %v4600
    %v4671 = vunpack.c.h.b16 %v4600
    %v4672 = vunpack.c.l.b16 %v4601
    %v4673 = vunpack.c.l.b16 %v4602
    %v4674 = vunpack.c.h.b16 %v4602
    %v4675 = vunpack.c.l.b16 %v4603
    %v4676 = vunpack.c.l.b16 %v4604
    %v4677 = vunpack.c.h.b16 %v4604
    %v4678 = vunpack.c.l.b16 %v4605
    %v4679 = vunpack.c.l.b16 %v4606
    %v4680 = vunpack.c.h.b16 %v4606
    %v4681 = vunpack.c.l.b16 %v4607
    %v4682 = vunpack.c.l.b16 %v4608
    %v4683 = vunpack.c.h.b16 %v4608
    %v4684 = vunpack.c.l.b16 %v4609
    %v4685 = vunpack.c.l.b16 %v4610
    %v4686 = vunpack.c.h.b16 %v4610
    %v4687 = vunpack.c.l.b16 %v4611
    %v4688 = vunpack.c.l.b16 %v4612
    %v4689 = vunpack.c.h.b16 %v4612
    %v4690 = vunpack.c.l.b16 %v4613
    %v4691 = vunpack.c.l.b16 %v4614
    %v4692 = vunpack.c.h.b16 %v4614
    %v4693 = vunpack.c.l.b16 %v4615
    %v4694 = vunpack.c.l.b16 %v4616
    %v4695 = vunpack.c.h.b16 %v4616
    %v4696 = vunpack.c.l.b16 %v4617
    %v4697 = vunpack.c.l.b16 %v4618
    %v4698 = vunpack.c.h.b16 %v4618
    %v4699 = vunpack.c.l.b16 %v4619
    %v4700 = vpack.c.b16 %v4655, %v4652
    %v4701 = vpack.c.b16 %v4656, %v4653
    %v4702 = vpack.c.b16 %v4657, %v4654
    %v4703 = vpack.c.b16 %v4661, %v4658
    %v4704 = vpack.c.b16 %v4662, %v4659
    %v4705 = vpack.c.b16 %v4663, %v4660
    %v4706 = vpack.c.b16 %v4667, %v4664
    %v4707 = vpack.c.b16 %v4668, %v4665
    %v4708 = vpack.c.b16 %v4669, %v4666
    %v4709 = vpack.c.b16 %v4673, %v4670
    %v4710 = vpack.c.b16 %v4674, %v4671
    %v4711 = vpack.c.b16 %v4675, %v4672
    %v4712 = vpack.c.b16 %v4679, %v4676
    %v4713 = vpack.c.b16 %v4680, %v4677
    %v4714 = vpack.c.b16 %v4681, %v4678
    %v4715 = vpack.c.b16 %v4685, %v4682
    %v4716 = vpack.c.b16 %v4686, %v4683
    %v4717 = vpack.c.b16 %v4687, %v4684
    %v4718 = vpack.c.b16 %v4691, %v4688
    %v4719 = vpack.c.b16 %v4692, %v4689
    %v4720 = vpack.c.b16 %v4693, %v4690
    %v4721 = vpack.c.b16 %v4697, %v4694
    %v4722 = vpack.c.b16 %v4698, %v4695
    %v4723 = vpack.c.b16 %v4699, %v4696
    %4748 = vmatprep.subr.bf16.mxu0 %v4722
    %4749 = vmatpush1.bf16.msra.mxu0 %v4721
    %4750 = vmatprep.subr.bf16.mxu0 %v4719
    %4751 = vmatpush1.bf16.msra.mxu0 %v4718
    %4752 = vmatprep.subr.bf16.mxu0 %v4716
    %4753 = vmatpush1.bf16.msra.mxu0 %v4715
    %4754 = vmatprep.subr.bf16.mxu0 %v4713
    %4755 = vmatpush1.bf16.msra.mxu0 %v4712
    %4756 = vmatprep.subr.bf16.mxu0 %v4710
    %4757 = vmatpush1.bf16.msra.mxu0 %v4709
    %4758 = vmatprep.subr.bf16.mxu0 %v4707
    %4759 = vmatpush1.bf16.msra.mxu0 %v4706
    %4760 = vmatprep.subr.bf16.mxu0 %v4704
    %4761 = vmatpush1.bf16.msra.mxu0 %v4703
    %4762 = vmatprep.subr.bf16.mxu0 %v4701
    %4763 = vmatpush1.bf16.msra.mxu0 %v4700
    %4764 = vmatprep.subr.bf16.mxu0 0
    %4765 = vmatpush2.bf16.msra.mxu0 0
    %4766 = vmatprep.subr.bf16.mxu0 0
    %4767 = vmatpush2.bf16.msra.mxu0 0
    %4768 = vmatprep.subr.bf16.mxu0 0
    %4769 = vmatpush2.bf16.msra.mxu0 0
    %4770 = vmatprep.subr.bf16.mxu0 0
    %4771 = vmatpush2.bf16.msra.mxu0 0
    %4772 = vmatprep.subr.bf16.mxu0 0
    %4773 = vmatpush2.bf16.msra.mxu0 0
    %4774 = vmatprep.subr.bf16.mxu0 0
    %4775 = vmatpush2.bf16.msra.mxu0 0
    %4776 = vmatprep.subr.bf16.mxu0 0
    %4777 = vmatpush2.bf16.msra.mxu0 0
    %4778 = vmatprep.subr.bf16.mxu0 0
    %4779 = vmatpush2.bf16.msra.mxu0 0
    %4780 = vmatprep.mubr.bf16.mxu0 0
    %4781 = vmatmul.mubr.bf16.gmra.mxu0 %v4587
    %v4782 = vpop.f32.mrf.mxu0
    %v4783 = vadd.f32 %v673, %v4782
    %v4784 = vpop.f32.mrf.mxu0
    %v4785 = vadd.f32 %v677, %v4784
    %v4786 = vpop.f32.mrf.mxu0
    %v4787 = vpop.f32.mrf.mxu0
    %4788 = vdwg.mxu0
    %4789 = vmatprep.subr.bf16.mxu0 0
    %4790 = vmatpush1.bf16.msra.mxu0 %v4723
    %4791 = vmatprep.subr.bf16.mxu0 0
    %4792 = vmatpush1.bf16.msra.mxu0 %v4720
    %4793 = vmatprep.subr.bf16.mxu0 0
    %4794 = vmatpush1.bf16.msra.mxu0 %v4717
    %4795 = vmatprep.subr.bf16.mxu0 0
    %4796 = vmatpush1.bf16.msra.mxu0 %v4714
    %4797 = vmatprep.subr.bf16.mxu0 0
    %4798 = vmatpush1.bf16.msra.mxu0 %v4711
    %4799 = vmatprep.subr.bf16.mxu0 0
    %4800 = vmatpush1.bf16.msra.mxu0 %v4708
    %4801 = vmatprep.subr.bf16.mxu0 0
    %4802 = vmatpush1.bf16.msra.mxu0 %v4705
    %4803 = vmatprep.subr.bf16.mxu0 0
    %4804 = vmatpush1.bf16.msra.mxu0 %v4702
    %4805 = vmatprep.subr.bf16.mxu0 0
    %4806 = vmatpush2.bf16.msra.mxu0 0
    %4807 = vmatprep.subr.bf16.mxu0 0
    %4808 = vmatpush2.bf16.msra.mxu0 0
    %4809 = vmatprep.subr.bf16.mxu0 0
    %4810 = vmatpush2.bf16.msra.mxu0 0
    %4811 = vmatprep.subr.bf16.mxu0 0
    %4812 = vmatpush2.bf16.msra.mxu0 0
    %4813 = vmatprep.subr.bf16.mxu0 0
    %4814 = vmatpush2.bf16.msra.mxu0 0
    %4815 = vmatprep.subr.bf16.mxu0 0
    %4816 = vmatpush2.bf16.msra.mxu0 0
    %4817 = vmatprep.subr.bf16.mxu0 0
    %4818 = vmatpush2.bf16.msra.mxu0 0
    %4819 = vmatprep.subr.bf16.mxu0 0
    %4820 = vmatpush2.bf16.msra.mxu0 0
    %4821 = vmatprep.mubr.bf16.mxu0 0
    %4822 = vmatmul.mubr.bf16.gmra.mxu0 %v4587
    %v4823 = vpop.f32.mrf.mxu0
    %v4824 = vadd.f32 %v681, %v4823
    %v4825 = vpop.f32.mrf.mxu0
    %v4826 = vpop.f32.mrf.mxu0
    %v4827 = vpop.f32.mrf.mxu0
    %4828 = vdwg.mxu0
    %v4829 = vadd.f32 %v4583, %v4783
    %v4830 = vxor.u32 %v4829, 2147483648
    %v4831 = vmul.f32 %v4830, 1.442695
    %v4832 = vpow.pop %v4831
    %v4833 = vadd.f32 %v4832, 1.0
    %v4834 = vrcp.pop %v4833
    %v4835 = vmul.f32 1.0, %v4834
    %v4836 = vadd.f32 %v4584, %v4785
    %v4837 = vxor.u32 %v4836, 2147483648
    %v4838 = vmul.f32 %v4837, 1.442695
    %v4839 = vpow.pop %v4838
    %v4840 = vadd.f32 %v4839, 1.0
    %v4841 = vrcp.pop %v4840
    %v4842 = vmul.f32 1.0, %v4841
    %v4843 = vmul.f32 %v4835, %v4824
    %v4844 = vadd.f32 %v4585, %v4843
    %v4845 = vtanh.pop %v4844
    %v4846 = vsub.f32 %v4586, %v4845
    %v4847 = vmul.f32 %v4842, %v4846
    %v4848 = vadd.f32 %v4845, %v4847
    %v4849 = vsel %vm1256, %v4848, %v4586
    %4850 = vst [vmem:[#allocation3] sm:$0xff] %v4849
    %v4851 = vsel %vm1256, %v4848, 0.0
    %v4852 = vld [vmem:[%s1260] sm:$0xff]
    %v4853 = vadd.f32 %v4852, %v4851
    %4854 = vst [vmem:[%s1260] sm:$0xff] %v4853
    %v4855 = vld [vmem:[%s981] sm:$0xff]
    %v4856 = vld [vmem:[%s981 + $0x8] sm:$0xff]
    %v4857 = vld [vmem:[%s981 + $0x10] sm:$0xff]
    %v4858 = vld [vmem:[%s986] sm:$0xff]
    %v4859 = vpack.c.bf16 %v4858, %v4858
    %v4860 = vld [vmem:[%s989] sm:$0xff]
    %v4861 = vld [vmem:[%s989 + $0x8] sm:$0xf]
    %v4862 = vld [vmem:[%s989 + $0xc] sm:$0xff]
    %v4863 = vld [vmem:[%s989 + $0x14] sm:$0xf]
    %v4864 = vld [vmem:[%s989 + $0x18] sm:$0xff]
    %v4865 = vld [vmem:[%s989 + $0x20] sm:$0xf]
    %v4866 = vld [vmem:[%s989 + $0x24] sm:$0xff]
    %v4867 = vld [vmem:[%s989 + $0x2c] sm:$0xf]
    %v4868 = vld [vmem:[%s989 + $0x30] sm:$0xff]
    %v4869 = vld [vmem:[%s989 + $0x38] sm:$0xf]
    %v4870 = vld [vmem:[%s989 + $0x3c] sm:$0xff]
    %v4871 = vld [vmem:[%s989 + $0x44] sm:$0xf]
    %v4872 = vld [vmem:[%s989 + $0x48] sm:$0xff]
    %v4873 = vld [vmem:[%s989 + $0x50] sm:$0xf]
    %v4874 = vld [vmem:[%s989 + $0x54] sm:$0xff]
    %v4875 = vld [vmem:[%s989 + $0x5c] sm:$0xf]
    %v4876 = vld [vmem:[%s989 + $0x60] sm:$0xff]
    %v4877 = vld [vmem:[%s989 + $0x68] sm:$0xf]
    %v4878 = vld [vmem:[%s989 + $0x6c] sm:$0xff]
    %v4879 = vld [vmem:[%s989 + $0x74] sm:$0xf]
    %v4880 = vld [vmem:[%s989 + $0x78] sm:$0xff]
    %v4881 = vld [vmem:[%s989 + $0x80] sm:$0xf]
    %v4882 = vld [vmem:[%s989 + $0x84] sm:$0xff]
    %v4883 = vld [vmem:[%s989 + $0x8c] sm:$0xf]
    %v4884 = vld [vmem:[%s989 + $0x90] sm:$0xff]
    %v4885 = vld [vmem:[%s989 + $0x98] sm:$0xf]
    %v4886 = vld [vmem:[%s989 + $0x9c] sm:$0xff]
    %v4887 = vld [vmem:[%s989 + $0xa4] sm:$0xf]
    %v4888 = vld [vmem:[%s989 + $0xa8] sm:$0xff]
    %v4889 = vld [vmem:[%s989 + $0xb0] sm:$0xf]
    %v4890 = vld [vmem:[%s989 + $0xb4] sm:$0xff]
    %v4891 = vld [vmem:[%s989 + $0xbc] sm:$0xf]
    %v4924 = vunpack.c.l.b16 %v4860
    %v4925 = vunpack.c.h.b16 %v4860
    %v4926 = vunpack.c.l.b16 %v4861
    %v4927 = vunpack.c.l.b16 %v4862
    %v4928 = vunpack.c.h.b16 %v4862
    %v4929 = vunpack.c.l.b16 %v4863
    %v4930 = vunpack.c.l.b16 %v4864
    %v4931 = vunpack.c.h.b16 %v4864
    %v4932 = vunpack.c.l.b16 %v4865
    %v4933 = vunpack.c.l.b16 %v4866
    %v4934 = vunpack.c.h.b16 %v4866
    %v4935 = vunpack.c.l.b16 %v4867
    %v4936 = vunpack.c.l.b16 %v4868
    %v4937 = vunpack.c.h.b16 %v4868
    %v4938 = vunpack.c.l.b16 %v4869
    %v4939 = vunpack.c.l.b16 %v4870
    %v4940 = vunpack.c.h.b16 %v4870
    %v4941 = vunpack.c.l.b16 %v4871
    %v4942 = vunpack.c.l.b16 %v4872
    %v4943 = vunpack.c.h.b16 %v4872
    %v4944 = vunpack.c.l.b16 %v4873
    %v4945 = vunpack.c.l.b16 %v4874
    %v4946 = vunpack.c.h.b16 %v4874
    %v4947 = vunpack.c.l.b16 %v4875
    %v4948 = vunpack.c.l.b16 %v4876
    %v4949 = vunpack.c.h.b16 %v4876
    %v4950 = vunpack.c.l.b16 %v4877
    %v4951 = vunpack.c.l.b16 %v4878
    %v4952 = vunpack.c.h.b16 %v4878
    %v4953 = vunpack.c.l.b16 %v4879
    %v4954 = vunpack.c.l.b16 %v4880
    %v4955 = vunpack.c.h.b16 %v4880
    %v4956 = vunpack.c.l.b16 %v4881
    %v4957 = vunpack.c.l.b16 %v4882
    %v4958 = vunpack.c.h.b16 %v4882
    %v4959 = vunpack.c.l.b16 %v4883
    %v4960 = vunpack.c.l.b16 %v4884
    %v4961 = vunpack.c.h.b16 %v4884
    %v4962 = vunpack.c.l.b16 %v4885
    %v4963 = vunpack.c.l.b16 %v4886
    %v4964 = vunpack.c.h.b16 %v4886
    %v4965 = vunpack.c.l.b16 %v4887
    %v4966 = vunpack.c.l.b16 %v4888
    %v4967 = vunpack.c.h.b16 %v4888
    %v4968 = vunpack.c.l.b16 %v4889
    %v4969 = vunpack.c.l.b16 %v4890
    %v4970 = vunpack.c.h.b16 %v4890
    %v4971 = vunpack.c.l.b16 %v4891
    %v4972 = vpack.c.b16 %v4927, %v4924
    %v4973 = vpack.c.b16 %v4928, %v4925
    %v4974 = vpack.c.b16 %v4929, %v4926
    %v4975 = vpack.c.b16 %v4933, %v4930
    %v4976 = vpack.c.b16 %v4934, %v4931
    %v4977 = vpack.c.b16 %v4935, %v4932
    %v4978 = vpack.c.b16 %v4939, %v4936
    %v4979 = vpack.c.b16 %v4940, %v4937
    %v4980 = vpack.c.b16 %v4941, %v4938
    %v4981 = vpack.c.b16 %v4945, %v4942
    %v4982 = vpack.c.b16 %v4946, %v4943
    %v4983 = vpack.c.b16 %v4947, %v4944
    %v4984 = vpack.c.b16 %v4951, %v4948
    %v4985 = vpack.c.b16 %v4952, %v4949
    %v4986 = vpack.c.b16 %v4953, %v4950
    %v4987 = vpack.c.b16 %v4957, %v4954
    %v4988 = vpack.c.b16 %v4958, %v4955
    %v4989 = vpack.c.b16 %v4959, %v4956
    %v4990 = vpack.c.b16 %v4963, %v4960
    %v4991 = vpack.c.b16 %v4964, %v4961
    %v4992 = vpack.c.b16 %v4965, %v4962
    %v4993 = vpack.c.b16 %v4969, %v4966
    %v4994 = vpack.c.b16 %v4970, %v4967
    %v4995 = vpack.c.b16 %v4971, %v4968
    %5020 = vmatprep.subr.bf16.mxu0 %v4994
    %5021 = vmatpush1.bf16.msra.mxu0 %v4993
    %5022 = vmatprep.subr.bf16.mxu0 %v4991
    %5023 = vmatpush1.bf16.msra.mxu0 %v4990
    %5024 = vmatprep.subr.bf16.mxu0 %v4988
    %5025 = vmatpush1.bf16.msra.mxu0 %v4987
    %5026 = vmatprep.subr.bf16.mxu0 %v4985
    %5027 = vmatpush1.bf16.msra.mxu0 %v4984
    %5028 = vmatprep.subr.bf16.mxu0 %v4982
    %5029 = vmatpush1.bf16.msra.mxu0 %v4981
    %5030 = vmatprep.subr.bf16.mxu0 %v4979
    %5031 = vmatpush1.bf16.msra.mxu0 %v4978
    %5032 = vmatprep.subr.bf16.mxu0 %v4976
    %5033 = vmatpush1.bf16.msra.mxu0 %v4975
    %5034 = vmatprep.subr.bf16.mxu0 %v4973
    %5035 = vmatpush1.bf16.msra.mxu0 %v4972
    %5036 = vmatprep.subr.bf16.mxu0 0
    %5037 = vmatpush2.bf16.msra.mxu0 0
    %5038 = vmatprep.subr.bf16.mxu0 0
    %5039 = vmatpush2.bf16.msra.mxu0 0
    %5040 = vmatprep.subr.bf16.mxu0 0
    %5041 = vmatpush2.bf16.msra.mxu0 0
    %5042 = vmatprep.subr.bf16.mxu0 0
    %5043 = vmatpush2.bf16.msra.mxu0 0
    %5044 = vmatprep.subr.bf16.mxu0 0
    %5045 = vmatpush2.bf16.msra.mxu0 0
    %5046 = vmatprep.subr.bf16.mxu0 0
    %5047 = vmatpush2.bf16.msra.mxu0 0
    %5048 = vmatprep.subr.bf16.mxu0 0
    %5049 = vmatpush2.bf16.msra.mxu0 0
    %5050 = vmatprep.subr.bf16.mxu0 0
    %5051 = vmatpush2.bf16.msra.mxu0 0
    %5052 = vmatprep.mubr.bf16.mxu0 0
    %5053 = vmatmul.mubr.bf16.gmra.mxu0 %v4859
    %v5054 = vpop.f32.mrf.mxu0
    %v5055 = vadd.f32 %v691, %v5054
    %v5056 = vpop.f32.mrf.mxu0
    %v5057 = vadd.f32 %v695, %v5056
    %v5058 = vpop.f32.mrf.mxu0
    %v5059 = vpop.f32.mrf.mxu0
    %5060 = vdwg.mxu0
    %5061 = vmatprep.subr.bf16.mxu0 0
    %5062 = vmatpush1.bf16.msra.mxu0 %v4995
    %5063 = vmatprep.subr.bf16.mxu0 0
    %5064 = vmatpush1.bf16.msra.mxu0 %v4992
    %5065 = vmatprep.subr.bf16.mxu0 0
    %5066 = vmatpush1.bf16.msra.mxu0 %v4989
    %5067 = vmatprep.subr.bf16.mxu0 0
    %5068 = vmatpush1.bf16.msra.mxu0 %v4986
    %5069 = vmatprep.subr.bf16.mxu0 0
    %5070 = vmatpush1.bf16.msra.mxu0 %v4983
    %5071 = vmatprep.subr.bf16.mxu0 0
    %5072 = vmatpush1.bf16.msra.mxu0 %v4980
    %5073 = vmatprep.subr.bf16.mxu0 0
    %5074 = vmatpush1.bf16.msra.mxu0 %v4977
    %5075 = vmatprep.subr.bf16.mxu0 0
    %5076 = vmatpush1.bf16.msra.mxu0 %v4974
    %5077 = vmatprep.subr.bf16.mxu0 0
    %5078 = vmatpush2.bf16.msra.mxu0 0
    %5079 = vmatprep.subr.bf16.mxu0 0
    %5080 = vmatpush2.bf16.msra.mxu0 0
    %5081 = vmatprep.subr.bf16.mxu0 0
    %5082 = vmatpush2.bf16.msra.mxu0 0
    %5083 = vmatprep.subr.bf16.mxu0 0
    %5084 = vmatpush2.bf16.msra.mxu0 0
    %5085 = vmatprep.subr.bf16.mxu0 0
    %5086 = vmatpush2.bf16.msra.mxu0 0
    %5087 = vmatprep.subr.bf16.mxu0 0
    %5088 = vmatpush2.bf16.msra.mxu0 0
    %5089 = vmatprep.subr.bf16.mxu0 0
    %5090 = vmatpush2.bf16.msra.mxu0 0
    %5091 = vmatprep.subr.bf16.mxu0 0
    %5092 = vmatpush2.bf16.msra.mxu0 0
    %5093 = vmatprep.mubr.bf16.mxu0 0
    %5094 = vmatmul.mubr.bf16.gmra.mxu0 %v4859
    %v5095 = vpop.f32.mrf.mxu0
    %v5096 = vadd.f32 %v699, %v5095
    %v5097 = vpop.f32.mrf.mxu0
    %v5098 = vpop.f32.mrf.mxu0
    %v5099 = vpop.f32.mrf.mxu0
    %5100 = vdwg.mxu0
    %v5101 = vadd.f32 %v4855, %v5055
    %v5102 = vxor.u32 %v5101, 2147483648
    %v5103 = vmul.f32 %v5102, 1.442695
    %v5104 = vpow.pop %v5103
    %v5105 = vadd.f32 %v5104, 1.0
    %v5106 = vrcp.pop %v5105
    %v5107 = vmul.f32 1.0, %v5106
    %v5108 = vadd.f32 %v4856, %v5057
    %v5109 = vxor.u32 %v5108, 2147483648
    %v5110 = vmul.f32 %v5109, 1.442695
    %v5111 = vpow.pop %v5110
    %v5112 = vadd.f32 %v5111, 1.0
    %v5113 = vrcp.pop %v5112
    %v5114 = vmul.f32 1.0, %v5113
    %v5115 = vmul.f32 %v5107, %v5096
    %v5116 = vadd.f32 %v4857, %v5115
    %v5117 = vtanh.pop %v5116
    %v5118 = vsub.f32 %v4858, %v5117
    %v5119 = vmul.f32 %v5114, %v5118
    %v5120 = vadd.f32 %v5117, %v5119
    %v5121 = vsel %vm974, %v5120, %v4858
    %5122 = vst [vmem:[%s986] sm:$0xff] %v5121
    %v5123 = vsel %vm974, %v5120, 0.0
    %v5124 = vld [vmem:[%s6] sm:$0xff]
    %v5125 = vadd.f32 %v5124, %v5123
    %5126 = vst [vmem:[%s6] sm:$0xff] %v5125
    %v5127 = vld [vmem:[%s6] sm:$0xff]
    %v5128 = vld [vmem:[%s6 + $0x8] sm:$0xff]
    %v5129 = vld [vmem:[%s6 + $0x10] sm:$0xff]
    %v5130 = vld [vmem:[%s6 + $0x18] sm:$0xff]
    %v5131 = vld [vmem:[%s6 + $0x20] sm:$0xff]
    %v5132 = vld [vmem:[%s6 + $0x28] sm:$0xff]
    %v5133 = vld [vmem:[%s6 + $0x30] sm:$0xff]
    %v5134 = vld [vmem:[%s6 + $0x38] sm:$0xff]
    %v5135 = vmul.f32 %v5127, 0.5
    %v5136 = vmul.f32 %v5128, 0.5
    %v5137 = vmul.f32 %v5129, 0.5
    %v5138 = vmul.f32 %v5130, 0.5
    %v5139 = vmul.f32 %v5131, 0.5
    %v5140 = vmul.f32 %v5132, 0.5
    %v5141 = vmul.f32 %v5133, 0.5
    %v5142 = vmul.f32 %v5134, 0.5
    %v5143 = vmul.f32 %v5135, %v5135
    %v5144 = vmul.f32 %v5136, %v5136
    %v5145 = vmul.f32 %v5137, %v5137
    %v5146 = vmul.f32 %v5138, %v5138
    %v5147 = vmul.f32 %v5139, %v5139
    %v5148 = vmul.f32 %v5140, %v5140
    %v5149 = vmul.f32 %v5141, %v5141
    %v5150 = vmul.f32 %v5142, %v5142
    %5151 = vadd.xlane.f32.xlu0 %v5143
    %v5152 = vpop.xlane.xlu0 %5151
    %5153 = vadd.xlane.f32.xlu0 %v5144
    %v5154 = vpop.xlane.xlu0 %5153
    %5155 = vadd.xlane.f32.xlu0 %v5145
    %v5156 = vpop.xlane.xlu0 %5155
    %5157 = vadd.xlane.f32.xlu0 %v5146
    %v5158 = vpop.xlane.xlu0 %5157
    %5159 = vadd.xlane.f32.xlu0 %v5147
    %v5160 = vpop.xlane.xlu0 %5159
    %5161 = vadd.xlane.f32.xlu0 %v5148
    %v5162 = vpop.xlane.xlu0 %5161
    %5163 = vadd.xlane.f32.xlu0 %v5149
    %v5164 = vpop.xlane.xlu0 %5163
    %5165 = vadd.xlane.f32.xlu0 %v5150
    %v5166 = vpop.xlane.xlu0 %5165
    %v5167 = vrsqrt.pop %v5152
    %v5168 = vmul.f32 %v5152, %v5167
    %vm5169 = vcmp.eq.f32.partialorder %v5152, inf
    %v5170 = vsel %vm5169, %v5152, %v5168
    %vm5171 = vcmp.eq.f32.partialorder %v5152, 0.0
    %v5172 = vand.u32 %v5152, 2147483648
    %v5173 = vsel %vm5171, %v5172, %v5170
    %v5174 = vrsqrt.pop %v5154
    %v5175 = vmul.f32 %v5154, %v5174
    %vm5176 = vcmp.eq.f32.partialorder %v5154, inf
    %v5177 = vsel %vm5176, %v5154, %v5175
    %vm5178 = vcmp.eq.f32.partialorder %v5154, 0.0
    %v5179 = vand.u32 %v5154, 2147483648
    %v5180 = vsel %vm5178, %v5179, %v5177
    %v5181 = vrsqrt.pop %v5156
    %v5182 = vmul.f32 %v5156, %v5181
    %vm5183 = vcmp.eq.f32.partialorder %v5156, inf
    %v5184 = vsel %vm5183, %v5156, %v5182
    %vm5185 = vcmp.eq.f32.partialorder %v5156, 0.0
    %v5186 = vand.u32 %v5156, 2147483648
    %v5187 = vsel %vm5185, %v5186, %v5184
    %v5188 = vrsqrt.pop %v5158
    %v5189 = vmul.f32 %v5158, %v5188
    %vm5190 = vcmp.eq.f32.partialorder %v5158, inf
    %v5191 = vsel %vm5190, %v5158, %v5189
    %vm5192 = vcmp.eq.f32.partialorder %v5158, 0.0
    %v5193 = vand.u32 %v5158, 2147483648
    %v5194 = vsel %vm5192, %v5193, %v5191
    %v5195 = vrsqrt.pop %v5160
    %v5196 = vmul.f32 %v5160, %v5195
    %vm5197 = vcmp.eq.f32.partialorder %v5160, inf
    %v5198 = vsel %vm5197, %v5160, %v5196
    %vm5199 = vcmp.eq.f32.partialorder %v5160, 0.0
    %v5200 = vand.u32 %v5160, 2147483648
    %v5201 = vsel %vm5199, %v5200, %v5198
    %v5202 = vrsqrt.pop %v5162
    %v5203 = vmul.f32 %v5162, %v5202
    %vm5204 = vcmp.eq.f32.partialorder %v5162, inf
    %v5205 = vsel %vm5204, %v5162, %v5203
    %vm5206 = vcmp.eq.f32.partialorder %v5162, 0.0
    %v5207 = vand.u32 %v5162, 2147483648
    %v5208 = vsel %vm5206, %v5207, %v5205
    %v5209 = vrsqrt.pop %v5164
    %v5210 = vmul.f32 %v5164, %v5209
    %vm5211 = vcmp.eq.f32.partialorder %v5164, inf
    %v5212 = vsel %vm5211, %v5164, %v5210
    %vm5213 = vcmp.eq.f32.partialorder %v5164, 0.0
    %v5214 = vand.u32 %v5164, 2147483648
    %v5215 = vsel %vm5213, %v5214, %v5212
    %v5216 = vrsqrt.pop %v5166
    %v5217 = vmul.f32 %v5166, %v5216
    %vm5218 = vcmp.eq.f32.partialorder %v5166, inf
    %v5219 = vsel %vm5218, %v5166, %v5217
    %vm5220 = vcmp.eq.f32.partialorder %v5166, 0.0
    %v5221 = vand.u32 %v5166, 2147483648
    %v5222 = vsel %vm5220, %v5221, %v5219
    %v5223 = vadd.f32 %v5173, 1e-08
    %v5224 = vadd.f32 %v5180, 1e-08
    %v5225 = vadd.f32 %v5187, 1e-08
    %v5226 = vadd.f32 %v5194, 1e-08
    %v5227 = vadd.f32 %v5201, 1e-08
    %v5228 = vadd.f32 %v5208, 1e-08
    %v5229 = vadd.f32 %v5215, 1e-08
    %v5230 = vadd.f32 %v5222, 1e-08
    %v5231 = vrcp.pop %v5223
    %v5232 = vrcp.pop %v5224
    %v5233 = vrcp.pop %v5225
    %v5234 = vrcp.pop %v5226
    %v5235 = vrcp.pop %v5227
    %v5236 = vrcp.pop %v5228
    %v5237 = vrcp.pop %v5229
    %v5238 = vrcp.pop %v5230
    %v5239 = vmul.f32 %v5135, %v5231
    %v5240 = vmul.f32 %v5136, %v5232
    %v5241 = vmul.f32 %v5137, %v5233
    %v5242 = vmul.f32 %v5138, %v5234
    %v5243 = vmul.f32 %v5139, %v5235
    %v5244 = vmul.f32 %v5140, %v5236
    %v5245 = vmul.f32 %v5141, %v5237
    %v5246 = vmul.f32 %v5142, %v5238
    %5247 = vst [vmem:[%s6] sm:$0xff] %v5239
    %5248 = vst [vmem:[%s6 + $0x8] sm:$0xff] %v5240
    %5249 = vst [vmem:[%s6 + $0x10] sm:$0xff] %v5241
    %5250 = vst [vmem:[%s6 + $0x18] sm:$0xff] %v5242
    %5251 = vst [vmem:[%s6 + $0x20] sm:$0xff] %v5243
    %5252 = vst [vmem:[%s6 + $0x28] sm:$0xff] %v5244
    %5253 = vst [vmem:[%s6 + $0x30] sm:$0xff] %v5245
    %5254 = vst [vmem:[%s6 + $0x38] sm:$0xff] %v5246
    // Predicated region
    $region30: #{encoder_text_forward.1} parent=1 // pred_check
      _
    $region31: #{encoder_text_forward.1} parent=1 // pred_check_branch
      %5256 = sbr.rel (0) target = $region33
    $region32: #{encoder_text_forward.1} parent=1 // pred_region
      _
    $region33: #{encoder_text_forward.1} parent=1 // pred_fallthru
      _
    // Predicated region
    $region34: #{encoder_text_forward.1} parent=1 // pred_check
      _
    $region35: #{encoder_text_forward.1} parent=1 // pred_check_branch
      %5258 = sbr.rel (0) target = $region37
    $region36: #{encoder_text_forward.1} parent=1 // pred_region
      _
    $region37: #{encoder_text_forward.1} parent=1 // pred_fallthru
      _
    %5259 = vsyncpa [#allocation5], 1

</llo_original>
